<compile_context>
chip_gen: v7x
topology: tpu7x:2x2x1
jax: 0.10.0
libtpu: 0.0.40
codegen_flags: <defaults>
</compile_context>

<pallas_src>
import functools

import jax
import jax.numpy as jnp
import numpy as np
from jax.experimental import pallas as pl
from jax.experimental.pallas import tpu as pltpu

EPS = 1e-5


# --------------------------------------------------------------------------
# Fused kernel: whole bottleneck block for one batch element.
# --------------------------------------------------------------------------
def _fused_detnet_kernel(*refs, H, W, dil, has_downsample):
    if has_downsample:
        (x_ref, mask_ref, w1_ref, w2_ref, w3_ref, wd_ref,
         b1_ref, b2_ref, b3_ref, bd_ref, o_ref, h1p_ref, acc_ref) = refs
    else:
        (x_ref, mask_ref, w1_ref, w2_ref, w3_ref,
         b1_ref, b2_ref, b3_ref, o_ref, h1p_ref, acc_ref) = refs
        wd_ref = bd_ref = None

    HW = H * W
    S = (h1p_ref.shape[0] - HW) // 2          # zero-halo rows on each side

    x = x_ref[0]                              # (HW, Cin) bf16

    # ---- conv1 (1x1) + bn1 (scale pre-folded into w1) + relu, f32 epilogue.
    h1 = jnp.dot(x, w1_ref[...], preferred_element_type=jnp.float32)
    h1 = jnp.maximum(h1 + b1_ref[...], 0.0)   # (HW, planes) f32

    # Stage conv1 output into a flat zero-haloed VMEM buffer: every tap of the
    # dilated 3x3 conv becomes a plain row-shifted 2-D view (no strided window
    # gathers, no reshape relayouts, no HBM-side padding).
    h1p_ref[...] = jnp.zeros_like(h1p_ref)
    h1p_ref[S:S + HW, :] = h1

    # ---- conv2: 3x3, dilation=2, padding=2 == 9 full-width MXU matmuls.
    # Host-precomputed per-tap masks zero the positions whose column offset
    # would wrap into the neighbouring image row; the zero halo handles rows
    # falling above/below the image.
    acc_ref[...] = jnp.zeros_like(acc_ref)
    t = 0
    for ky in range(3):
        for kx in range(3):
            off = ((ky - 1) * W + (kx - 1)) * dil
            shifted = h1p_ref[S + off:S + off + HW, :].astype(jnp.bfloat16)
            tap = jnp.dot(shifted, w2_ref[t], preferred_element_type=jnp.float32)
            acc_ref[...] += tap * mask_ref[t]
            t += 1
    h2 = jnp.maximum(acc_ref[...] + b2_ref[...], 0.0).astype(jnp.bfloat16)

    # ---- conv3 (1x1) + bn3 + residual (+ fused downsample conv+bn) + relu.
    y = jnp.dot(h2, w3_ref[...], preferred_element_type=jnp.float32) + b3_ref[...]
    if has_downsample:
        res = jnp.dot(x, wd_ref[...], preferred_element_type=jnp.float32) + bd_ref[...]
    else:
        res = x.astype(jnp.float32)           # identity path: Cin == Cout
    o_ref[0] = jnp.maximum(y + res, 0.0).astype(o_ref.dtype)


# --------------------------------------------------------------------------
# Host-side helpers
# --------------------------------------------------------------------------
def _tap_masks(H, W, dil):
    """(9, H*W, 1) f32 validity mask for each tap of a 3x3 dilated conv."""
    ys, xs = np.meshgrid(np.arange(H), np.arange(W), indexing="ij")
    ms = []
    for ky in range(3):
        for kx in range(3):
            dy, dx = (ky - 1) * dil, (kx - 1) * dil
            m = ((ys + dy >= 0) & (ys + dy < H) &
                 (xs + dx >= 0) & (xs + dx < W)).astype(np.float32)
            ms.append(m.reshape(H * W, 1))
    return jnp.asarray(np.stack(ms, axis=0))


def _fold_bn(bn):
    scale = bn['gamma'] / jnp.sqrt(bn['var'] + EPS)
    shift = bn['beta'] - bn['mean'] * scale
    return scale, shift


# --------------------------------------------------------------------------
# Parameter construction (deterministic, mirrors nn.Module __init__ shapes)
# --------------------------------------------------------------------------
def init_params(key, in_planes, planes, stride=1, block_type='A'):
    expansion = 1
    out_planes = expansion * planes
    keys = jax.random.split(key, 16)

    def bn_params(kg, kb, km, kv, c):
        gamma = jax.random.uniform(kg, (c,), jnp.float32, 0.5, 1.5)
        beta = 0.1 * jax.random.normal(kb, (c,), jnp.float32)
        mean = 0.1 * jax.random.normal(km, (c,), jnp.float32)
        var = jax.random.uniform(kv, (c,), jnp.float32, 0.5, 1.5)
        return dict(gamma=gamma, beta=beta, mean=mean, var=var)

    p = {
        # conv weights in PyTorch OIHW layout
        'w1': 0.1 * jax.random.normal(keys[0], (planes, in_planes, 1, 1), jnp.float32),
        'w2': 0.1 * jax.random.normal(keys[1], (planes, planes, 3, 3), jnp.float32),
        'w3': 0.1 * jax.random.normal(keys[2], (out_planes, planes, 1, 1), jnp.float32),
        'bn1': bn_params(keys[3], keys[4], keys[5], keys[6], planes),
        'bn2': bn_params(keys[7], keys[8], keys[9], keys[10], planes),
        'bn3': bn_params(keys[11], keys[12], keys[13], keys[14], out_planes),
        'has_downsample': (stride != 1 or in_planes != out_planes or block_type == 'B'),
        'stride': stride,
    }
    if p['has_downsample']:
        dk = jax.random.split(keys[15], 5)
        p['wd'] = 0.1 * jax.random.normal(dk[0], (out_planes, in_planes, 1, 1), jnp.float32)
        p['bnd'] = bn_params(dk[1], dk[2], dk[3], dk[4], out_planes)
    return p


# --------------------------------------------------------------------------
# Forward pass (Pallas) — matches detnet_bottleneck.forward (eval-mode BN)
# --------------------------------------------------------------------------
def detnet_bottleneck_forward(x_nchw, params):
    assert params['stride'] == 1, "stride=1 only (module default)"
    dil = 2

    x = jnp.transpose(x_nchw, (0, 2, 3, 1)).astype(jnp.float32)  # NCHW -> NHWC
    N, H, W, Cin = x.shape
    planes = params['w1'].shape[0]
    out_planes = params['w3'].shape[0]
    HW = H * W
    S = -(-(dil * (W + 1)) // 8) * 8          # halo rows, rounded to sublane tile

    # Fold BN scale into the conv weights (f32), then cast weights to bf16.
    s1, b1 = _fold_bn(params['bn1'])
    s2, b2 = _fold_bn(params['bn2'])
    s3, b3 = _fold_bn(params['bn3'])
    w1f = (params['w1'][:, :, 0, 0].T * s1[None, :]).astype(jnp.bfloat16)        # (Cin, P)
    w2_hwio = jnp.transpose(params['w2'], (2, 3, 1, 0)).reshape(9, planes, planes)
    w2f = (w2_hwio * s2[None, None, :]).astype(jnp.bfloat16)                      # (9, P, P)
    w3f = (params['w3'][:, :, 0, 0].T * s3[None, :]).astype(jnp.bfloat16)         # (P, Cout)
    b1 = b1.reshape(1, -1).astype(jnp.float32)
    b2 = b2.reshape(1, -1).astype(jnp.float32)
    b3 = b3.reshape(1, -1).astype(jnp.float32)

    masks = _tap_masks(H, W, dil)                                                 # (9, HW, 1)
    x_flat = x.reshape(N, HW, Cin).astype(jnp.bfloat16)   # bf16 halves input DMA bytes

    has_ds = params['has_downsample']
    kernel = functools.partial(_fused_detnet_kernel, H=H, W=W, dil=dil,
                               has_downsample=has_ds)

    in_specs = [
        pl.BlockSpec((1, HW, Cin), lambda n: (n, 0, 0)),            # x (pipelined)
        pl.BlockSpec((9, HW, 1), lambda n: (0, 0, 0)),              # tap masks (resident)
        pl.BlockSpec((Cin, planes), lambda n: (0, 0)),              # w1 (resident)
        pl.BlockSpec((9, planes, planes), lambda n: (0, 0, 0)),     # w2 (resident)
        pl.BlockSpec((planes, out_planes), lambda n: (0, 0)),       # w3 (resident)
    ]
    args = [x_flat, masks, w1f, w2f, w3f]
    if has_ds:
        sd, bd = _fold_bn(params['bnd'])
        wdf = (params['wd'][:, :, 0, 0].T * sd[None, :]).astype(jnp.bfloat16)     # (Cin, Cout)
        in_specs.append(pl.BlockSpec((Cin, out_planes), lambda n: (0, 0)))
        args.append(wdf)
    in_specs += [
        pl.BlockSpec((1, planes), lambda n: (0, 0)),                # b1
        pl.BlockSpec((1, planes), lambda n: (0, 0)),                # b2
        pl.BlockSpec((1, out_planes), lambda n: (0, 0)),            # b3
    ]
    args += [b1, b2, b3]
    if has_ds:
        in_specs.append(pl.BlockSpec((1, out_planes), lambda n: (0, 0)))
        args.append(bd.reshape(1, -1).astype(jnp.float32))

    # Per-batch VMEM footprint at real DetNet sizes (H=W~26, C=256..1024, bf16
    # weights) is a few MiB, comfortably inside v7x's 64 MiB even with double
    # buffering, so the default scoped VMEM limit is sufficient.
    out_flat = pl.pallas_call(
        kernel,
        out_shape=jax.ShapeDtypeStruct((N, HW, out_planes), jnp.float32),
        grid=(N,),
        in_specs=in_specs,
        out_specs=pl.BlockSpec((1, HW, out_planes), lambda n: (n, 0, 0)),
        scratch_shapes=[
            pltpu.VMEM((2 * S + HW, planes), jnp.float32),          # haloed conv1 output
            pltpu.VMEM((HW, planes), jnp.float32),                  # conv2 accumulator
        ],
        compiler_params=pltpu.CompilerParams(
            dimension_semantics=("parallel",)),
    )(*args)

    out = out_flat.reshape(N, H, W, out_planes)
    return jnp.transpose(out, (0, 3, 1, 2))                         # back to NCHW


# --------------------------------------------------------------------------
# Pure-JAX reference (NCHW, f32 lax convs) for correctness checking
# --------------------------------------------------------------------------
def reference_forward(x, p):
    def conv(x, w, padding=0, dilation=1):
        return jax.lax.conv_general_dilated(
            x, w, window_strides=(1, 1),
            padding=[(padding, padding), (padding, padding)],
            rhs_dilation=(dilation, dilation),
            dimension_numbers=('NCHW', 'OIHW', 'NCHW'))

    def bn(x, b):
        s = b['gamma'] / jnp.sqrt(b['var'] + EPS)
        t = b['beta'] - b['mean'] * s
        return x * s[None, :, None, None] + t[None, :, None, None]

    out = jax.nn.relu(bn(conv(x, p['w1']), p['bn1']))
    out = jax.nn.relu(bn(conv(out, p['w2'], padding=2, dilation=2), p['bn2']))
    out = bn(conv(out, p['w3']), p['bn3'])
    if p['has_downsample']:
        res = bn(conv(x, p['wd']), p['bnd'])
    else:
        res = x
    return jax.nn.relu(out + res)


# --------------------------------------------------------------------------
if __name__ == "__main__":
    key = jax.random.PRNGKey(0)
    kx, kp, kp2 = jax.random.split(key, 3)

    N, H, W = 2, 16, 16

    # Case 1: in_planes != planes -> downsample branch active (fused in-kernel).
    in_planes, planes = 4, 8
    x = jax.random.normal(kx, (N, in_planes, H, W), jnp.float32)    # NCHW input
    params = init_params(kp, in_planes, planes, stride=1, block_type='A')
    out = jax.block_until_ready(detnet_bottleneck_forward(x, params))
    ref = jax.block_until_ready(reference_forward(x, params))
    # bf16 MXU operands (f32 accumulation / epilogue) -> compare at bf16-level tolerance.
    np.testing.assert_allclose(np.asarray(out), np.asarray(ref), rtol=2e-2, atol=2e-2)

    # Case 2: in_planes == planes, block_type 'A' -> identity residual path.
    params2 = init_params(kp2, planes, planes, stride=1, block_type='A')
    x2 = jax.random.normal(kx, (N, planes, H, W), jnp.float32)
    out2 = jax.block_until_ready(detnet_bottleneck_forward(x2, params2))
    ref2 = jax.block_until_ready(reference_forward(x2, params2))
    np.testing.assert_allclose(np.asarray(out2), np.asarray(ref2), rtol=2e-2, atol=2e-2)

    print("KERNEL_OK")
</pallas_src>

<mosaic_0001>
module attributes {stable_mosaic.version = 11 : i64} {
  func.func @_fused_detnet_kernel(%arg0: i32, %arg1: memref<1x256x4xbf16, #tpu.memory_space<vmem>>, %arg2: memref<9x256x1xf32, #tpu.memory_space<vmem>>, %arg3: memref<4x8xbf16, #tpu.memory_space<vmem>>, %arg4: memref<9x8x8xbf16, #tpu.memory_space<vmem>>, %arg5: memref<8x8xbf16, #tpu.memory_space<vmem>>, %arg6: memref<4x8xbf16, #tpu.memory_space<vmem>>, %arg7: memref<1x8xf32, #tpu.memory_space<vmem>>, %arg8: memref<1x8xf32, #tpu.memory_space<vmem>>, %arg9: memref<1x8xf32, #tpu.memory_space<vmem>>, %arg10: memref<1x8xf32, #tpu.memory_space<vmem>>, %arg11: memref<1x256x8xf32, #tpu.memory_space<vmem>>, %arg12: memref<336x8xf32, #tpu.memory_space<vmem>>, %arg13: memref<256x8xf32, #tpu.memory_space<vmem>>) attributes {dimension_semantics = [#tpu.dimension_semantics<parallel>], iteration_bounds = array<i64: 2>, scalar_prefetch = 0 : i64, scratch_operands = 2 : i64, tpu.core_type = #tpu.core_type<tc>, window_params = [{transform_indices = @transform_0, window_bounds = array<i64: 1, 256, 4>}, {pipeline_mode = #tpu.pipeline_mode<synchronous>, transform_indices = @transform_1, window_bounds = array<i64: 9, 256, 1>}, {pipeline_mode = #tpu.pipeline_mode<synchronous>, transform_indices = @transform_2, window_bounds = array<i64: 4, 8>}, {pipeline_mode = #tpu.pipeline_mode<synchronous>, transform_indices = @transform_3, window_bounds = array<i64: 9, 8, 8>}, {pipeline_mode = #tpu.pipeline_mode<synchronous>, transform_indices = @transform_4, window_bounds = array<i64: 8, 8>}, {pipeline_mode = #tpu.pipeline_mode<synchronous>, transform_indices = @transform_5, window_bounds = array<i64: 4, 8>}, {pipeline_mode = #tpu.pipeline_mode<synchronous>, transform_indices = @transform_6, window_bounds = array<i64: 1, 8>}, {pipeline_mode = #tpu.pipeline_mode<synchronous>, transform_indices = @transform_7, window_bounds = array<i64: 1, 8>}, {pipeline_mode = #tpu.pipeline_mode<synchronous>, transform_indices = @transform_8, window_bounds = array<i64: 1, 8>}, {pipeline_mode = #tpu.pipeline_mode<synchronous>, transform_indices = @transform_9, window_bounds = array<i64: 1, 8>}, {transform_indices = @transform_10, window_bounds = array<i64: 1, 256, 8>}]} {
    %c0 = arith.constant 0 : index
    %c0_0 = arith.constant 0 : index
    %c0_1 = arith.constant 0 : index
    %0 = vector.load %arg1[%c0, %c0_0, %c0_1] : memref<1x256x4xbf16, #tpu.memory_space<vmem>>, vector<1x256x4xbf16>
    %1 = vector.shape_cast %0 : vector<1x256x4xbf16> to vector<256x4xbf16>
    %c0_2 = arith.constant 0 : index
    %c0_3 = arith.constant 0 : index
    %2 = vector.load %arg3[%c0_2, %c0_3] : memref<4x8xbf16, #tpu.memory_space<vmem>>, vector<4x8xbf16>
    %cst = arith.constant dense<0.000000e+00> : vector<256x8xf32>
    %3 = tpu.matmul %1, %2, %cst {dimension_numbers = #tpu.dot_dimension_numbers<[1], [0], [0], [1], [0, 0, 1, 1], [], []>} : vector<256x4xbf16>, vector<4x8xbf16>, vector<256x8xf32> -> vector<256x8xf32>
    %c0_4 = arith.constant 0 : index
    %c0_5 = arith.constant 0 : index
    %4 = vector.load %arg7[%c0_4, %c0_5] : memref<1x8xf32, #tpu.memory_space<vmem>>, vector<1x8xf32>
    %5 = vector.broadcast %4 : vector<1x8xf32> to vector<256x8xf32>
    %6 = arith.addf %3, %5 : vector<256x8xf32>
    %cst_6 = arith.constant 0.000000e+00 : f32
    %7 = vector.broadcast %cst_6 : f32 to vector<256x8xf32>
    %8 = arith.maximumf %6, %7 : vector<256x8xf32>
    %cst_7 = arith.constant 0.000000e+00 : f32
    %9 = vector.broadcast %cst_7 : f32 to vector<336x8xf32>
    %c0_8 = arith.constant 0 : index
    %c0_9 = arith.constant 0 : index
    %10 = vector.load %arg12[%c0_8, %c0_9] : memref<336x8xf32, #tpu.memory_space<vmem>>, vector<336x8xf32>
    tpu.vector_store %arg12[%c0_8, %c0_9], %9 {strides = array<i32>} : memref<336x8xf32, #tpu.memory_space<vmem>>, vector<336x8xf32>,
    %c40 = arith.constant 40 : index
    %c0_10 = arith.constant 0 : index
    %11 = vector.load %arg12[%c40, %c0_10] : memref<336x8xf32, #tpu.memory_space<vmem>>, vector<256x8xf32>
    tpu.vector_store %arg12[%c40, %c0_10], %8 {strides = array<i32>} : memref<336x8xf32, #tpu.memory_space<vmem>>, vector<256x8xf32>,
    %cst_11 = arith.constant 0.000000e+00 : f32
    %12 = vector.broadcast %cst_11 : f32 to vector<256x8xf32>
    %c0_12 = arith.constant 0 : index
    %c0_13 = arith.constant 0 : index
    %13 = vector.load %arg13[%c0_12, %c0_13] : memref<256x8xf32, #tpu.memory_space<vmem>>, vector<256x8xf32>
    tpu.vector_store %arg13[%c0_12, %c0_13], %12 {strides = array<i32>} : memref<256x8xf32, #tpu.memory_space<vmem>>, vector<256x8xf32>,
    %c6 = arith.constant 6 : index
    %c0_14 = arith.constant 0 : index
    %14 = vector.load %arg12[%c6, %c0_14] : memref<336x8xf32, #tpu.memory_space<vmem>>, vector<256x8xf32>
    %15 = arith.truncf %14 : vector<256x8xf32> to vector<256x8xbf16>
    %c0_15 = arith.constant 0 : index
    %c0_16 = arith.constant 0 : index
    %c0_17 = arith.constant 0 : index
    %16 = vector.load %arg4[%c0_15, %c0_16, %c0_17] : memref<9x8x8xbf16, #tpu.memory_space<vmem>>, vector<1x8x8xbf16>
    %17 = vector.shape_cast %16 : vector<1x8x8xbf16> to vector<8x8xbf16>
    %cst_18 = arith.constant dense<0.000000e+00> : vector<256x8xf32>
    %18 = tpu.matmul %15, %17, %cst_18 {dimension_numbers = #tpu.dot_dimension_numbers<[1], [0], [0], [1], [0, 0, 1, 1], [], []>} : vector<256x8xbf16>, vector<8x8xbf16>, vector<256x8xf32> -> vector<256x8xf32>
    %c0_19 = arith.constant 0 : index
    %c0_20 = arith.constant 0 : index
    %19 = vector.load %arg13[%c0_19, %c0_20] : memref<256x8xf32, #tpu.memory_space<vmem>>, vector<256x8xf32>
    %c0_21 = arith.constant 0 : index
    %c0_22 = arith.constant 0 : index
    %c0_23 = arith.constant 0 : index
    %20 = vector.load %arg2[%c0_21, %c0_22, %c0_23] : memref<9x256x1xf32, #tpu.memory_space<vmem>>, vector<1x256x1xf32>
    %21 = vector.shape_cast %20 : vector<1x256x1xf32> to vector<256x1xf32>
    %22 = vector.broadcast %21 : vector<256x1xf32> to vector<256x8xf32>
    %23 = arith.mulf %18, %22 : vector<256x8xf32>
    %24 = arith.addf %19, %23 : vector<256x8xf32>
    %c0_24 = arith.constant 0 : index
    %c0_25 = arith.constant 0 : index
    %25 = vector.load %arg13[%c0_24, %c0_25] : memref<256x8xf32, #tpu.memory_space<vmem>>, vector<256x8xf32>
    tpu.vector_store %arg13[%c0_24, %c0_25], %24 {strides = array<i32>} : memref<256x8xf32, #tpu.memory_space<vmem>>, vector<256x8xf32>,
    %c8 = arith.constant 8 : index
    %c0_26 = arith.constant 0 : index
    %26 = vector.load %arg12[%c8, %c0_26] : memref<336x8xf32, #tpu.memory_space<vmem>>, vector<256x8xf32>
    %27 = arith.truncf %26 : vector<256x8xf32> to vector<256x8xbf16>
    %c1 = arith.constant 1 : index
    %c0_27 = arith.constant 0 : index
    %c0_28 = arith.constant 0 : index
    %28 = vector.load %arg4[%c1, %c0_27, %c0_28] : memref<9x8x8xbf16, #tpu.memory_space<vmem>>, vector<1x8x8xbf16>
    %29 = vector.shape_cast %28 : vector<1x8x8xbf16> to vector<8x8xbf16>
    %cst_29 = arith.constant dense<0.000000e+00> : vector<256x8xf32>
    %30 = tpu.matmul %27, %29, %cst_29 {dimension_numbers = #tpu.dot_dimension_numbers<[1], [0], [0], [1], [0, 0, 1, 1], [], []>} : vector<256x8xbf16>, vector<8x8xbf16>, vector<256x8xf32> -> vector<256x8xf32>
    %c0_30 = arith.constant 0 : index
    %c0_31 = arith.constant 0 : index
    %31 = vector.load %arg13[%c0_30, %c0_31] : memref<256x8xf32, #tpu.memory_space<vmem>>, vector<256x8xf32>
    %c1_32 = arith.constant 1 : index
    %c0_33 = arith.constant 0 : index
    %c0_34 = arith.constant 0 : index
    %32 = vector.load %arg2[%c1_32, %c0_33, %c0_34] : memref<9x256x1xf32, #tpu.memory_space<vmem>>, vector<1x256x1xf32>
    %33 = vector.shape_cast %32 : vector<1x256x1xf32> to vector<256x1xf32>
    %34 = vector.broadcast %33 : vector<256x1xf32> to vector<256x8xf32>
    %35 = arith.mulf %30, %34 : vector<256x8xf32>
    %36 = arith.addf %31, %35 : vector<256x8xf32>
    %c0_35 = arith.constant 0 : index
    %c0_36 = arith.constant 0 : index
    %37 = vector.load %arg13[%c0_35, %c0_36] : memref<256x8xf32, #tpu.memory_space<vmem>>, vector<256x8xf32>
    tpu.vector_store %arg13[%c0_35, %c0_36], %36 {strides = array<i32>} : memref<256x8xf32, #tpu.memory_space<vmem>>, vector<256x8xf32>,
    %c10 = arith.constant 10 : index
    %c0_37 = arith.constant 0 : index
    %38 = vector.load %arg12[%c10, %c0_37] : memref<336x8xf32, #tpu.memory_space<vmem>>, vector<256x8xf32>
    %39 = arith.truncf %38 : vector<256x8xf32> to vector<256x8xbf16>
    %c2 = arith.constant 2 : index
    %c0_38 = arith.constant 0 : index
    %c0_39 = arith.constant 0 : index
    %40 = vector.load %arg4[%c2, %c0_38, %c0_39] : memref<9x8x8xbf16, #tpu.memory_space<vmem>>, vector<1x8x8xbf16>
    %41 = vector.shape_cast %40 : vector<1x8x8xbf16> to vector<8x8xbf16>
    %cst_40 = arith.constant dense<0.000000e+00> : vector<256x8xf32>
    %42 = tpu.matmul %39, %41, %cst_40 {dimension_numbers = #tpu.dot_dimension_numbers<[1], [0], [0], [1], [0, 0, 1, 1], [], []>} : vector<256x8xbf16>, vector<8x8xbf16>, vector<256x8xf32> -> vector<256x8xf32>
    %c0_41 = arith.constant 0 : index
    %c0_42 = arith.constant 0 : index
    %43 = vector.load %arg13[%c0_41, %c0_42] : memref<256x8xf32, #tpu.memory_space<vmem>>, vector<256x8xf32>
    %c2_43 = arith.constant 2 : index
    %c0_44 = arith.constant 0 : index
    %c0_45 = arith.constant 0 : index
    %44 = vector.load %arg2[%c2_43, %c0_44, %c0_45] : memref<9x256x1xf32, #tpu.memory_space<vmem>>, vector<1x256x1xf32>
    %45 = vector.shape_cast %44 : vector<1x256x1xf32> to vector<256x1xf32>
    %46 = vector.broadcast %45 : vector<256x1xf32> to vector<256x8xf32>
    %47 = arith.mulf %42, %46 : vector<256x8xf32>
    %48 = arith.addf %43, %47 : vector<256x8xf32>
    %c0_46 = arith.constant 0 : index
    %c0_47 = arith.constant 0 : index
    %49 = vector.load %arg13[%c0_46, %c0_47] : memref<256x8xf32, #tpu.memory_space<vmem>>, vector<256x8xf32>
    tpu.vector_store %arg13[%c0_46, %c0_47], %48 {strides = array<i32>} : memref<256x8xf32, #tpu.memory_space<vmem>>, vector<256x8xf32>,
    %c38 = arith.constant 38 : index
    %c0_48 = arith.constant 0 : index
    %50 = vector.load %arg12[%c38, %c0_48] : memref<336x8xf32, #tpu.memory_space<vmem>>, vector<256x8xf32>
    %51 = arith.truncf %50 : vector<256x8xf32> to vector<256x8xbf16>
    %c3 = arith.constant 3 : index
    %c0_49 = arith.constant 0 : index
    %c0_50 = arith.constant 0 : index
    %52 = vector.load %arg4[%c3, %c0_49, %c0_50] : memref<9x8x8xbf16, #tpu.memory_space<vmem>>, vector<1x8x8xbf16>
    %53 = vector.shape_cast %52 : vector<1x8x8xbf16> to vector<8x8xbf16>
    %cst_51 = arith.constant dense<0.000000e+00> : vector<256x8xf32>
    %54 = tpu.matmul %51, %53, %cst_51 {dimension_numbers = #tpu.dot_dimension_numbers<[1], [0], [0], [1], [0, 0, 1, 1], [], []>} : vector<256x8xbf16>, vector<8x8xbf16>, vector<256x8xf32> -> vector<256x8xf32>
    %c0_52 = arith.constant 0 : index
    %c0_53 = arith.constant 0 : index
    %55 = vector.load %arg13[%c0_52, %c0_53] : memref<256x8xf32, #tpu.memory_space<vmem>>, vector<256x8xf32>
    %c3_54 = arith.constant 3 : index
    %c0_55 = arith.constant 0 : index
    %c0_56 = arith.constant 0 : index
    %56 = vector.load %arg2[%c3_54, %c0_55, %c0_56] : memref<9x256x1xf32, #tpu.memory_space<vmem>>, vector<1x256x1xf32>
    %57 = vector.shape_cast %56 : vector<1x256x1xf32> to vector<256x1xf32>
    %58 = vector.broadcast %57 : vector<256x1xf32> to vector<256x8xf32>
    %59 = arith.mulf %54, %58 : vector<256x8xf32>
    %60 = arith.addf %55, %59 : vector<256x8xf32>
    %c0_57 = arith.constant 0 : index
    %c0_58 = arith.constant 0 : index
    %61 = vector.load %arg13[%c0_57, %c0_58] : memref<256x8xf32, #tpu.memory_space<vmem>>, vector<256x8xf32>
    tpu.vector_store %arg13[%c0_57, %c0_58], %60 {strides = array<i32>} : memref<256x8xf32, #tpu.memory_space<vmem>>, vector<256x8xf32>,
    %c40_59 = arith.constant 40 : index
    %c0_60 = arith.constant 0 : index
    %62 = vector.load %arg12[%c40_59, %c0_60] : memref<336x8xf32, #tpu.memory_space<vmem>>, vector<256x8xf32>
    %63 = arith.truncf %62 : vector<256x8xf32> to vector<256x8xbf16>
    %c4 = arith.constant 4 : index
    %c0_61 = arith.constant 0 : index
    %c0_62 = arith.constant 0 : index
    %64 = vector.load %arg4[%c4, %c0_61, %c0_62] : memref<9x8x8xbf16, #tpu.memory_space<vmem>>, vector<1x8x8xbf16>
    %65 = vector.shape_cast %64 : vector<1x8x8xbf16> to vector<8x8xbf16>
    %cst_63 = arith.constant dense<0.000000e+00> : vector<256x8xf32>
    %66 = tpu.matmul %63, %65, %cst_63 {dimension_numbers = #tpu.dot_dimension_numbers<[1], [0], [0], [1], [0, 0, 1, 1], [], []>} : vector<256x8xbf16>, vector<8x8xbf16>, vector<256x8xf32> -> vector<256x8xf32>
    %c0_64 = arith.constant 0 : index
    %c0_65 = arith.constant 0 : index
    %67 = vector.load %arg13[%c0_64, %c0_65] : memref<256x8xf32, #tpu.memory_space<vmem>>, vector<256x8xf32>
    %c4_66 = arith.constant 4 : index
    %c0_67 = arith.constant 0 : index
    %c0_68 = arith.constant 0 : index
    %68 = vector.load %arg2[%c4_66, %c0_67, %c0_68] : memref<9x256x1xf32, #tpu.memory_space<vmem>>, vector<1x256x1xf32>
    %69 = vector.shape_cast %68 : vector<1x256x1xf32> to vector<256x1xf32>
    %70 = vector.broadcast %69 : vector<256x1xf32> to vector<256x8xf32>
    %71 = arith.mulf %66, %70 : vector<256x8xf32>
    %72 = arith.addf %67, %71 : vector<256x8xf32>
    %c0_69 = arith.constant 0 : index
    %c0_70 = arith.constant 0 : index
    %73 = vector.load %arg13[%c0_69, %c0_70] : memref<256x8xf32, #tpu.memory_space<vmem>>, vector<256x8xf32>
    tpu.vector_store %arg13[%c0_69, %c0_70], %72 {strides = array<i32>} : memref<256x8xf32, #tpu.memory_space<vmem>>, vector<256x8xf32>,
    %c42 = arith.constant 42 : index
    %c0_71 = arith.constant 0 : index
    %74 = vector.load %arg12[%c42, %c0_71] : memref<336x8xf32, #tpu.memory_space<vmem>>, vector<256x8xf32>
    %75 = arith.truncf %74 : vector<256x8xf32> to vector<256x8xbf16>
    %c5 = arith.constant 5 : index
    %c0_72 = arith.constant 0 : index
    %c0_73 = arith.constant 0 : index
    %76 = vector.load %arg4[%c5, %c0_72, %c0_73] : memref<9x8x8xbf16, #tpu.memory_space<vmem>>, vector<1x8x8xbf16>
    %77 = vector.shape_cast %76 : vector<1x8x8xbf16> to vector<8x8xbf16>
    %cst_74 = arith.constant dense<0.000000e+00> : vector<256x8xf32>
    %78 = tpu.matmul %75, %77, %cst_74 {dimension_numbers = #tpu.dot_dimension_numbers<[1], [0], [0], [1], [0, 0, 1, 1], [], []>} : vector<256x8xbf16>, vector<8x8xbf16>, vector<256x8xf32> -> vector<256x8xf32>
    %c0_75 = arith.constant 0 : index
    %c0_76 = arith.constant 0 : index
    %79 = vector.load %arg13[%c0_75, %c0_76] : memref<256x8xf32, #tpu.memory_space<vmem>>, vector<256x8xf32>
    %c5_77 = arith.constant 5 : index
    %c0_78 = arith.constant 0 : index
    %c0_79 = arith.constant 0 : index
    %80 = vector.load %arg2[%c5_77, %c0_78, %c0_79] : memref<9x256x1xf32, #tpu.memory_space<vmem>>, vector<1x256x1xf32>
    %81 = vector.shape_cast %80 : vector<1x256x1xf32> to vector<256x1xf32>
    %82 = vector.broadcast %81 : vector<256x1xf32> to vector<256x8xf32>
    %83 = arith.mulf %78, %82 : vector<256x8xf32>
    %84 = arith.addf %79, %83 : vector<256x8xf32>
    %c0_80 = arith.constant 0 : index
    %c0_81 = arith.constant 0 : index
    %85 = vector.load %arg13[%c0_80, %c0_81] : memref<256x8xf32, #tpu.memory_space<vmem>>, vector<256x8xf32>
    tpu.vector_store %arg13[%c0_80, %c0_81], %84 {strides = array<i32>} : memref<256x8xf32, #tpu.memory_space<vmem>>, vector<256x8xf32>,
    %c70 = arith.constant 70 : index
    %c0_82 = arith.constant 0 : index
    %86 = vector.load %arg12[%c70, %c0_82] : memref<336x8xf32, #tpu.memory_space<vmem>>, vector<256x8xf32>
    %87 = arith.truncf %86 : vector<256x8xf32> to vector<256x8xbf16>
    %c6_83 = arith.constant 6 : index
    %c0_84 = arith.constant 0 : index
    %c0_85 = arith.constant 0 : index
    %88 = vector.load %arg4[%c6_83, %c0_84, %c0_85] : memref<9x8x8xbf16, #tpu.memory_space<vmem>>, vector<1x8x8xbf16>
    %89 = vector.shape_cast %88 : vector<1x8x8xbf16> to vector<8x8xbf16>
    %cst_86 = arith.constant dense<0.000000e+00> : vector<256x8xf32>
    %90 = tpu.matmul %87, %89, %cst_86 {dimension_numbers = #tpu.dot_dimension_numbers<[1], [0], [0], [1], [0, 0, 1, 1], [], []>} : vector<256x8xbf16>, vector<8x8xbf16>, vector<256x8xf32> -> vector<256x8xf32>
    %c0_87 = arith.constant 0 : index
    %c0_88 = arith.constant 0 : index
    %91 = vector.load %arg13[%c0_87, %c0_88] : memref<256x8xf32, #tpu.memory_space<vmem>>, vector<256x8xf32>
    %c6_89 = arith.constant 6 : index
    %c0_90 = arith.constant 0 : index
    %c0_91 = arith.constant 0 : index
    %92 = vector.load %arg2[%c6_89, %c0_90, %c0_91] : memref<9x256x1xf32, #tpu.memory_space<vmem>>, vector<1x256x1xf32>
    %93 = vector.shape_cast %92 : vector<1x256x1xf32> to vector<256x1xf32>
    %94 = vector.broadcast %93 : vector<256x1xf32> to vector<256x8xf32>
    %95 = arith.mulf %90, %94 : vector<256x8xf32>
    %96 = arith.addf %91, %95 : vector<256x8xf32>
    %c0_92 = arith.constant 0 : index
    %c0_93 = arith.constant 0 : index
    %97 = vector.load %arg13[%c0_92, %c0_93] : memref<256x8xf32, #tpu.memory_space<vmem>>, vector<256x8xf32>
    tpu.vector_store %arg13[%c0_92, %c0_93], %96 {strides = array<i32>} : memref<256x8xf32, #tpu.memory_space<vmem>>, vector<256x8xf32>,
    %c72 = arith.constant 72 : index
    %c0_94 = arith.constant 0 : index
    %98 = vector.load %arg12[%c72, %c0_94] : memref<336x8xf32, #tpu.memory_space<vmem>>, vector<256x8xf32>
    %99 = arith.truncf %98 : vector<256x8xf32> to vector<256x8xbf16>
    %c7 = arith.constant 7 : index
    %c0_95 = arith.constant 0 : index
    %c0_96 = arith.constant 0 : index
    %100 = vector.load %arg4[%c7, %c0_95, %c0_96] : memref<9x8x8xbf16, #tpu.memory_space<vmem>>, vector<1x8x8xbf16>
    %101 = vector.shape_cast %100 : vector<1x8x8xbf16> to vector<8x8xbf16>
    %cst_97 = arith.constant dense<0.000000e+00> : vector<256x8xf32>
    %102 = tpu.matmul %99, %101, %cst_97 {dimension_numbers = #tpu.dot_dimension_numbers<[1], [0], [0], [1], [0, 0, 1, 1], [], []>} : vector<256x8xbf16>, vector<8x8xbf16>, vector<256x8xf32> -> vector<256x8xf32>
    %c0_98 = arith.constant 0 : index
    %c0_99 = arith.constant 0 : index
    %103 = vector.load %arg13[%c0_98, %c0_99] : memref<256x8xf32, #tpu.memory_space<vmem>>, vector<256x8xf32>
    %c7_100 = arith.constant 7 : index
    %c0_101 = arith.constant 0 : index
    %c0_102 = arith.constant 0 : index
    %104 = vector.load %arg2[%c7_100, %c0_101, %c0_102] : memref<9x256x1xf32, #tpu.memory_space<vmem>>, vector<1x256x1xf32>
    %105 = vector.shape_cast %104 : vector<1x256x1xf32> to vector<256x1xf32>
    %106 = vector.broadcast %105 : vector<256x1xf32> to vector<256x8xf32>
    %107 = arith.mulf %102, %106 : vector<256x8xf32>
    %108 = arith.addf %103, %107 : vector<256x8xf32>
    %c0_103 = arith.constant 0 : index
    %c0_104 = arith.constant 0 : index
    %109 = vector.load %arg13[%c0_103, %c0_104] : memref<256x8xf32, #tpu.memory_space<vmem>>, vector<256x8xf32>
    tpu.vector_store %arg13[%c0_103, %c0_104], %108 {strides = array<i32>} : memref<256x8xf32, #tpu.memory_space<vmem>>, vector<256x8xf32>,
    %c74 = arith.constant 74 : index
    %c0_105 = arith.constant 0 : index
    %110 = vector.load %arg12[%c74, %c0_105] : memref<336x8xf32, #tpu.memory_space<vmem>>, vector<256x8xf32>
    %111 = arith.truncf %110 : vector<256x8xf32> to vector<256x8xbf16>
    %c8_106 = arith.constant 8 : index
    %c0_107 = arith.constant 0 : index
    %c0_108 = arith.constant 0 : index
    %112 = vector.load %arg4[%c8_106, %c0_107, %c0_108] : memref<9x8x8xbf16, #tpu.memory_space<vmem>>, vector<1x8x8xbf16>
    %113 = vector.shape_cast %112 : vector<1x8x8xbf16> to vector<8x8xbf16>
    %cst_109 = arith.constant dense<0.000000e+00> : vector<256x8xf32>
    %114 = tpu.matmul %111, %113, %cst_109 {dimension_numbers = #tpu.dot_dimension_numbers<[1], [0], [0], [1], [0, 0, 1, 1], [], []>} : vector<256x8xbf16>, vector<8x8xbf16>, vector<256x8xf32> -> vector<256x8xf32>
    %c0_110 = arith.constant 0 : index
    %c0_111 = arith.constant 0 : index
    %115 = vector.load %arg13[%c0_110, %c0_111] : memref<256x8xf32, #tpu.memory_space<vmem>>, vector<256x8xf32>
    %c8_112 = arith.constant 8 : index
    %c0_113 = arith.constant 0 : index
    %c0_114 = arith.constant 0 : index
    %116 = vector.load %arg2[%c8_112, %c0_113, %c0_114] : memref<9x256x1xf32, #tpu.memory_space<vmem>>, vector<1x256x1xf32>
    %117 = vector.shape_cast %116 : vector<1x256x1xf32> to vector<256x1xf32>
    %118 = vector.broadcast %117 : vector<256x1xf32> to vector<256x8xf32>
    %119 = arith.mulf %114, %118 : vector<256x8xf32>
    %120 = arith.addf %115, %119 : vector<256x8xf32>
    %c0_115 = arith.constant 0 : index
    %c0_116 = arith.constant 0 : index
    %121 = vector.load %arg13[%c0_115, %c0_116] : memref<256x8xf32, #tpu.memory_space<vmem>>, vector<256x8xf32>
    tpu.vector_store %arg13[%c0_115, %c0_116], %120 {strides = array<i32>} : memref<256x8xf32, #tpu.memory_space<vmem>>, vector<256x8xf32>,
    %c0_117 = arith.constant 0 : index
    %c0_118 = arith.constant 0 : index
    %122 = vector.load %arg13[%c0_117, %c0_118] : memref<256x8xf32, #tpu.memory_space<vmem>>, vector<256x8xf32>
    %c0_119 = arith.constant 0 : index
    %c0_120 = arith.constant 0 : index
    %123 = vector.load %arg8[%c0_119, %c0_120] : memref<1x8xf32, #tpu.memory_space<vmem>>, vector<1x8xf32>
    %124 = vector.broadcast %123 : vector<1x8xf32> to vector<256x8xf32>
    %125 = arith.addf %122, %124 : vector<256x8xf32>
    %cst_121 = arith.constant 0.000000e+00 : f32
    %126 = vector.broadcast %cst_121 : f32 to vector<256x8xf32>
    %127 = arith.maximumf %125, %126 : vector<256x8xf32>
    %128 = arith.truncf %127 : vector<256x8xf32> to vector<256x8xbf16>
    %c0_122 = arith.constant 0 : index
    %c0_123 = arith.constant 0 : index
    %129 = vector.load %arg5[%c0_122, %c0_123] : memref<8x8xbf16, #tpu.memory_space<vmem>>, vector<8x8xbf16>
    %cst_124 = arith.constant dense<0.000000e+00> : vector<256x8xf32>
    %130 = tpu.matmul %128, %129, %cst_124 {dimension_numbers = #tpu.dot_dimension_numbers<[1], [0], [0], [1], [0, 0, 1, 1], [], []>} : vector<256x8xbf16>, vector<8x8xbf16>, vector<256x8xf32> -> vector<256x8xf32>
    %c0_125 = arith.constant 0 : index
    %c0_126 = arith.constant 0 : index
    %131 = vector.load %arg9[%c0_125, %c0_126] : memref<1x8xf32, #tpu.memory_space<vmem>>, vector<1x8xf32>
    %132 = vector.broadcast %131 : vector<1x8xf32> to vector<256x8xf32>
    %133 = arith.addf %130, %132 : vector<256x8xf32>
    %c0_127 = arith.constant 0 : index
    %c0_128 = arith.constant 0 : index
    %134 = vector.load %arg6[%c0_127, %c0_128] : memref<4x8xbf16, #tpu.memory_space<vmem>>, vector<4x8xbf16>
    %cst_129 = arith.constant dense<0.000000e+00> : vector<256x8xf32>
    %135 = tpu.matmul %1, %134, %cst_129 {dimension_numbers = #tpu.dot_dimension_numbers<[1], [0], [0], [1], [0, 0, 1, 1], [], []>} : vector<256x4xbf16>, vector<4x8xbf16>, vector<256x8xf32> -> vector<256x8xf32>
    %c0_130 = arith.constant 0 : index
    %c0_131 = arith.constant 0 : index
    %136 = vector.load %arg10[%c0_130, %c0_131] : memref<1x8xf32, #tpu.memory_space<vmem>>, vector<1x8xf32>
    %137 = vector.broadcast %136 : vector<1x8xf32> to vector<256x8xf32>
    %138 = arith.addf %135, %137 : vector<256x8xf32>
    %139 = arith.addf %133, %138 : vector<256x8xf32>
    %cst_132 = arith.constant 0.000000e+00 : f32
    %140 = vector.broadcast %cst_132 : f32 to vector<256x8xf32>
    %141 = arith.maximumf %139, %140 : vector<256x8xf32>
    %c0_133 = arith.constant 0 : index
    %c0_134 = arith.constant 0 : index
    %c0_135 = arith.constant 0 : index
    %142 = vector.load %arg11[%c0_133, %c0_134, %c0_135] : memref<1x256x8xf32, #tpu.memory_space<vmem>>, vector<1x256x8xf32>
    %143 = vector.shape_cast %142 : vector<1x256x8xf32> to vector<256x8xf32>
    %144 = vector.shape_cast %141 : vector<256x8xf32> to vector<1x256x8xf32>
    tpu.vector_store %arg11[%c0_133, %c0_134, %c0_135], %144 {strides = array<i32>} : memref<1x256x8xf32, #tpu.memory_space<vmem>>, vector<1x256x8xf32>,
    return
  }
  func.func @transform_0(%arg0: i32) -> (i32, i32, i32) {
    %c0_i32 = arith.constant 0 : i32
    %c0_i32_0 = arith.constant 0 : i32
    %c0_i32_1 = arith.constant 0 : i32
    return %arg0, %c0_i32, %c0_i32_0 : i32, i32, i32
  }
  func.func @transform_1(%arg0: i32) -> (i32, i32, i32) {
    %c0_i32 = arith.constant 0 : i32
    %c0_i32_0 = arith.constant 0 : i32
    %c0_i32_1 = arith.constant 0 : i32
    %c0_i32_2 = arith.constant 0 : i32
    return %c0_i32, %c0_i32_0, %c0_i32_1 : i32, i32, i32
  }
  func.func @transform_2(%arg0: i32) -> (i32, i32) {
    %c0_i32 = arith.constant 0 : i32
    %c0_i32_0 = arith.constant 0 : i32
    %c0_i32_1 = arith.constant 0 : i32
    return %c0_i32, %c0_i32_0 : i32, i32
  }
  func.func @transform_3(%arg0: i32) -> (i32, i32, i32) {
    %c0_i32 = arith.constant 0 : i32
    %c0_i32_0 = arith.constant 0 : i32
    %c0_i32_1 = arith.constant 0 : i32
    %c0_i32_2 = arith.constant 0 : i32
    return %c0_i32, %c0_i32_0, %c0_i32_1 : i32, i32, i32
  }
  func.func @transform_4(%arg0: i32) -> (i32, i32) {
    %c0_i32 = arith.constant 0 : i32
    %c0_i32_0 = arith.constant 0 : i32
    %c0_i32_1 = arith.constant 0 : i32
    return %c0_i32, %c0_i32_0 : i32, i32
  }
  func.func @transform_5(%arg0: i32) -> (i32, i32) {
    %c0_i32 = arith.constant 0 : i32
    %c0_i32_0 = arith.constant 0 : i32
    %c0_i32_1 = arith.constant 0 : i32
    return %c0_i32, %c0_i32_0 : i32, i32
  }
  func.func @transform_6(%arg0: i32) -> (i32, i32) {
    %c0_i32 = arith.constant 0 : i32
    %c0_i32_0 = arith.constant 0 : i32
    %c0_i32_1 = arith.constant 0 : i32
    return %c0_i32, %c0_i32_0 : i32, i32
  }
  func.func @transform_7(%arg0: i32) -> (i32, i32) {
    %c0_i32 = arith.constant 0 : i32
    %c0_i32_0 = arith.constant 0 : i32
    %c0_i32_1 = arith.constant 0 : i32
    return %c0_i32, %c0_i32_0 : i32, i32
  }
  func.func @transform_8(%arg0: i32) -> (i32, i32) {
    %c0_i32 = arith.constant 0 : i32
    %c0_i32_0 = arith.constant 0 : i32
    %c0_i32_1 = arith.constant 0 : i32
    return %c0_i32, %c0_i32_0 : i32, i32
  }
  func.func @transform_9(%arg0: i32) -> (i32, i32) {
    %c0_i32 = arith.constant 0 : i32
    %c0_i32_0 = arith.constant 0 : i32
    %c0_i32_1 = arith.constant 0 : i32
    return %c0_i32, %c0_i32_0 : i32, i32
  }
  func.func @transform_10(%arg0: i32) -> (i32, i32, i32) {
    %c0_i32 = arith.constant 0 : i32
    %c0_i32_0 = arith.constant 0 : i32
    %c0_i32_1 = arith.constant 0 : i32
    return %arg0, %c0_i32, %c0_i32_0 : i32, i32, i32
  }
}

</mosaic_0001>

<llo_original>
// kernel: tpu_custom_call.1
$region0: #{tpu_custom_call.1}
  #allocation0 [shape = 'u32[]', space=smem, size = 0x4, offset = 0x4, fixed_abs, tag = 'smem constant byte address 0x4 - core index']
  #allocation1 [shape = 'u32[144,128]{1,0:T(1,128)}', space=vmem, size = 0x12000, scoped, tag = 'internal scratch']
  #allocation2 [shape = 'f32[336,8]{1,0:T(8,128)}', space=vmem, size = 0x2a000, scoped, tag = 'scratch operand']
  #allocation3 [shape = 'f32[256,8]{1,0:T(8,128)}', space=vmem, size = 0x20000, scoped, tag = 'scratch operand']
  %s0 = inlined_call_operand.vmem [shape: bf16[2,256,4], index: 0, kind: input, shape index: {}]
  %s1 = inlined_call_operand.vmem [shape: f32[9,256,1], index: 1, kind: input, shape index: {}]
  %s2 = inlined_call_operand.vmem [shape: bf16[4,8], index: 2, kind: input, shape index: {}]
  %s3 = inlined_call_operand.vmem [shape: bf16[9,8,8], index: 3, kind: input, shape index: {}]
  %s4 = inlined_call_operand.vmem [shape: bf16[8,8], index: 4, kind: input, shape index: {}]
  %s5 = inlined_call_operand.vmem [shape: bf16[4,8], index: 5, kind: input, shape index: {}]
  %s6 = inlined_call_operand.vmem [shape: f32[1,8], index: 6, kind: input, shape index: {}]
  %s7 = inlined_call_operand.vmem [shape: f32[1,8], index: 7, kind: input, shape index: {}]
  %s8 = inlined_call_operand.vmem [shape: f32[1,8], index: 8, kind: input, shape index: {}]
  %s9 = inlined_call_operand.vmem [shape: f32[1,8], index: 9, kind: input, shape index: {}]
  %s10 = inlined_call_operand.vmem [shape: f32[2,256,8], index: 10, kind: output, shape index: {}]
  %s11 = sld [smem:[#allocation0]]
  $region73: #{tpu_custom_call.1} parent=0
    _
  %s13 = ssub.s32 1, %s11
  %s14 = scalar_select 0, %s13, %s11
  loop: start=0, step=1, limit=4
  $region2: #{tpu_custom_call.1} parent=0 // loop_pre_header
    _
  $region3: #{tpu_custom_call.1} parent=0 // loop_header
    %s16 = sphi 0, %s20
    %p17 = scmp.ge.s32.totalorder %s16, 4
    %s26 = sphi 0, %s28
    %s29 = sphi 0, %s26
    %s30 = sphi 0, %s29
    %s46 = sphi 0, %s30
    %s50 = sphi 0, %s50
    %s52 = sphi 0, %s50
    %s53 = sphi 0, %s52
    %s67 = sphi 0, %s53
    %s71 = sphi 0, %s71
    %s73 = sphi 0, %s71
    %s74 = sphi 0, %s73
    %s88 = sphi 0, %s74
    %s92 = sphi 0, %s92
    %s94 = sphi 0, %s92
    %s95 = sphi 0, %s94
    %s109 = sphi 0, %s95
    %s113 = sphi 0, %s113
    %s115 = sphi 0, %s113
    %s116 = sphi 0, %s115
    %s130 = sphi 0, %s116
    %s134 = sphi 0, %s134
    %s136 = sphi 0, %s134
    %s137 = sphi 0, %s136
    %s151 = sphi 0, %s137
    %s155 = sphi 0, %s155
    %s157 = sphi 0, %s155
    %s158 = sphi 0, %s157
    %s172 = sphi 0, %s158
    %s176 = sphi 0, %s176
    %s178 = sphi 0, %s176
    %s179 = sphi 0, %s178
    %s193 = sphi 0, %s179
    %s197 = sphi 0, %s197
    %s199 = sphi 0, %s197
    %s200 = sphi 0, %s199
    %s214 = sphi 0, %s200
    %s218 = sphi 0, %s218
    %s220 = sphi 0, %s218
    %s221 = sphi 0, %s220
    %s235 = sphi 0, %s221
    %s241 = sphi 0, %s243
    %s244 = sphi 0, %s241
    %s245 = sphi 0, %s244
    %s261 = sphi 0, %s245
  $region4: #{tpu_custom_call.1} parent=0 // loop_header_branch
    %19 = sbr.rel (%p17) target = $region8
  $region5: #{tpu_custom_call.1} parent=0 // loop_body
    %s21 = ssub.s32 %s16, 1
    %s22 = ssub.s32 %s16, 2
    %s23 = sadd.s32 %s16, 1
    %s24 = ssub.s32 %s16, %s23
    %p25 = scmp.eq.s32.totalorder %s24, 0
    %s27 = sadd.s32 %s26, 1
    %s28 = scalar_select %p25, %s26, %s27
    %p31 = pneg %p25
    %p32 = scmp.eq.s32.totalorder %s16, 1
    %p33 = por %p31, %p32
    %p34 = scmp.ne.s32.totalorder %s26, %s29
    %p35 = scmp.eq.s32.totalorder %s16, 0
    %p36 = por %p34, %p35
    %p37 = scmp.ne.s32.totalorder %s26, %s29
    %p38 = scmp.eq.s32.totalorder %s21, 1
    %p39 = por %p37, %p38
    %p40 = scmp.ne.s32.totalorder %s29, %s30
    %p41 = scmp.eq.s32.totalorder %s21, 0
    %p42 = por %p40, %p41
    %p43 = scmp.ne.s32.totalorder %s29, %s30
    %p44 = scmp.eq.s32.totalorder %s22, 1
    %p45 = por %p43, %p44
    %p47 = scmp.ne.s32.totalorder %s30, %s46
    %p48 = scmp.eq.s32.totalorder %s22, 0
    %p49 = por %p47, %p48
    %s51 = sadd.s32 %s50, 1
    %p54 = scmp.eq.s32.totalorder %s16, 1
    %p55 = scmp.ne.s32.totalorder %s50, %s52
    %p56 = scmp.eq.s32.totalorder %s16, 0
    %p57 = por %p55, %p56
    %p58 = scmp.ne.s32.totalorder %s50, %s52
    %p59 = scmp.eq.s32.totalorder %s21, 1
    %p60 = por %p58, %p59
    %p61 = scmp.ne.s32.totalorder %s52, %s53
    %p62 = scmp.eq.s32.totalorder %s21, 0
    %p63 = por %p61, %p62
    %p64 = scmp.ne.s32.totalorder %s52, %s53
    %p65 = scmp.eq.s32.totalorder %s22, 1
    %p66 = por %p64, %p65
    %p68 = scmp.ne.s32.totalorder %s53, %s67
    %p69 = scmp.eq.s32.totalorder %s22, 0
    %p70 = por %p68, %p69
    %s72 = sadd.s32 %s71, 1
    %p75 = scmp.eq.s32.totalorder %s16, 1
    %p76 = scmp.ne.s32.totalorder %s71, %s73
    %p77 = scmp.eq.s32.totalorder %s16, 0
    %p78 = por %p76, %p77
    %p79 = scmp.ne.s32.totalorder %s71, %s73
    %p80 = scmp.eq.s32.totalorder %s21, 1
    %p81 = por %p79, %p80
    %p82 = scmp.ne.s32.totalorder %s73, %s74
    %p83 = scmp.eq.s32.totalorder %s21, 0
    %p84 = por %p82, %p83
    %p85 = scmp.ne.s32.totalorder %s73, %s74
    %p86 = scmp.eq.s32.totalorder %s22, 1
    %p87 = por %p85, %p86
    %p89 = scmp.ne.s32.totalorder %s74, %s88
    %p90 = scmp.eq.s32.totalorder %s22, 0
    %p91 = por %p89, %p90
    %s93 = sadd.s32 %s92, 1
    %p96 = scmp.eq.s32.totalorder %s16, 1
    %p97 = scmp.ne.s32.totalorder %s92, %s94
    %p98 = scmp.eq.s32.totalorder %s16, 0
    %p99 = por %p97, %p98
    %p100 = scmp.ne.s32.totalorder %s92, %s94
    %p101 = scmp.eq.s32.totalorder %s21, 1
    %p102 = por %p100, %p101
    %p103 = scmp.ne.s32.totalorder %s94, %s95
    %p104 = scmp.eq.s32.totalorder %s21, 0
    %p105 = por %p103, %p104
    %p106 = scmp.ne.s32.totalorder %s94, %s95
    %p107 = scmp.eq.s32.totalorder %s22, 1
    %p108 = por %p106, %p107
    %p110 = scmp.ne.s32.totalorder %s95, %s109
    %p111 = scmp.eq.s32.totalorder %s22, 0
    %p112 = por %p110, %p111
    %s114 = sadd.s32 %s113, 1
    %p117 = scmp.eq.s32.totalorder %s16, 1
    %p118 = scmp.ne.s32.totalorder %s113, %s115
    %p119 = scmp.eq.s32.totalorder %s16, 0
    %p120 = por %p118, %p119
    %p121 = scmp.ne.s32.totalorder %s113, %s115
    %p122 = scmp.eq.s32.totalorder %s21, 1
    %p123 = por %p121, %p122
    %p124 = scmp.ne.s32.totalorder %s115, %s116
    %p125 = scmp.eq.s32.totalorder %s21, 0
    %p126 = por %p124, %p125
    %p127 = scmp.ne.s32.totalorder %s115, %s116
    %p128 = scmp.eq.s32.totalorder %s22, 1
    %p129 = por %p127, %p128
    %p131 = scmp.ne.s32.totalorder %s116, %s130
    %p132 = scmp.eq.s32.totalorder %s22, 0
    %p133 = por %p131, %p132
    %s135 = sadd.s32 %s134, 1
    %p138 = scmp.eq.s32.totalorder %s16, 1
    %p139 = scmp.ne.s32.totalorder %s134, %s136
    %p140 = scmp.eq.s32.totalorder %s16, 0
    %p141 = por %p139, %p140
    %p142 = scmp.ne.s32.totalorder %s134, %s136
    %p143 = scmp.eq.s32.totalorder %s21, 1
    %p144 = por %p142, %p143
    %p145 = scmp.ne.s32.totalorder %s136, %s137
    %p146 = scmp.eq.s32.totalorder %s21, 0
    %p147 = por %p145, %p146
    %p148 = scmp.ne.s32.totalorder %s136, %s137
    %p149 = scmp.eq.s32.totalorder %s22, 1
    %p150 = por %p148, %p149
    %p152 = scmp.ne.s32.totalorder %s137, %s151
    %p153 = scmp.eq.s32.totalorder %s22, 0
    %p154 = por %p152, %p153
    %s156 = sadd.s32 %s155, 1
    %p159 = scmp.eq.s32.totalorder %s16, 1
    %p160 = scmp.ne.s32.totalorder %s155, %s157
    %p161 = scmp.eq.s32.totalorder %s16, 0
    %p162 = por %p160, %p161
    %p163 = scmp.ne.s32.totalorder %s155, %s157
    %p164 = scmp.eq.s32.totalorder %s21, 1
    %p165 = por %p163, %p164
    %p166 = scmp.ne.s32.totalorder %s157, %s158
    %p167 = scmp.eq.s32.totalorder %s21, 0
    %p168 = por %p166, %p167
    %p169 = scmp.ne.s32.totalorder %s157, %s158
    %p170 = scmp.eq.s32.totalorder %s22, 1
    %p171 = por %p169, %p170
    %p173 = scmp.ne.s32.totalorder %s158, %s172
    %p174 = scmp.eq.s32.totalorder %s22, 0
    %p175 = por %p173, %p174
    %s177 = sadd.s32 %s176, 1
    %p180 = scmp.eq.s32.totalorder %s16, 1
    %p181 = scmp.ne.s32.totalorder %s176, %s178
    %p182 = scmp.eq.s32.totalorder %s16, 0
    %p183 = por %p181, %p182
    %p184 = scmp.ne.s32.totalorder %s176, %s178
    %p185 = scmp.eq.s32.totalorder %s21, 1
    %p186 = por %p184, %p185
    %p187 = scmp.ne.s32.totalorder %s178, %s179
    %p188 = scmp.eq.s32.totalorder %s21, 0
    %p189 = por %p187, %p188
    %p190 = scmp.ne.s32.totalorder %s178, %s179
    %p191 = scmp.eq.s32.totalorder %s22, 1
    %p192 = por %p190, %p191
    %p194 = scmp.ne.s32.totalorder %s179, %s193
    %p195 = scmp.eq.s32.totalorder %s22, 0
    %p196 = por %p194, %p195
    %s198 = sadd.s32 %s197, 1
    %p201 = scmp.eq.s32.totalorder %s16, 1
    %p202 = scmp.ne.s32.totalorder %s197, %s199
    %p203 = scmp.eq.s32.totalorder %s16, 0
    %p204 = por %p202, %p203
    %p205 = scmp.ne.s32.totalorder %s197, %s199
    %p206 = scmp.eq.s32.totalorder %s21, 1
    %p207 = por %p205, %p206
    %p208 = scmp.ne.s32.totalorder %s199, %s200
    %p209 = scmp.eq.s32.totalorder %s21, 0
    %p210 = por %p208, %p209
    %p211 = scmp.ne.s32.totalorder %s199, %s200
    %p212 = scmp.eq.s32.totalorder %s22, 1
    %p213 = por %p211, %p212
    %p215 = scmp.ne.s32.totalorder %s200, %s214
    %p216 = scmp.eq.s32.totalorder %s22, 0
    %p217 = por %p215, %p216
    %s219 = sadd.s32 %s218, 1
    %p222 = scmp.eq.s32.totalorder %s16, 1
    %p223 = scmp.ne.s32.totalorder %s218, %s220
    %p224 = scmp.eq.s32.totalorder %s16, 0
    %p225 = por %p223, %p224
    %p226 = scmp.ne.s32.totalorder %s218, %s220
    %p227 = scmp.eq.s32.totalorder %s21, 1
    %p228 = por %p226, %p227
    %p229 = scmp.ne.s32.totalorder %s220, %s221
    %p230 = scmp.eq.s32.totalorder %s21, 0
    %p231 = por %p229, %p230
    %p232 = scmp.ne.s32.totalorder %s220, %s221
    %p233 = scmp.eq.s32.totalorder %s22, 1
    %p234 = por %p232, %p233
    %p236 = scmp.ne.s32.totalorder %s221, %s235
    %p237 = scmp.eq.s32.totalorder %s22, 0
    %p238 = por %p236, %p237
    %s239 = ssub.s32 %s16, %s23
    %p240 = scmp.eq.s32.totalorder %s239, 0
    %s242 = sadd.s32 %s241, 1
    %s243 = scalar_select %p240, %s241, %s242
    %p246 = pneg %p240
    %p247 = scmp.eq.s32.totalorder %s16, 1
    %p248 = por %p246, %p247
    %p249 = scmp.ne.s32.totalorder %s241, %s244
    %p250 = scmp.eq.s32.totalorder %s16, 0
    %p251 = por %p249, %p250
    %p252 = scmp.ne.s32.totalorder %s241, %s244
    %p253 = scmp.eq.s32.totalorder %s21, 1
    %p254 = por %p252, %p253
    %p255 = scmp.ne.s32.totalorder %s244, %s245
    %p256 = scmp.eq.s32.totalorder %s21, 0
    %p257 = por %p255, %p256
    %p258 = scmp.ne.s32.totalorder %s244, %s245
    %p259 = scmp.eq.s32.totalorder %s22, 1
    %p260 = por %p258, %p259
    %p262 = scmp.ne.s32.totalorder %s245, %s261
    %p263 = scmp.eq.s32.totalorder %s22, 0
    %p264 = por %p262, %p263
    %p265 = scmp.le.s32.totalorder 1, %s16
    %p266 = scmp.lt.s32.totalorder %s16, 3
    %p267 = pnand %p265, %p266
    %p268 = pneg %p267
    // Predicated region
    $region9: #{tpu_custom_call.1} parent=5 // pred_check
      _
    $region10: #{tpu_custom_call.1} parent=5 // pred_check_branch
      %270 = sbr.rel (%p267) target = $region12
    $region11: #{tpu_custom_call.1} parent=5 // pred_region
      %s271 = ssub.s32 %s16, 1
      // Predicated region
      $region13: #{tpu_custom_call.1} parent=11 // pred_check
        %p272 = pneg %p63
      $region14: #{tpu_custom_call.1} parent=11 // pred_check_branch
        %274 = sbr.rel (%p272) target = $region16
      $region15: #{tpu_custom_call.1} parent=11 // pred_region
        _
      $region16: #{tpu_custom_call.1} parent=11 // pred_fallthru
        _
      // Predicated region
      $region17: #{tpu_custom_call.1} parent=11 // pred_check
        %p275 = pneg %p84
      $region18: #{tpu_custom_call.1} parent=11 // pred_check_branch
        %277 = sbr.rel (%p275) target = $region20
      $region19: #{tpu_custom_call.1} parent=11 // pred_region
        _
      $region20: #{tpu_custom_call.1} parent=11 // pred_fallthru
        _
      // Predicated region
      $region21: #{tpu_custom_call.1} parent=11 // pred_check
        %p278 = pneg %p105
      $region22: #{tpu_custom_call.1} parent=11 // pred_check_branch
        %280 = sbr.rel (%p278) target = $region24
      $region23: #{tpu_custom_call.1} parent=11 // pred_region
        _
      $region24: #{tpu_custom_call.1} parent=11 // pred_fallthru
        _
      // Predicated region
      $region25: #{tpu_custom_call.1} parent=11 // pred_check
        %p281 = pneg %p126
      $region26: #{tpu_custom_call.1} parent=11 // pred_check_branch
        %283 = sbr.rel (%p281) target = $region28
      $region27: #{tpu_custom_call.1} parent=11 // pred_region
        _
      $region28: #{tpu_custom_call.1} parent=11 // pred_fallthru
        _
      // Predicated region
      $region29: #{tpu_custom_call.1} parent=11 // pred_check
        %p284 = pneg %p147
      $region30: #{tpu_custom_call.1} parent=11 // pred_check_branch
        %286 = sbr.rel (%p284) target = $region32
      $region31: #{tpu_custom_call.1} parent=11 // pred_region
        _
      $region32: #{tpu_custom_call.1} parent=11 // pred_fallthru
        _
      // Predicated region
      $region33: #{tpu_custom_call.1} parent=11 // pred_check
        %p287 = pneg %p168
      $region34: #{tpu_custom_call.1} parent=11 // pred_check_branch
        %289 = sbr.rel (%p287) target = $region36
      $region35: #{tpu_custom_call.1} parent=11 // pred_region
        _
      $region36: #{tpu_custom_call.1} parent=11 // pred_fallthru
        _
      // Predicated region
      $region37: #{tpu_custom_call.1} parent=11 // pred_check
        %p290 = pneg %p189
      $region38: #{tpu_custom_call.1} parent=11 // pred_check_branch
        %292 = sbr.rel (%p290) target = $region40
      $region39: #{tpu_custom_call.1} parent=11 // pred_region
        _
      $region40: #{tpu_custom_call.1} parent=11 // pred_fallthru
        _
      // Predicated region
      $region41: #{tpu_custom_call.1} parent=11 // pred_check
        %p293 = pneg %p210
      $region42: #{tpu_custom_call.1} parent=11 // pred_check_branch
        %295 = sbr.rel (%p293) target = $region44
      $region43: #{tpu_custom_call.1} parent=11 // pred_region
        _
      $region44: #{tpu_custom_call.1} parent=11 // pred_fallthru
        _
      // Predicated region
      $region45: #{tpu_custom_call.1} parent=11 // pred_check
        %p296 = pneg %p231
      $region46: #{tpu_custom_call.1} parent=11 // pred_check_branch
        %298 = sbr.rel (%p296) target = $region48
      $region47: #{tpu_custom_call.1} parent=11 // pred_region
        _
      $region48: #{tpu_custom_call.1} parent=11 // pred_fallthru
        _
    $region12: #{tpu_custom_call.1} parent=5 // pred_fallthru
      _
    %p299 = scmp.lt.s32.totalorder %s16, 2
    // Predicated region
    $region49: #{tpu_custom_call.1} parent=5 // pred_check
      %p300 = pneg %p299
    $region50: #{tpu_custom_call.1} parent=5 // pred_check_branch
      %302 = sbr.rel (%p300) target = $region52
    $region51: #{tpu_custom_call.1} parent=5 // pred_region
      // Predicated region
      $region53: #{tpu_custom_call.1} parent=51 // pred_check
        %p303 = pneg %p36
      $region54: #{tpu_custom_call.1} parent=51 // pred_check_branch
        %305 = sbr.rel (%p303) target = $region56
      $region55: #{tpu_custom_call.1} parent=51 // pred_region
        %p306 = scmp.lt.s32.totalorder %s16, 1
        %s307 = scalar_select %p306, %s16, 1
        %s308 = smul.addr %s307, 32
        %s309 = smul.addr %s308, 4
        %s310 = scalar_lea.vmem %s0, %s309
      $region56: #{tpu_custom_call.1} parent=51 // pred_fallthru
        _
    $region52: #{tpu_custom_call.1} parent=5 // pred_fallthru
      _
    %p311 = scmp.le.s32.totalorder 1, %s16
    %p312 = scmp.lt.s32.totalorder %s16, 3
    %p313 = pnand %p311, %p312
    %p314 = pneg %p313
    // Predicated region
    $region57: #{tpu_custom_call.1} parent=5 // pred_check
      _
    $region58: #{tpu_custom_call.1} parent=5 // pred_check_branch
      %316 = sbr.rel (%p313) target = $region60
    $region59: #{tpu_custom_call.1} parent=5 // pred_region
      %s317 = ssub.s32 %s16, 1
      %p318 = scmp.lt.s32.totalorder %s21, 1
      %s319 = scalar_select %p318, %s21, 1
      %s320 = smul.addr %s319, 32
      %s321 = smul.addr %s320, 4
      %s322 = scalar_lea.vmem %s0, %s321
      %p323 = pneg %p42
      %p324 = pneg %p39
      %p325 = pneg %p63
      %p326 = pneg %p60
      %p327 = pneg %p84
      %p328 = pneg %p81
      %p329 = pneg %p105
      %p330 = pneg %p102
      %p331 = pneg %p126
      %p332 = pneg %p123
      %p333 = pneg %p147
      %p334 = pneg %p144
      %p335 = pneg %p168
      %p336 = pneg %p165
      %p337 = pneg %p189
      %p338 = pneg %p186
      %p339 = pneg %p210
      %p340 = pneg %p207
      %p341 = pneg %p231
      %p342 = pneg %p228
      %p343 = pneg %p257
      %p344 = pneg %p254
      %p345 = scmp.lt.s32.totalorder %s21, 1
      %s346 = scalar_select %p345, %s21, 1
      %s347 = smul.addr %s346, 32
      %s348 = smul.addr %s347, 8
      %s349 = scalar_lea.vmem %s10, %s348
      %p350 = scmp.lt.s32.totalorder %s21, 1
      %s351 = scalar_select %p350, %s21, 1
      %s352 = smul.addr %s351, 32
      %s353 = smul.addr %s352, 4
      %s354 = scalar_lea.vmem %s0, %s353
      %p355 = scmp.lt.s32.totalorder %s21, 1
      %s356 = scalar_select %p355, %s21, 1
      %s357 = smul.addr %s356, 32
      %s358 = smul.addr %s357, 8
      %s359 = scalar_lea.vmem %s10, %s358
      %v361 = vld [vmem:[%s354] sm:$0xf]
      %v362 = vld [vmem:[%s354 + $0x4] sm:$0xf]
      %v363 = vld [vmem:[%s354 + $0x8] sm:$0xf]
      %v364 = vld [vmem:[%s354 + $0xc] sm:$0xf]
      %v365 = vld [vmem:[%s354 + $0x10] sm:$0xf]
      %v366 = vld [vmem:[%s354 + $0x14] sm:$0xf]
      %v367 = vld [vmem:[%s354 + $0x18] sm:$0xf]
      %v368 = vld [vmem:[%s354 + $0x1c] sm:$0xf]
      %v369 = vld [vmem:[%s354 + $0x20] sm:$0xf]
      %v370 = vld [vmem:[%s354 + $0x24] sm:$0xf]
      %v371 = vld [vmem:[%s354 + $0x28] sm:$0xf]
      %v372 = vld [vmem:[%s354 + $0x2c] sm:$0xf]
      %v373 = vld [vmem:[%s354 + $0x30] sm:$0xf]
      %v374 = vld [vmem:[%s354 + $0x34] sm:$0xf]
      %v375 = vld [vmem:[%s354 + $0x38] sm:$0xf]
      %v376 = vld [vmem:[%s354 + $0x3c] sm:$0xf]
      %v377 = vld [vmem:[%s354 + $0x40] sm:$0xf]
      %v378 = vld [vmem:[%s354 + $0x44] sm:$0xf]
      %v379 = vld [vmem:[%s354 + $0x48] sm:$0xf]
      %v380 = vld [vmem:[%s354 + $0x4c] sm:$0xf]
      %v381 = vld [vmem:[%s354 + $0x50] sm:$0xf]
      %v382 = vld [vmem:[%s354 + $0x54] sm:$0xf]
      %v383 = vld [vmem:[%s354 + $0x58] sm:$0xf]
      %v384 = vld [vmem:[%s354 + $0x5c] sm:$0xf]
      %v385 = vld [vmem:[%s354 + $0x60] sm:$0xf]
      %v386 = vld [vmem:[%s354 + $0x64] sm:$0xf]
      %v387 = vld [vmem:[%s354 + $0x68] sm:$0xf]
      %v388 = vld [vmem:[%s354 + $0x6c] sm:$0xf]
      %v389 = vld [vmem:[%s354 + $0x70] sm:$0xf]
      %v390 = vld [vmem:[%s354 + $0x74] sm:$0xf]
      %v391 = vld [vmem:[%s354 + $0x78] sm:$0xf]
      %v392 = vld [vmem:[%s354 + $0x7c] sm:$0xf]
      %v393 = vld [vmem:[%s2] sm:$0x3]
      %v394 = vld [vmem:[%s6] sm:$0x1]
      %v396 = vlaneseq
      %v397 = vshrl.u32 %v396, 7
      %v398 = vsub.s32 0, %v397
      %v399 = vrot.slane %v394, %v398
      %v433 = vunpack.c.l.b16 %v361
      %v434 = vunpack.c.l.b16 %v362
      %v435 = vunpack.c.l.b16 %v363
      %v436 = vunpack.c.l.b16 %v364
      %v437 = vunpack.c.l.b16 %v365
      %v438 = vunpack.c.l.b16 %v366
      %v439 = vunpack.c.l.b16 %v367
      %v440 = vunpack.c.l.b16 %v368
      %v441 = vunpack.c.l.b16 %v369
      %v442 = vunpack.c.l.b16 %v370
      %v443 = vunpack.c.l.b16 %v371
      %v444 = vunpack.c.l.b16 %v372
      %v445 = vunpack.c.l.b16 %v373
      %v446 = vunpack.c.l.b16 %v374
      %v447 = vunpack.c.l.b16 %v375
      %v448 = vunpack.c.l.b16 %v376
      %v449 = vunpack.c.l.b16 %v377
      %v450 = vunpack.c.l.b16 %v378
      %v451 = vunpack.c.l.b16 %v379
      %v452 = vunpack.c.l.b16 %v380
      %v453 = vunpack.c.l.b16 %v381
      %v454 = vunpack.c.l.b16 %v382
      %v455 = vunpack.c.l.b16 %v383
      %v456 = vunpack.c.l.b16 %v384
      %v457 = vunpack.c.l.b16 %v385
      %v458 = vunpack.c.l.b16 %v386
      %v459 = vunpack.c.l.b16 %v387
      %v460 = vunpack.c.l.b16 %v388
      %v461 = vunpack.c.l.b16 %v389
      %v462 = vunpack.c.l.b16 %v390
      %v463 = vunpack.c.l.b16 %v391
      %v464 = vunpack.c.l.b16 %v392
      %v465 = vpack.c.b16 %v434, %v433
      %v466 = vpack.c.b16 %v436, %v435
      %v467 = vpack.c.b16 %v438, %v437
      %v468 = vpack.c.b16 %v440, %v439
      %v469 = vpack.c.b16 %v442, %v441
      %v470 = vpack.c.b16 %v444, %v443
      %v471 = vpack.c.b16 %v446, %v445
      %v472 = vpack.c.b16 %v448, %v447
      %v473 = vpack.c.b16 %v450, %v449
      %v474 = vpack.c.b16 %v452, %v451
      %v475 = vpack.c.b16 %v454, %v453
      %v476 = vpack.c.b16 %v456, %v455
      %v477 = vpack.c.b16 %v458, %v457
      %v478 = vpack.c.b16 %v460, %v459
      %v479 = vpack.c.b16 %v462, %v461
      %v480 = vpack.c.b16 %v464, %v463
      %vm481 = vcmask 31744
      %v483 = vsel %vm481, %v465, 0
      %v486 = vsel %vm481, %v466, 0
      %v489 = vsel %vm481, %v467, 0
      %v492 = vsel %vm481, %v468, 0
      %v495 = vsel %vm481, %v469, 0
      %v498 = vsel %vm481, %v470, 0
      %v501 = vsel %vm481, %v471, 0
      %v504 = vsel %vm481, %v472, 0
      %v507 = vsel %vm481, %v473, 0
      %v510 = vsel %vm481, %v474, 0
      %v513 = vsel %vm481, %v475, 0
      %v516 = vsel %vm481, %v476, 0
      %v519 = vsel %vm481, %v477, 0
      %v522 = vsel %vm481, %v478, 0
      %v525 = vsel %vm481, %v479, 0
      %v528 = vsel %vm481, %v480, 0
      %vm530 = vcmask 1041408
      %v532 = vsel %vm530, %v393, 0
      %534 = vmatprep.subr.bf16.mxu0 0
      %535 = vmatpush1.bf16.msra.mxu0 %v532
      %536 = vmatprep.subr.bf16.mxu0 0
      %537 = vmatpush1.bf16.msra.mxu0 0
      %538 = vmatprep.subr.bf16.mxu0 0
      %539 = vmatpush1.bf16.msra.mxu0 0
      %540 = vmatprep.subr.bf16.mxu0 0
      %541 = vmatpush1.bf16.msra.mxu0 0
      %542 = vmatprep.subr.bf16.mxu0 0
      %543 = vmatpush1.bf16.msra.mxu0 0
      %544 = vmatprep.subr.bf16.mxu0 0
      %545 = vmatpush1.bf16.msra.mxu0 0
      %546 = vmatprep.subr.bf16.mxu0 0
      %547 = vmatpush1.bf16.msra.mxu0 0
      %548 = vmatprep.subr.bf16.mxu0 0
      %549 = vmatpush1.bf16.msra.mxu0 0
      %550 = vmatprep.subr.bf16.mxu0 0
      %551 = vmatpush1.bf16.msra.mxu0 0
      %552 = vmatprep.subr.bf16.mxu0 0
      %553 = vmatpush1.bf16.msra.mxu0 0
      %554 = vmatprep.subr.bf16.mxu0 0
      %555 = vmatpush1.bf16.msra.mxu0 0
      %556 = vmatprep.subr.bf16.mxu0 0
      %557 = vmatpush1.bf16.msra.mxu0 0
      %558 = vmatprep.subr.bf16.mxu0 0
      %559 = vmatpush1.bf16.msra.mxu0 0
      %560 = vmatprep.subr.bf16.mxu0 0
      %561 = vmatpush1.bf16.msra.mxu0 0
      %562 = vmatprep.subr.bf16.mxu0 0
      %563 = vmatpush1.bf16.msra.mxu0 0
      %564 = vmatprep.subr.bf16.mxu0 0
      %565 = vmatpush1.bf16.msra.mxu0 0
      %566 = vmatprep.mubr.bf16.mxu0 0
      %567 = vmatmul.mubr.bf16.gmra.mrb[0].mxu0 %v483
      %v568 = vpop.f32.mrb[0].mxu0
      %v569 = vadd.f32 %v399, %v568
      %v570 = vpop.f32.mrb[0].mxu0
      %v571 = vpop.f32.mrb[0].mxu0
      %v572 = vadd.f32 %v399, %v571
      %v573 = vpop.f32.mrb[0].mxu0
      %574 = vmatprep.mubr.bf16.mxu0 0
      %575 = vmatmul.mubr.bf16.gmra.mrb[0].mxu0 %v486
      %v576 = vpop.f32.mrb[0].mxu0
      %v577 = vadd.f32 %v399, %v576
      %v578 = vpop.f32.mrb[0].mxu0
      %v579 = vpop.f32.mrb[0].mxu0
      %v580 = vadd.f32 %v399, %v579
      %v581 = vpop.f32.mrb[0].mxu0
      %582 = vmatprep.mubr.bf16.mxu0 0
      %583 = vmatmul.mubr.bf16.gmra.mrb[0].mxu0 %v489
      %v584 = vpop.f32.mrb[0].mxu0
      %v585 = vadd.f32 %v399, %v584
      %v586 = vpop.f32.mrb[0].mxu0
      %v587 = vpop.f32.mrb[0].mxu0
      %v588 = vadd.f32 %v399, %v587
      %v589 = vpop.f32.mrb[0].mxu0
      %590 = vmatprep.mubr.bf16.mxu0 0
      %591 = vmatmul.mubr.bf16.gmra.mrb[0].mxu0 %v492
      %v592 = vpop.f32.mrb[0].mxu0
      %v593 = vadd.f32 %v399, %v592
      %v594 = vpop.f32.mrb[0].mxu0
      %v595 = vpop.f32.mrb[0].mxu0
      %v596 = vadd.f32 %v399, %v595
      %v597 = vpop.f32.mrb[0].mxu0
      %598 = vmatprep.mubr.bf16.mxu0 0
      %599 = vmatmul.mubr.bf16.gmra.mrb[0].mxu0 %v495
      %v600 = vpop.f32.mrb[0].mxu0
      %v601 = vadd.f32 %v399, %v600
      %v602 = vpop.f32.mrb[0].mxu0
      %v603 = vpop.f32.mrb[0].mxu0
      %v604 = vadd.f32 %v399, %v603
      %v605 = vpop.f32.mrb[0].mxu0
      %606 = vmatprep.mubr.bf16.mxu0 0
      %607 = vmatmul.mubr.bf16.gmra.mrb[0].mxu0 %v498
      %v608 = vpop.f32.mrb[0].mxu0
      %v609 = vadd.f32 %v399, %v608
      %v610 = vpop.f32.mrb[0].mxu0
      %v611 = vpop.f32.mrb[0].mxu0
      %v612 = vadd.f32 %v399, %v611
      %v613 = vpop.f32.mrb[0].mxu0
      %614 = vmatprep.mubr.bf16.mxu0 0
      %615 = vmatmul.mubr.bf16.gmra.mrb[0].mxu0 %v501
      %v616 = vpop.f32.mrb[0].mxu0
      %v617 = vadd.f32 %v399, %v616
      %v618 = vpop.f32.mrb[0].mxu0
      %v619 = vpop.f32.mrb[0].mxu0
      %v620 = vadd.f32 %v399, %v619
      %v621 = vpop.f32.mrb[0].mxu0
      %622 = vmatprep.mubr.bf16.mxu0 0
      %623 = vmatmul.mubr.bf16.gmra.mrb[0].mxu0 %v504
      %v624 = vpop.f32.mrb[0].mxu0
      %v625 = vadd.f32 %v399, %v624
      %v626 = vpop.f32.mrb[0].mxu0
      %v627 = vpop.f32.mrb[0].mxu0
      %v628 = vadd.f32 %v399, %v627
      %v629 = vpop.f32.mrb[0].mxu0
      %630 = vmatprep.mubr.bf16.mxu0 0
      %631 = vmatmul.mubr.bf16.gmra.mrb[0].mxu0 %v507
      %v632 = vpop.f32.mrb[0].mxu0
      %v633 = vadd.f32 %v399, %v632
      %v634 = vpop.f32.mrb[0].mxu0
      %v635 = vpop.f32.mrb[0].mxu0
      %v636 = vadd.f32 %v399, %v635
      %v637 = vpop.f32.mrb[0].mxu0
      %638 = vmatprep.mubr.bf16.mxu0 0
      %639 = vmatmul.mubr.bf16.gmra.mrb[0].mxu0 %v510
      %v640 = vpop.f32.mrb[0].mxu0
      %v641 = vadd.f32 %v399, %v640
      %v642 = vpop.f32.mrb[0].mxu0
      %v643 = vpop.f32.mrb[0].mxu0
      %v644 = vadd.f32 %v399, %v643
      %v645 = vpop.f32.mrb[0].mxu0
      %646 = vmatprep.mubr.bf16.mxu0 0
      %647 = vmatmul.mubr.bf16.gmra.mrb[0].mxu0 %v513
      %v648 = vpop.f32.mrb[0].mxu0
      %v649 = vadd.f32 %v399, %v648
      %v650 = vpop.f32.mrb[0].mxu0
      %v651 = vpop.f32.mrb[0].mxu0
      %v652 = vadd.f32 %v399, %v651
      %v653 = vpop.f32.mrb[0].mxu0
      %654 = vmatprep.mubr.bf16.mxu0 0
      %655 = vmatmul.mubr.bf16.gmra.mrb[0].mxu0 %v516
      %v656 = vpop.f32.mrb[0].mxu0
      %v657 = vadd.f32 %v399, %v656
      %v658 = vpop.f32.mrb[0].mxu0
      %v659 = vpop.f32.mrb[0].mxu0
      %v660 = vadd.f32 %v399, %v659
      %v661 = vpop.f32.mrb[0].mxu0
      %662 = vmatprep.mubr.bf16.mxu0 0
      %663 = vmatmul.mubr.bf16.gmra.mrb[0].mxu0 %v519
      %v664 = vpop.f32.mrb[0].mxu0
      %v665 = vadd.f32 %v399, %v664
      %v666 = vpop.f32.mrb[0].mxu0
      %v667 = vpop.f32.mrb[0].mxu0
      %v668 = vadd.f32 %v399, %v667
      %v669 = vpop.f32.mrb[0].mxu0
      %670 = vmatprep.mubr.bf16.mxu0 0
      %671 = vmatmul.mubr.bf16.gmra.mrb[0].mxu0 %v522
      %v672 = vpop.f32.mrb[0].mxu0
      %v673 = vadd.f32 %v399, %v672
      %v674 = vpop.f32.mrb[0].mxu0
      %v675 = vpop.f32.mrb[0].mxu0
      %v676 = vadd.f32 %v399, %v675
      %v677 = vpop.f32.mrb[0].mxu0
      %678 = vmatprep.mubr.bf16.mxu0 0
      %679 = vmatmul.mubr.bf16.gmra.mrb[0].mxu0 %v525
      %v680 = vpop.f32.mrb[0].mxu0
      %v681 = vadd.f32 %v399, %v680
      %v682 = vpop.f32.mrb[0].mxu0
      %v683 = vpop.f32.mrb[0].mxu0
      %v684 = vadd.f32 %v399, %v683
      %v685 = vpop.f32.mrb[0].mxu0
      %686 = vmatprep.mubr.bf16.mxu0 0
      %687 = vmatmul.mubr.bf16.gmra.mrb[0].mxu0 %v528
      %v688 = vpop.f32.mrb[0].mxu0
      %v689 = vadd.f32 %v399, %v688
      %v690 = vpop.f32.mrb[0].mxu0
      %v691 = vpop.f32.mrb[0].mxu0
      %v692 = vadd.f32 %v399, %v691
      %v693 = vpop.f32.mrb[0].mxu0
      %694 = vdwg.mxu0
      %v695 = vmax.f32 %v569, 0.0
      %v696 = vmax.f32 %v572, 0.0
      %v697 = vmax.f32 %v577, 0.0
      %v698 = vmax.f32 %v580, 0.0
      %v699 = vmax.f32 %v585, 0.0
      %v700 = vmax.f32 %v588, 0.0
      %v701 = vmax.f32 %v593, 0.0
      %v702 = vmax.f32 %v596, 0.0
      %v703 = vmax.f32 %v601, 0.0
      %v704 = vmax.f32 %v604, 0.0
      %v705 = vmax.f32 %v609, 0.0
      %v706 = vmax.f32 %v612, 0.0
      %v707 = vmax.f32 %v617, 0.0
      %v708 = vmax.f32 %v620, 0.0
      %v709 = vmax.f32 %v625, 0.0
      %v710 = vmax.f32 %v628, 0.0
      %v711 = vmax.f32 %v633, 0.0
      %v712 = vmax.f32 %v636, 0.0
      %v713 = vmax.f32 %v641, 0.0
      %v714 = vmax.f32 %v644, 0.0
      %v715 = vmax.f32 %v649, 0.0
      %v716 = vmax.f32 %v652, 0.0
      %v717 = vmax.f32 %v657, 0.0
      %v718 = vmax.f32 %v660, 0.0
      %v719 = vmax.f32 %v665, 0.0
      %v720 = vmax.f32 %v668, 0.0
      %v721 = vmax.f32 %v673, 0.0
      %v722 = vmax.f32 %v676, 0.0
      %v723 = vmax.f32 %v681, 0.0
      %v724 = vmax.f32 %v684, 0.0
      %v725 = vmax.f32 %v689, 0.0
      %v726 = vmax.f32 %v692, 0.0
      %vm727 = vcmask 64512
      %728 = vst.msk [vmem:[#allocation2] sm:$0xff] %vm727, 0.0
      %729 = vst.msk [vmem:[#allocation2 + $0x8] sm:$0xff] %vm727, 0.0
      %730 = vst.msk [vmem:[#allocation2 + $0x10] sm:$0xff] %vm727, 0.0
      %731 = vst.msk [vmem:[#allocation2 + $0x18] sm:$0xff] %vm727, 0.0
      %732 = vst.msk [vmem:[#allocation2 + $0x20] sm:$0xff] %vm727, 0.0
      %733 = vst.msk [vmem:[#allocation2 + $0x28] sm:$0xff] %vm727, 0.0
      %734 = vst.msk [vmem:[#allocation2 + $0x30] sm:$0xff] %vm727, 0.0
      %735 = vst.msk [vmem:[#allocation2 + $0x38] sm:$0xff] %vm727, 0.0
      %736 = vst.msk [vmem:[#allocation2 + $0x40] sm:$0xff] %vm727, 0.0
      %737 = vst.msk [vmem:[#allocation2 + $0x48] sm:$0xff] %vm727, 0.0
      %738 = vst.msk [vmem:[#allocation2 + $0x50] sm:$0xff] %vm727, 0.0
      %739 = vst.msk [vmem:[#allocation2 + $0x58] sm:$0xff] %vm727, 0.0
      %740 = vst.msk [vmem:[#allocation2 + $0x60] sm:$0xff] %vm727, 0.0
      %741 = vst.msk [vmem:[#allocation2 + $0x68] sm:$0xff] %vm727, 0.0
      %742 = vst.msk [vmem:[#allocation2 + $0x70] sm:$0xff] %vm727, 0.0
      %743 = vst.msk [vmem:[#allocation2 + $0x78] sm:$0xff] %vm727, 0.0
      %744 = vst.msk [vmem:[#allocation2 + $0x80] sm:$0xff] %vm727, 0.0
      %745 = vst.msk [vmem:[#allocation2 + $0x88] sm:$0xff] %vm727, 0.0
      %746 = vst.msk [vmem:[#allocation2 + $0x90] sm:$0xff] %vm727, 0.0
      %747 = vst.msk [vmem:[#allocation2 + $0x98] sm:$0xff] %vm727, 0.0
      %748 = vst.msk [vmem:[#allocation2 + $0xa0] sm:$0xff] %vm727, 0.0
      %749 = vst.msk [vmem:[#allocation2 + $0xa8] sm:$0xff] %vm727, 0.0
      %750 = vst.msk [vmem:[#allocation2 + $0xb0] sm:$0xff] %vm727, 0.0
      %751 = vst.msk [vmem:[#allocation2 + $0xb8] sm:$0xff] %vm727, 0.0
      %752 = vst.msk [vmem:[#allocation2 + $0xc0] sm:$0xff] %vm727, 0.0
      %753 = vst.msk [vmem:[#allocation2 + $0xc8] sm:$0xff] %vm727, 0.0
      %754 = vst.msk [vmem:[#allocation2 + $0xd0] sm:$0xff] %vm727, 0.0
      %755 = vst.msk [vmem:[#allocation2 + $0xd8] sm:$0xff] %vm727, 0.0
      %756 = vst.msk [vmem:[#allocation2 + $0xe0] sm:$0xff] %vm727, 0.0
      %757 = vst.msk [vmem:[#allocation2 + $0xe8] sm:$0xff] %vm727, 0.0
      %758 = vst.msk [vmem:[#allocation2 + $0xf0] sm:$0xff] %vm727, 0.0
      %759 = vst.msk [vmem:[#allocation2 + $0xf8] sm:$0xff] %vm727, 0.0
      %760 = vst.msk [vmem:[#allocation2 + $0x100] sm:$0xff] %vm727, 0.0
      %761 = vst.msk [vmem:[#allocation2 + $0x108] sm:$0xff] %vm727, 0.0
      %762 = vst.msk [vmem:[#allocation2 + $0x110] sm:$0xff] %vm727, 0.0
      %763 = vst.msk [vmem:[#allocation2 + $0x118] sm:$0xff] %vm727, 0.0
      %764 = vst.msk [vmem:[#allocation2 + $0x120] sm:$0xff] %vm727, 0.0
      %765 = vst.msk [vmem:[#allocation2 + $0x128] sm:$0xff] %vm727, 0.0
      %766 = vst.msk [vmem:[#allocation2 + $0x130] sm:$0xff] %vm727, 0.0
      %767 = vst.msk [vmem:[#allocation2 + $0x138] sm:$0xff] %vm727, 0.0
      %768 = vst.msk [vmem:[#allocation2 + $0x140] sm:$0xff] %vm727, 0.0
      %769 = vst.msk [vmem:[#allocation2 + $0x148] sm:$0xff] %vm727, 0.0
      %770 = vst.msk [vmem:[#allocation2 + $0x28] sm:$0xff] %vm727, %v695
      %771 = vst.msk [vmem:[#allocation2 + $0x30] sm:$0xff] %vm727, %v696
      %772 = vst.msk [vmem:[#allocation2 + $0x38] sm:$0xff] %vm727, %v697
      %773 = vst.msk [vmem:[#allocation2 + $0x40] sm:$0xff] %vm727, %v698
      %774 = vst.msk [vmem:[#allocation2 + $0x48] sm:$0xff] %vm727, %v699
      %775 = vst.msk [vmem:[#allocation2 + $0x50] sm:$0xff] %vm727, %v700
      %776 = vst.msk [vmem:[#allocation2 + $0x58] sm:$0xff] %vm727, %v701
      %777 = vst.msk [vmem:[#allocation2 + $0x60] sm:$0xff] %vm727, %v702
      %778 = vst.msk [vmem:[#allocation2 + $0x68] sm:$0xff] %vm727, %v703
      %779 = vst.msk [vmem:[#allocation2 + $0x70] sm:$0xff] %vm727, %v704
      %780 = vst.msk [vmem:[#allocation2 + $0x78] sm:$0xff] %vm727, %v705
      %781 = vst.msk [vmem:[#allocation2 + $0x80] sm:$0xff] %vm727, %v706
      %782 = vst.msk [vmem:[#allocation2 + $0x88] sm:$0xff] %vm727, %v707
      %783 = vst.msk [vmem:[#allocation2 + $0x90] sm:$0xff] %vm727, %v708
      %784 = vst.msk [vmem:[#allocation2 + $0x98] sm:$0xff] %vm727, %v709
      %785 = vst.msk [vmem:[#allocation2 + $0xa0] sm:$0xff] %vm727, %v710
      %786 = vst.msk [vmem:[#allocation2 + $0xa8] sm:$0xff] %vm727, %v711
      %787 = vst.msk [vmem:[#allocation2 + $0xb0] sm:$0xff] %vm727, %v712
      %788 = vst.msk [vmem:[#allocation2 + $0xb8] sm:$0xff] %vm727, %v713
      %789 = vst.msk [vmem:[#allocation2 + $0xc0] sm:$0xff] %vm727, %v714
      %790 = vst.msk [vmem:[#allocation2 + $0xc8] sm:$0xff] %vm727, %v715
      %791 = vst.msk [vmem:[#allocation2 + $0xd0] sm:$0xff] %vm727, %v716
      %792 = vst.msk [vmem:[#allocation2 + $0xd8] sm:$0xff] %vm727, %v717
      %793 = vst.msk [vmem:[#allocation2 + $0xe0] sm:$0xff] %vm727, %v718
      %794 = vst.msk [vmem:[#allocation2 + $0xe8] sm:$0xff] %vm727, %v719
      %795 = vst.msk [vmem:[#allocation2 + $0xf0] sm:$0xff] %vm727, %v720
      %796 = vst.msk [vmem:[#allocation2 + $0xf8] sm:$0xff] %vm727, %v721
      %797 = vst.msk [vmem:[#allocation2 + $0x100] sm:$0xff] %vm727, %v722
      %798 = vst.msk [vmem:[#allocation2 + $0x108] sm:$0xff] %vm727, %v723
      %799 = vst.msk [vmem:[#allocation2 + $0x110] sm:$0xff] %vm727, %v724
      %800 = vst.msk [vmem:[#allocation2 + $0x118] sm:$0xff] %vm727, %v725
      %801 = vst.msk [vmem:[#allocation2 + $0x120] sm:$0xff] %vm727, %v726
      %802 = vst.msk [vmem:[#allocation3] sm:$0xff] %vm727, 0.0
      %803 = vst.msk [vmem:[#allocation3 + $0x8] sm:$0xff] %vm727, 0.0
      %804 = vst.msk [vmem:[#allocation3 + $0x10] sm:$0xff] %vm727, 0.0
      %805 = vst.msk [vmem:[#allocation3 + $0x18] sm:$0xff] %vm727, 0.0
      %806 = vst.msk [vmem:[#allocation3 + $0x20] sm:$0xff] %vm727, 0.0
      %807 = vst.msk [vmem:[#allocation3 + $0x28] sm:$0xff] %vm727, 0.0
      %808 = vst.msk [vmem:[#allocation3 + $0x30] sm:$0xff] %vm727, 0.0
      %809 = vst.msk [vmem:[#allocation3 + $0x38] sm:$0xff] %vm727, 0.0
      %810 = vst.msk [vmem:[#allocation3 + $0x40] sm:$0xff] %vm727, 0.0
      %811 = vst.msk [vmem:[#allocation3 + $0x48] sm:$0xff] %vm727, 0.0
      %812 = vst.msk [vmem:[#allocation3 + $0x50] sm:$0xff] %vm727, 0.0
      %813 = vst.msk [vmem:[#allocation3 + $0x58] sm:$0xff] %vm727, 0.0
      %814 = vst.msk [vmem:[#allocation3 + $0x60] sm:$0xff] %vm727, 0.0
      %815 = vst.msk [vmem:[#allocation3 + $0x68] sm:$0xff] %vm727, 0.0
      %816 = vst.msk [vmem:[#allocation3 + $0x70] sm:$0xff] %vm727, 0.0
      %817 = vst.msk [vmem:[#allocation3 + $0x78] sm:$0xff] %vm727, 0.0
      %818 = vst.msk [vmem:[#allocation3 + $0x80] sm:$0xff] %vm727, 0.0
      %819 = vst.msk [vmem:[#allocation3 + $0x88] sm:$0xff] %vm727, 0.0
      %820 = vst.msk [vmem:[#allocation3 + $0x90] sm:$0xff] %vm727, 0.0
      %821 = vst.msk [vmem:[#allocation3 + $0x98] sm:$0xff] %vm727, 0.0
      %822 = vst.msk [vmem:[#allocation3 + $0xa0] sm:$0xff] %vm727, 0.0
      %823 = vst.msk [vmem:[#allocation3 + $0xa8] sm:$0xff] %vm727, 0.0
      %824 = vst.msk [vmem:[#allocation3 + $0xb0] sm:$0xff] %vm727, 0.0
      %825 = vst.msk [vmem:[#allocation3 + $0xb8] sm:$0xff] %vm727, 0.0
      %826 = vst.msk [vmem:[#allocation3 + $0xc0] sm:$0xff] %vm727, 0.0
      %827 = vst.msk [vmem:[#allocation3 + $0xc8] sm:$0xff] %vm727, 0.0
      %828 = vst.msk [vmem:[#allocation3 + $0xd0] sm:$0xff] %vm727, 0.0
      %829 = vst.msk [vmem:[#allocation3 + $0xd8] sm:$0xff] %vm727, 0.0
      %830 = vst.msk [vmem:[#allocation3 + $0xe0] sm:$0xff] %vm727, 0.0
      %831 = vst.msk [vmem:[#allocation3 + $0xe8] sm:$0xff] %vm727, 0.0
      %832 = vst.msk [vmem:[#allocation3 + $0xf0] sm:$0xff] %vm727, 0.0
      %833 = vst.msk [vmem:[#allocation3 + $0xf8] sm:$0xff] %vm727, 0.0
      %v834 = vld [vmem:[#allocation2 + $0x6] sm:$0xff]
      %v835 = vld [vmem:[#allocation2 + $0xe] sm:$0xff]
      %v836 = vld [vmem:[#allocation2 + $0x16] sm:$0xff]
      %v837 = vld [vmem:[#allocation2 + $0x1e] sm:$0xff]
      %v838 = vld [vmem:[#allocation2 + $0x26] sm:$0xff]
      %v839 = vld [vmem:[#allocation2 + $0x2e] sm:$0xff]
      %v840 = vld [vmem:[#allocation2 + $0x36] sm:$0xff]
      %v841 = vld [vmem:[#allocation2 + $0x3e] sm:$0xff]
      %v842 = vld [vmem:[#allocation2 + $0x46] sm:$0xff]
      %v843 = vld [vmem:[#allocation2 + $0x4e] sm:$0xff]
      %v844 = vld [vmem:[#allocation2 + $0x56] sm:$0xff]
      %v845 = vld [vmem:[#allocation2 + $0x5e] sm:$0xff]
      %v846 = vld [vmem:[#allocation2 + $0x66] sm:$0xff]
      %v847 = vld [vmem:[#allocation2 + $0x6e] sm:$0xff]
      %v848 = vld [vmem:[#allocation2 + $0x76] sm:$0xff]
      %v849 = vld [vmem:[#allocation2 + $0x7e] sm:$0xff]
      %v850 = vld [vmem:[#allocation2 + $0x86] sm:$0xff]
      %v851 = vld [vmem:[#allocation2 + $0x8e] sm:$0xff]
      %v852 = vld [vmem:[#allocation2 + $0x96] sm:$0xff]
      %v853 = vld [vmem:[#allocation2 + $0x9e] sm:$0xff]
      %v854 = vld [vmem:[#allocation2 + $0xa6] sm:$0xff]
      %v855 = vld [vmem:[#allocation2 + $0xae] sm:$0xff]
      %v856 = vld [vmem:[#allocation2 + $0xb6] sm:$0xff]
      %v857 = vld [vmem:[#allocation2 + $0xbe] sm:$0xff]
      %v858 = vld [vmem:[#allocation2 + $0xc6] sm:$0xff]
      %v859 = vld [vmem:[#allocation2 + $0xce] sm:$0xff]
      %v860 = vld [vmem:[#allocation2 + $0xd6] sm:$0xff]
      %v861 = vld [vmem:[#allocation2 + $0xde] sm:$0xff]
      %v862 = vld [vmem:[#allocation2 + $0xe6] sm:$0xff]
      %v863 = vld [vmem:[#allocation2 + $0xee] sm:$0xff]
      %v864 = vld [vmem:[#allocation2 + $0xf6] sm:$0xff]
      %v865 = vld [vmem:[#allocation2 + $0xfe] sm:$0xff]
      %v866 = vpack.c.bf16 %v835, %v834
      %v867 = vpack.c.bf16 %v837, %v836
      %v868 = vpack.c.bf16 %v839, %v838
      %v869 = vpack.c.bf16 %v841, %v840
      %v870 = vpack.c.bf16 %v843, %v842
      %v871 = vpack.c.bf16 %v845, %v844
      %v872 = vpack.c.bf16 %v847, %v846
      %v873 = vpack.c.bf16 %v849, %v848
      %v874 = vpack.c.bf16 %v851, %v850
      %v875 = vpack.c.bf16 %v853, %v852
      %v876 = vpack.c.bf16 %v855, %v854
      %v877 = vpack.c.bf16 %v857, %v856
      %v878 = vpack.c.bf16 %v859, %v858
      %v879 = vpack.c.bf16 %v861, %v860
      %v880 = vpack.c.bf16 %v863, %v862
      %v881 = vpack.c.bf16 %v865, %v864
      %v882 = vld [vmem:[%s3] sm:$0xf]
      %v884 = vsel %vm727, %v866, 0
      %v887 = vsel %vm727, %v867, 0
      %v890 = vsel %vm727, %v868, 0
      %v893 = vsel %vm727, %v869, 0
      %v896 = vsel %vm727, %v870, 0
      %v899 = vsel %vm727, %v871, 0
      %v902 = vsel %vm727, %v872, 0
      %v905 = vsel %vm727, %v873, 0
      %v908 = vsel %vm727, %v874, 0
      %v911 = vsel %vm727, %v875, 0
      %v914 = vsel %vm727, %v876, 0
      %v917 = vsel %vm727, %v877, 0
      %v920 = vsel %vm727, %v878, 0
      %v923 = vsel %vm727, %v879, 0
      %v926 = vsel %vm727, %v880, 0
      %v929 = vsel %vm727, %v881, 0
      %vm931 = vcmask 1043456
      %v933 = vsel %vm931, %v882, 0
      %935 = vmatprep.subr.bf16.mxu0 0
      %936 = vmatpush1.bf16.msra.mxu0 %v933
      %937 = vmatprep.subr.bf16.mxu0 0
      %938 = vmatpush1.bf16.msra.mxu0 0
      %939 = vmatprep.subr.bf16.mxu0 0
      %940 = vmatpush1.bf16.msra.mxu0 0
      %941 = vmatprep.subr.bf16.mxu0 0
      %942 = vmatpush1.bf16.msra.mxu0 0
      %943 = vmatprep.subr.bf16.mxu0 0
      %944 = vmatpush1.bf16.msra.mxu0 0
      %945 = vmatprep.subr.bf16.mxu0 0
      %946 = vmatpush1.bf16.msra.mxu0 0
      %947 = vmatprep.subr.bf16.mxu0 0
      %948 = vmatpush1.bf16.msra.mxu0 0
      %949 = vmatprep.subr.bf16.mxu0 0
      %950 = vmatpush1.bf16.msra.mxu0 0
      %951 = vmatprep.subr.bf16.mxu0 0
      %952 = vmatpush1.bf16.msra.mxu0 0
      %953 = vmatprep.subr.bf16.mxu0 0
      %954 = vmatpush1.bf16.msra.mxu0 0
      %955 = vmatprep.subr.bf16.mxu0 0
      %956 = vmatpush1.bf16.msra.mxu0 0
      %957 = vmatprep.subr.bf16.mxu0 0
      %958 = vmatpush1.bf16.msra.mxu0 0
      %959 = vmatprep.subr.bf16.mxu0 0
      %960 = vmatpush1.bf16.msra.mxu0 0
      %961 = vmatprep.subr.bf16.mxu0 0
      %962 = vmatpush1.bf16.msra.mxu0 0
      %963 = vmatprep.subr.bf16.mxu0 0
      %964 = vmatpush1.bf16.msra.mxu0 0
      %965 = vmatprep.subr.bf16.mxu0 0
      %966 = vmatpush1.bf16.msra.mxu0 0
      %967 = vmatprep.mubr.bf16.mxu0 0
      %968 = vmatmul.mubr.bf16.gmra.mrb[0].mxu0 %v884
      %v969 = vpop.f32.mrb[0].mxu0
      %v970 = vadd.f32 0.0, %v969
      %v971 = vpop.f32.mrb[0].mxu0
      %v972 = vpop.f32.mrb[0].mxu0
      %v973 = vadd.f32 0.0, %v972
      %v974 = vpop.f32.mrb[0].mxu0
      %975 = vmatprep.mubr.bf16.mxu0 0
      %976 = vmatmul.mubr.bf16.gmra.mrb[0].mxu0 %v887
      %v977 = vpop.f32.mrb[0].mxu0
      %v978 = vadd.f32 0.0, %v977
      %v979 = vpop.f32.mrb[0].mxu0
      %v980 = vpop.f32.mrb[0].mxu0
      %v981 = vadd.f32 0.0, %v980
      %v982 = vpop.f32.mrb[0].mxu0
      %983 = vmatprep.mubr.bf16.mxu0 0
      %984 = vmatmul.mubr.bf16.gmra.mrb[0].mxu0 %v890
      %v985 = vpop.f32.mrb[0].mxu0
      %v986 = vadd.f32 0.0, %v985
      %v987 = vpop.f32.mrb[0].mxu0
      %v988 = vpop.f32.mrb[0].mxu0
      %v989 = vadd.f32 0.0, %v988
      %v990 = vpop.f32.mrb[0].mxu0
      %991 = vmatprep.mubr.bf16.mxu0 0
      %992 = vmatmul.mubr.bf16.gmra.mrb[0].mxu0 %v893
      %v993 = vpop.f32.mrb[0].mxu0
      %v994 = vadd.f32 0.0, %v993
      %v995 = vpop.f32.mrb[0].mxu0
      %v996 = vpop.f32.mrb[0].mxu0
      %v997 = vadd.f32 0.0, %v996
      %v998 = vpop.f32.mrb[0].mxu0
      %999 = vmatprep.mubr.bf16.mxu0 0
      %1000 = vmatmul.mubr.bf16.gmra.mrb[0].mxu0 %v896
      %v1001 = vpop.f32.mrb[0].mxu0
      %v1002 = vadd.f32 0.0, %v1001
      %v1003 = vpop.f32.mrb[0].mxu0
      %v1004 = vpop.f32.mrb[0].mxu0
      %v1005 = vadd.f32 0.0, %v1004
      %v1006 = vpop.f32.mrb[0].mxu0
      %1007 = vmatprep.mubr.bf16.mxu0 0
      %1008 = vmatmul.mubr.bf16.gmra.mrb[0].mxu0 %v899
      %v1009 = vpop.f32.mrb[0].mxu0
      %v1010 = vadd.f32 0.0, %v1009
      %v1011 = vpop.f32.mrb[0].mxu0
      %v1012 = vpop.f32.mrb[0].mxu0
      %v1013 = vadd.f32 0.0, %v1012
      %v1014 = vpop.f32.mrb[0].mxu0
      %1015 = vmatprep.mubr.bf16.mxu0 0
      %1016 = vmatmul.mubr.bf16.gmra.mrb[0].mxu0 %v902
      %v1017 = vpop.f32.mrb[0].mxu0
      %v1018 = vadd.f32 0.0, %v1017
      %v1019 = vpop.f32.mrb[0].mxu0
      %v1020 = vpop.f32.mrb[0].mxu0
      %v1021 = vadd.f32 0.0, %v1020
      %v1022 = vpop.f32.mrb[0].mxu0
      %1023 = vmatprep.mubr.bf16.mxu0 0
      %1024 = vmatmul.mubr.bf16.gmra.mrb[0].mxu0 %v905
      %v1025 = vpop.f32.mrb[0].mxu0
      %v1026 = vadd.f32 0.0, %v1025
      %v1027 = vpop.f32.mrb[0].mxu0
      %v1028 = vpop.f32.mrb[0].mxu0
      %v1029 = vadd.f32 0.0, %v1028
      %v1030 = vpop.f32.mrb[0].mxu0
      %1031 = vmatprep.mubr.bf16.mxu0 0
      %1032 = vmatmul.mubr.bf16.gmra.mrb[0].mxu0 %v908
      %v1033 = vpop.f32.mrb[0].mxu0
      %v1034 = vadd.f32 0.0, %v1033
      %v1035 = vpop.f32.mrb[0].mxu0
      %v1036 = vpop.f32.mrb[0].mxu0
      %v1037 = vadd.f32 0.0, %v1036
      %v1038 = vpop.f32.mrb[0].mxu0
      %1039 = vmatprep.mubr.bf16.mxu0 0
      %1040 = vmatmul.mubr.bf16.gmra.mrb[0].mxu0 %v911
      %v1041 = vpop.f32.mrb[0].mxu0
      %v1042 = vadd.f32 0.0, %v1041
      %v1043 = vpop.f32.mrb[0].mxu0
      %v1044 = vpop.f32.mrb[0].mxu0
      %v1045 = vadd.f32 0.0, %v1044
      %v1046 = vpop.f32.mrb[0].mxu0
      %1047 = vmatprep.mubr.bf16.mxu0 0
      %1048 = vmatmul.mubr.bf16.gmra.mrb[0].mxu0 %v914
      %v1049 = vpop.f32.mrb[0].mxu0
      %v1050 = vadd.f32 0.0, %v1049
      %v1051 = vpop.f32.mrb[0].mxu0
      %v1052 = vpop.f32.mrb[0].mxu0
      %v1053 = vadd.f32 0.0, %v1052
      %v1054 = vpop.f32.mrb[0].mxu0
      %1055 = vmatprep.mubr.bf16.mxu0 0
      %1056 = vmatmul.mubr.bf16.gmra.mrb[0].mxu0 %v917
      %v1057 = vpop.f32.mrb[0].mxu0
      %v1058 = vadd.f32 0.0, %v1057
      %v1059 = vpop.f32.mrb[0].mxu0
      %v1060 = vpop.f32.mrb[0].mxu0
      %v1061 = vadd.f32 0.0, %v1060
      %v1062 = vpop.f32.mrb[0].mxu0
      %1063 = vmatprep.mubr.bf16.mxu0 0
      %1064 = vmatmul.mubr.bf16.gmra.mrb[0].mxu0 %v920
      %v1065 = vpop.f32.mrb[0].mxu0
      %v1066 = vadd.f32 0.0, %v1065
      %v1067 = vpop.f32.mrb[0].mxu0
      %v1068 = vpop.f32.mrb[0].mxu0
      %v1069 = vadd.f32 0.0, %v1068
      %v1070 = vpop.f32.mrb[0].mxu0
      %1071 = vmatprep.mubr.bf16.mxu0 0
      %1072 = vmatmul.mubr.bf16.gmra.mrb[0].mxu0 %v923
      %v1073 = vpop.f32.mrb[0].mxu0
      %v1074 = vadd.f32 0.0, %v1073
      %v1075 = vpop.f32.mrb[0].mxu0
      %v1076 = vpop.f32.mrb[0].mxu0
      %v1077 = vadd.f32 0.0, %v1076
      %v1078 = vpop.f32.mrb[0].mxu0
      %1079 = vmatprep.mubr.bf16.mxu0 0
      %1080 = vmatmul.mubr.bf16.gmra.mrb[0].mxu0 %v926
      %v1081 = vpop.f32.mrb[0].mxu0
      %v1082 = vadd.f32 0.0, %v1081
      %v1083 = vpop.f32.mrb[0].mxu0
      %v1084 = vpop.f32.mrb[0].mxu0
      %v1085 = vadd.f32 0.0, %v1084
      %v1086 = vpop.f32.mrb[0].mxu0
      %1087 = vmatprep.mubr.bf16.mxu0 0
      %1088 = vmatmul.mubr.bf16.gmra.mrb[0].mxu0 %v929
      %v1089 = vpop.f32.mrb[0].mxu0
      %v1090 = vadd.f32 0.0, %v1089
      %v1091 = vpop.f32.mrb[0].mxu0
      %v1092 = vpop.f32.mrb[0].mxu0
      %v1093 = vadd.f32 0.0, %v1092
      %v1094 = vpop.f32.mrb[0].mxu0
      %1095 = vdwg.mxu0
      %v1096 = vld [vmem:[#allocation3] sm:$0xff]
      %v1097 = vld [vmem:[#allocation3 + $0x8] sm:$0xff]
      %v1098 = vld [vmem:[#allocation3 + $0x10] sm:$0xff]
      %v1099 = vld [vmem:[#allocation3 + $0x18] sm:$0xff]
      %v1100 = vld [vmem:[#allocation3 + $0x20] sm:$0xff]
      %v1101 = vld [vmem:[#allocation3 + $0x28] sm:$0xff]
      %v1102 = vld [vmem:[#allocation3 + $0x30] sm:$0xff]
      %v1103 = vld [vmem:[#allocation3 + $0x38] sm:$0xff]
      %v1104 = vld [vmem:[#allocation3 + $0x40] sm:$0xff]
      %v1105 = vld [vmem:[#allocation3 + $0x48] sm:$0xff]
      %v1106 = vld [vmem:[#allocation3 + $0x50] sm:$0xff]
      %v1107 = vld [vmem:[#allocation3 + $0x58] sm:$0xff]
      %v1108 = vld [vmem:[#allocation3 + $0x60] sm:$0xff]
      %v1109 = vld [vmem:[#allocation3 + $0x68] sm:$0xff]
      %v1110 = vld [vmem:[#allocation3 + $0x70] sm:$0xff]
      %v1111 = vld [vmem:[#allocation3 + $0x78] sm:$0xff]
      %v1112 = vld [vmem:[#allocation3 + $0x80] sm:$0xff]
      %v1113 = vld [vmem:[#allocation3 + $0x88] sm:$0xff]
      %v1114 = vld [vmem:[#allocation3 + $0x90] sm:$0xff]
      %v1115 = vld [vmem:[#allocation3 + $0x98] sm:$0xff]
      %v1116 = vld [vmem:[#allocation3 + $0xa0] sm:$0xff]
      %v1117 = vld [vmem:[#allocation3 + $0xa8] sm:$0xff]
      %v1118 = vld [vmem:[#allocation3 + $0xb0] sm:$0xff]
      %v1119 = vld [vmem:[#allocation3 + $0xb8] sm:$0xff]
      %v1120 = vld [vmem:[#allocation3 + $0xc0] sm:$0xff]
      %v1121 = vld [vmem:[#allocation3 + $0xc8] sm:$0xff]
      %v1122 = vld [vmem:[#allocation3 + $0xd0] sm:$0xff]
      %v1123 = vld [vmem:[#allocation3 + $0xd8] sm:$0xff]
      %v1124 = vld [vmem:[#allocation3 + $0xe0] sm:$0xff]
      %v1125 = vld [vmem:[#allocation3 + $0xe8] sm:$0xff]
      %v1126 = vld [vmem:[#allocation3 + $0xf0] sm:$0xff]
      %v1127 = vld [vmem:[#allocation3 + $0xf8] sm:$0xff]
      %v1128 = vld [vmem:[%s1] sm:$0xff]
      %v1129 = vld [vmem:[%s1 + $0x8] sm:$0xff]
      %v1130 = vld [vmem:[%s1 + $0x10] sm:$0xff]
      %v1131 = vld [vmem:[%s1 + $0x18] sm:$0xff]
      %v1132 = vld [vmem:[%s1 + $0x20] sm:$0xff]
      %v1133 = vld [vmem:[%s1 + $0x28] sm:$0xff]
      %v1134 = vld [vmem:[%s1 + $0x30] sm:$0xff]
      %v1135 = vld [vmem:[%s1 + $0x38] sm:$0xff]
      %v1136 = vld [vmem:[%s1 + $0x40] sm:$0xff]
      %v1137 = vld [vmem:[%s1 + $0x48] sm:$0xff]
      %v1138 = vld [vmem:[%s1 + $0x50] sm:$0xff]
      %v1139 = vld [vmem:[%s1 + $0x58] sm:$0xff]
      %v1140 = vld [vmem:[%s1 + $0x60] sm:$0xff]
      %v1141 = vld [vmem:[%s1 + $0x68] sm:$0xff]
      %v1142 = vld [vmem:[%s1 + $0x70] sm:$0xff]
      %v1143 = vld [vmem:[%s1 + $0x78] sm:$0xff]
      %v1144 = vld [vmem:[%s1 + $0x80] sm:$0xff]
      %v1145 = vld [vmem:[%s1 + $0x88] sm:$0xff]
      %v1146 = vld [vmem:[%s1 + $0x90] sm:$0xff]
      %v1147 = vld [vmem:[%s1 + $0x98] sm:$0xff]
      %v1148 = vld [vmem:[%s1 + $0xa0] sm:$0xff]
      %v1149 = vld [vmem:[%s1 + $0xa8] sm:$0xff]
      %v1150 = vld [vmem:[%s1 + $0xb0] sm:$0xff]
      %v1151 = vld [vmem:[%s1 + $0xb8] sm:$0xff]
      %v1152 = vld [vmem:[%s1 + $0xc0] sm:$0xff]
      %v1153 = vld [vmem:[%s1 + $0xc8] sm:$0xff]
      %v1154 = vld [vmem:[%s1 + $0xd0] sm:$0xff]
      %v1155 = vld [vmem:[%s1 + $0xd8] sm:$0xff]
      %v1156 = vld [vmem:[%s1 + $0xe0] sm:$0xff]
      %v1157 = vld [vmem:[%s1 + $0xe8] sm:$0xff]
      %v1158 = vld [vmem:[%s1 + $0xf0] sm:$0xff]
      %v1159 = vld [vmem:[%s1 + $0xf8] sm:$0xff]
      %1161 = vset.pattern.permute.xlu0 0
      %1162 = vperm.xlu0 %1161, %v1128
      %v1163 = vpop.permute.xlu0 %1162
      %1166 = vset.pattern.permute.xlu0 0
      %1167 = vperm.xlu0 %1166, %v1129
      %v1168 = vpop.permute.xlu0 %1167
      %1171 = vset.pattern.permute.xlu0 0
      %1172 = vperm.xlu0 %1171, %v1130
      %v1173 = vpop.permute.xlu0 %1172
      %1176 = vset.pattern.permute.xlu0 0
      %1177 = vperm.xlu0 %1176, %v1131
      %v1178 = vpop.permute.xlu0 %1177
      %1181 = vset.pattern.permute.xlu0 0
      %1182 = vperm.xlu0 %1181, %v1132
      %v1183 = vpop.permute.xlu0 %1182
      %1186 = vset.pattern.permute.xlu0 0
      %1187 = vperm.xlu0 %1186, %v1133
      %v1188 = vpop.permute.xlu0 %1187
      %1191 = vset.pattern.permute.xlu0 0
      %1192 = vperm.xlu0 %1191, %v1134
      %v1193 = vpop.permute.xlu0 %1192
      %1196 = vset.pattern.permute.xlu0 0
      %1197 = vperm.xlu0 %1196, %v1135
      %v1198 = vpop.permute.xlu0 %1197
      %1201 = vset.pattern.permute.xlu0 0
      %1202 = vperm.xlu0 %1201, %v1136
      %v1203 = vpop.permute.xlu0 %1202
      %1206 = vset.pattern.permute.xlu0 0
      %1207 = vperm.xlu0 %1206, %v1137
      %v1208 = vpop.permute.xlu0 %1207
      %1211 = vset.pattern.permute.xlu0 0
      %1212 = vperm.xlu0 %1211, %v1138
      %v1213 = vpop.permute.xlu0 %1212
      %1216 = vset.pattern.permute.xlu0 0
      %1217 = vperm.xlu0 %1216, %v1139
      %v1218 = vpop.permute.xlu0 %1217
      %1221 = vset.pattern.permute.xlu0 0
      %1222 = vperm.xlu0 %1221, %v1140
      %v1223 = vpop.permute.xlu0 %1222
      %1226 = vset.pattern.permute.xlu0 0
      %1227 = vperm.xlu0 %1226, %v1141
      %v1228 = vpop.permute.xlu0 %1227
      %1231 = vset.pattern.permute.xlu0 0
      %1232 = vperm.xlu0 %1231, %v1142
      %v1233 = vpop.permute.xlu0 %1232
      %1236 = vset.pattern.permute.xlu0 0
      %1237 = vperm.xlu0 %1236, %v1143
      %v1238 = vpop.permute.xlu0 %1237
      %1241 = vset.pattern.permute.xlu0 0
      %1242 = vperm.xlu0 %1241, %v1144
      %v1243 = vpop.permute.xlu0 %1242
      %1246 = vset.pattern.permute.xlu0 0
      %1247 = vperm.xlu0 %1246, %v1145
      %v1248 = vpop.permute.xlu0 %1247
      %1251 = vset.pattern.permute.xlu0 0
      %1252 = vperm.xlu0 %1251, %v1146
      %v1253 = vpop.permute.xlu0 %1252
      %1256 = vset.pattern.permute.xlu0 0
      %1257 = vperm.xlu0 %1256, %v1147
      %v1258 = vpop.permute.xlu0 %1257
      %1261 = vset.pattern.permute.xlu0 0
      %1262 = vperm.xlu0 %1261, %v1148
      %v1263 = vpop.permute.xlu0 %1262
      %1266 = vset.pattern.permute.xlu0 0
      %1267 = vperm.xlu0 %1266, %v1149
      %v1268 = vpop.permute.xlu0 %1267
      %1271 = vset.pattern.permute.xlu0 0
      %1272 = vperm.xlu0 %1271, %v1150
      %v1273 = vpop.permute.xlu0 %1272
      %1276 = vset.pattern.permute.xlu0 0
      %1277 = vperm.xlu0 %1276, %v1151
      %v1278 = vpop.permute.xlu0 %1277
      %1281 = vset.pattern.permute.xlu0 0
      %1282 = vperm.xlu0 %1281, %v1152
      %v1283 = vpop.permute.xlu0 %1282
      %1286 = vset.pattern.permute.xlu0 0
      %1287 = vperm.xlu0 %1286, %v1153
      %v1288 = vpop.permute.xlu0 %1287
      %1291 = vset.pattern.permute.xlu0 0
      %1292 = vperm.xlu0 %1291, %v1154
      %v1293 = vpop.permute.xlu0 %1292
      %1296 = vset.pattern.permute.xlu0 0
      %1297 = vperm.xlu0 %1296, %v1155
      %v1298 = vpop.permute.xlu0 %1297
      %1301 = vset.pattern.permute.xlu0 0
      %1302 = vperm.xlu0 %1301, %v1156
      %v1303 = vpop.permute.xlu0 %1302
      %1306 = vset.pattern.permute.xlu0 0
      %1307 = vperm.xlu0 %1306, %v1157
      %v1308 = vpop.permute.xlu0 %1307
      %1311 = vset.pattern.permute.xlu0 0
      %1312 = vperm.xlu0 %1311, %v1158
      %v1313 = vpop.permute.xlu0 %1312
      %1316 = vset.pattern.permute.xlu0 0
      %1317 = vperm.xlu0 %1316, %v1159
      %v1318 = vpop.permute.xlu0 %1317
      %v1320 = vmul.f32 %v970, %v1163
      %v1321 = vmul.f32 %v973, %v1168
      %v1322 = vmul.f32 %v978, %v1173
      %v1323 = vmul.f32 %v981, %v1178
      %v1324 = vmul.f32 %v986, %v1183
      %v1325 = vmul.f32 %v989, %v1188
      %v1326 = vmul.f32 %v994, %v1193
      %v1327 = vmul.f32 %v997, %v1198
      %v1328 = vmul.f32 %v1002, %v1203
      %v1329 = vmul.f32 %v1005, %v1208
      %v1330 = vmul.f32 %v1010, %v1213
      %v1331 = vmul.f32 %v1013, %v1218
      %v1332 = vmul.f32 %v1018, %v1223
      %v1333 = vmul.f32 %v1021, %v1228
      %v1334 = vmul.f32 %v1026, %v1233
      %v1335 = vmul.f32 %v1029, %v1238
      %v1336 = vmul.f32 %v1034, %v1243
      %v1337 = vmul.f32 %v1037, %v1248
      %v1338 = vmul.f32 %v1042, %v1253
      %v1339 = vmul.f32 %v1045, %v1258
      %v1340 = vmul.f32 %v1050, %v1263
      %v1341 = vmul.f32 %v1053, %v1268
      %v1342 = vmul.f32 %v1058, %v1273
      %v1343 = vmul.f32 %v1061, %v1278
      %v1344 = vmul.f32 %v1066, %v1283
      %v1345 = vmul.f32 %v1069, %v1288
      %v1346 = vmul.f32 %v1074, %v1293
      %v1347 = vmul.f32 %v1077, %v1298
      %v1348 = vmul.f32 %v1082, %v1303
      %v1349 = vmul.f32 %v1085, %v1308
      %v1350 = vmul.f32 %v1090, %v1313
      %v1351 = vmul.f32 %v1093, %v1318
      %v1352 = vadd.f32 %v1096, %v1320
      %v1353 = vadd.f32 %v1097, %v1321
      %v1354 = vadd.f32 %v1098, %v1322
      %v1355 = vadd.f32 %v1099, %v1323
      %v1356 = vadd.f32 %v1100, %v1324
      %v1357 = vadd.f32 %v1101, %v1325
      %v1358 = vadd.f32 %v1102, %v1326
      %v1359 = vadd.f32 %v1103, %v1327
      %v1360 = vadd.f32 %v1104, %v1328
      %v1361 = vadd.f32 %v1105, %v1329
      %v1362 = vadd.f32 %v1106, %v1330
      %v1363 = vadd.f32 %v1107, %v1331
      %v1364 = vadd.f32 %v1108, %v1332
      %v1365 = vadd.f32 %v1109, %v1333
      %v1366 = vadd.f32 %v1110, %v1334
      %v1367 = vadd.f32 %v1111, %v1335
      %v1368 = vadd.f32 %v1112, %v1336
      %v1369 = vadd.f32 %v1113, %v1337
      %v1370 = vadd.f32 %v1114, %v1338
      %v1371 = vadd.f32 %v1115, %v1339
      %v1372 = vadd.f32 %v1116, %v1340
      %v1373 = vadd.f32 %v1117, %v1341
      %v1374 = vadd.f32 %v1118, %v1342
      %v1375 = vadd.f32 %v1119, %v1343
      %v1376 = vadd.f32 %v1120, %v1344
      %v1377 = vadd.f32 %v1121, %v1345
      %v1378 = vadd.f32 %v1122, %v1346
      %v1379 = vadd.f32 %v1123, %v1347
      %v1380 = vadd.f32 %v1124, %v1348
      %v1381 = vadd.f32 %v1125, %v1349
      %v1382 = vadd.f32 %v1126, %v1350
      %v1383 = vadd.f32 %v1127, %v1351
      %1384 = vst.msk [vmem:[#allocation3] sm:$0xff] %vm727, %v1352
      %1385 = vst.msk [vmem:[#allocation3 + $0x8] sm:$0xff] %vm727, %v1353
      %1386 = vst.msk [vmem:[#allocation3 + $0x10] sm:$0xff] %vm727, %v1354
      %1387 = vst.msk [vmem:[#allocation3 + $0x18] sm:$0xff] %vm727, %v1355
      %1388 = vst.msk [vmem:[#allocation3 + $0x20] sm:$0xff] %vm727, %v1356
      %1389 = vst.msk [vmem:[#allocation3 + $0x28] sm:$0xff] %vm727, %v1357
      %1390 = vst.msk [vmem:[#allocation3 + $0x30] sm:$0xff] %vm727, %v1358
      %1391 = vst.msk [vmem:[#allocation3 + $0x38] sm:$0xff] %vm727, %v1359
      %1392 = vst.msk [vmem:[#allocation3 + $0x40] sm:$0xff] %vm727, %v1360
      %1393 = vst.msk [vmem:[#allocation3 + $0x48] sm:$0xff] %vm727, %v1361
      %1394 = vst.msk [vmem:[#allocation3 + $0x50] sm:$0xff] %vm727, %v1362
      %1395 = vst.msk [vmem:[#allocation3 + $0x58] sm:$0xff] %vm727, %v1363
      %1396 = vst.msk [vmem:[#allocation3 + $0x60] sm:$0xff] %vm727, %v1364
      %1397 = vst.msk [vmem:[#allocation3 + $0x68] sm:$0xff] %vm727, %v1365
      %1398 = vst.msk [vmem:[#allocation3 + $0x70] sm:$0xff] %vm727, %v1366
      %1399 = vst.msk [vmem:[#allocation3 + $0x78] sm:$0xff] %vm727, %v1367
      %1400 = vst.msk [vmem:[#allocation3 + $0x80] sm:$0xff] %vm727, %v1368
      %1401 = vst.msk [vmem:[#allocation3 + $0x88] sm:$0xff] %vm727, %v1369
      %1402 = vst.msk [vmem:[#allocation3 + $0x90] sm:$0xff] %vm727, %v1370
      %1403 = vst.msk [vmem:[#allocation3 + $0x98] sm:$0xff] %vm727, %v1371
      %1404 = vst.msk [vmem:[#allocation3 + $0xa0] sm:$0xff] %vm727, %v1372
      %1405 = vst.msk [vmem:[#allocation3 + $0xa8] sm:$0xff] %vm727, %v1373
      %1406 = vst.msk [vmem:[#allocation3 + $0xb0] sm:$0xff] %vm727, %v1374
      %1407 = vst.msk [vmem:[#allocation3 + $0xb8] sm:$0xff] %vm727, %v1375
      %1408 = vst.msk [vmem:[#allocation3 + $0xc0] sm:$0xff] %vm727, %v1376
      %1409 = vst.msk [vmem:[#allocation3 + $0xc8] sm:$0xff] %vm727, %v1377
      %1410 = vst.msk [vmem:[#allocation3 + $0xd0] sm:$0xff] %vm727, %v1378
      %1411 = vst.msk [vmem:[#allocation3 + $0xd8] sm:$0xff] %vm727, %v1379
      %1412 = vst.msk [vmem:[#allocation3 + $0xe0] sm:$0xff] %vm727, %v1380
      %1413 = vst.msk [vmem:[#allocation3 + $0xe8] sm:$0xff] %vm727, %v1381
      %1414 = vst.msk [vmem:[#allocation3 + $0xf0] sm:$0xff] %vm727, %v1382
      %1415 = vst.msk [vmem:[#allocation3 + $0xf8] sm:$0xff] %vm727, %v1383
      %v1416 = vld [vmem:[#allocation2 + $0x8] sm:$0xff]
      %v1417 = vld [vmem:[#allocation2 + $0x10] sm:$0xff]
      %v1418 = vld [vmem:[#allocation2 + $0x18] sm:$0xff]
      %v1419 = vld [vmem:[#allocation2 + $0x20] sm:$0xff]
      %v1420 = vld [vmem:[#allocation2 + $0x28] sm:$0xff]
      %v1421 = vld [vmem:[#allocation2 + $0x30] sm:$0xff]
      %v1422 = vld [vmem:[#allocation2 + $0x38] sm:$0xff]
      %v1423 = vld [vmem:[#allocation2 + $0x40] sm:$0xff]
      %v1424 = vld [vmem:[#allocation2 + $0x48] sm:$0xff]
      %v1425 = vld [vmem:[#allocation2 + $0x50] sm:$0xff]
      %v1426 = vld [vmem:[#allocation2 + $0x58] sm:$0xff]
      %v1427 = vld [vmem:[#allocation2 + $0x60] sm:$0xff]
      %v1428 = vld [vmem:[#allocation2 + $0x68] sm:$0xff]
      %v1429 = vld [vmem:[#allocation2 + $0x70] sm:$0xff]
      %v1430 = vld [vmem:[#allocation2 + $0x78] sm:$0xff]
      %v1431 = vld [vmem:[#allocation2 + $0x80] sm:$0xff]
      %v1432 = vld [vmem:[#allocation2 + $0x88] sm:$0xff]
      %v1433 = vld [vmem:[#allocation2 + $0x90] sm:$0xff]
      %v1434 = vld [vmem:[#allocation2 + $0x98] sm:$0xff]
      %v1435 = vld [vmem:[#allocation2 + $0xa0] sm:$0xff]
      %v1436 = vld [vmem:[#allocation2 + $0xa8] sm:$0xff]
      %v1437 = vld [vmem:[#allocation2 + $0xb0] sm:$0xff]
      %v1438 = vld [vmem:[#allocation2 + $0xb8] sm:$0xff]
      %v1439 = vld [vmem:[#allocation2 + $0xc0] sm:$0xff]
      %v1440 = vld [vmem:[#allocation2 + $0xc8] sm:$0xff]
      %v1441 = vld [vmem:[#allocation2 + $0xd0] sm:$0xff]
      %v1442 = vld [vmem:[#allocation2 + $0xd8] sm:$0xff]
      %v1443 = vld [vmem:[#allocation2 + $0xe0] sm:$0xff]
      %v1444 = vld [vmem:[#allocation2 + $0xe8] sm:$0xff]
      %v1445 = vld [vmem:[#allocation2 + $0xf0] sm:$0xff]
      %v1446 = vld [vmem:[#allocation2 + $0xf8] sm:$0xff]
      %v1447 = vld [vmem:[#allocation2 + $0x100] sm:$0xff]
      %v1448 = vpack.c.bf16 %v1417, %v1416
      %v1449 = vpack.c.bf16 %v1419, %v1418
      %v1450 = vpack.c.bf16 %v1421, %v1420
      %v1451 = vpack.c.bf16 %v1423, %v1422
      %v1452 = vpack.c.bf16 %v1425, %v1424
      %v1453 = vpack.c.bf16 %v1427, %v1426
      %v1454 = vpack.c.bf16 %v1429, %v1428
      %v1455 = vpack.c.bf16 %v1431, %v1430
      %v1456 = vpack.c.bf16 %v1433, %v1432
      %v1457 = vpack.c.bf16 %v1435, %v1434
      %v1458 = vpack.c.bf16 %v1437, %v1436
      %v1459 = vpack.c.bf16 %v1439, %v1438
      %v1460 = vpack.c.bf16 %v1441, %v1440
      %v1461 = vpack.c.bf16 %v1443, %v1442
      %v1462 = vpack.c.bf16 %v1445, %v1444
      %v1463 = vpack.c.bf16 %v1447, %v1446
      %s1464 = scalar_lea.vmem %s3, 4
      %v1465 = vld [vmem:[%s1464] sm:$0xf]
      %v1467 = vsel %vm727, %v1448, 0
      %v1470 = vsel %vm727, %v1449, 0
      %v1473 = vsel %vm727, %v1450, 0
      %v1476 = vsel %vm727, %v1451, 0
      %v1479 = vsel %vm727, %v1452, 0
      %v1482 = vsel %vm727, %v1453, 0
      %v1485 = vsel %vm727, %v1454, 0
      %v1488 = vsel %vm727, %v1455, 0
      %v1491 = vsel %vm727, %v1456, 0
      %v1494 = vsel %vm727, %v1457, 0
      %v1497 = vsel %vm727, %v1458, 0
      %v1500 = vsel %vm727, %v1459, 0
      %v1503 = vsel %vm727, %v1460, 0
      %v1506 = vsel %vm727, %v1461, 0
      %v1509 = vsel %vm727, %v1462, 0
      %v1512 = vsel %vm727, %v1463, 0
      %v1515 = vsel %vm931, %v1465, 0
      %1517 = vmatprep.subr.bf16.mxu0 0
      %1518 = vmatpush1.bf16.msra.mxu0 %v1515
      %1519 = vmatprep.subr.bf16.mxu0 0
      %1520 = vmatpush1.bf16.msra.mxu0 0
      %1521 = vmatprep.subr.bf16.mxu0 0
      %1522 = vmatpush1.bf16.msra.mxu0 0
      %1523 = vmatprep.subr.bf16.mxu0 0
      %1524 = vmatpush1.bf16.msra.mxu0 0
      %1525 = vmatprep.subr.bf16.mxu0 0
      %1526 = vmatpush1.bf16.msra.mxu0 0
      %1527 = vmatprep.subr.bf16.mxu0 0
      %1528 = vmatpush1.bf16.msra.mxu0 0
      %1529 = vmatprep.subr.bf16.mxu0 0
      %1530 = vmatpush1.bf16.msra.mxu0 0
      %1531 = vmatprep.subr.bf16.mxu0 0
      %1532 = vmatpush1.bf16.msra.mxu0 0
      %1533 = vmatprep.subr.bf16.mxu0 0
      %1534 = vmatpush1.bf16.msra.mxu0 0
      %1535 = vmatprep.subr.bf16.mxu0 0
      %1536 = vmatpush1.bf16.msra.mxu0 0
      %1537 = vmatprep.subr.bf16.mxu0 0
      %1538 = vmatpush1.bf16.msra.mxu0 0
      %1539 = vmatprep.subr.bf16.mxu0 0
      %1540 = vmatpush1.bf16.msra.mxu0 0
      %1541 = vmatprep.subr.bf16.mxu0 0
      %1542 = vmatpush1.bf16.msra.mxu0 0
      %1543 = vmatprep.subr.bf16.mxu0 0
      %1544 = vmatpush1.bf16.msra.mxu0 0
      %1545 = vmatprep.subr.bf16.mxu0 0
      %1546 = vmatpush1.bf16.msra.mxu0 0
      %1547 = vmatprep.subr.bf16.mxu0 0
      %1548 = vmatpush1.bf16.msra.mxu0 0
      %1549 = vmatprep.mubr.bf16.mxu0 0
      %1550 = vmatmul.mubr.bf16.gmra.mrb[0].mxu0 %v1467
      %v1551 = vpop.f32.mrb[0].mxu0
      %v1552 = vadd.f32 0.0, %v1551
      %v1553 = vpop.f32.mrb[0].mxu0
      %v1554 = vpop.f32.mrb[0].mxu0
      %v1555 = vadd.f32 0.0, %v1554
      %v1556 = vpop.f32.mrb[0].mxu0
      %1557 = vmatprep.mubr.bf16.mxu0 0
      %1558 = vmatmul.mubr.bf16.gmra.mrb[0].mxu0 %v1470
      %v1559 = vpop.f32.mrb[0].mxu0
      %v1560 = vadd.f32 0.0, %v1559
      %v1561 = vpop.f32.mrb[0].mxu0
      %v1562 = vpop.f32.mrb[0].mxu0
      %v1563 = vadd.f32 0.0, %v1562
      %v1564 = vpop.f32.mrb[0].mxu0
      %1565 = vmatprep.mubr.bf16.mxu0 0
      %1566 = vmatmul.mubr.bf16.gmra.mrb[0].mxu0 %v1473
      %v1567 = vpop.f32.mrb[0].mxu0
      %v1568 = vadd.f32 0.0, %v1567
      %v1569 = vpop.f32.mrb[0].mxu0
      %v1570 = vpop.f32.mrb[0].mxu0
      %v1571 = vadd.f32 0.0, %v1570
      %v1572 = vpop.f32.mrb[0].mxu0
      %1573 = vmatprep.mubr.bf16.mxu0 0
      %1574 = vmatmul.mubr.bf16.gmra.mrb[0].mxu0 %v1476
      %v1575 = vpop.f32.mrb[0].mxu0
      %v1576 = vadd.f32 0.0, %v1575
      %v1577 = vpop.f32.mrb[0].mxu0
      %v1578 = vpop.f32.mrb[0].mxu0
      %v1579 = vadd.f32 0.0, %v1578
      %v1580 = vpop.f32.mrb[0].mxu0
      %1581 = vmatprep.mubr.bf16.mxu0 0
      %1582 = vmatmul.mubr.bf16.gmra.mrb[0].mxu0 %v1479
      %v1583 = vpop.f32.mrb[0].mxu0
      %v1584 = vadd.f32 0.0, %v1583
      %v1585 = vpop.f32.mrb[0].mxu0
      %v1586 = vpop.f32.mrb[0].mxu0
      %v1587 = vadd.f32 0.0, %v1586
      %v1588 = vpop.f32.mrb[0].mxu0
      %1589 = vmatprep.mubr.bf16.mxu0 0
      %1590 = vmatmul.mubr.bf16.gmra.mrb[0].mxu0 %v1482
      %v1591 = vpop.f32.mrb[0].mxu0
      %v1592 = vadd.f32 0.0, %v1591
      %v1593 = vpop.f32.mrb[0].mxu0
      %v1594 = vpop.f32.mrb[0].mxu0
      %v1595 = vadd.f32 0.0, %v1594
      %v1596 = vpop.f32.mrb[0].mxu0
      %1597 = vmatprep.mubr.bf16.mxu0 0
      %1598 = vmatmul.mubr.bf16.gmra.mrb[0].mxu0 %v1485
      %v1599 = vpop.f32.mrb[0].mxu0
      %v1600 = vadd.f32 0.0, %v1599
      %v1601 = vpop.f32.mrb[0].mxu0
      %v1602 = vpop.f32.mrb[0].mxu0
      %v1603 = vadd.f32 0.0, %v1602
      %v1604 = vpop.f32.mrb[0].mxu0
      %1605 = vmatprep.mubr.bf16.mxu0 0
      %1606 = vmatmul.mubr.bf16.gmra.mrb[0].mxu0 %v1488
      %v1607 = vpop.f32.mrb[0].mxu0
      %v1608 = vadd.f32 0.0, %v1607
      %v1609 = vpop.f32.mrb[0].mxu0
      %v1610 = vpop.f32.mrb[0].mxu0
      %v1611 = vadd.f32 0.0, %v1610
      %v1612 = vpop.f32.mrb[0].mxu0
      %1613 = vmatprep.mubr.bf16.mxu0 0
      %1614 = vmatmul.mubr.bf16.gmra.mrb[0].mxu0 %v1491
      %v1615 = vpop.f32.mrb[0].mxu0
      %v1616 = vadd.f32 0.0, %v1615
      %v1617 = vpop.f32.mrb[0].mxu0
      %v1618 = vpop.f32.mrb[0].mxu0
      %v1619 = vadd.f32 0.0, %v1618
      %v1620 = vpop.f32.mrb[0].mxu0
      %1621 = vmatprep.mubr.bf16.mxu0 0
      %1622 = vmatmul.mubr.bf16.gmra.mrb[0].mxu0 %v1494
      %v1623 = vpop.f32.mrb[0].mxu0
      %v1624 = vadd.f32 0.0, %v1623
      %v1625 = vpop.f32.mrb[0].mxu0
      %v1626 = vpop.f32.mrb[0].mxu0
      %v1627 = vadd.f32 0.0, %v1626
      %v1628 = vpop.f32.mrb[0].mxu0
      %1629 = vmatprep.mubr.bf16.mxu0 0
      %1630 = vmatmul.mubr.bf16.gmra.mrb[0].mxu0 %v1497
      %v1631 = vpop.f32.mrb[0].mxu0
      %v1632 = vadd.f32 0.0, %v1631
      %v1633 = vpop.f32.mrb[0].mxu0
      %v1634 = vpop.f32.mrb[0].mxu0
      %v1635 = vadd.f32 0.0, %v1634
      %v1636 = vpop.f32.mrb[0].mxu0
      %1637 = vmatprep.mubr.bf16.mxu0 0
      %1638 = vmatmul.mubr.bf16.gmra.mrb[0].mxu0 %v1500
      %v1639 = vpop.f32.mrb[0].mxu0
      %v1640 = vadd.f32 0.0, %v1639
      %v1641 = vpop.f32.mrb[0].mxu0
      %v1642 = vpop.f32.mrb[0].mxu0
      %v1643 = vadd.f32 0.0, %v1642
      %v1644 = vpop.f32.mrb[0].mxu0
      %1645 = vmatprep.mubr.bf16.mxu0 0
      %1646 = vmatmul.mubr.bf16.gmra.mrb[0].mxu0 %v1503
      %v1647 = vpop.f32.mrb[0].mxu0
      %v1648 = vadd.f32 0.0, %v1647
      %v1649 = vpop.f32.mrb[0].mxu0
      %v1650 = vpop.f32.mrb[0].mxu0
      %v1651 = vadd.f32 0.0, %v1650
      %v1652 = vpop.f32.mrb[0].mxu0
      %1653 = vmatprep.mubr.bf16.mxu0 0
      %1654 = vmatmul.mubr.bf16.gmra.mrb[0].mxu0 %v1506
      %v1655 = vpop.f32.mrb[0].mxu0
      %v1656 = vadd.f32 0.0, %v1655
      %v1657 = vpop.f32.mrb[0].mxu0
      %v1658 = vpop.f32.mrb[0].mxu0
      %v1659 = vadd.f32 0.0, %v1658
      %v1660 = vpop.f32.mrb[0].mxu0
      %1661 = vmatprep.mubr.bf16.mxu0 0
      %1662 = vmatmul.mubr.bf16.gmra.mrb[0].mxu0 %v1509
      %v1663 = vpop.f32.mrb[0].mxu0
      %v1664 = vadd.f32 0.0, %v1663
      %v1665 = vpop.f32.mrb[0].mxu0
      %v1666 = vpop.f32.mrb[0].mxu0
      %v1667 = vadd.f32 0.0, %v1666
      %v1668 = vpop.f32.mrb[0].mxu0
      %1669 = vmatprep.mubr.bf16.mxu0 0
      %1670 = vmatmul.mubr.bf16.gmra.mrb[0].mxu0 %v1512
      %v1671 = vpop.f32.mrb[0].mxu0
      %v1672 = vadd.f32 0.0, %v1671
      %v1673 = vpop.f32.mrb[0].mxu0
      %v1674 = vpop.f32.mrb[0].mxu0
      %v1675 = vadd.f32 0.0, %v1674
      %v1676 = vpop.f32.mrb[0].mxu0
      %1677 = vdwg.mxu0
      %v1678 = vld [vmem:[#allocation3] sm:$0xff]
      %v1679 = vld [vmem:[#allocation3 + $0x8] sm:$0xff]
      %v1680 = vld [vmem:[#allocation3 + $0x10] sm:$0xff]
      %v1681 = vld [vmem:[#allocation3 + $0x18] sm:$0xff]
      %v1682 = vld [vmem:[#allocation3 + $0x20] sm:$0xff]
      %v1683 = vld [vmem:[#allocation3 + $0x28] sm:$0xff]
      %v1684 = vld [vmem:[#allocation3 + $0x30] sm:$0xff]
      %v1685 = vld [vmem:[#allocation3 + $0x38] sm:$0xff]
      %v1686 = vld [vmem:[#allocation3 + $0x40] sm:$0xff]
      %v1687 = vld [vmem:[#allocation3 + $0x48] sm:$0xff]
      %v1688 = vld [vmem:[#allocation3 + $0x50] sm:$0xff]
      %v1689 = vld [vmem:[#allocation3 + $0x58] sm:$0xff]
      %v1690 = vld [vmem:[#allocation3 + $0x60] sm:$0xff]
      %v1691 = vld [vmem:[#allocation3 + $0x68] sm:$0xff]
      %v1692 = vld [vmem:[#allocation3 + $0x70] sm:$0xff]
      %v1693 = vld [vmem:[#allocation3 + $0x78] sm:$0xff]
      %v1694 = vld [vmem:[#allocation3 + $0x80] sm:$0xff]
      %v1695 = vld [vmem:[#allocation3 + $0x88] sm:$0xff]
      %v1696 = vld [vmem:[#allocation3 + $0x90] sm:$0xff]
      %v1697 = vld [vmem:[#allocation3 + $0x98] sm:$0xff]
      %v1698 = vld [vmem:[#allocation3 + $0xa0] sm:$0xff]
      %v1699 = vld [vmem:[#allocation3 + $0xa8] sm:$0xff]
      %v1700 = vld [vmem:[#allocation3 + $0xb0] sm:$0xff]
      %v1701 = vld [vmem:[#allocation3 + $0xb8] sm:$0xff]
      %v1702 = vld [vmem:[#allocation3 + $0xc0] sm:$0xff]
      %v1703 = vld [vmem:[#allocation3 + $0xc8] sm:$0xff]
      %v1704 = vld [vmem:[#allocation3 + $0xd0] sm:$0xff]
      %v1705 = vld [vmem:[#allocation3 + $0xd8] sm:$0xff]
      %v1706 = vld [vmem:[#allocation3 + $0xe0] sm:$0xff]
      %v1707 = vld [vmem:[#allocation3 + $0xe8] sm:$0xff]
      %v1708 = vld [vmem:[#allocation3 + $0xf0] sm:$0xff]
      %v1709 = vld [vmem:[#allocation3 + $0xf8] sm:$0xff]
      %s1710 = scalar_lea.vmem %s1, 256
      %v1711 = vld [vmem:[%s1710] sm:$0xff]
      %v1712 = vld [vmem:[%s1710 + $0x8] sm:$0xff]
      %v1713 = vld [vmem:[%s1710 + $0x10] sm:$0xff]
      %v1714 = vld [vmem:[%s1710 + $0x18] sm:$0xff]
      %v1715 = vld [vmem:[%s1710 + $0x20] sm:$0xff]
      %v1716 = vld [vmem:[%s1710 + $0x28] sm:$0xff]
      %v1717 = vld [vmem:[%s1710 + $0x30] sm:$0xff]
      %v1718 = vld [vmem:[%s1710 + $0x38] sm:$0xff]
      %v1719 = vld [vmem:[%s1710 + $0x40] sm:$0xff]
      %v1720 = vld [vmem:[%s1710 + $0x48] sm:$0xff]
      %v1721 = vld [vmem:[%s1710 + $0x50] sm:$0xff]
      %v1722 = vld [vmem:[%s1710 + $0x58] sm:$0xff]
      %v1723 = vld [vmem:[%s1710 + $0x60] sm:$0xff]
      %v1724 = vld [vmem:[%s1710 + $0x68] sm:$0xff]
      %v1725 = vld [vmem:[%s1710 + $0x70] sm:$0xff]
      %v1726 = vld [vmem:[%s1710 + $0x78] sm:$0xff]
      %v1727 = vld [vmem:[%s1710 + $0x80] sm:$0xff]
      %v1728 = vld [vmem:[%s1710 + $0x88] sm:$0xff]
      %v1729 = vld [vmem:[%s1710 + $0x90] sm:$0xff]
      %v1730 = vld [vmem:[%s1710 + $0x98] sm:$0xff]
      %v1731 = vld [vmem:[%s1710 + $0xa0] sm:$0xff]
      %v1732 = vld [vmem:[%s1710 + $0xa8] sm:$0xff]
      %v1733 = vld [vmem:[%s1710 + $0xb0] sm:$0xff]
      %v1734 = vld [vmem:[%s1710 + $0xb8] sm:$0xff]
      %v1735 = vld [vmem:[%s1710 + $0xc0] sm:$0xff]
      %v1736 = vld [vmem:[%s1710 + $0xc8] sm:$0xff]
      %v1737 = vld [vmem:[%s1710 + $0xd0] sm:$0xff]
      %v1738 = vld [vmem:[%s1710 + $0xd8] sm:$0xff]
      %v1739 = vld [vmem:[%s1710 + $0xe0] sm:$0xff]
      %v1740 = vld [vmem:[%s1710 + $0xe8] sm:$0xff]
      %v1741 = vld [vmem:[%s1710 + $0xf0] sm:$0xff]
      %v1742 = vld [vmem:[%s1710 + $0xf8] sm:$0xff]
      %1744 = vset.pattern.permute.xlu0 0
      %1745 = vperm.xlu0 %1744, %v1711
      %v1746 = vpop.permute.xlu0 %1745
      %1749 = vset.pattern.permute.xlu0 0
      %1750 = vperm.xlu0 %1749, %v1712
      %v1751 = vpop.permute.xlu0 %1750
      %1754 = vset.pattern.permute.xlu0 0
      %1755 = vperm.xlu0 %1754, %v1713
      %v1756 = vpop.permute.xlu0 %1755
      %1759 = vset.pattern.permute.xlu0 0
      %1760 = vperm.xlu0 %1759, %v1714
      %v1761 = vpop.permute.xlu0 %1760
      %1764 = vset.pattern.permute.xlu0 0
      %1765 = vperm.xlu0 %1764, %v1715
      %v1766 = vpop.permute.xlu0 %1765
      %1769 = vset.pattern.permute.xlu0 0
      %1770 = vperm.xlu0 %1769, %v1716
      %v1771 = vpop.permute.xlu0 %1770
      %1774 = vset.pattern.permute.xlu0 0
      %1775 = vperm.xlu0 %1774, %v1717
      %v1776 = vpop.permute.xlu0 %1775
      %1779 = vset.pattern.permute.xlu0 0
      %1780 = vperm.xlu0 %1779, %v1718
      %v1781 = vpop.permute.xlu0 %1780
      %1784 = vset.pattern.permute.xlu0 0
      %1785 = vperm.xlu0 %1784, %v1719
      %v1786 = vpop.permute.xlu0 %1785
      %1789 = vset.pattern.permute.xlu0 0
      %1790 = vperm.xlu0 %1789, %v1720
      %v1791 = vpop.permute.xlu0 %1790
      %1794 = vset.pattern.permute.xlu0 0
      %1795 = vperm.xlu0 %1794, %v1721
      %v1796 = vpop.permute.xlu0 %1795
      %1799 = vset.pattern.permute.xlu0 0
      %1800 = vperm.xlu0 %1799, %v1722
      %v1801 = vpop.permute.xlu0 %1800
      %1804 = vset.pattern.permute.xlu0 0
      %1805 = vperm.xlu0 %1804, %v1723
      %v1806 = vpop.permute.xlu0 %1805
      %1809 = vset.pattern.permute.xlu0 0
      %1810 = vperm.xlu0 %1809, %v1724
      %v1811 = vpop.permute.xlu0 %1810
      %1814 = vset.pattern.permute.xlu0 0
      %1815 = vperm.xlu0 %1814, %v1725
      %v1816 = vpop.permute.xlu0 %1815
      %1819 = vset.pattern.permute.xlu0 0
      %1820 = vperm.xlu0 %1819, %v1726
      %v1821 = vpop.permute.xlu0 %1820
      %1824 = vset.pattern.permute.xlu0 0
      %1825 = vperm.xlu0 %1824, %v1727
      %v1826 = vpop.permute.xlu0 %1825
      %1829 = vset.pattern.permute.xlu0 0
      %1830 = vperm.xlu0 %1829, %v1728
      %v1831 = vpop.permute.xlu0 %1830
      %1834 = vset.pattern.permute.xlu0 0
      %1835 = vperm.xlu0 %1834, %v1729
      %v1836 = vpop.permute.xlu0 %1835
      %1839 = vset.pattern.permute.xlu0 0
      %1840 = vperm.xlu0 %1839, %v1730
      %v1841 = vpop.permute.xlu0 %1840
      %1844 = vset.pattern.permute.xlu0 0
      %1845 = vperm.xlu0 %1844, %v1731
      %v1846 = vpop.permute.xlu0 %1845
      %1849 = vset.pattern.permute.xlu0 0
      %1850 = vperm.xlu0 %1849, %v1732
      %v1851 = vpop.permute.xlu0 %1850
      %1854 = vset.pattern.permute.xlu0 0
      %1855 = vperm.xlu0 %1854, %v1733
      %v1856 = vpop.permute.xlu0 %1855
      %1859 = vset.pattern.permute.xlu0 0
      %1860 = vperm.xlu0 %1859, %v1734
      %v1861 = vpop.permute.xlu0 %1860
      %1864 = vset.pattern.permute.xlu0 0
      %1865 = vperm.xlu0 %1864, %v1735
      %v1866 = vpop.permute.xlu0 %1865
      %1869 = vset.pattern.permute.xlu0 0
      %1870 = vperm.xlu0 %1869, %v1736
      %v1871 = vpop.permute.xlu0 %1870
      %1874 = vset.pattern.permute.xlu0 0
      %1875 = vperm.xlu0 %1874, %v1737
      %v1876 = vpop.permute.xlu0 %1875
      %1879 = vset.pattern.permute.xlu0 0
      %1880 = vperm.xlu0 %1879, %v1738
      %v1881 = vpop.permute.xlu0 %1880
      %1884 = vset.pattern.permute.xlu0 0
      %1885 = vperm.xlu0 %1884, %v1739
      %v1886 = vpop.permute.xlu0 %1885
      %1889 = vset.pattern.permute.xlu0 0
      %1890 = vperm.xlu0 %1889, %v1740
      %v1891 = vpop.permute.xlu0 %1890
      %1894 = vset.pattern.permute.xlu0 0
      %1895 = vperm.xlu0 %1894, %v1741
      %v1896 = vpop.permute.xlu0 %1895
      %1899 = vset.pattern.permute.xlu0 0
      %1900 = vperm.xlu0 %1899, %v1742
      %v1901 = vpop.permute.xlu0 %1900
      %v1903 = vmul.f32 %v1552, %v1746
      %v1904 = vmul.f32 %v1555, %v1751
      %v1905 = vmul.f32 %v1560, %v1756
      %v1906 = vmul.f32 %v1563, %v1761
      %v1907 = vmul.f32 %v1568, %v1766
      %v1908 = vmul.f32 %v1571, %v1771
      %v1909 = vmul.f32 %v1576, %v1776
      %v1910 = vmul.f32 %v1579, %v1781
      %v1911 = vmul.f32 %v1584, %v1786
      %v1912 = vmul.f32 %v1587, %v1791
      %v1913 = vmul.f32 %v1592, %v1796
      %v1914 = vmul.f32 %v1595, %v1801
      %v1915 = vmul.f32 %v1600, %v1806
      %v1916 = vmul.f32 %v1603, %v1811
      %v1917 = vmul.f32 %v1608, %v1816
      %v1918 = vmul.f32 %v1611, %v1821
      %v1919 = vmul.f32 %v1616, %v1826
      %v1920 = vmul.f32 %v1619, %v1831
      %v1921 = vmul.f32 %v1624, %v1836
      %v1922 = vmul.f32 %v1627, %v1841
      %v1923 = vmul.f32 %v1632, %v1846
      %v1924 = vmul.f32 %v1635, %v1851
      %v1925 = vmul.f32 %v1640, %v1856
      %v1926 = vmul.f32 %v1643, %v1861
      %v1927 = vmul.f32 %v1648, %v1866
      %v1928 = vmul.f32 %v1651, %v1871
      %v1929 = vmul.f32 %v1656, %v1876
      %v1930 = vmul.f32 %v1659, %v1881
      %v1931 = vmul.f32 %v1664, %v1886
      %v1932 = vmul.f32 %v1667, %v1891
      %v1933 = vmul.f32 %v1672, %v1896
      %v1934 = vmul.f32 %v1675, %v1901
      %v1935 = vadd.f32 %v1678, %v1903
      %v1936 = vadd.f32 %v1679, %v1904
      %v1937 = vadd.f32 %v1680, %v1905
      %v1938 = vadd.f32 %v1681, %v1906
      %v1939 = vadd.f32 %v1682, %v1907
      %v1940 = vadd.f32 %v1683, %v1908
      %v1941 = vadd.f32 %v1684, %v1909
      %v1942 = vadd.f32 %v1685, %v1910
      %v1943 = vadd.f32 %v1686, %v1911
      %v1944 = vadd.f32 %v1687, %v1912
      %v1945 = vadd.f32 %v1688, %v1913
      %v1946 = vadd.f32 %v1689, %v1914
      %v1947 = vadd.f32 %v1690, %v1915
      %v1948 = vadd.f32 %v1691, %v1916
      %v1949 = vadd.f32 %v1692, %v1917
      %v1950 = vadd.f32 %v1693, %v1918
      %v1951 = vadd.f32 %v1694, %v1919
      %v1952 = vadd.f32 %v1695, %v1920
      %v1953 = vadd.f32 %v1696, %v1921
      %v1954 = vadd.f32 %v1697, %v1922
      %v1955 = vadd.f32 %v1698, %v1923
      %v1956 = vadd.f32 %v1699, %v1924
      %v1957 = vadd.f32 %v1700, %v1925
      %v1958 = vadd.f32 %v1701, %v1926
      %v1959 = vadd.f32 %v1702, %v1927
      %v1960 = vadd.f32 %v1703, %v1928
      %v1961 = vadd.f32 %v1704, %v1929
      %v1962 = vadd.f32 %v1705, %v1930
      %v1963 = vadd.f32 %v1706, %v1931
      %v1964 = vadd.f32 %v1707, %v1932
      %v1965 = vadd.f32 %v1708, %v1933
      %v1966 = vadd.f32 %v1709, %v1934
      %1967 = vst.msk [vmem:[#allocation3] sm:$0xff] %vm727, %v1935
      %1968 = vst.msk [vmem:[#allocation3 + $0x8] sm:$0xff] %vm727, %v1936
      %1969 = vst.msk [vmem:[#allocation3 + $0x10] sm:$0xff] %vm727, %v1937
      %1970 = vst.msk [vmem:[#allocation3 + $0x18] sm:$0xff] %vm727, %v1938
      %1971 = vst.msk [vmem:[#allocation3 + $0x20] sm:$0xff] %vm727, %v1939
      %1972 = vst.msk [vmem:[#allocation3 + $0x28] sm:$0xff] %vm727, %v1940
      %1973 = vst.msk [vmem:[#allocation3 + $0x30] sm:$0xff] %vm727, %v1941
      %1974 = vst.msk [vmem:[#allocation3 + $0x38] sm:$0xff] %vm727, %v1942
      %1975 = vst.msk [vmem:[#allocation3 + $0x40] sm:$0xff] %vm727, %v1943
      %1976 = vst.msk [vmem:[#allocation3 + $0x48] sm:$0xff] %vm727, %v1944
      %1977 = vst.msk [vmem:[#allocation3 + $0x50] sm:$0xff] %vm727, %v1945
      %1978 = vst.msk [vmem:[#allocation3 + $0x58] sm:$0xff] %vm727, %v1946
      %1979 = vst.msk [vmem:[#allocation3 + $0x60] sm:$0xff] %vm727, %v1947
      %1980 = vst.msk [vmem:[#allocation3 + $0x68] sm:$0xff] %vm727, %v1948
      %1981 = vst.msk [vmem:[#allocation3 + $0x70] sm:$0xff] %vm727, %v1949
      %1982 = vst.msk [vmem:[#allocation3 + $0x78] sm:$0xff] %vm727, %v1950
      %1983 = vst.msk [vmem:[#allocation3 + $0x80] sm:$0xff] %vm727, %v1951
      %1984 = vst.msk [vmem:[#allocation3 + $0x88] sm:$0xff] %vm727, %v1952
      %1985 = vst.msk [vmem:[#allocation3 + $0x90] sm:$0xff] %vm727, %v1953
      %1986 = vst.msk [vmem:[#allocation3 + $0x98] sm:$0xff] %vm727, %v1954
      %1987 = vst.msk [vmem:[#allocation3 + $0xa0] sm:$0xff] %vm727, %v1955
      %1988 = vst.msk [vmem:[#allocation3 + $0xa8] sm:$0xff] %vm727, %v1956
      %1989 = vst.msk [vmem:[#allocation3 + $0xb0] sm:$0xff] %vm727, %v1957
      %1990 = vst.msk [vmem:[#allocation3 + $0xb8] sm:$0xff] %vm727, %v1958
      %1991 = vst.msk [vmem:[#allocation3 + $0xc0] sm:$0xff] %vm727, %v1959
      %1992 = vst.msk [vmem:[#allocation3 + $0xc8] sm:$0xff] %vm727, %v1960
      %1993 = vst.msk [vmem:[#allocation3 + $0xd0] sm:$0xff] %vm727, %v1961
      %1994 = vst.msk [vmem:[#allocation3 + $0xd8] sm:$0xff] %vm727, %v1962
      %1995 = vst.msk [vmem:[#allocation3 + $0xe0] sm:$0xff] %vm727, %v1963
      %1996 = vst.msk [vmem:[#allocation3 + $0xe8] sm:$0xff] %vm727, %v1964
      %1997 = vst.msk [vmem:[#allocation3 + $0xf0] sm:$0xff] %vm727, %v1965
      %1998 = vst.msk [vmem:[#allocation3 + $0xf8] sm:$0xff] %vm727, %v1966
      %v1999 = vld [vmem:[#allocation2 + $0xa] sm:$0xff]
      %v2000 = vld [vmem:[#allocation2 + $0x12] sm:$0xff]
      %v2001 = vld [vmem:[#allocation2 + $0x1a] sm:$0xff]
      %v2002 = vld [vmem:[#allocation2 + $0x22] sm:$0xff]
      %v2003 = vld [vmem:[#allocation2 + $0x2a] sm:$0xff]
      %v2004 = vld [vmem:[#allocation2 + $0x32] sm:$0xff]
      %v2005 = vld [vmem:[#allocation2 + $0x3a] sm:$0xff]
      %v2006 = vld [vmem:[#allocation2 + $0x42] sm:$0xff]
      %v2007 = vld [vmem:[#allocation2 + $0x4a] sm:$0xff]
      %v2008 = vld [vmem:[#allocation2 + $0x52] sm:$0xff]
      %v2009 = vld [vmem:[#allocation2 + $0x5a] sm:$0xff]
      %v2010 = vld [vmem:[#allocation2 + $0x62] sm:$0xff]
      %v2011 = vld [vmem:[#allocation2 + $0x6a] sm:$0xff]
      %v2012 = vld [vmem:[#allocation2 + $0x72] sm:$0xff]
      %v2013 = vld [vmem:[#allocation2 + $0x7a] sm:$0xff]
      %v2014 = vld [vmem:[#allocation2 + $0x82] sm:$0xff]
      %v2015 = vld [vmem:[#allocation2 + $0x8a] sm:$0xff]
      %v2016 = vld [vmem:[#allocation2 + $0x92] sm:$0xff]
      %v2017 = vld [vmem:[#allocation2 + $0x9a] sm:$0xff]
      %v2018 = vld [vmem:[#allocation2 + $0xa2] sm:$0xff]
      %v2019 = vld [vmem:[#allocation2 + $0xaa] sm:$0xff]
      %v2020 = vld [vmem:[#allocation2 + $0xb2] sm:$0xff]
      %v2021 = vld [vmem:[#allocation2 + $0xba] sm:$0xff]
      %v2022 = vld [vmem:[#allocation2 + $0xc2] sm:$0xff]
      %v2023 = vld [vmem:[#allocation2 + $0xca] sm:$0xff]
      %v2024 = vld [vmem:[#allocation2 + $0xd2] sm:$0xff]
      %v2025 = vld [vmem:[#allocation2 + $0xda] sm:$0xff]
      %v2026 = vld [vmem:[#allocation2 + $0xe2] sm:$0xff]
      %v2027 = vld [vmem:[#allocation2 + $0xea] sm:$0xff]
      %v2028 = vld [vmem:[#allocation2 + $0xf2] sm:$0xff]
      %v2029 = vld [vmem:[#allocation2 + $0xfa] sm:$0xff]
      %v2030 = vld [vmem:[#allocation2 + $0x102] sm:$0xff]
      %v2031 = vpack.c.bf16 %v2000, %v1999
      %v2032 = vpack.c.bf16 %v2002, %v2001
      %v2033 = vpack.c.bf16 %v2004, %v2003
      %v2034 = vpack.c.bf16 %v2006, %v2005
      %v2035 = vpack.c.bf16 %v2008, %v2007
      %v2036 = vpack.c.bf16 %v2010, %v2009
      %v2037 = vpack.c.bf16 %v2012, %v2011
      %v2038 = vpack.c.bf16 %v2014, %v2013
      %v2039 = vpack.c.bf16 %v2016, %v2015
      %v2040 = vpack.c.bf16 %v2018, %v2017
      %v2041 = vpack.c.bf16 %v2020, %v2019
      %v2042 = vpack.c.bf16 %v2022, %v2021
      %v2043 = vpack.c.bf16 %v2024, %v2023
      %v2044 = vpack.c.bf16 %v2026, %v2025
      %v2045 = vpack.c.bf16 %v2028, %v2027
      %v2046 = vpack.c.bf16 %v2030, %v2029
      %s2047 = scalar_lea.vmem %s3, 8
      %v2048 = vld [vmem:[%s2047] sm:$0xf]
      %v2050 = vsel %vm727, %v2031, 0
      %v2053 = vsel %vm727, %v2032, 0
      %v2056 = vsel %vm727, %v2033, 0
      %v2059 = vsel %vm727, %v2034, 0
      %v2062 = vsel %vm727, %v2035, 0
      %v2065 = vsel %vm727, %v2036, 0
      %v2068 = vsel %vm727, %v2037, 0
      %v2071 = vsel %vm727, %v2038, 0
      %v2074 = vsel %vm727, %v2039, 0
      %v2077 = vsel %vm727, %v2040, 0
      %v2080 = vsel %vm727, %v2041, 0
      %v2083 = vsel %vm727, %v2042, 0
      %v2086 = vsel %vm727, %v2043, 0
      %v2089 = vsel %vm727, %v2044, 0
      %v2092 = vsel %vm727, %v2045, 0
      %v2095 = vsel %vm727, %v2046, 0
      %v2098 = vsel %vm931, %v2048, 0
      %2100 = vmatprep.subr.bf16.mxu0 0
      %2101 = vmatpush1.bf16.msra.mxu0 %v2098
      %2102 = vmatprep.subr.bf16.mxu0 0
      %2103 = vmatpush1.bf16.msra.mxu0 0
      %2104 = vmatprep.subr.bf16.mxu0 0
      %2105 = vmatpush1.bf16.msra.mxu0 0
      %2106 = vmatprep.subr.bf16.mxu0 0
      %2107 = vmatpush1.bf16.msra.mxu0 0
      %2108 = vmatprep.subr.bf16.mxu0 0
      %2109 = vmatpush1.bf16.msra.mxu0 0
      %2110 = vmatprep.subr.bf16.mxu0 0
      %2111 = vmatpush1.bf16.msra.mxu0 0
      %2112 = vmatprep.subr.bf16.mxu0 0
      %2113 = vmatpush1.bf16.msra.mxu0 0
      %2114 = vmatprep.subr.bf16.mxu0 0
      %2115 = vmatpush1.bf16.msra.mxu0 0
      %2116 = vmatprep.subr.bf16.mxu0 0
      %2117 = vmatpush1.bf16.msra.mxu0 0
      %2118 = vmatprep.subr.bf16.mxu0 0
      %2119 = vmatpush1.bf16.msra.mxu0 0
      %2120 = vmatprep.subr.bf16.mxu0 0
      %2121 = vmatpush1.bf16.msra.mxu0 0
      %2122 = vmatprep.subr.bf16.mxu0 0
      %2123 = vmatpush1.bf16.msra.mxu0 0
      %2124 = vmatprep.subr.bf16.mxu0 0
      %2125 = vmatpush1.bf16.msra.mxu0 0
      %2126 = vmatprep.subr.bf16.mxu0 0
      %2127 = vmatpush1.bf16.msra.mxu0 0
      %2128 = vmatprep.subr.bf16.mxu0 0
      %2129 = vmatpush1.bf16.msra.mxu0 0
      %2130 = vmatprep.subr.bf16.mxu0 0
      %2131 = vmatpush1.bf16.msra.mxu0 0
      %2132 = vmatprep.mubr.bf16.mxu0 0
      %2133 = vmatmul.mubr.bf16.gmra.mrb[0].mxu0 %v2050
      %v2134 = vpop.f32.mrb[0].mxu0
      %v2135 = vadd.f32 0.0, %v2134
      %v2136 = vpop.f32.mrb[0].mxu0
      %v2137 = vpop.f32.mrb[0].mxu0
      %v2138 = vadd.f32 0.0, %v2137
      %v2139 = vpop.f32.mrb[0].mxu0
      %2140 = vmatprep.mubr.bf16.mxu0 0
      %2141 = vmatmul.mubr.bf16.gmra.mrb[0].mxu0 %v2053
      %v2142 = vpop.f32.mrb[0].mxu0
      %v2143 = vadd.f32 0.0, %v2142
      %v2144 = vpop.f32.mrb[0].mxu0
      %v2145 = vpop.f32.mrb[0].mxu0
      %v2146 = vadd.f32 0.0, %v2145
      %v2147 = vpop.f32.mrb[0].mxu0
      %2148 = vmatprep.mubr.bf16.mxu0 0
      %2149 = vmatmul.mubr.bf16.gmra.mrb[0].mxu0 %v2056
      %v2150 = vpop.f32.mrb[0].mxu0
      %v2151 = vadd.f32 0.0, %v2150
      %v2152 = vpop.f32.mrb[0].mxu0
      %v2153 = vpop.f32.mrb[0].mxu0
      %v2154 = vadd.f32 0.0, %v2153
      %v2155 = vpop.f32.mrb[0].mxu0
      %2156 = vmatprep.mubr.bf16.mxu0 0
      %2157 = vmatmul.mubr.bf16.gmra.mrb[0].mxu0 %v2059
      %v2158 = vpop.f32.mrb[0].mxu0
      %v2159 = vadd.f32 0.0, %v2158
      %v2160 = vpop.f32.mrb[0].mxu0
      %v2161 = vpop.f32.mrb[0].mxu0
      %v2162 = vadd.f32 0.0, %v2161
      %v2163 = vpop.f32.mrb[0].mxu0
      %2164 = vmatprep.mubr.bf16.mxu0 0
      %2165 = vmatmul.mubr.bf16.gmra.mrb[0].mxu0 %v2062
      %v2166 = vpop.f32.mrb[0].mxu0
      %v2167 = vadd.f32 0.0, %v2166
      %v2168 = vpop.f32.mrb[0].mxu0
      %v2169 = vpop.f32.mrb[0].mxu0
      %v2170 = vadd.f32 0.0, %v2169
      %v2171 = vpop.f32.mrb[0].mxu0
      %2172 = vmatprep.mubr.bf16.mxu0 0
      %2173 = vmatmul.mubr.bf16.gmra.mrb[0].mxu0 %v2065
      %v2174 = vpop.f32.mrb[0].mxu0
      %v2175 = vadd.f32 0.0, %v2174
      %v2176 = vpop.f32.mrb[0].mxu0
      %v2177 = vpop.f32.mrb[0].mxu0
      %v2178 = vadd.f32 0.0, %v2177
      %v2179 = vpop.f32.mrb[0].mxu0
      %2180 = vmatprep.mubr.bf16.mxu0 0
      %2181 = vmatmul.mubr.bf16.gmra.mrb[0].mxu0 %v2068
      %v2182 = vpop.f32.mrb[0].mxu0
      %v2183 = vadd.f32 0.0, %v2182
      %v2184 = vpop.f32.mrb[0].mxu0
      %v2185 = vpop.f32.mrb[0].mxu0
      %v2186 = vadd.f32 0.0, %v2185
      %v2187 = vpop.f32.mrb[0].mxu0
      %2188 = vmatprep.mubr.bf16.mxu0 0
      %2189 = vmatmul.mubr.bf16.gmra.mrb[0].mxu0 %v2071
      %v2190 = vpop.f32.mrb[0].mxu0
      %v2191 = vadd.f32 0.0, %v2190
      %v2192 = vpop.f32.mrb[0].mxu0
      %v2193 = vpop.f32.mrb[0].mxu0
      %v2194 = vadd.f32 0.0, %v2193
      %v2195 = vpop.f32.mrb[0].mxu0
      %2196 = vmatprep.mubr.bf16.mxu0 0
      %2197 = vmatmul.mubr.bf16.gmra.mrb[0].mxu0 %v2074
      %v2198 = vpop.f32.mrb[0].mxu0
      %v2199 = vadd.f32 0.0, %v2198
      %v2200 = vpop.f32.mrb[0].mxu0
      %v2201 = vpop.f32.mrb[0].mxu0
      %v2202 = vadd.f32 0.0, %v2201
      %v2203 = vpop.f32.mrb[0].mxu0
      %2204 = vmatprep.mubr.bf16.mxu0 0
      %2205 = vmatmul.mubr.bf16.gmra.mrb[0].mxu0 %v2077
      %v2206 = vpop.f32.mrb[0].mxu0
      %v2207 = vadd.f32 0.0, %v2206
      %v2208 = vpop.f32.mrb[0].mxu0
      %v2209 = vpop.f32.mrb[0].mxu0
      %v2210 = vadd.f32 0.0, %v2209
      %v2211 = vpop.f32.mrb[0].mxu0
      %2212 = vmatprep.mubr.bf16.mxu0 0
      %2213 = vmatmul.mubr.bf16.gmra.mrb[0].mxu0 %v2080
      %v2214 = vpop.f32.mrb[0].mxu0
      %v2215 = vadd.f32 0.0, %v2214
      %v2216 = vpop.f32.mrb[0].mxu0
      %v2217 = vpop.f32.mrb[0].mxu0
      %v2218 = vadd.f32 0.0, %v2217
      %v2219 = vpop.f32.mrb[0].mxu0
      %2220 = vmatprep.mubr.bf16.mxu0 0
      %2221 = vmatmul.mubr.bf16.gmra.mrb[0].mxu0 %v2083
      %v2222 = vpop.f32.mrb[0].mxu0
      %v2223 = vadd.f32 0.0, %v2222
      %v2224 = vpop.f32.mrb[0].mxu0
      %v2225 = vpop.f32.mrb[0].mxu0
      %v2226 = vadd.f32 0.0, %v2225
      %v2227 = vpop.f32.mrb[0].mxu0
      %2228 = vmatprep.mubr.bf16.mxu0 0
      %2229 = vmatmul.mubr.bf16.gmra.mrb[0].mxu0 %v2086
      %v2230 = vpop.f32.mrb[0].mxu0
      %v2231 = vadd.f32 0.0, %v2230
      %v2232 = vpop.f32.mrb[0].mxu0
      %v2233 = vpop.f32.mrb[0].mxu0
      %v2234 = vadd.f32 0.0, %v2233
      %v2235 = vpop.f32.mrb[0].mxu0
      %2236 = vmatprep.mubr.bf16.mxu0 0
      %2237 = vmatmul.mubr.bf16.gmra.mrb[0].mxu0 %v2089
      %v2238 = vpop.f32.mrb[0].mxu0
      %v2239 = vadd.f32 0.0, %v2238
      %v2240 = vpop.f32.mrb[0].mxu0
      %v2241 = vpop.f32.mrb[0].mxu0
      %v2242 = vadd.f32 0.0, %v2241
      %v2243 = vpop.f32.mrb[0].mxu0
      %2244 = vmatprep.mubr.bf16.mxu0 0
      %2245 = vmatmul.mubr.bf16.gmra.mrb[0].mxu0 %v2092
      %v2246 = vpop.f32.mrb[0].mxu0
      %v2247 = vadd.f32 0.0, %v2246
      %v2248 = vpop.f32.mrb[0].mxu0
      %v2249 = vpop.f32.mrb[0].mxu0
      %v2250 = vadd.f32 0.0, %v2249
      %v2251 = vpop.f32.mrb[0].mxu0
      %2252 = vmatprep.mubr.bf16.mxu0 0
      %2253 = vmatmul.mubr.bf16.gmra.mrb[0].mxu0 %v2095
      %v2254 = vpop.f32.mrb[0].mxu0
      %v2255 = vadd.f32 0.0, %v2254
      %v2256 = vpop.f32.mrb[0].mxu0
      %v2257 = vpop.f32.mrb[0].mxu0
      %v2258 = vadd.f32 0.0, %v2257
      %v2259 = vpop.f32.mrb[0].mxu0
      %2260 = vdwg.mxu0
      %v2261 = vld [vmem:[#allocation3] sm:$0xff]
      %v2262 = vld [vmem:[#allocation3 + $0x8] sm:$0xff]
      %v2263 = vld [vmem:[#allocation3 + $0x10] sm:$0xff]
      %v2264 = vld [vmem:[#allocation3 + $0x18] sm:$0xff]
      %v2265 = vld [vmem:[#allocation3 + $0x20] sm:$0xff]
      %v2266 = vld [vmem:[#allocation3 + $0x28] sm:$0xff]
      %v2267 = vld [vmem:[#allocation3 + $0x30] sm:$0xff]
      %v2268 = vld [vmem:[#allocation3 + $0x38] sm:$0xff]
      %v2269 = vld [vmem:[#allocation3 + $0x40] sm:$0xff]
      %v2270 = vld [vmem:[#allocation3 + $0x48] sm:$0xff]
      %v2271 = vld [vmem:[#allocation3 + $0x50] sm:$0xff]
      %v2272 = vld [vmem:[#allocation3 + $0x58] sm:$0xff]
      %v2273 = vld [vmem:[#allocation3 + $0x60] sm:$0xff]
      %v2274 = vld [vmem:[#allocation3 + $0x68] sm:$0xff]
      %v2275 = vld [vmem:[#allocation3 + $0x70] sm:$0xff]
      %v2276 = vld [vmem:[#allocation3 + $0x78] sm:$0xff]
      %v2277 = vld [vmem:[#allocation3 + $0x80] sm:$0xff]
      %v2278 = vld [vmem:[#allocation3 + $0x88] sm:$0xff]
      %v2279 = vld [vmem:[#allocation3 + $0x90] sm:$0xff]
      %v2280 = vld [vmem:[#allocation3 + $0x98] sm:$0xff]
      %v2281 = vld [vmem:[#allocation3 + $0xa0] sm:$0xff]
      %v2282 = vld [vmem:[#allocation3 + $0xa8] sm:$0xff]
      %v2283 = vld [vmem:[#allocation3 + $0xb0] sm:$0xff]
      %v2284 = vld [vmem:[#allocation3 + $0xb8] sm:$0xff]
      %v2285 = vld [vmem:[#allocation3 + $0xc0] sm:$0xff]
      %v2286 = vld [vmem:[#allocation3 + $0xc8] sm:$0xff]
      %v2287 = vld [vmem:[#allocation3 + $0xd0] sm:$0xff]
      %v2288 = vld [vmem:[#allocation3 + $0xd8] sm:$0xff]
      %v2289 = vld [vmem:[#allocation3 + $0xe0] sm:$0xff]
      %v2290 = vld [vmem:[#allocation3 + $0xe8] sm:$0xff]
      %v2291 = vld [vmem:[#allocation3 + $0xf0] sm:$0xff]
      %v2292 = vld [vmem:[#allocation3 + $0xf8] sm:$0xff]
      %s2293 = scalar_lea.vmem %s1, 512
      %v2294 = vld [vmem:[%s2293] sm:$0xff]
      %v2295 = vld [vmem:[%s2293 + $0x8] sm:$0xff]
      %v2296 = vld [vmem:[%s2293 + $0x10] sm:$0xff]
      %v2297 = vld [vmem:[%s2293 + $0x18] sm:$0xff]
      %v2298 = vld [vmem:[%s2293 + $0x20] sm:$0xff]
      %v2299 = vld [vmem:[%s2293 + $0x28] sm:$0xff]
      %v2300 = vld [vmem:[%s2293 + $0x30] sm:$0xff]
      %v2301 = vld [vmem:[%s2293 + $0x38] sm:$0xff]
      %v2302 = vld [vmem:[%s2293 + $0x40] sm:$0xff]
      %v2303 = vld [vmem:[%s2293 + $0x48] sm:$0xff]
      %v2304 = vld [vmem:[%s2293 + $0x50] sm:$0xff]
      %v2305 = vld [vmem:[%s2293 + $0x58] sm:$0xff]
      %v2306 = vld [vmem:[%s2293 + $0x60] sm:$0xff]
      %v2307 = vld [vmem:[%s2293 + $0x68] sm:$0xff]
      %v2308 = vld [vmem:[%s2293 + $0x70] sm:$0xff]
      %v2309 = vld [vmem:[%s2293 + $0x78] sm:$0xff]
      %v2310 = vld [vmem:[%s2293 + $0x80] sm:$0xff]
      %v2311 = vld [vmem:[%s2293 + $0x88] sm:$0xff]
      %v2312 = vld [vmem:[%s2293 + $0x90] sm:$0xff]
      %v2313 = vld [vmem:[%s2293 + $0x98] sm:$0xff]
      %v2314 = vld [vmem:[%s2293 + $0xa0] sm:$0xff]
      %v2315 = vld [vmem:[%s2293 + $0xa8] sm:$0xff]
      %v2316 = vld [vmem:[%s2293 + $0xb0] sm:$0xff]
      %v2317 = vld [vmem:[%s2293 + $0xb8] sm:$0xff]
      %v2318 = vld [vmem:[%s2293 + $0xc0] sm:$0xff]
      %v2319 = vld [vmem:[%s2293 + $0xc8] sm:$0xff]
      %v2320 = vld [vmem:[%s2293 + $0xd0] sm:$0xff]
      %v2321 = vld [vmem:[%s2293 + $0xd8] sm:$0xff]
      %v2322 = vld [vmem:[%s2293 + $0xe0] sm:$0xff]
      %v2323 = vld [vmem:[%s2293 + $0xe8] sm:$0xff]
      %v2324 = vld [vmem:[%s2293 + $0xf0] sm:$0xff]
      %v2325 = vld [vmem:[%s2293 + $0xf8] sm:$0xff]
      %2327 = vset.pattern.permute.xlu0 0
      %2328 = vperm.xlu0 %2327, %v2294
      %v2329 = vpop.permute.xlu0 %2328
      %2332 = vset.pattern.permute.xlu0 0
      %2333 = vperm.xlu0 %2332, %v2295
      %v2334 = vpop.permute.xlu0 %2333
      %2337 = vset.pattern.permute.xlu0 0
      %2338 = vperm.xlu0 %2337, %v2296
      %v2339 = vpop.permute.xlu0 %2338
      %2342 = vset.pattern.permute.xlu0 0
      %2343 = vperm.xlu0 %2342, %v2297
      %v2344 = vpop.permute.xlu0 %2343
      %2347 = vset.pattern.permute.xlu0 0
      %2348 = vperm.xlu0 %2347, %v2298
      %v2349 = vpop.permute.xlu0 %2348
      %2352 = vset.pattern.permute.xlu0 0
      %2353 = vperm.xlu0 %2352, %v2299
      %v2354 = vpop.permute.xlu0 %2353
      %2357 = vset.pattern.permute.xlu0 0
      %2358 = vperm.xlu0 %2357, %v2300
      %v2359 = vpop.permute.xlu0 %2358
      %2362 = vset.pattern.permute.xlu0 0
      %2363 = vperm.xlu0 %2362, %v2301
      %v2364 = vpop.permute.xlu0 %2363
      %2367 = vset.pattern.permute.xlu0 0
      %2368 = vperm.xlu0 %2367, %v2302
      %v2369 = vpop.permute.xlu0 %2368
      %2372 = vset.pattern.permute.xlu0 0
      %2373 = vperm.xlu0 %2372, %v2303
      %v2374 = vpop.permute.xlu0 %2373
      %2377 = vset.pattern.permute.xlu0 0
      %2378 = vperm.xlu0 %2377, %v2304
      %v2379 = vpop.permute.xlu0 %2378
      %2382 = vset.pattern.permute.xlu0 0
      %2383 = vperm.xlu0 %2382, %v2305
      %v2384 = vpop.permute.xlu0 %2383
      %2387 = vset.pattern.permute.xlu0 0
      %2388 = vperm.xlu0 %2387, %v2306
      %v2389 = vpop.permute.xlu0 %2388
      %2392 = vset.pattern.permute.xlu0 0
      %2393 = vperm.xlu0 %2392, %v2307
      %v2394 = vpop.permute.xlu0 %2393
      %2397 = vset.pattern.permute.xlu0 0
      %2398 = vperm.xlu0 %2397, %v2308
      %v2399 = vpop.permute.xlu0 %2398
      %2402 = vset.pattern.permute.xlu0 0
      %2403 = vperm.xlu0 %2402, %v2309
      %v2404 = vpop.permute.xlu0 %2403
      %2407 = vset.pattern.permute.xlu0 0
      %2408 = vperm.xlu0 %2407, %v2310
      %v2409 = vpop.permute.xlu0 %2408
      %2412 = vset.pattern.permute.xlu0 0
      %2413 = vperm.xlu0 %2412, %v2311
      %v2414 = vpop.permute.xlu0 %2413
      %2417 = vset.pattern.permute.xlu0 0
      %2418 = vperm.xlu0 %2417, %v2312
      %v2419 = vpop.permute.xlu0 %2418
      %2422 = vset.pattern.permute.xlu0 0
      %2423 = vperm.xlu0 %2422, %v2313
      %v2424 = vpop.permute.xlu0 %2423
      %2427 = vset.pattern.permute.xlu0 0
      %2428 = vperm.xlu0 %2427, %v2314
      %v2429 = vpop.permute.xlu0 %2428
      %2432 = vset.pattern.permute.xlu0 0
      %2433 = vperm.xlu0 %2432, %v2315
      %v2434 = vpop.permute.xlu0 %2433
      %2437 = vset.pattern.permute.xlu0 0
      %2438 = vperm.xlu0 %2437, %v2316
      %v2439 = vpop.permute.xlu0 %2438
      %2442 = vset.pattern.permute.xlu0 0
      %2443 = vperm.xlu0 %2442, %v2317
      %v2444 = vpop.permute.xlu0 %2443
      %2447 = vset.pattern.permute.xlu0 0
      %2448 = vperm.xlu0 %2447, %v2318
      %v2449 = vpop.permute.xlu0 %2448
      %2452 = vset.pattern.permute.xlu0 0
      %2453 = vperm.xlu0 %2452, %v2319
      %v2454 = vpop.permute.xlu0 %2453
      %2457 = vset.pattern.permute.xlu0 0
      %2458 = vperm.xlu0 %2457, %v2320
      %v2459 = vpop.permute.xlu0 %2458
      %2462 = vset.pattern.permute.xlu0 0
      %2463 = vperm.xlu0 %2462, %v2321
      %v2464 = vpop.permute.xlu0 %2463
      %2467 = vset.pattern.permute.xlu0 0
      %2468 = vperm.xlu0 %2467, %v2322
      %v2469 = vpop.permute.xlu0 %2468
      %2472 = vset.pattern.permute.xlu0 0
      %2473 = vperm.xlu0 %2472, %v2323
      %v2474 = vpop.permute.xlu0 %2473
      %2477 = vset.pattern.permute.xlu0 0
      %2478 = vperm.xlu0 %2477, %v2324
      %v2479 = vpop.permute.xlu0 %2478
      %2482 = vset.pattern.permute.xlu0 0
      %2483 = vperm.xlu0 %2482, %v2325
      %v2484 = vpop.permute.xlu0 %2483
      %v2486 = vmul.f32 %v2135, %v2329
      %v2487 = vmul.f32 %v2138, %v2334
      %v2488 = vmul.f32 %v2143, %v2339
      %v2489 = vmul.f32 %v2146, %v2344
      %v2490 = vmul.f32 %v2151, %v2349
      %v2491 = vmul.f32 %v2154, %v2354
      %v2492 = vmul.f32 %v2159, %v2359
      %v2493 = vmul.f32 %v2162, %v2364
      %v2494 = vmul.f32 %v2167, %v2369
      %v2495 = vmul.f32 %v2170, %v2374
      %v2496 = vmul.f32 %v2175, %v2379
      %v2497 = vmul.f32 %v2178, %v2384
      %v2498 = vmul.f32 %v2183, %v2389
      %v2499 = vmul.f32 %v2186, %v2394
      %v2500 = vmul.f32 %v2191, %v2399
      %v2501 = vmul.f32 %v2194, %v2404
      %v2502 = vmul.f32 %v2199, %v2409
      %v2503 = vmul.f32 %v2202, %v2414
      %v2504 = vmul.f32 %v2207, %v2419
      %v2505 = vmul.f32 %v2210, %v2424
      %v2506 = vmul.f32 %v2215, %v2429
      %v2507 = vmul.f32 %v2218, %v2434
      %v2508 = vmul.f32 %v2223, %v2439
      %v2509 = vmul.f32 %v2226, %v2444
      %v2510 = vmul.f32 %v2231, %v2449
      %v2511 = vmul.f32 %v2234, %v2454
      %v2512 = vmul.f32 %v2239, %v2459
      %v2513 = vmul.f32 %v2242, %v2464
      %v2514 = vmul.f32 %v2247, %v2469
      %v2515 = vmul.f32 %v2250, %v2474
      %v2516 = vmul.f32 %v2255, %v2479
      %v2517 = vmul.f32 %v2258, %v2484
      %v2518 = vadd.f32 %v2261, %v2486
      %v2519 = vadd.f32 %v2262, %v2487
      %v2520 = vadd.f32 %v2263, %v2488
      %v2521 = vadd.f32 %v2264, %v2489
      %v2522 = vadd.f32 %v2265, %v2490
      %v2523 = vadd.f32 %v2266, %v2491
      %v2524 = vadd.f32 %v2267, %v2492
      %v2525 = vadd.f32 %v2268, %v2493
      %v2526 = vadd.f32 %v2269, %v2494
      %v2527 = vadd.f32 %v2270, %v2495
      %v2528 = vadd.f32 %v2271, %v2496
      %v2529 = vadd.f32 %v2272, %v2497
      %v2530 = vadd.f32 %v2273, %v2498
      %v2531 = vadd.f32 %v2274, %v2499
      %v2532 = vadd.f32 %v2275, %v2500
      %v2533 = vadd.f32 %v2276, %v2501
      %v2534 = vadd.f32 %v2277, %v2502
      %v2535 = vadd.f32 %v2278, %v2503
      %v2536 = vadd.f32 %v2279, %v2504
      %v2537 = vadd.f32 %v2280, %v2505
      %v2538 = vadd.f32 %v2281, %v2506
      %v2539 = vadd.f32 %v2282, %v2507
      %v2540 = vadd.f32 %v2283, %v2508
      %v2541 = vadd.f32 %v2284, %v2509
      %v2542 = vadd.f32 %v2285, %v2510
      %v2543 = vadd.f32 %v2286, %v2511
      %v2544 = vadd.f32 %v2287, %v2512
      %v2545 = vadd.f32 %v2288, %v2513
      %v2546 = vadd.f32 %v2289, %v2514
      %v2547 = vadd.f32 %v2290, %v2515
      %v2548 = vadd.f32 %v2291, %v2516
      %v2549 = vadd.f32 %v2292, %v2517
      %2550 = vst.msk [vmem:[#allocation3] sm:$0xff] %vm727, %v2518
      %2551 = vst.msk [vmem:[#allocation3 + $0x8] sm:$0xff] %vm727, %v2519
      %2552 = vst.msk [vmem:[#allocation3 + $0x10] sm:$0xff] %vm727, %v2520
      %2553 = vst.msk [vmem:[#allocation3 + $0x18] sm:$0xff] %vm727, %v2521
      %2554 = vst.msk [vmem:[#allocation3 + $0x20] sm:$0xff] %vm727, %v2522
      %2555 = vst.msk [vmem:[#allocation3 + $0x28] sm:$0xff] %vm727, %v2523
      %2556 = vst.msk [vmem:[#allocation3 + $0x30] sm:$0xff] %vm727, %v2524
      %2557 = vst.msk [vmem:[#allocation3 + $0x38] sm:$0xff] %vm727, %v2525
      %2558 = vst.msk [vmem:[#allocation3 + $0x40] sm:$0xff] %vm727, %v2526
      %2559 = vst.msk [vmem:[#allocation3 + $0x48] sm:$0xff] %vm727, %v2527
      %2560 = vst.msk [vmem:[#allocation3 + $0x50] sm:$0xff] %vm727, %v2528
      %2561 = vst.msk [vmem:[#allocation3 + $0x58] sm:$0xff] %vm727, %v2529
      %2562 = vst.msk [vmem:[#allocation3 + $0x60] sm:$0xff] %vm727, %v2530
      %2563 = vst.msk [vmem:[#allocation3 + $0x68] sm:$0xff] %vm727, %v2531
      %2564 = vst.msk [vmem:[#allocation3 + $0x70] sm:$0xff] %vm727, %v2532
      %2565 = vst.msk [vmem:[#allocation3 + $0x78] sm:$0xff] %vm727, %v2533
      %2566 = vst.msk [vmem:[#allocation3 + $0x80] sm:$0xff] %vm727, %v2534
      %2567 = vst.msk [vmem:[#allocation3 + $0x88] sm:$0xff] %vm727, %v2535
      %2568 = vst.msk [vmem:[#allocation3 + $0x90] sm:$0xff] %vm727, %v2536
      %2569 = vst.msk [vmem:[#allocation3 + $0x98] sm:$0xff] %vm727, %v2537
      %2570 = vst.msk [vmem:[#allocation3 + $0xa0] sm:$0xff] %vm727, %v2538
      %2571 = vst.msk [vmem:[#allocation3 + $0xa8] sm:$0xff] %vm727, %v2539
      %2572 = vst.msk [vmem:[#allocation3 + $0xb0] sm:$0xff] %vm727, %v2540
      %2573 = vst.msk [vmem:[#allocation3 + $0xb8] sm:$0xff] %vm727, %v2541
      %2574 = vst.msk [vmem:[#allocation3 + $0xc0] sm:$0xff] %vm727, %v2542
      %2575 = vst.msk [vmem:[#allocation3 + $0xc8] sm:$0xff] %vm727, %v2543
      %2576 = vst.msk [vmem:[#allocation3 + $0xd0] sm:$0xff] %vm727, %v2544
      %2577 = vst.msk [vmem:[#allocation3 + $0xd8] sm:$0xff] %vm727, %v2545
      %2578 = vst.msk [vmem:[#allocation3 + $0xe0] sm:$0xff] %vm727, %v2546
      %2579 = vst.msk [vmem:[#allocation3 + $0xe8] sm:$0xff] %vm727, %v2547
      %2580 = vst.msk [vmem:[#allocation3 + $0xf0] sm:$0xff] %vm727, %v2548
      %2581 = vst.msk [vmem:[#allocation3 + $0xf8] sm:$0xff] %vm727, %v2549
      %v2582 = vld [vmem:[#allocation2 + $0x26] sm:$0xff]
      %v2583 = vld [vmem:[#allocation2 + $0x2e] sm:$0xff]
      %v2584 = vld [vmem:[#allocation2 + $0x36] sm:$0xff]
      %v2585 = vld [vmem:[#allocation2 + $0x3e] sm:$0xff]
      %v2586 = vld [vmem:[#allocation2 + $0x46] sm:$0xff]
      %v2587 = vld [vmem:[#allocation2 + $0x4e] sm:$0xff]
      %v2588 = vld [vmem:[#allocation2 + $0x56] sm:$0xff]
      %v2589 = vld [vmem:[#allocation2 + $0x5e] sm:$0xff]
      %v2590 = vld [vmem:[#allocation2 + $0x66] sm:$0xff]
      %v2591 = vld [vmem:[#allocation2 + $0x6e] sm:$0xff]
      %v2592 = vld [vmem:[#allocation2 + $0x76] sm:$0xff]
      %v2593 = vld [vmem:[#allocation2 + $0x7e] sm:$0xff]
      %v2594 = vld [vmem:[#allocation2 + $0x86] sm:$0xff]
      %v2595 = vld [vmem:[#allocation2 + $0x8e] sm:$0xff]
      %v2596 = vld [vmem:[#allocation2 + $0x96] sm:$0xff]
      %v2597 = vld [vmem:[#allocation2 + $0x9e] sm:$0xff]
      %v2598 = vld [vmem:[#allocation2 + $0xa6] sm:$0xff]
      %v2599 = vld [vmem:[#allocation2 + $0xae] sm:$0xff]
      %v2600 = vld [vmem:[#allocation2 + $0xb6] sm:$0xff]
      %v2601 = vld [vmem:[#allocation2 + $0xbe] sm:$0xff]
      %v2602 = vld [vmem:[#allocation2 + $0xc6] sm:$0xff]
      %v2603 = vld [vmem:[#allocation2 + $0xce] sm:$0xff]
      %v2604 = vld [vmem:[#allocation2 + $0xd6] sm:$0xff]
      %v2605 = vld [vmem:[#allocation2 + $0xde] sm:$0xff]
      %v2606 = vld [vmem:[#allocation2 + $0xe6] sm:$0xff]
      %v2607 = vld [vmem:[#allocation2 + $0xee] sm:$0xff]
      %v2608 = vld [vmem:[#allocation2 + $0xf6] sm:$0xff]
      %v2609 = vld [vmem:[#allocation2 + $0xfe] sm:$0xff]
      %v2610 = vld [vmem:[#allocation2 + $0x106] sm:$0xff]
      %v2611 = vld [vmem:[#allocation2 + $0x10e] sm:$0xff]
      %v2612 = vld [vmem:[#allocation2 + $0x116] sm:$0xff]
      %v2613 = vld [vmem:[#allocation2 + $0x11e] sm:$0xff]
      %v2614 = vpack.c.bf16 %v2583, %v2582
      %v2615 = vpack.c.bf16 %v2585, %v2584
      %v2616 = vpack.c.bf16 %v2587, %v2586
      %v2617 = vpack.c.bf16 %v2589, %v2588
      %v2618 = vpack.c.bf16 %v2591, %v2590
      %v2619 = vpack.c.bf16 %v2593, %v2592
      %v2620 = vpack.c.bf16 %v2595, %v2594
      %v2621 = vpack.c.bf16 %v2597, %v2596
      %v2622 = vpack.c.bf16 %v2599, %v2598
      %v2623 = vpack.c.bf16 %v2601, %v2600
      %v2624 = vpack.c.bf16 %v2603, %v2602
      %v2625 = vpack.c.bf16 %v2605, %v2604
      %v2626 = vpack.c.bf16 %v2607, %v2606
      %v2627 = vpack.c.bf16 %v2609, %v2608
      %v2628 = vpack.c.bf16 %v2611, %v2610
      %v2629 = vpack.c.bf16 %v2613, %v2612
      %s2630 = scalar_lea.vmem %s3, 12
      %v2631 = vld [vmem:[%s2630] sm:$0xf]
      %v2633 = vsel %vm727, %v2614, 0
      %v2636 = vsel %vm727, %v2615, 0
      %v2639 = vsel %vm727, %v2616, 0
      %v2642 = vsel %vm727, %v2617, 0
      %v2645 = vsel %vm727, %v2618, 0
      %v2648 = vsel %vm727, %v2619, 0
      %v2651 = vsel %vm727, %v2620, 0
      %v2654 = vsel %vm727, %v2621, 0
      %v2657 = vsel %vm727, %v2622, 0
      %v2660 = vsel %vm727, %v2623, 0
      %v2663 = vsel %vm727, %v2624, 0
      %v2666 = vsel %vm727, %v2625, 0
      %v2669 = vsel %vm727, %v2626, 0
      %v2672 = vsel %vm727, %v2627, 0
      %v2675 = vsel %vm727, %v2628, 0
      %v2678 = vsel %vm727, %v2629, 0
      %v2681 = vsel %vm931, %v2631, 0
      %2683 = vmatprep.subr.bf16.mxu0 0
      %2684 = vmatpush1.bf16.msra.mxu0 %v2681
      %2685 = vmatprep.subr.bf16.mxu0 0
      %2686 = vmatpush1.bf16.msra.mxu0 0
      %2687 = vmatprep.subr.bf16.mxu0 0
      %2688 = vmatpush1.bf16.msra.mxu0 0
      %2689 = vmatprep.subr.bf16.mxu0 0
      %2690 = vmatpush1.bf16.msra.mxu0 0
      %2691 = vmatprep.subr.bf16.mxu0 0
      %2692 = vmatpush1.bf16.msra.mxu0 0
      %2693 = vmatprep.subr.bf16.mxu0 0
      %2694 = vmatpush1.bf16.msra.mxu0 0
      %2695 = vmatprep.subr.bf16.mxu0 0
      %2696 = vmatpush1.bf16.msra.mxu0 0
      %2697 = vmatprep.subr.bf16.mxu0 0
      %2698 = vmatpush1.bf16.msra.mxu0 0
      %2699 = vmatprep.subr.bf16.mxu0 0
      %2700 = vmatpush1.bf16.msra.mxu0 0
      %2701 = vmatprep.subr.bf16.mxu0 0
      %2702 = vmatpush1.bf16.msra.mxu0 0
      %2703 = vmatprep.subr.bf16.mxu0 0
      %2704 = vmatpush1.bf16.msra.mxu0 0
      %2705 = vmatprep.subr.bf16.mxu0 0
      %2706 = vmatpush1.bf16.msra.mxu0 0
      %2707 = vmatprep.subr.bf16.mxu0 0
      %2708 = vmatpush1.bf16.msra.mxu0 0
      %2709 = vmatprep.subr.bf16.mxu0 0
      %2710 = vmatpush1.bf16.msra.mxu0 0
      %2711 = vmatprep.subr.bf16.mxu0 0
      %2712 = vmatpush1.bf16.msra.mxu0 0
      %2713 = vmatprep.subr.bf16.mxu0 0
      %2714 = vmatpush1.bf16.msra.mxu0 0
      %2715 = vmatprep.mubr.bf16.mxu0 0
      %2716 = vmatmul.mubr.bf16.gmra.mrb[0].mxu0 %v2633
      %v2717 = vpop.f32.mrb[0].mxu0
      %v2718 = vadd.f32 0.0, %v2717
      %v2719 = vpop.f32.mrb[0].mxu0
      %v2720 = vpop.f32.mrb[0].mxu0
      %v2721 = vadd.f32 0.0, %v2720
      %v2722 = vpop.f32.mrb[0].mxu0
      %2723 = vmatprep.mubr.bf16.mxu0 0
      %2724 = vmatmul.mubr.bf16.gmra.mrb[0].mxu0 %v2636
      %v2725 = vpop.f32.mrb[0].mxu0
      %v2726 = vadd.f32 0.0, %v2725
      %v2727 = vpop.f32.mrb[0].mxu0
      %v2728 = vpop.f32.mrb[0].mxu0
      %v2729 = vadd.f32 0.0, %v2728
      %v2730 = vpop.f32.mrb[0].mxu0
      %2731 = vmatprep.mubr.bf16.mxu0 0
      %2732 = vmatmul.mubr.bf16.gmra.mrb[0].mxu0 %v2639
      %v2733 = vpop.f32.mrb[0].mxu0
      %v2734 = vadd.f32 0.0, %v2733
      %v2735 = vpop.f32.mrb[0].mxu0
      %v2736 = vpop.f32.mrb[0].mxu0
      %v2737 = vadd.f32 0.0, %v2736
      %v2738 = vpop.f32.mrb[0].mxu0
      %2739 = vmatprep.mubr.bf16.mxu0 0
      %2740 = vmatmul.mubr.bf16.gmra.mrb[0].mxu0 %v2642
      %v2741 = vpop.f32.mrb[0].mxu0
      %v2742 = vadd.f32 0.0, %v2741
      %v2743 = vpop.f32.mrb[0].mxu0
      %v2744 = vpop.f32.mrb[0].mxu0
      %v2745 = vadd.f32 0.0, %v2744
      %v2746 = vpop.f32.mrb[0].mxu0
      %2747 = vmatprep.mubr.bf16.mxu0 0
      %2748 = vmatmul.mubr.bf16.gmra.mrb[0].mxu0 %v2645
      %v2749 = vpop.f32.mrb[0].mxu0
      %v2750 = vadd.f32 0.0, %v2749
      %v2751 = vpop.f32.mrb[0].mxu0
      %v2752 = vpop.f32.mrb[0].mxu0
      %v2753 = vadd.f32 0.0, %v2752
      %v2754 = vpop.f32.mrb[0].mxu0
      %2755 = vmatprep.mubr.bf16.mxu0 0
      %2756 = vmatmul.mubr.bf16.gmra.mrb[0].mxu0 %v2648
      %v2757 = vpop.f32.mrb[0].mxu0
      %v2758 = vadd.f32 0.0, %v2757
      %v2759 = vpop.f32.mrb[0].mxu0
      %v2760 = vpop.f32.mrb[0].mxu0
      %v2761 = vadd.f32 0.0, %v2760
      %v2762 = vpop.f32.mrb[0].mxu0
      %2763 = vmatprep.mubr.bf16.mxu0 0
      %2764 = vmatmul.mubr.bf16.gmra.mrb[0].mxu0 %v2651
      %v2765 = vpop.f32.mrb[0].mxu0
      %v2766 = vadd.f32 0.0, %v2765
      %v2767 = vpop.f32.mrb[0].mxu0
      %v2768 = vpop.f32.mrb[0].mxu0
      %v2769 = vadd.f32 0.0, %v2768
      %v2770 = vpop.f32.mrb[0].mxu0
      %2771 = vmatprep.mubr.bf16.mxu0 0
      %2772 = vmatmul.mubr.bf16.gmra.mrb[0].mxu0 %v2654
      %v2773 = vpop.f32.mrb[0].mxu0
      %v2774 = vadd.f32 0.0, %v2773
      %v2775 = vpop.f32.mrb[0].mxu0
      %v2776 = vpop.f32.mrb[0].mxu0
      %v2777 = vadd.f32 0.0, %v2776
      %v2778 = vpop.f32.mrb[0].mxu0
      %2779 = vmatprep.mubr.bf16.mxu0 0
      %2780 = vmatmul.mubr.bf16.gmra.mrb[0].mxu0 %v2657
      %v2781 = vpop.f32.mrb[0].mxu0
      %v2782 = vadd.f32 0.0, %v2781
      %v2783 = vpop.f32.mrb[0].mxu0
      %v2784 = vpop.f32.mrb[0].mxu0
      %v2785 = vadd.f32 0.0, %v2784
      %v2786 = vpop.f32.mrb[0].mxu0
      %2787 = vmatprep.mubr.bf16.mxu0 0
      %2788 = vmatmul.mubr.bf16.gmra.mrb[0].mxu0 %v2660
      %v2789 = vpop.f32.mrb[0].mxu0
      %v2790 = vadd.f32 0.0, %v2789
      %v2791 = vpop.f32.mrb[0].mxu0
      %v2792 = vpop.f32.mrb[0].mxu0
      %v2793 = vadd.f32 0.0, %v2792
      %v2794 = vpop.f32.mrb[0].mxu0
      %2795 = vmatprep.mubr.bf16.mxu0 0
      %2796 = vmatmul.mubr.bf16.gmra.mrb[0].mxu0 %v2663
      %v2797 = vpop.f32.mrb[0].mxu0
      %v2798 = vadd.f32 0.0, %v2797
      %v2799 = vpop.f32.mrb[0].mxu0
      %v2800 = vpop.f32.mrb[0].mxu0
      %v2801 = vadd.f32 0.0, %v2800
      %v2802 = vpop.f32.mrb[0].mxu0
      %2803 = vmatprep.mubr.bf16.mxu0 0
      %2804 = vmatmul.mubr.bf16.gmra.mrb[0].mxu0 %v2666
      %v2805 = vpop.f32.mrb[0].mxu0
      %v2806 = vadd.f32 0.0, %v2805
      %v2807 = vpop.f32.mrb[0].mxu0
      %v2808 = vpop.f32.mrb[0].mxu0
      %v2809 = vadd.f32 0.0, %v2808
      %v2810 = vpop.f32.mrb[0].mxu0
      %2811 = vmatprep.mubr.bf16.mxu0 0
      %2812 = vmatmul.mubr.bf16.gmra.mrb[0].mxu0 %v2669
      %v2813 = vpop.f32.mrb[0].mxu0
      %v2814 = vadd.f32 0.0, %v2813
      %v2815 = vpop.f32.mrb[0].mxu0
      %v2816 = vpop.f32.mrb[0].mxu0
      %v2817 = vadd.f32 0.0, %v2816
      %v2818 = vpop.f32.mrb[0].mxu0
      %2819 = vmatprep.mubr.bf16.mxu0 0
      %2820 = vmatmul.mubr.bf16.gmra.mrb[0].mxu0 %v2672
      %v2821 = vpop.f32.mrb[0].mxu0
      %v2822 = vadd.f32 0.0, %v2821
      %v2823 = vpop.f32.mrb[0].mxu0
      %v2824 = vpop.f32.mrb[0].mxu0
      %v2825 = vadd.f32 0.0, %v2824
      %v2826 = vpop.f32.mrb[0].mxu0
      %2827 = vmatprep.mubr.bf16.mxu0 0
      %2828 = vmatmul.mubr.bf16.gmra.mrb[0].mxu0 %v2675
      %v2829 = vpop.f32.mrb[0].mxu0
      %v2830 = vadd.f32 0.0, %v2829
      %v2831 = vpop.f32.mrb[0].mxu0
      %v2832 = vpop.f32.mrb[0].mxu0
      %v2833 = vadd.f32 0.0, %v2832
      %v2834 = vpop.f32.mrb[0].mxu0
      %2835 = vmatprep.mubr.bf16.mxu0 0
      %2836 = vmatmul.mubr.bf16.gmra.mrb[0].mxu0 %v2678
      %v2837 = vpop.f32.mrb[0].mxu0
      %v2838 = vadd.f32 0.0, %v2837
      %v2839 = vpop.f32.mrb[0].mxu0
      %v2840 = vpop.f32.mrb[0].mxu0
      %v2841 = vadd.f32 0.0, %v2840
      %v2842 = vpop.f32.mrb[0].mxu0
      %2843 = vdwg.mxu0
      %v2844 = vld [vmem:[#allocation3] sm:$0xff]
      %v2845 = vld [vmem:[#allocation3 + $0x8] sm:$0xff]
      %v2846 = vld [vmem:[#allocation3 + $0x10] sm:$0xff]
      %v2847 = vld [vmem:[#allocation3 + $0x18] sm:$0xff]
      %v2848 = vld [vmem:[#allocation3 + $0x20] sm:$0xff]
      %v2849 = vld [vmem:[#allocation3 + $0x28] sm:$0xff]
      %v2850 = vld [vmem:[#allocation3 + $0x30] sm:$0xff]
      %v2851 = vld [vmem:[#allocation3 + $0x38] sm:$0xff]
      %v2852 = vld [vmem:[#allocation3 + $0x40] sm:$0xff]
      %v2853 = vld [vmem:[#allocation3 + $0x48] sm:$0xff]
      %v2854 = vld [vmem:[#allocation3 + $0x50] sm:$0xff]
      %v2855 = vld [vmem:[#allocation3 + $0x58] sm:$0xff]
      %v2856 = vld [vmem:[#allocation3 + $0x60] sm:$0xff]
      %v2857 = vld [vmem:[#allocation3 + $0x68] sm:$0xff]
      %v2858 = vld [vmem:[#allocation3 + $0x70] sm:$0xff]
      %v2859 = vld [vmem:[#allocation3 + $0x78] sm:$0xff]
      %v2860 = vld [vmem:[#allocation3 + $0x80] sm:$0xff]
      %v2861 = vld [vmem:[#allocation3 + $0x88] sm:$0xff]
      %v2862 = vld [vmem:[#allocation3 + $0x90] sm:$0xff]
      %v2863 = vld [vmem:[#allocation3 + $0x98] sm:$0xff]
      %v2864 = vld [vmem:[#allocation3 + $0xa0] sm:$0xff]
      %v2865 = vld [vmem:[#allocation3 + $0xa8] sm:$0xff]
      %v2866 = vld [vmem:[#allocation3 + $0xb0] sm:$0xff]
      %v2867 = vld [vmem:[#allocation3 + $0xb8] sm:$0xff]
      %v2868 = vld [vmem:[#allocation3 + $0xc0] sm:$0xff]
      %v2869 = vld [vmem:[#allocation3 + $0xc8] sm:$0xff]
      %v2870 = vld [vmem:[#allocation3 + $0xd0] sm:$0xff]
      %v2871 = vld [vmem:[#allocation3 + $0xd8] sm:$0xff]
      %v2872 = vld [vmem:[#allocation3 + $0xe0] sm:$0xff]
      %v2873 = vld [vmem:[#allocation3 + $0xe8] sm:$0xff]
      %v2874 = vld [vmem:[#allocation3 + $0xf0] sm:$0xff]
      %v2875 = vld [vmem:[#allocation3 + $0xf8] sm:$0xff]
      %s2876 = scalar_lea.vmem %s1, 768
      %v2877 = vld [vmem:[%s2876] sm:$0xff]
      %v2878 = vld [vmem:[%s2876 + $0x8] sm:$0xff]
      %v2879 = vld [vmem:[%s2876 + $0x10] sm:$0xff]
      %v2880 = vld [vmem:[%s2876 + $0x18] sm:$0xff]
      %v2881 = vld [vmem:[%s2876 + $0x20] sm:$0xff]
      %v2882 = vld [vmem:[%s2876 + $0x28] sm:$0xff]
      %v2883 = vld [vmem:[%s2876 + $0x30] sm:$0xff]
      %v2884 = vld [vmem:[%s2876 + $0x38] sm:$0xff]
      %v2885 = vld [vmem:[%s2876 + $0x40] sm:$0xff]
      %v2886 = vld [vmem:[%s2876 + $0x48] sm:$0xff]
      %v2887 = vld [vmem:[%s2876 + $0x50] sm:$0xff]
      %v2888 = vld [vmem:[%s2876 + $0x58] sm:$0xff]
      %v2889 = vld [vmem:[%s2876 + $0x60] sm:$0xff]
      %v2890 = vld [vmem:[%s2876 + $0x68] sm:$0xff]
      %v2891 = vld [vmem:[%s2876 + $0x70] sm:$0xff]
      %v2892 = vld [vmem:[%s2876 + $0x78] sm:$0xff]
      %v2893 = vld [vmem:[%s2876 + $0x80] sm:$0xff]
      %v2894 = vld [vmem:[%s2876 + $0x88] sm:$0xff]
      %v2895 = vld [vmem:[%s2876 + $0x90] sm:$0xff]
      %v2896 = vld [vmem:[%s2876 + $0x98] sm:$0xff]
      %v2897 = vld [vmem:[%s2876 + $0xa0] sm:$0xff]
      %v2898 = vld [vmem:[%s2876 + $0xa8] sm:$0xff]
      %v2899 = vld [vmem:[%s2876 + $0xb0] sm:$0xff]
      %v2900 = vld [vmem:[%s2876 + $0xb8] sm:$0xff]
      %v2901 = vld [vmem:[%s2876 + $0xc0] sm:$0xff]
      %v2902 = vld [vmem:[%s2876 + $0xc8] sm:$0xff]
      %v2903 = vld [vmem:[%s2876 + $0xd0] sm:$0xff]
      %v2904 = vld [vmem:[%s2876 + $0xd8] sm:$0xff]
      %v2905 = vld [vmem:[%s2876 + $0xe0] sm:$0xff]
      %v2906 = vld [vmem:[%s2876 + $0xe8] sm:$0xff]
      %v2907 = vld [vmem:[%s2876 + $0xf0] sm:$0xff]
      %v2908 = vld [vmem:[%s2876 + $0xf8] sm:$0xff]
      %2910 = vset.pattern.permute.xlu0 0
      %2911 = vperm.xlu0 %2910, %v2877
      %v2912 = vpop.permute.xlu0 %2911
      %2915 = vset.pattern.permute.xlu0 0
      %2916 = vperm.xlu0 %2915, %v2878
      %v2917 = vpop.permute.xlu0 %2916
      %2920 = vset.pattern.permute.xlu0 0
      %2921 = vperm.xlu0 %2920, %v2879
      %v2922 = vpop.permute.xlu0 %2921
      %2925 = vset.pattern.permute.xlu0 0
      %2926 = vperm.xlu0 %2925, %v2880
      %v2927 = vpop.permute.xlu0 %2926
      %2930 = vset.pattern.permute.xlu0 0
      %2931 = vperm.xlu0 %2930, %v2881
      %v2932 = vpop.permute.xlu0 %2931
      %2935 = vset.pattern.permute.xlu0 0
      %2936 = vperm.xlu0 %2935, %v2882
      %v2937 = vpop.permute.xlu0 %2936
      %2940 = vset.pattern.permute.xlu0 0
      %2941 = vperm.xlu0 %2940, %v2883
      %v2942 = vpop.permute.xlu0 %2941
      %2945 = vset.pattern.permute.xlu0 0
      %2946 = vperm.xlu0 %2945, %v2884
      %v2947 = vpop.permute.xlu0 %2946
      %2950 = vset.pattern.permute.xlu0 0
      %2951 = vperm.xlu0 %2950, %v2885
      %v2952 = vpop.permute.xlu0 %2951
      %2955 = vset.pattern.permute.xlu0 0
      %2956 = vperm.xlu0 %2955, %v2886
      %v2957 = vpop.permute.xlu0 %2956
      %2960 = vset.pattern.permute.xlu0 0
      %2961 = vperm.xlu0 %2960, %v2887
      %v2962 = vpop.permute.xlu0 %2961
      %2965 = vset.pattern.permute.xlu0 0
      %2966 = vperm.xlu0 %2965, %v2888
      %v2967 = vpop.permute.xlu0 %2966
      %2970 = vset.pattern.permute.xlu0 0
      %2971 = vperm.xlu0 %2970, %v2889
      %v2972 = vpop.permute.xlu0 %2971
      %2975 = vset.pattern.permute.xlu0 0
      %2976 = vperm.xlu0 %2975, %v2890
      %v2977 = vpop.permute.xlu0 %2976
      %2980 = vset.pattern.permute.xlu0 0
      %2981 = vperm.xlu0 %2980, %v2891
      %v2982 = vpop.permute.xlu0 %2981
      %2985 = vset.pattern.permute.xlu0 0
      %2986 = vperm.xlu0 %2985, %v2892
      %v2987 = vpop.permute.xlu0 %2986
      %2990 = vset.pattern.permute.xlu0 0
      %2991 = vperm.xlu0 %2990, %v2893
      %v2992 = vpop.permute.xlu0 %2991
      %2995 = vset.pattern.permute.xlu0 0
      %2996 = vperm.xlu0 %2995, %v2894
      %v2997 = vpop.permute.xlu0 %2996
      %3000 = vset.pattern.permute.xlu0 0
      %3001 = vperm.xlu0 %3000, %v2895
      %v3002 = vpop.permute.xlu0 %3001
      %3005 = vset.pattern.permute.xlu0 0
      %3006 = vperm.xlu0 %3005, %v2896
      %v3007 = vpop.permute.xlu0 %3006
      %3010 = vset.pattern.permute.xlu0 0
      %3011 = vperm.xlu0 %3010, %v2897
      %v3012 = vpop.permute.xlu0 %3011
      %3015 = vset.pattern.permute.xlu0 0
      %3016 = vperm.xlu0 %3015, %v2898
      %v3017 = vpop.permute.xlu0 %3016
      %3020 = vset.pattern.permute.xlu0 0
      %3021 = vperm.xlu0 %3020, %v2899
      %v3022 = vpop.permute.xlu0 %3021
      %3025 = vset.pattern.permute.xlu0 0
      %3026 = vperm.xlu0 %3025, %v2900
      %v3027 = vpop.permute.xlu0 %3026
      %3030 = vset.pattern.permute.xlu0 0
      %3031 = vperm.xlu0 %3030, %v2901
      %v3032 = vpop.permute.xlu0 %3031
      %3035 = vset.pattern.permute.xlu0 0
      %3036 = vperm.xlu0 %3035, %v2902
      %v3037 = vpop.permute.xlu0 %3036
      %3040 = vset.pattern.permute.xlu0 0
      %3041 = vperm.xlu0 %3040, %v2903
      %v3042 = vpop.permute.xlu0 %3041
      %3045 = vset.pattern.permute.xlu0 0
      %3046 = vperm.xlu0 %3045, %v2904
      %v3047 = vpop.permute.xlu0 %3046
      %3050 = vset.pattern.permute.xlu0 0
      %3051 = vperm.xlu0 %3050, %v2905
      %v3052 = vpop.permute.xlu0 %3051
      %3055 = vset.pattern.permute.xlu0 0
      %3056 = vperm.xlu0 %3055, %v2906
      %v3057 = vpop.permute.xlu0 %3056
      %3060 = vset.pattern.permute.xlu0 0
      %3061 = vperm.xlu0 %3060, %v2907
      %v3062 = vpop.permute.xlu0 %3061
      %3065 = vset.pattern.permute.xlu0 0
      %3066 = vperm.xlu0 %3065, %v2908
      %v3067 = vpop.permute.xlu0 %3066
      %v3069 = vmul.f32 %v2718, %v2912
      %v3070 = vmul.f32 %v2721, %v2917
      %v3071 = vmul.f32 %v2726, %v2922
      %v3072 = vmul.f32 %v2729, %v2927
      %v3073 = vmul.f32 %v2734, %v2932
      %v3074 = vmul.f32 %v2737, %v2937
      %v3075 = vmul.f32 %v2742, %v2942
      %v3076 = vmul.f32 %v2745, %v2947
      %v3077 = vmul.f32 %v2750, %v2952
      %v3078 = vmul.f32 %v2753, %v2957
      %v3079 = vmul.f32 %v2758, %v2962
      %v3080 = vmul.f32 %v2761, %v2967
      %v3081 = vmul.f32 %v2766, %v2972
      %v3082 = vmul.f32 %v2769, %v2977
      %v3083 = vmul.f32 %v2774, %v2982
      %v3084 = vmul.f32 %v2777, %v2987
      %v3085 = vmul.f32 %v2782, %v2992
      %v3086 = vmul.f32 %v2785, %v2997
      %v3087 = vmul.f32 %v2790, %v3002
      %v3088 = vmul.f32 %v2793, %v3007
      %v3089 = vmul.f32 %v2798, %v3012
      %v3090 = vmul.f32 %v2801, %v3017
      %v3091 = vmul.f32 %v2806, %v3022
      %v3092 = vmul.f32 %v2809, %v3027
      %v3093 = vmul.f32 %v2814, %v3032
      %v3094 = vmul.f32 %v2817, %v3037
      %v3095 = vmul.f32 %v2822, %v3042
      %v3096 = vmul.f32 %v2825, %v3047
      %v3097 = vmul.f32 %v2830, %v3052
      %v3098 = vmul.f32 %v2833, %v3057
      %v3099 = vmul.f32 %v2838, %v3062
      %v3100 = vmul.f32 %v2841, %v3067
      %v3101 = vadd.f32 %v2844, %v3069
      %v3102 = vadd.f32 %v2845, %v3070
      %v3103 = vadd.f32 %v2846, %v3071
      %v3104 = vadd.f32 %v2847, %v3072
      %v3105 = vadd.f32 %v2848, %v3073
      %v3106 = vadd.f32 %v2849, %v3074
      %v3107 = vadd.f32 %v2850, %v3075
      %v3108 = vadd.f32 %v2851, %v3076
      %v3109 = vadd.f32 %v2852, %v3077
      %v3110 = vadd.f32 %v2853, %v3078
      %v3111 = vadd.f32 %v2854, %v3079
      %v3112 = vadd.f32 %v2855, %v3080
      %v3113 = vadd.f32 %v2856, %v3081
      %v3114 = vadd.f32 %v2857, %v3082
      %v3115 = vadd.f32 %v2858, %v3083
      %v3116 = vadd.f32 %v2859, %v3084
      %v3117 = vadd.f32 %v2860, %v3085
      %v3118 = vadd.f32 %v2861, %v3086
      %v3119 = vadd.f32 %v2862, %v3087
      %v3120 = vadd.f32 %v2863, %v3088
      %v3121 = vadd.f32 %v2864, %v3089
      %v3122 = vadd.f32 %v2865, %v3090
      %v3123 = vadd.f32 %v2866, %v3091
      %v3124 = vadd.f32 %v2867, %v3092
      %v3125 = vadd.f32 %v2868, %v3093
      %v3126 = vadd.f32 %v2869, %v3094
      %v3127 = vadd.f32 %v2870, %v3095
      %v3128 = vadd.f32 %v2871, %v3096
      %v3129 = vadd.f32 %v2872, %v3097
      %v3130 = vadd.f32 %v2873, %v3098
      %v3131 = vadd.f32 %v2874, %v3099
      %v3132 = vadd.f32 %v2875, %v3100
      %3133 = vst.msk [vmem:[#allocation3] sm:$0xff] %vm727, %v3101
      %3134 = vst.msk [vmem:[#allocation3 + $0x8] sm:$0xff] %vm727, %v3102
      %3135 = vst.msk [vmem:[#allocation3 + $0x10] sm:$0xff] %vm727, %v3103
      %3136 = vst.msk [vmem:[#allocation3 + $0x18] sm:$0xff] %vm727, %v3104
      %3137 = vst.msk [vmem:[#allocation3 + $0x20] sm:$0xff] %vm727, %v3105
      %3138 = vst.msk [vmem:[#allocation3 + $0x28] sm:$0xff] %vm727, %v3106
      %3139 = vst.msk [vmem:[#allocation3 + $0x30] sm:$0xff] %vm727, %v3107
      %3140 = vst.msk [vmem:[#allocation3 + $0x38] sm:$0xff] %vm727, %v3108
      %3141 = vst.msk [vmem:[#allocation3 + $0x40] sm:$0xff] %vm727, %v3109
      %3142 = vst.msk [vmem:[#allocation3 + $0x48] sm:$0xff] %vm727, %v3110
      %3143 = vst.msk [vmem:[#allocation3 + $0x50] sm:$0xff] %vm727, %v3111
      %3144 = vst.msk [vmem:[#allocation3 + $0x58] sm:$0xff] %vm727, %v3112
      %3145 = vst.msk [vmem:[#allocation3 + $0x60] sm:$0xff] %vm727, %v3113
      %3146 = vst.msk [vmem:[#allocation3 + $0x68] sm:$0xff] %vm727, %v3114
      %3147 = vst.msk [vmem:[#allocation3 + $0x70] sm:$0xff] %vm727, %v3115
      %3148 = vst.msk [vmem:[#allocation3 + $0x78] sm:$0xff] %vm727, %v3116
      %3149 = vst.msk [vmem:[#allocation3 + $0x80] sm:$0xff] %vm727, %v3117
      %3150 = vst.msk [vmem:[#allocation3 + $0x88] sm:$0xff] %vm727, %v3118
      %3151 = vst.msk [vmem:[#allocation3 + $0x90] sm:$0xff] %vm727, %v3119
      %3152 = vst.msk [vmem:[#allocation3 + $0x98] sm:$0xff] %vm727, %v3120
      %3153 = vst.msk [vmem:[#allocation3 + $0xa0] sm:$0xff] %vm727, %v3121
      %3154 = vst.msk [vmem:[#allocation3 + $0xa8] sm:$0xff] %vm727, %v3122
      %3155 = vst.msk [vmem:[#allocation3 + $0xb0] sm:$0xff] %vm727, %v3123
      %3156 = vst.msk [vmem:[#allocation3 + $0xb8] sm:$0xff] %vm727, %v3124
      %3157 = vst.msk [vmem:[#allocation3 + $0xc0] sm:$0xff] %vm727, %v3125
      %3158 = vst.msk [vmem:[#allocation3 + $0xc8] sm:$0xff] %vm727, %v3126
      %3159 = vst.msk [vmem:[#allocation3 + $0xd0] sm:$0xff] %vm727, %v3127
      %3160 = vst.msk [vmem:[#allocation3 + $0xd8] sm:$0xff] %vm727, %v3128
      %3161 = vst.msk [vmem:[#allocation3 + $0xe0] sm:$0xff] %vm727, %v3129
      %3162 = vst.msk [vmem:[#allocation3 + $0xe8] sm:$0xff] %vm727, %v3130
      %3163 = vst.msk [vmem:[#allocation3 + $0xf0] sm:$0xff] %vm727, %v3131
      %3164 = vst.msk [vmem:[#allocation3 + $0xf8] sm:$0xff] %vm727, %v3132
      %v3165 = vld [vmem:[#allocation2 + $0x28] sm:$0xff]
      %v3166 = vld [vmem:[#allocation2 + $0x30] sm:$0xff]
      %v3167 = vld [vmem:[#allocation2 + $0x38] sm:$0xff]
      %v3168 = vld [vmem:[#allocation2 + $0x40] sm:$0xff]
      %v3169 = vld [vmem:[#allocation2 + $0x48] sm:$0xff]
      %v3170 = vld [vmem:[#allocation2 + $0x50] sm:$0xff]
      %v3171 = vld [vmem:[#allocation2 + $0x58] sm:$0xff]
      %v3172 = vld [vmem:[#allocation2 + $0x60] sm:$0xff]
      %v3173 = vld [vmem:[#allocation2 + $0x68] sm:$0xff]
      %v3174 = vld [vmem:[#allocation2 + $0x70] sm:$0xff]
      %v3175 = vld [vmem:[#allocation2 + $0x78] sm:$0xff]
      %v3176 = vld [vmem:[#allocation2 + $0x80] sm:$0xff]
      %v3177 = vld [vmem:[#allocation2 + $0x88] sm:$0xff]
      %v3178 = vld [vmem:[#allocation2 + $0x90] sm:$0xff]
      %v3179 = vld [vmem:[#allocation2 + $0x98] sm:$0xff]
      %v3180 = vld [vmem:[#allocation2 + $0xa0] sm:$0xff]
      %v3181 = vld [vmem:[#allocation2 + $0xa8] sm:$0xff]
      %v3182 = vld [vmem:[#allocation2 + $0xb0] sm:$0xff]
      %v3183 = vld [vmem:[#allocation2 + $0xb8] sm:$0xff]
      %v3184 = vld [vmem:[#allocation2 + $0xc0] sm:$0xff]
      %v3185 = vld [vmem:[#allocation2 + $0xc8] sm:$0xff]
      %v3186 = vld [vmem:[#allocation2 + $0xd0] sm:$0xff]
      %v3187 = vld [vmem:[#allocation2 + $0xd8] sm:$0xff]
      %v3188 = vld [vmem:[#allocation2 + $0xe0] sm:$0xff]
      %v3189 = vld [vmem:[#allocation2 + $0xe8] sm:$0xff]
      %v3190 = vld [vmem:[#allocation2 + $0xf0] sm:$0xff]
      %v3191 = vld [vmem:[#allocation2 + $0xf8] sm:$0xff]
      %v3192 = vld [vmem:[#allocation2 + $0x100] sm:$0xff]
      %v3193 = vld [vmem:[#allocation2 + $0x108] sm:$0xff]
      %v3194 = vld [vmem:[#allocation2 + $0x110] sm:$0xff]
      %v3195 = vld [vmem:[#allocation2 + $0x118] sm:$0xff]
      %v3196 = vld [vmem:[#allocation2 + $0x120] sm:$0xff]
      %v3197 = vpack.c.bf16 %v3166, %v3165
      %v3198 = vpack.c.bf16 %v3168, %v3167
      %v3199 = vpack.c.bf16 %v3170, %v3169
      %v3200 = vpack.c.bf16 %v3172, %v3171
      %v3201 = vpack.c.bf16 %v3174, %v3173
      %v3202 = vpack.c.bf16 %v3176, %v3175
      %v3203 = vpack.c.bf16 %v3178, %v3177
      %v3204 = vpack.c.bf16 %v3180, %v3179
      %v3205 = vpack.c.bf16 %v3182, %v3181
      %v3206 = vpack.c.bf16 %v3184, %v3183
      %v3207 = vpack.c.bf16 %v3186, %v3185
      %v3208 = vpack.c.bf16 %v3188, %v3187
      %v3209 = vpack.c.bf16 %v3190, %v3189
      %v3210 = vpack.c.bf16 %v3192, %v3191
      %v3211 = vpack.c.bf16 %v3194, %v3193
      %v3212 = vpack.c.bf16 %v3196, %v3195
      %s3213 = scalar_lea.vmem %s3, 16
      %v3214 = vld [vmem:[%s3213] sm:$0xf]
      %v3216 = vsel %vm727, %v3197, 0
      %v3219 = vsel %vm727, %v3198, 0
      %v3222 = vsel %vm727, %v3199, 0
      %v3225 = vsel %vm727, %v3200, 0
      %v3228 = vsel %vm727, %v3201, 0
      %v3231 = vsel %vm727, %v3202, 0
      %v3234 = vsel %vm727, %v3203, 0
      %v3237 = vsel %vm727, %v3204, 0
      %v3240 = vsel %vm727, %v3205, 0
      %v3243 = vsel %vm727, %v3206, 0
      %v3246 = vsel %vm727, %v3207, 0
      %v3249 = vsel %vm727, %v3208, 0
      %v3252 = vsel %vm727, %v3209, 0
      %v3255 = vsel %vm727, %v3210, 0
      %v3258 = vsel %vm727, %v3211, 0
      %v3261 = vsel %vm727, %v3212, 0
      %v3264 = vsel %vm931, %v3214, 0
      %3266 = vmatprep.subr.bf16.mxu0 0
      %3267 = vmatpush1.bf16.msra.mxu0 %v3264
      %3268 = vmatprep.subr.bf16.mxu0 0
      %3269 = vmatpush1.bf16.msra.mxu0 0
      %3270 = vmatprep.subr.bf16.mxu0 0
      %3271 = vmatpush1.bf16.msra.mxu0 0
      %3272 = vmatprep.subr.bf16.mxu0 0
      %3273 = vmatpush1.bf16.msra.mxu0 0
      %3274 = vmatprep.subr.bf16.mxu0 0
      %3275 = vmatpush1.bf16.msra.mxu0 0
      %3276 = vmatprep.subr.bf16.mxu0 0
      %3277 = vmatpush1.bf16.msra.mxu0 0
      %3278 = vmatprep.subr.bf16.mxu0 0
      %3279 = vmatpush1.bf16.msra.mxu0 0
      %3280 = vmatprep.subr.bf16.mxu0 0
      %3281 = vmatpush1.bf16.msra.mxu0 0
      %3282 = vmatprep.subr.bf16.mxu0 0
      %3283 = vmatpush1.bf16.msra.mxu0 0
      %3284 = vmatprep.subr.bf16.mxu0 0
      %3285 = vmatpush1.bf16.msra.mxu0 0
      %3286 = vmatprep.subr.bf16.mxu0 0
      %3287 = vmatpush1.bf16.msra.mxu0 0
      %3288 = vmatprep.subr.bf16.mxu0 0
      %3289 = vmatpush1.bf16.msra.mxu0 0
      %3290 = vmatprep.subr.bf16.mxu0 0
      %3291 = vmatpush1.bf16.msra.mxu0 0
      %3292 = vmatprep.subr.bf16.mxu0 0
      %3293 = vmatpush1.bf16.msra.mxu0 0
      %3294 = vmatprep.subr.bf16.mxu0 0
      %3295 = vmatpush1.bf16.msra.mxu0 0
      %3296 = vmatprep.subr.bf16.mxu0 0
      %3297 = vmatpush1.bf16.msra.mxu0 0
      %3298 = vmatprep.mubr.bf16.mxu0 0
      %3299 = vmatmul.mubr.bf16.gmra.mrb[0].mxu0 %v3216
      %v3300 = vpop.f32.mrb[0].mxu0
      %v3301 = vadd.f32 0.0, %v3300
      %v3302 = vpop.f32.mrb[0].mxu0
      %v3303 = vpop.f32.mrb[0].mxu0
      %v3304 = vadd.f32 0.0, %v3303
      %v3305 = vpop.f32.mrb[0].mxu0
      %3306 = vmatprep.mubr.bf16.mxu0 0
      %3307 = vmatmul.mubr.bf16.gmra.mrb[0].mxu0 %v3219
      %v3308 = vpop.f32.mrb[0].mxu0
      %v3309 = vadd.f32 0.0, %v3308
      %v3310 = vpop.f32.mrb[0].mxu0
      %v3311 = vpop.f32.mrb[0].mxu0
      %v3312 = vadd.f32 0.0, %v3311
      %v3313 = vpop.f32.mrb[0].mxu0
      %3314 = vmatprep.mubr.bf16.mxu0 0
      %3315 = vmatmul.mubr.bf16.gmra.mrb[0].mxu0 %v3222
      %v3316 = vpop.f32.mrb[0].mxu0
      %v3317 = vadd.f32 0.0, %v3316
      %v3318 = vpop.f32.mrb[0].mxu0
      %v3319 = vpop.f32.mrb[0].mxu0
      %v3320 = vadd.f32 0.0, %v3319
      %v3321 = vpop.f32.mrb[0].mxu0
      %3322 = vmatprep.mubr.bf16.mxu0 0
      %3323 = vmatmul.mubr.bf16.gmra.mrb[0].mxu0 %v3225
      %v3324 = vpop.f32.mrb[0].mxu0
      %v3325 = vadd.f32 0.0, %v3324
      %v3326 = vpop.f32.mrb[0].mxu0
      %v3327 = vpop.f32.mrb[0].mxu0
      %v3328 = vadd.f32 0.0, %v3327
      %v3329 = vpop.f32.mrb[0].mxu0
      %3330 = vmatprep.mubr.bf16.mxu0 0
      %3331 = vmatmul.mubr.bf16.gmra.mrb[0].mxu0 %v3228
      %v3332 = vpop.f32.mrb[0].mxu0
      %v3333 = vadd.f32 0.0, %v3332
      %v3334 = vpop.f32.mrb[0].mxu0
      %v3335 = vpop.f32.mrb[0].mxu0
      %v3336 = vadd.f32 0.0, %v3335
      %v3337 = vpop.f32.mrb[0].mxu0
      %3338 = vmatprep.mubr.bf16.mxu0 0
      %3339 = vmatmul.mubr.bf16.gmra.mrb[0].mxu0 %v3231
      %v3340 = vpop.f32.mrb[0].mxu0
      %v3341 = vadd.f32 0.0, %v3340
      %v3342 = vpop.f32.mrb[0].mxu0
      %v3343 = vpop.f32.mrb[0].mxu0
      %v3344 = vadd.f32 0.0, %v3343
      %v3345 = vpop.f32.mrb[0].mxu0
      %3346 = vmatprep.mubr.bf16.mxu0 0
      %3347 = vmatmul.mubr.bf16.gmra.mrb[0].mxu0 %v3234
      %v3348 = vpop.f32.mrb[0].mxu0
      %v3349 = vadd.f32 0.0, %v3348
      %v3350 = vpop.f32.mrb[0].mxu0
      %v3351 = vpop.f32.mrb[0].mxu0
      %v3352 = vadd.f32 0.0, %v3351
      %v3353 = vpop.f32.mrb[0].mxu0
      %3354 = vmatprep.mubr.bf16.mxu0 0
      %3355 = vmatmul.mubr.bf16.gmra.mrb[0].mxu0 %v3237
      %v3356 = vpop.f32.mrb[0].mxu0
      %v3357 = vadd.f32 0.0, %v3356
      %v3358 = vpop.f32.mrb[0].mxu0
      %v3359 = vpop.f32.mrb[0].mxu0
      %v3360 = vadd.f32 0.0, %v3359
      %v3361 = vpop.f32.mrb[0].mxu0
      %3362 = vmatprep.mubr.bf16.mxu0 0
      %3363 = vmatmul.mubr.bf16.gmra.mrb[0].mxu0 %v3240
      %v3364 = vpop.f32.mrb[0].mxu0
      %v3365 = vadd.f32 0.0, %v3364
      %v3366 = vpop.f32.mrb[0].mxu0
      %v3367 = vpop.f32.mrb[0].mxu0
      %v3368 = vadd.f32 0.0, %v3367
      %v3369 = vpop.f32.mrb[0].mxu0
      %3370 = vmatprep.mubr.bf16.mxu0 0
      %3371 = vmatmul.mubr.bf16.gmra.mrb[0].mxu0 %v3243
      %v3372 = vpop.f32.mrb[0].mxu0
      %v3373 = vadd.f32 0.0, %v3372
      %v3374 = vpop.f32.mrb[0].mxu0
      %v3375 = vpop.f32.mrb[0].mxu0
      %v3376 = vadd.f32 0.0, %v3375
      %v3377 = vpop.f32.mrb[0].mxu0
      %3378 = vmatprep.mubr.bf16.mxu0 0
      %3379 = vmatmul.mubr.bf16.gmra.mrb[0].mxu0 %v3246
      %v3380 = vpop.f32.mrb[0].mxu0
      %v3381 = vadd.f32 0.0, %v3380
      %v3382 = vpop.f32.mrb[0].mxu0
      %v3383 = vpop.f32.mrb[0].mxu0
      %v3384 = vadd.f32 0.0, %v3383
      %v3385 = vpop.f32.mrb[0].mxu0
      %3386 = vmatprep.mubr.bf16.mxu0 0
      %3387 = vmatmul.mubr.bf16.gmra.mrb[0].mxu0 %v3249
      %v3388 = vpop.f32.mrb[0].mxu0
      %v3389 = vadd.f32 0.0, %v3388
      %v3390 = vpop.f32.mrb[0].mxu0
      %v3391 = vpop.f32.mrb[0].mxu0
      %v3392 = vadd.f32 0.0, %v3391
      %v3393 = vpop.f32.mrb[0].mxu0
      %3394 = vmatprep.mubr.bf16.mxu0 0
      %3395 = vmatmul.mubr.bf16.gmra.mrb[0].mxu0 %v3252
      %v3396 = vpop.f32.mrb[0].mxu0
      %v3397 = vadd.f32 0.0, %v3396
      %v3398 = vpop.f32.mrb[0].mxu0
      %v3399 = vpop.f32.mrb[0].mxu0
      %v3400 = vadd.f32 0.0, %v3399
      %v3401 = vpop.f32.mrb[0].mxu0
      %3402 = vmatprep.mubr.bf16.mxu0 0
      %3403 = vmatmul.mubr.bf16.gmra.mrb[0].mxu0 %v3255
      %v3404 = vpop.f32.mrb[0].mxu0
      %v3405 = vadd.f32 0.0, %v3404
      %v3406 = vpop.f32.mrb[0].mxu0
      %v3407 = vpop.f32.mrb[0].mxu0
      %v3408 = vadd.f32 0.0, %v3407
      %v3409 = vpop.f32.mrb[0].mxu0
      %3410 = vmatprep.mubr.bf16.mxu0 0
      %3411 = vmatmul.mubr.bf16.gmra.mrb[0].mxu0 %v3258
      %v3412 = vpop.f32.mrb[0].mxu0
      %v3413 = vadd.f32 0.0, %v3412
      %v3414 = vpop.f32.mrb[0].mxu0
      %v3415 = vpop.f32.mrb[0].mxu0
      %v3416 = vadd.f32 0.0, %v3415
      %v3417 = vpop.f32.mrb[0].mxu0
      %3418 = vmatprep.mubr.bf16.mxu0 0
      %3419 = vmatmul.mubr.bf16.gmra.mrb[0].mxu0 %v3261
      %v3420 = vpop.f32.mrb[0].mxu0
      %v3421 = vadd.f32 0.0, %v3420
      %v3422 = vpop.f32.mrb[0].mxu0
      %v3423 = vpop.f32.mrb[0].mxu0
      %v3424 = vadd.f32 0.0, %v3423
      %v3425 = vpop.f32.mrb[0].mxu0
      %3426 = vdwg.mxu0
      %v3427 = vld [vmem:[#allocation3] sm:$0xff]
      %v3428 = vld [vmem:[#allocation3 + $0x8] sm:$0xff]
      %v3429 = vld [vmem:[#allocation3 + $0x10] sm:$0xff]
      %v3430 = vld [vmem:[#allocation3 + $0x18] sm:$0xff]
      %v3431 = vld [vmem:[#allocation3 + $0x20] sm:$0xff]
      %v3432 = vld [vmem:[#allocation3 + $0x28] sm:$0xff]
      %v3433 = vld [vmem:[#allocation3 + $0x30] sm:$0xff]
      %v3434 = vld [vmem:[#allocation3 + $0x38] sm:$0xff]
      %v3435 = vld [vmem:[#allocation3 + $0x40] sm:$0xff]
      %v3436 = vld [vmem:[#allocation3 + $0x48] sm:$0xff]
      %v3437 = vld [vmem:[#allocation3 + $0x50] sm:$0xff]
      %v3438 = vld [vmem:[#allocation3 + $0x58] sm:$0xff]
      %v3439 = vld [vmem:[#allocation3 + $0x60] sm:$0xff]
      %v3440 = vld [vmem:[#allocation3 + $0x68] sm:$0xff]
      %v3441 = vld [vmem:[#allocation3 + $0x70] sm:$0xff]
      %v3442 = vld [vmem:[#allocation3 + $0x78] sm:$0xff]
      %v3443 = vld [vmem:[#allocation3 + $0x80] sm:$0xff]
      %v3444 = vld [vmem:[#allocation3 + $0x88] sm:$0xff]
      %v3445 = vld [vmem:[#allocation3 + $0x90] sm:$0xff]
      %v3446 = vld [vmem:[#allocation3 + $0x98] sm:$0xff]
      %v3447 = vld [vmem:[#allocation3 + $0xa0] sm:$0xff]
      %v3448 = vld [vmem:[#allocation3 + $0xa8] sm:$0xff]
      %v3449 = vld [vmem:[#allocation3 + $0xb0] sm:$0xff]
      %v3450 = vld [vmem:[#allocation3 + $0xb8] sm:$0xff]
      %v3451 = vld [vmem:[#allocation3 + $0xc0] sm:$0xff]
      %v3452 = vld [vmem:[#allocation3 + $0xc8] sm:$0xff]
      %v3453 = vld [vmem:[#allocation3 + $0xd0] sm:$0xff]
      %v3454 = vld [vmem:[#allocation3 + $0xd8] sm:$0xff]
      %v3455 = vld [vmem:[#allocation3 + $0xe0] sm:$0xff]
      %v3456 = vld [vmem:[#allocation3 + $0xe8] sm:$0xff]
      %v3457 = vld [vmem:[#allocation3 + $0xf0] sm:$0xff]
      %v3458 = vld [vmem:[#allocation3 + $0xf8] sm:$0xff]
      %s3459 = scalar_lea.vmem %s1, 1024
      %v3460 = vld [vmem:[%s3459] sm:$0xff]
      %v3461 = vld [vmem:[%s3459 + $0x8] sm:$0xff]
      %v3462 = vld [vmem:[%s3459 + $0x10] sm:$0xff]
      %v3463 = vld [vmem:[%s3459 + $0x18] sm:$0xff]
      %v3464 = vld [vmem:[%s3459 + $0x20] sm:$0xff]
      %v3465 = vld [vmem:[%s3459 + $0x28] sm:$0xff]
      %v3466 = vld [vmem:[%s3459 + $0x30] sm:$0xff]
      %v3467 = vld [vmem:[%s3459 + $0x38] sm:$0xff]
      %v3468 = vld [vmem:[%s3459 + $0x40] sm:$0xff]
      %v3469 = vld [vmem:[%s3459 + $0x48] sm:$0xff]
      %v3470 = vld [vmem:[%s3459 + $0x50] sm:$0xff]
      %v3471 = vld [vmem:[%s3459 + $0x58] sm:$0xff]
      %v3472 = vld [vmem:[%s3459 + $0x60] sm:$0xff]
      %v3473 = vld [vmem:[%s3459 + $0x68] sm:$0xff]
      %v3474 = vld [vmem:[%s3459 + $0x70] sm:$0xff]
      %v3475 = vld [vmem:[%s3459 + $0x78] sm:$0xff]
      %v3476 = vld [vmem:[%s3459 + $0x80] sm:$0xff]
      %v3477 = vld [vmem:[%s3459 + $0x88] sm:$0xff]
      %v3478 = vld [vmem:[%s3459 + $0x90] sm:$0xff]
      %v3479 = vld [vmem:[%s3459 + $0x98] sm:$0xff]
      %v3480 = vld [vmem:[%s3459 + $0xa0] sm:$0xff]
      %v3481 = vld [vmem:[%s3459 + $0xa8] sm:$0xff]
      %v3482 = vld [vmem:[%s3459 + $0xb0] sm:$0xff]
      %v3483 = vld [vmem:[%s3459 + $0xb8] sm:$0xff]
      %v3484 = vld [vmem:[%s3459 + $0xc0] sm:$0xff]
      %v3485 = vld [vmem:[%s3459 + $0xc8] sm:$0xff]
      %v3486 = vld [vmem:[%s3459 + $0xd0] sm:$0xff]
      %v3487 = vld [vmem:[%s3459 + $0xd8] sm:$0xff]
      %v3488 = vld [vmem:[%s3459 + $0xe0] sm:$0xff]
      %v3489 = vld [vmem:[%s3459 + $0xe8] sm:$0xff]
      %v3490 = vld [vmem:[%s3459 + $0xf0] sm:$0xff]
      %v3491 = vld [vmem:[%s3459 + $0xf8] sm:$0xff]
      %3493 = vset.pattern.permute.xlu0 0
      %3494 = vperm.xlu0 %3493, %v3460
      %v3495 = vpop.permute.xlu0 %3494
      %3498 = vset.pattern.permute.xlu0 0
      %3499 = vperm.xlu0 %3498, %v3461
      %v3500 = vpop.permute.xlu0 %3499
      %3503 = vset.pattern.permute.xlu0 0
      %3504 = vperm.xlu0 %3503, %v3462
      %v3505 = vpop.permute.xlu0 %3504
      %3508 = vset.pattern.permute.xlu0 0
      %3509 = vperm.xlu0 %3508, %v3463
      %v3510 = vpop.permute.xlu0 %3509
      %3513 = vset.pattern.permute.xlu0 0
      %3514 = vperm.xlu0 %3513, %v3464
      %v3515 = vpop.permute.xlu0 %3514
      %3518 = vset.pattern.permute.xlu0 0
      %3519 = vperm.xlu0 %3518, %v3465
      %v3520 = vpop.permute.xlu0 %3519
      %3523 = vset.pattern.permute.xlu0 0
      %3524 = vperm.xlu0 %3523, %v3466
      %v3525 = vpop.permute.xlu0 %3524
      %3528 = vset.pattern.permute.xlu0 0
      %3529 = vperm.xlu0 %3528, %v3467
      %v3530 = vpop.permute.xlu0 %3529
      %3533 = vset.pattern.permute.xlu0 0
      %3534 = vperm.xlu0 %3533, %v3468
      %v3535 = vpop.permute.xlu0 %3534
      %3538 = vset.pattern.permute.xlu0 0
      %3539 = vperm.xlu0 %3538, %v3469
      %v3540 = vpop.permute.xlu0 %3539
      %3543 = vset.pattern.permute.xlu0 0
      %3544 = vperm.xlu0 %3543, %v3470
      %v3545 = vpop.permute.xlu0 %3544
      %3548 = vset.pattern.permute.xlu0 0
      %3549 = vperm.xlu0 %3548, %v3471
      %v3550 = vpop.permute.xlu0 %3549
      %3553 = vset.pattern.permute.xlu0 0
      %3554 = vperm.xlu0 %3553, %v3472
      %v3555 = vpop.permute.xlu0 %3554
      %3558 = vset.pattern.permute.xlu0 0
      %3559 = vperm.xlu0 %3558, %v3473
      %v3560 = vpop.permute.xlu0 %3559
      %3563 = vset.pattern.permute.xlu0 0
      %3564 = vperm.xlu0 %3563, %v3474
      %v3565 = vpop.permute.xlu0 %3564
      %3568 = vset.pattern.permute.xlu0 0
      %3569 = vperm.xlu0 %3568, %v3475
      %v3570 = vpop.permute.xlu0 %3569
      %3573 = vset.pattern.permute.xlu0 0
      %3574 = vperm.xlu0 %3573, %v3476
      %v3575 = vpop.permute.xlu0 %3574
      %3578 = vset.pattern.permute.xlu0 0
      %3579 = vperm.xlu0 %3578, %v3477
      %v3580 = vpop.permute.xlu0 %3579
      %3583 = vset.pattern.permute.xlu0 0
      %3584 = vperm.xlu0 %3583, %v3478
      %v3585 = vpop.permute.xlu0 %3584
      %3588 = vset.pattern.permute.xlu0 0
      %3589 = vperm.xlu0 %3588, %v3479
      %v3590 = vpop.permute.xlu0 %3589
      %3593 = vset.pattern.permute.xlu0 0
      %3594 = vperm.xlu0 %3593, %v3480
      %v3595 = vpop.permute.xlu0 %3594
      %3598 = vset.pattern.permute.xlu0 0
      %3599 = vperm.xlu0 %3598, %v3481
      %v3600 = vpop.permute.xlu0 %3599
      %3603 = vset.pattern.permute.xlu0 0
      %3604 = vperm.xlu0 %3603, %v3482
      %v3605 = vpop.permute.xlu0 %3604
      %3608 = vset.pattern.permute.xlu0 0
      %3609 = vperm.xlu0 %3608, %v3483
      %v3610 = vpop.permute.xlu0 %3609
      %3613 = vset.pattern.permute.xlu0 0
      %3614 = vperm.xlu0 %3613, %v3484
      %v3615 = vpop.permute.xlu0 %3614
      %3618 = vset.pattern.permute.xlu0 0
      %3619 = vperm.xlu0 %3618, %v3485
      %v3620 = vpop.permute.xlu0 %3619
      %3623 = vset.pattern.permute.xlu0 0
      %3624 = vperm.xlu0 %3623, %v3486
      %v3625 = vpop.permute.xlu0 %3624
      %3628 = vset.pattern.permute.xlu0 0
      %3629 = vperm.xlu0 %3628, %v3487
      %v3630 = vpop.permute.xlu0 %3629
      %3633 = vset.pattern.permute.xlu0 0
      %3634 = vperm.xlu0 %3633, %v3488
      %v3635 = vpop.permute.xlu0 %3634
      %3638 = vset.pattern.permute.xlu0 0
      %3639 = vperm.xlu0 %3638, %v3489
      %v3640 = vpop.permute.xlu0 %3639
      %3643 = vset.pattern.permute.xlu0 0
      %3644 = vperm.xlu0 %3643, %v3490
      %v3645 = vpop.permute.xlu0 %3644
      %3648 = vset.pattern.permute.xlu0 0
      %3649 = vperm.xlu0 %3648, %v3491
      %v3650 = vpop.permute.xlu0 %3649
      %v3652 = vmul.f32 %v3301, %v3495
      %v3653 = vmul.f32 %v3304, %v3500
      %v3654 = vmul.f32 %v3309, %v3505
      %v3655 = vmul.f32 %v3312, %v3510
      %v3656 = vmul.f32 %v3317, %v3515
      %v3657 = vmul.f32 %v3320, %v3520
      %v3658 = vmul.f32 %v3325, %v3525
      %v3659 = vmul.f32 %v3328, %v3530
      %v3660 = vmul.f32 %v3333, %v3535
      %v3661 = vmul.f32 %v3336, %v3540
      %v3662 = vmul.f32 %v3341, %v3545
      %v3663 = vmul.f32 %v3344, %v3550
      %v3664 = vmul.f32 %v3349, %v3555
      %v3665 = vmul.f32 %v3352, %v3560
      %v3666 = vmul.f32 %v3357, %v3565
      %v3667 = vmul.f32 %v3360, %v3570
      %v3668 = vmul.f32 %v3365, %v3575
      %v3669 = vmul.f32 %v3368, %v3580
      %v3670 = vmul.f32 %v3373, %v3585
      %v3671 = vmul.f32 %v3376, %v3590
      %v3672 = vmul.f32 %v3381, %v3595
      %v3673 = vmul.f32 %v3384, %v3600
      %v3674 = vmul.f32 %v3389, %v3605
      %v3675 = vmul.f32 %v3392, %v3610
      %v3676 = vmul.f32 %v3397, %v3615
      %v3677 = vmul.f32 %v3400, %v3620
      %v3678 = vmul.f32 %v3405, %v3625
      %v3679 = vmul.f32 %v3408, %v3630
      %v3680 = vmul.f32 %v3413, %v3635
      %v3681 = vmul.f32 %v3416, %v3640
      %v3682 = vmul.f32 %v3421, %v3645
      %v3683 = vmul.f32 %v3424, %v3650
      %v3684 = vadd.f32 %v3427, %v3652
      %v3685 = vadd.f32 %v3428, %v3653
      %v3686 = vadd.f32 %v3429, %v3654
      %v3687 = vadd.f32 %v3430, %v3655
      %v3688 = vadd.f32 %v3431, %v3656
      %v3689 = vadd.f32 %v3432, %v3657
      %v3690 = vadd.f32 %v3433, %v3658
      %v3691 = vadd.f32 %v3434, %v3659
      %v3692 = vadd.f32 %v3435, %v3660
      %v3693 = vadd.f32 %v3436, %v3661
      %v3694 = vadd.f32 %v3437, %v3662
      %v3695 = vadd.f32 %v3438, %v3663
      %v3696 = vadd.f32 %v3439, %v3664
      %v3697 = vadd.f32 %v3440, %v3665
      %v3698 = vadd.f32 %v3441, %v3666
      %v3699 = vadd.f32 %v3442, %v3667
      %v3700 = vadd.f32 %v3443, %v3668
      %v3701 = vadd.f32 %v3444, %v3669
      %v3702 = vadd.f32 %v3445, %v3670
      %v3703 = vadd.f32 %v3446, %v3671
      %v3704 = vadd.f32 %v3447, %v3672
      %v3705 = vadd.f32 %v3448, %v3673
      %v3706 = vadd.f32 %v3449, %v3674
      %v3707 = vadd.f32 %v3450, %v3675
      %v3708 = vadd.f32 %v3451, %v3676
      %v3709 = vadd.f32 %v3452, %v3677
      %v3710 = vadd.f32 %v3453, %v3678
      %v3711 = vadd.f32 %v3454, %v3679
      %v3712 = vadd.f32 %v3455, %v3680
      %v3713 = vadd.f32 %v3456, %v3681
      %v3714 = vadd.f32 %v3457, %v3682
      %v3715 = vadd.f32 %v3458, %v3683
      %3716 = vst.msk [vmem:[#allocation3] sm:$0xff] %vm727, %v3684
      %3717 = vst.msk [vmem:[#allocation3 + $0x8] sm:$0xff] %vm727, %v3685
      %3718 = vst.msk [vmem:[#allocation3 + $0x10] sm:$0xff] %vm727, %v3686
      %3719 = vst.msk [vmem:[#allocation3 + $0x18] sm:$0xff] %vm727, %v3687
      %3720 = vst.msk [vmem:[#allocation3 + $0x20] sm:$0xff] %vm727, %v3688
      %3721 = vst.msk [vmem:[#allocation3 + $0x28] sm:$0xff] %vm727, %v3689
      %3722 = vst.msk [vmem:[#allocation3 + $0x30] sm:$0xff] %vm727, %v3690
      %3723 = vst.msk [vmem:[#allocation3 + $0x38] sm:$0xff] %vm727, %v3691
      %3724 = vst.msk [vmem:[#allocation3 + $0x40] sm:$0xff] %vm727, %v3692
      %3725 = vst.msk [vmem:[#allocation3 + $0x48] sm:$0xff] %vm727, %v3693
      %3726 = vst.msk [vmem:[#allocation3 + $0x50] sm:$0xff] %vm727, %v3694
      %3727 = vst.msk [vmem:[#allocation3 + $0x58] sm:$0xff] %vm727, %v3695
      %3728 = vst.msk [vmem:[#allocation3 + $0x60] sm:$0xff] %vm727, %v3696
      %3729 = vst.msk [vmem:[#allocation3 + $0x68] sm:$0xff] %vm727, %v3697
      %3730 = vst.msk [vmem:[#allocation3 + $0x70] sm:$0xff] %vm727, %v3698
      %3731 = vst.msk [vmem:[#allocation3 + $0x78] sm:$0xff] %vm727, %v3699
      %3732 = vst.msk [vmem:[#allocation3 + $0x80] sm:$0xff] %vm727, %v3700
      %3733 = vst.msk [vmem:[#allocation3 + $0x88] sm:$0xff] %vm727, %v3701
      %3734 = vst.msk [vmem:[#allocation3 + $0x90] sm:$0xff] %vm727, %v3702
      %3735 = vst.msk [vmem:[#allocation3 + $0x98] sm:$0xff] %vm727, %v3703
      %3736 = vst.msk [vmem:[#allocation3 + $0xa0] sm:$0xff] %vm727, %v3704
      %3737 = vst.msk [vmem:[#allocation3 + $0xa8] sm:$0xff] %vm727, %v3705
      %3738 = vst.msk [vmem:[#allocation3 + $0xb0] sm:$0xff] %vm727, %v3706
      %3739 = vst.msk [vmem:[#allocation3 + $0xb8] sm:$0xff] %vm727, %v3707
      %3740 = vst.msk [vmem:[#allocation3 + $0xc0] sm:$0xff] %vm727, %v3708
      %3741 = vst.msk [vmem:[#allocation3 + $0xc8] sm:$0xff] %vm727, %v3709
      %3742 = vst.msk [vmem:[#allocation3 + $0xd0] sm:$0xff] %vm727, %v3710
      %3743 = vst.msk [vmem:[#allocation3 + $0xd8] sm:$0xff] %vm727, %v3711
      %3744 = vst.msk [vmem:[#allocation3 + $0xe0] sm:$0xff] %vm727, %v3712
      %3745 = vst.msk [vmem:[#allocation3 + $0xe8] sm:$0xff] %vm727, %v3713
      %3746 = vst.msk [vmem:[#allocation3 + $0xf0] sm:$0xff] %vm727, %v3714
      %3747 = vst.msk [vmem:[#allocation3 + $0xf8] sm:$0xff] %vm727, %v3715
      %v3748 = vld [vmem:[#allocation2 + $0x2a] sm:$0xff]
      %v3749 = vld [vmem:[#allocation2 + $0x32] sm:$0xff]
      %v3750 = vld [vmem:[#allocation2 + $0x3a] sm:$0xff]
      %v3751 = vld [vmem:[#allocation2 + $0x42] sm:$0xff]
      %v3752 = vld [vmem:[#allocation2 + $0x4a] sm:$0xff]
      %v3753 = vld [vmem:[#allocation2 + $0x52] sm:$0xff]
      %v3754 = vld [vmem:[#allocation2 + $0x5a] sm:$0xff]
      %v3755 = vld [vmem:[#allocation2 + $0x62] sm:$0xff]
      %v3756 = vld [vmem:[#allocation2 + $0x6a] sm:$0xff]
      %v3757 = vld [vmem:[#allocation2 + $0x72] sm:$0xff]
      %v3758 = vld [vmem:[#allocation2 + $0x7a] sm:$0xff]
      %v3759 = vld [vmem:[#allocation2 + $0x82] sm:$0xff]
      %v3760 = vld [vmem:[#allocation2 + $0x8a] sm:$0xff]
      %v3761 = vld [vmem:[#allocation2 + $0x92] sm:$0xff]
      %v3762 = vld [vmem:[#allocation2 + $0x9a] sm:$0xff]
      %v3763 = vld [vmem:[#allocation2 + $0xa2] sm:$0xff]
      %v3764 = vld [vmem:[#allocation2 + $0xaa] sm:$0xff]
      %v3765 = vld [vmem:[#allocation2 + $0xb2] sm:$0xff]
      %v3766 = vld [vmem:[#allocation2 + $0xba] sm:$0xff]
      %v3767 = vld [vmem:[#allocation2 + $0xc2] sm:$0xff]
      %v3768 = vld [vmem:[#allocation2 + $0xca] sm:$0xff]
      %v3769 = vld [vmem:[#allocation2 + $0xd2] sm:$0xff]
      %v3770 = vld [vmem:[#allocation2 + $0xda] sm:$0xff]
      %v3771 = vld [vmem:[#allocation2 + $0xe2] sm:$0xff]
      %v3772 = vld [vmem:[#allocation2 + $0xea] sm:$0xff]
      %v3773 = vld [vmem:[#allocation2 + $0xf2] sm:$0xff]
      %v3774 = vld [vmem:[#allocation2 + $0xfa] sm:$0xff]
      %v3775 = vld [vmem:[#allocation2 + $0x102] sm:$0xff]
      %v3776 = vld [vmem:[#allocation2 + $0x10a] sm:$0xff]
      %v3777 = vld [vmem:[#allocation2 + $0x112] sm:$0xff]
      %v3778 = vld [vmem:[#allocation2 + $0x11a] sm:$0xff]
      %v3779 = vld [vmem:[#allocation2 + $0x122] sm:$0xff]
      %v3780 = vpack.c.bf16 %v3749, %v3748
      %v3781 = vpack.c.bf16 %v3751, %v3750
      %v3782 = vpack.c.bf16 %v3753, %v3752
      %v3783 = vpack.c.bf16 %v3755, %v3754
      %v3784 = vpack.c.bf16 %v3757, %v3756
      %v3785 = vpack.c.bf16 %v3759, %v3758
      %v3786 = vpack.c.bf16 %v3761, %v3760
      %v3787 = vpack.c.bf16 %v3763, %v3762
      %v3788 = vpack.c.bf16 %v3765, %v3764
      %v3789 = vpack.c.bf16 %v3767, %v3766
      %v3790 = vpack.c.bf16 %v3769, %v3768
      %v3791 = vpack.c.bf16 %v3771, %v3770
      %v3792 = vpack.c.bf16 %v3773, %v3772
      %v3793 = vpack.c.bf16 %v3775, %v3774
      %v3794 = vpack.c.bf16 %v3777, %v3776
      %v3795 = vpack.c.bf16 %v3779, %v3778
      %s3796 = scalar_lea.vmem %s3, 20
      %v3797 = vld [vmem:[%s3796] sm:$0xf]
      %v3799 = vsel %vm727, %v3780, 0
      %v3802 = vsel %vm727, %v3781, 0
      %v3805 = vsel %vm727, %v3782, 0
      %v3808 = vsel %vm727, %v3783, 0
      %v3811 = vsel %vm727, %v3784, 0
      %v3814 = vsel %vm727, %v3785, 0
      %v3817 = vsel %vm727, %v3786, 0
      %v3820 = vsel %vm727, %v3787, 0
      %v3823 = vsel %vm727, %v3788, 0
      %v3826 = vsel %vm727, %v3789, 0
      %v3829 = vsel %vm727, %v3790, 0
      %v3832 = vsel %vm727, %v3791, 0
      %v3835 = vsel %vm727, %v3792, 0
      %v3838 = vsel %vm727, %v3793, 0
      %v3841 = vsel %vm727, %v3794, 0
      %v3844 = vsel %vm727, %v3795, 0
      %v3847 = vsel %vm931, %v3797, 0
      %3849 = vmatprep.subr.bf16.mxu0 0
      %3850 = vmatpush1.bf16.msra.mxu0 %v3847
      %3851 = vmatprep.subr.bf16.mxu0 0
      %3852 = vmatpush1.bf16.msra.mxu0 0
      %3853 = vmatprep.subr.bf16.mxu0 0
      %3854 = vmatpush1.bf16.msra.mxu0 0
      %3855 = vmatprep.subr.bf16.mxu0 0
      %3856 = vmatpush1.bf16.msra.mxu0 0
      %3857 = vmatprep.subr.bf16.mxu0 0
      %3858 = vmatpush1.bf16.msra.mxu0 0
      %3859 = vmatprep.subr.bf16.mxu0 0
      %3860 = vmatpush1.bf16.msra.mxu0 0
      %3861 = vmatprep.subr.bf16.mxu0 0
      %3862 = vmatpush1.bf16.msra.mxu0 0
      %3863 = vmatprep.subr.bf16.mxu0 0
      %3864 = vmatpush1.bf16.msra.mxu0 0
      %3865 = vmatprep.subr.bf16.mxu0 0
      %3866 = vmatpush1.bf16.msra.mxu0 0
      %3867 = vmatprep.subr.bf16.mxu0 0
      %3868 = vmatpush1.bf16.msra.mxu0 0
      %3869 = vmatprep.subr.bf16.mxu0 0
      %3870 = vmatpush1.bf16.msra.mxu0 0
      %3871 = vmatprep.subr.bf16.mxu0 0
      %3872 = vmatpush1.bf16.msra.mxu0 0
      %3873 = vmatprep.subr.bf16.mxu0 0
      %3874 = vmatpush1.bf16.msra.mxu0 0
      %3875 = vmatprep.subr.bf16.mxu0 0
      %3876 = vmatpush1.bf16.msra.mxu0 0
      %3877 = vmatprep.subr.bf16.mxu0 0
      %3878 = vmatpush1.bf16.msra.mxu0 0
      %3879 = vmatprep.subr.bf16.mxu0 0
      %3880 = vmatpush1.bf16.msra.mxu0 0
      %3881 = vmatprep.mubr.bf16.mxu0 0
      %3882 = vmatmul.mubr.bf16.gmra.mrb[0].mxu0 %v3799
      %v3883 = vpop.f32.mrb[0].mxu0
      %v3884 = vadd.f32 0.0, %v3883
      %v3885 = vpop.f32.mrb[0].mxu0
      %v3886 = vpop.f32.mrb[0].mxu0
      %v3887 = vadd.f32 0.0, %v3886
      %v3888 = vpop.f32.mrb[0].mxu0
      %3889 = vmatprep.mubr.bf16.mxu0 0
      %3890 = vmatmul.mubr.bf16.gmra.mrb[0].mxu0 %v3802
      %v3891 = vpop.f32.mrb[0].mxu0
      %v3892 = vadd.f32 0.0, %v3891
      %v3893 = vpop.f32.mrb[0].mxu0
      %v3894 = vpop.f32.mrb[0].mxu0
      %v3895 = vadd.f32 0.0, %v3894
      %v3896 = vpop.f32.mrb[0].mxu0
      %3897 = vmatprep.mubr.bf16.mxu0 0
      %3898 = vmatmul.mubr.bf16.gmra.mrb[0].mxu0 %v3805
      %v3899 = vpop.f32.mrb[0].mxu0
      %v3900 = vadd.f32 0.0, %v3899
      %v3901 = vpop.f32.mrb[0].mxu0
      %v3902 = vpop.f32.mrb[0].mxu0
      %v3903 = vadd.f32 0.0, %v3902
      %v3904 = vpop.f32.mrb[0].mxu0
      %3905 = vmatprep.mubr.bf16.mxu0 0
      %3906 = vmatmul.mubr.bf16.gmra.mrb[0].mxu0 %v3808
      %v3907 = vpop.f32.mrb[0].mxu0
      %v3908 = vadd.f32 0.0, %v3907
      %v3909 = vpop.f32.mrb[0].mxu0
      %v3910 = vpop.f32.mrb[0].mxu0
      %v3911 = vadd.f32 0.0, %v3910
      %v3912 = vpop.f32.mrb[0].mxu0
      %3913 = vmatprep.mubr.bf16.mxu0 0
      %3914 = vmatmul.mubr.bf16.gmra.mrb[0].mxu0 %v3811
      %v3915 = vpop.f32.mrb[0].mxu0
      %v3916 = vadd.f32 0.0, %v3915
      %v3917 = vpop.f32.mrb[0].mxu0
      %v3918 = vpop.f32.mrb[0].mxu0
      %v3919 = vadd.f32 0.0, %v3918
      %v3920 = vpop.f32.mrb[0].mxu0
      %3921 = vmatprep.mubr.bf16.mxu0 0
      %3922 = vmatmul.mubr.bf16.gmra.mrb[0].mxu0 %v3814
      %v3923 = vpop.f32.mrb[0].mxu0
      %v3924 = vadd.f32 0.0, %v3923
      %v3925 = vpop.f32.mrb[0].mxu0
      %v3926 = vpop.f32.mrb[0].mxu0
      %v3927 = vadd.f32 0.0, %v3926
      %v3928 = vpop.f32.mrb[0].mxu0
      %3929 = vmatprep.mubr.bf16.mxu0 0
      %3930 = vmatmul.mubr.bf16.gmra.mrb[0].mxu0 %v3817
      %v3931 = vpop.f32.mrb[0].mxu0
      %v3932 = vadd.f32 0.0, %v3931
      %v3933 = vpop.f32.mrb[0].mxu0
      %v3934 = vpop.f32.mrb[0].mxu0
      %v3935 = vadd.f32 0.0, %v3934
      %v3936 = vpop.f32.mrb[0].mxu0
      %3937 = vmatprep.mubr.bf16.mxu0 0
      %3938 = vmatmul.mubr.bf16.gmra.mrb[0].mxu0 %v3820
      %v3939 = vpop.f32.mrb[0].mxu0
      %v3940 = vadd.f32 0.0, %v3939
      %v3941 = vpop.f32.mrb[0].mxu0
      %v3942 = vpop.f32.mrb[0].mxu0
      %v3943 = vadd.f32 0.0, %v3942
      %v3944 = vpop.f32.mrb[0].mxu0
      %3945 = vmatprep.mubr.bf16.mxu0 0
      %3946 = vmatmul.mubr.bf16.gmra.mrb[0].mxu0 %v3823
      %v3947 = vpop.f32.mrb[0].mxu0
      %v3948 = vadd.f32 0.0, %v3947
      %v3949 = vpop.f32.mrb[0].mxu0
      %v3950 = vpop.f32.mrb[0].mxu0
      %v3951 = vadd.f32 0.0, %v3950
      %v3952 = vpop.f32.mrb[0].mxu0
      %3953 = vmatprep.mubr.bf16.mxu0 0
      %3954 = vmatmul.mubr.bf16.gmra.mrb[0].mxu0 %v3826
      %v3955 = vpop.f32.mrb[0].mxu0
      %v3956 = vadd.f32 0.0, %v3955
      %v3957 = vpop.f32.mrb[0].mxu0
      %v3958 = vpop.f32.mrb[0].mxu0
      %v3959 = vadd.f32 0.0, %v3958
      %v3960 = vpop.f32.mrb[0].mxu0
      %3961 = vmatprep.mubr.bf16.mxu0 0
      %3962 = vmatmul.mubr.bf16.gmra.mrb[0].mxu0 %v3829
      %v3963 = vpop.f32.mrb[0].mxu0
      %v3964 = vadd.f32 0.0, %v3963
      %v3965 = vpop.f32.mrb[0].mxu0
      %v3966 = vpop.f32.mrb[0].mxu0
      %v3967 = vadd.f32 0.0, %v3966
      %v3968 = vpop.f32.mrb[0].mxu0
      %3969 = vmatprep.mubr.bf16.mxu0 0
      %3970 = vmatmul.mubr.bf16.gmra.mrb[0].mxu0 %v3832
      %v3971 = vpop.f32.mrb[0].mxu0
      %v3972 = vadd.f32 0.0, %v3971
      %v3973 = vpop.f32.mrb[0].mxu0
      %v3974 = vpop.f32.mrb[0].mxu0
      %v3975 = vadd.f32 0.0, %v3974
      %v3976 = vpop.f32.mrb[0].mxu0
      %3977 = vmatprep.mubr.bf16.mxu0 0
      %3978 = vmatmul.mubr.bf16.gmra.mrb[0].mxu0 %v3835
      %v3979 = vpop.f32.mrb[0].mxu0
      %v3980 = vadd.f32 0.0, %v3979
      %v3981 = vpop.f32.mrb[0].mxu0
      %v3982 = vpop.f32.mrb[0].mxu0
      %v3983 = vadd.f32 0.0, %v3982
      %v3984 = vpop.f32.mrb[0].mxu0
      %3985 = vmatprep.mubr.bf16.mxu0 0
      %3986 = vmatmul.mubr.bf16.gmra.mrb[0].mxu0 %v3838
      %v3987 = vpop.f32.mrb[0].mxu0
      %v3988 = vadd.f32 0.0, %v3987
      %v3989 = vpop.f32.mrb[0].mxu0
      %v3990 = vpop.f32.mrb[0].mxu0
      %v3991 = vadd.f32 0.0, %v3990
      %v3992 = vpop.f32.mrb[0].mxu0
      %3993 = vmatprep.mubr.bf16.mxu0 0
      %3994 = vmatmul.mubr.bf16.gmra.mrb[0].mxu0 %v3841
      %v3995 = vpop.f32.mrb[0].mxu0
      %v3996 = vadd.f32 0.0, %v3995
      %v3997 = vpop.f32.mrb[0].mxu0
      %v3998 = vpop.f32.mrb[0].mxu0
      %v3999 = vadd.f32 0.0, %v3998
      %v4000 = vpop.f32.mrb[0].mxu0
      %4001 = vmatprep.mubr.bf16.mxu0 0
      %4002 = vmatmul.mubr.bf16.gmra.mrb[0].mxu0 %v3844
      %v4003 = vpop.f32.mrb[0].mxu0
      %v4004 = vadd.f32 0.0, %v4003
      %v4005 = vpop.f32.mrb[0].mxu0
      %v4006 = vpop.f32.mrb[0].mxu0
      %v4007 = vadd.f32 0.0, %v4006
      %v4008 = vpop.f32.mrb[0].mxu0
      %4009 = vdwg.mxu0
      %v4010 = vld [vmem:[#allocation3] sm:$0xff]
      %v4011 = vld [vmem:[#allocation3 + $0x8] sm:$0xff]
      %v4012 = vld [vmem:[#allocation3 + $0x10] sm:$0xff]
      %v4013 = vld [vmem:[#allocation3 + $0x18] sm:$0xff]
      %v4014 = vld [vmem:[#allocation3 + $0x20] sm:$0xff]
      %v4015 = vld [vmem:[#allocation3 + $0x28] sm:$0xff]
      %v4016 = vld [vmem:[#allocation3 + $0x30] sm:$0xff]
      %v4017 = vld [vmem:[#allocation3 + $0x38] sm:$0xff]
      %v4018 = vld [vmem:[#allocation3 + $0x40] sm:$0xff]
      %v4019 = vld [vmem:[#allocation3 + $0x48] sm:$0xff]
      %v4020 = vld [vmem:[#allocation3 + $0x50] sm:$0xff]
      %v4021 = vld [vmem:[#allocation3 + $0x58] sm:$0xff]
      %v4022 = vld [vmem:[#allocation3 + $0x60] sm:$0xff]
      %v4023 = vld [vmem:[#allocation3 + $0x68] sm:$0xff]
      %v4024 = vld [vmem:[#allocation3 + $0x70] sm:$0xff]
      %v4025 = vld [vmem:[#allocation3 + $0x78] sm:$0xff]
      %v4026 = vld [vmem:[#allocation3 + $0x80] sm:$0xff]
      %v4027 = vld [vmem:[#allocation3 + $0x88] sm:$0xff]
      %v4028 = vld [vmem:[#allocation3 + $0x90] sm:$0xff]
      %v4029 = vld [vmem:[#allocation3 + $0x98] sm:$0xff]
      %v4030 = vld [vmem:[#allocation3 + $0xa0] sm:$0xff]
      %v4031 = vld [vmem:[#allocation3 + $0xa8] sm:$0xff]
      %v4032 = vld [vmem:[#allocation3 + $0xb0] sm:$0xff]
      %v4033 = vld [vmem:[#allocation3 + $0xb8] sm:$0xff]
      %v4034 = vld [vmem:[#allocation3 + $0xc0] sm:$0xff]
      %v4035 = vld [vmem:[#allocation3 + $0xc8] sm:$0xff]
      %v4036 = vld [vmem:[#allocation3 + $0xd0] sm:$0xff]
      %v4037 = vld [vmem:[#allocation3 + $0xd8] sm:$0xff]
      %v4038 = vld [vmem:[#allocation3 + $0xe0] sm:$0xff]
      %v4039 = vld [vmem:[#allocation3 + $0xe8] sm:$0xff]
      %v4040 = vld [vmem:[#allocation3 + $0xf0] sm:$0xff]
      %v4041 = vld [vmem:[#allocation3 + $0xf8] sm:$0xff]
      %s4042 = scalar_lea.vmem %s1, 1280
      %v4043 = vld [vmem:[%s4042] sm:$0xff]
      %v4044 = vld [vmem:[%s4042 + $0x8] sm:$0xff]
      %v4045 = vld [vmem:[%s4042 + $0x10] sm:$0xff]
      %v4046 = vld [vmem:[%s4042 + $0x18] sm:$0xff]
      %v4047 = vld [vmem:[%s4042 + $0x20] sm:$0xff]
      %v4048 = vld [vmem:[%s4042 + $0x28] sm:$0xff]
      %v4049 = vld [vmem:[%s4042 + $0x30] sm:$0xff]
      %v4050 = vld [vmem:[%s4042 + $0x38] sm:$0xff]
      %v4051 = vld [vmem:[%s4042 + $0x40] sm:$0xff]
      %v4052 = vld [vmem:[%s4042 + $0x48] sm:$0xff]
      %v4053 = vld [vmem:[%s4042 + $0x50] sm:$0xff]
      %v4054 = vld [vmem:[%s4042 + $0x58] sm:$0xff]
      %v4055 = vld [vmem:[%s4042 + $0x60] sm:$0xff]
      %v4056 = vld [vmem:[%s4042 + $0x68] sm:$0xff]
      %v4057 = vld [vmem:[%s4042 + $0x70] sm:$0xff]
      %v4058 = vld [vmem:[%s4042 + $0x78] sm:$0xff]
      %v4059 = vld [vmem:[%s4042 + $0x80] sm:$0xff]
      %v4060 = vld [vmem:[%s4042 + $0x88] sm:$0xff]
      %v4061 = vld [vmem:[%s4042 + $0x90] sm:$0xff]
      %v4062 = vld [vmem:[%s4042 + $0x98] sm:$0xff]
      %v4063 = vld [vmem:[%s4042 + $0xa0] sm:$0xff]
      %v4064 = vld [vmem:[%s4042 + $0xa8] sm:$0xff]
      %v4065 = vld [vmem:[%s4042 + $0xb0] sm:$0xff]
      %v4066 = vld [vmem:[%s4042 + $0xb8] sm:$0xff]
      %v4067 = vld [vmem:[%s4042 + $0xc0] sm:$0xff]
      %v4068 = vld [vmem:[%s4042 + $0xc8] sm:$0xff]
      %v4069 = vld [vmem:[%s4042 + $0xd0] sm:$0xff]
      %v4070 = vld [vmem:[%s4042 + $0xd8] sm:$0xff]
      %v4071 = vld [vmem:[%s4042 + $0xe0] sm:$0xff]
      %v4072 = vld [vmem:[%s4042 + $0xe8] sm:$0xff]
      %v4073 = vld [vmem:[%s4042 + $0xf0] sm:$0xff]
      %v4074 = vld [vmem:[%s4042 + $0xf8] sm:$0xff]
      %4076 = vset.pattern.permute.xlu0 0
      %4077 = vperm.xlu0 %4076, %v4043
      %v4078 = vpop.permute.xlu0 %4077
      %4081 = vset.pattern.permute.xlu0 0
      %4082 = vperm.xlu0 %4081, %v4044
      %v4083 = vpop.permute.xlu0 %4082
      %4086 = vset.pattern.permute.xlu0 0
      %4087 = vperm.xlu0 %4086, %v4045
      %v4088 = vpop.permute.xlu0 %4087
      %4091 = vset.pattern.permute.xlu0 0
      %4092 = vperm.xlu0 %4091, %v4046
      %v4093 = vpop.permute.xlu0 %4092
      %4096 = vset.pattern.permute.xlu0 0
      %4097 = vperm.xlu0 %4096, %v4047
      %v4098 = vpop.permute.xlu0 %4097
      %4101 = vset.pattern.permute.xlu0 0
      %4102 = vperm.xlu0 %4101, %v4048
      %v4103 = vpop.permute.xlu0 %4102
      %4106 = vset.pattern.permute.xlu0 0
      %4107 = vperm.xlu0 %4106, %v4049
      %v4108 = vpop.permute.xlu0 %4107
      %4111 = vset.pattern.permute.xlu0 0
      %4112 = vperm.xlu0 %4111, %v4050
      %v4113 = vpop.permute.xlu0 %4112
      %4116 = vset.pattern.permute.xlu0 0
      %4117 = vperm.xlu0 %4116, %v4051
      %v4118 = vpop.permute.xlu0 %4117
      %4121 = vset.pattern.permute.xlu0 0
      %4122 = vperm.xlu0 %4121, %v4052
      %v4123 = vpop.permute.xlu0 %4122
      %4126 = vset.pattern.permute.xlu0 0
      %4127 = vperm.xlu0 %4126, %v4053
      %v4128 = vpop.permute.xlu0 %4127
      %4131 = vset.pattern.permute.xlu0 0
      %4132 = vperm.xlu0 %4131, %v4054
      %v4133 = vpop.permute.xlu0 %4132
      %4136 = vset.pattern.permute.xlu0 0
      %4137 = vperm.xlu0 %4136, %v4055
      %v4138 = vpop.permute.xlu0 %4137
      %4141 = vset.pattern.permute.xlu0 0
      %4142 = vperm.xlu0 %4141, %v4056
      %v4143 = vpop.permute.xlu0 %4142
      %4146 = vset.pattern.permute.xlu0 0
      %4147 = vperm.xlu0 %4146, %v4057
      %v4148 = vpop.permute.xlu0 %4147
      %4151 = vset.pattern.permute.xlu0 0
      %4152 = vperm.xlu0 %4151, %v4058
      %v4153 = vpop.permute.xlu0 %4152
      %4156 = vset.pattern.permute.xlu0 0
      %4157 = vperm.xlu0 %4156, %v4059
      %v4158 = vpop.permute.xlu0 %4157
      %4161 = vset.pattern.permute.xlu0 0
      %4162 = vperm.xlu0 %4161, %v4060
      %v4163 = vpop.permute.xlu0 %4162
      %4166 = vset.pattern.permute.xlu0 0
      %4167 = vperm.xlu0 %4166, %v4061
      %v4168 = vpop.permute.xlu0 %4167
      %4171 = vset.pattern.permute.xlu0 0
      %4172 = vperm.xlu0 %4171, %v4062
      %v4173 = vpop.permute.xlu0 %4172
      %4176 = vset.pattern.permute.xlu0 0
      %4177 = vperm.xlu0 %4176, %v4063
      %v4178 = vpop.permute.xlu0 %4177
      %4181 = vset.pattern.permute.xlu0 0
      %4182 = vperm.xlu0 %4181, %v4064
      %v4183 = vpop.permute.xlu0 %4182
      %4186 = vset.pattern.permute.xlu0 0
      %4187 = vperm.xlu0 %4186, %v4065
      %v4188 = vpop.permute.xlu0 %4187
      %4191 = vset.pattern.permute.xlu0 0
      %4192 = vperm.xlu0 %4191, %v4066
      %v4193 = vpop.permute.xlu0 %4192
      %4196 = vset.pattern.permute.xlu0 0
      %4197 = vperm.xlu0 %4196, %v4067
      %v4198 = vpop.permute.xlu0 %4197
      %4201 = vset.pattern.permute.xlu0 0
      %4202 = vperm.xlu0 %4201, %v4068
      %v4203 = vpop.permute.xlu0 %4202
      %4206 = vset.pattern.permute.xlu0 0
      %4207 = vperm.xlu0 %4206, %v4069
      %v4208 = vpop.permute.xlu0 %4207
      %4211 = vset.pattern.permute.xlu0 0
      %4212 = vperm.xlu0 %4211, %v4070
      %v4213 = vpop.permute.xlu0 %4212
      %4216 = vset.pattern.permute.xlu0 0
      %4217 = vperm.xlu0 %4216, %v4071
      %v4218 = vpop.permute.xlu0 %4217
      %4221 = vset.pattern.permute.xlu0 0
      %4222 = vperm.xlu0 %4221, %v4072
      %v4223 = vpop.permute.xlu0 %4222
      %4226 = vset.pattern.permute.xlu0 0
      %4227 = vperm.xlu0 %4226, %v4073
      %v4228 = vpop.permute.xlu0 %4227
      %4231 = vset.pattern.permute.xlu0 0
      %4232 = vperm.xlu0 %4231, %v4074
      %v4233 = vpop.permute.xlu0 %4232
      %v4235 = vmul.f32 %v3884, %v4078
      %v4236 = vmul.f32 %v3887, %v4083
      %v4237 = vmul.f32 %v3892, %v4088
      %v4238 = vmul.f32 %v3895, %v4093
      %v4239 = vmul.f32 %v3900, %v4098
      %v4240 = vmul.f32 %v3903, %v4103
      %v4241 = vmul.f32 %v3908, %v4108
      %v4242 = vmul.f32 %v3911, %v4113
      %v4243 = vmul.f32 %v3916, %v4118
      %v4244 = vmul.f32 %v3919, %v4123
      %v4245 = vmul.f32 %v3924, %v4128
      %v4246 = vmul.f32 %v3927, %v4133
      %v4247 = vmul.f32 %v3932, %v4138
      %v4248 = vmul.f32 %v3935, %v4143
      %v4249 = vmul.f32 %v3940, %v4148
      %v4250 = vmul.f32 %v3943, %v4153
      %v4251 = vmul.f32 %v3948, %v4158
      %v4252 = vmul.f32 %v3951, %v4163
      %v4253 = vmul.f32 %v3956, %v4168
      %v4254 = vmul.f32 %v3959, %v4173
      %v4255 = vmul.f32 %v3964, %v4178
      %v4256 = vmul.f32 %v3967, %v4183
      %v4257 = vmul.f32 %v3972, %v4188
      %v4258 = vmul.f32 %v3975, %v4193
      %v4259 = vmul.f32 %v3980, %v4198
      %v4260 = vmul.f32 %v3983, %v4203
      %v4261 = vmul.f32 %v3988, %v4208
      %v4262 = vmul.f32 %v3991, %v4213
      %v4263 = vmul.f32 %v3996, %v4218
      %v4264 = vmul.f32 %v3999, %v4223
      %v4265 = vmul.f32 %v4004, %v4228
      %v4266 = vmul.f32 %v4007, %v4233
      %v4267 = vadd.f32 %v4010, %v4235
      %v4268 = vadd.f32 %v4011, %v4236
      %v4269 = vadd.f32 %v4012, %v4237
      %v4270 = vadd.f32 %v4013, %v4238
      %v4271 = vadd.f32 %v4014, %v4239
      %v4272 = vadd.f32 %v4015, %v4240
      %v4273 = vadd.f32 %v4016, %v4241
      %v4274 = vadd.f32 %v4017, %v4242
      %v4275 = vadd.f32 %v4018, %v4243
      %v4276 = vadd.f32 %v4019, %v4244
      %v4277 = vadd.f32 %v4020, %v4245
      %v4278 = vadd.f32 %v4021, %v4246
      %v4279 = vadd.f32 %v4022, %v4247
      %v4280 = vadd.f32 %v4023, %v4248
      %v4281 = vadd.f32 %v4024, %v4249
      %v4282 = vadd.f32 %v4025, %v4250
      %v4283 = vadd.f32 %v4026, %v4251
      %v4284 = vadd.f32 %v4027, %v4252
      %v4285 = vadd.f32 %v4028, %v4253
      %v4286 = vadd.f32 %v4029, %v4254
      %v4287 = vadd.f32 %v4030, %v4255
      %v4288 = vadd.f32 %v4031, %v4256
      %v4289 = vadd.f32 %v4032, %v4257
      %v4290 = vadd.f32 %v4033, %v4258
      %v4291 = vadd.f32 %v4034, %v4259
      %v4292 = vadd.f32 %v4035, %v4260
      %v4293 = vadd.f32 %v4036, %v4261
      %v4294 = vadd.f32 %v4037, %v4262
      %v4295 = vadd.f32 %v4038, %v4263
      %v4296 = vadd.f32 %v4039, %v4264
      %v4297 = vadd.f32 %v4040, %v4265
      %v4298 = vadd.f32 %v4041, %v4266
      %4299 = vst.msk [vmem:[#allocation3] sm:$0xff] %vm727, %v4267
      %4300 = vst.msk [vmem:[#allocation3 + $0x8] sm:$0xff] %vm727, %v4268
      %4301 = vst.msk [vmem:[#allocation3 + $0x10] sm:$0xff] %vm727, %v4269
      %4302 = vst.msk [vmem:[#allocation3 + $0x18] sm:$0xff] %vm727, %v4270
      %4303 = vst.msk [vmem:[#allocation3 + $0x20] sm:$0xff] %vm727, %v4271
      %4304 = vst.msk [vmem:[#allocation3 + $0x28] sm:$0xff] %vm727, %v4272
      %4305 = vst.msk [vmem:[#allocation3 + $0x30] sm:$0xff] %vm727, %v4273
      %4306 = vst.msk [vmem:[#allocation3 + $0x38] sm:$0xff] %vm727, %v4274
      %4307 = vst.msk [vmem:[#allocation3 + $0x40] sm:$0xff] %vm727, %v4275
      %4308 = vst.msk [vmem:[#allocation3 + $0x48] sm:$0xff] %vm727, %v4276
      %4309 = vst.msk [vmem:[#allocation3 + $0x50] sm:$0xff] %vm727, %v4277
      %4310 = vst.msk [vmem:[#allocation3 + $0x58] sm:$0xff] %vm727, %v4278
      %4311 = vst.msk [vmem:[#allocation3 + $0x60] sm:$0xff] %vm727, %v4279
      %4312 = vst.msk [vmem:[#allocation3 + $0x68] sm:$0xff] %vm727, %v4280
      %4313 = vst.msk [vmem:[#allocation3 + $0x70] sm:$0xff] %vm727, %v4281
      %4314 = vst.msk [vmem:[#allocation3 + $0x78] sm:$0xff] %vm727, %v4282
      %4315 = vst.msk [vmem:[#allocation3 + $0x80] sm:$0xff] %vm727, %v4283
      %4316 = vst.msk [vmem:[#allocation3 + $0x88] sm:$0xff] %vm727, %v4284
      %4317 = vst.msk [vmem:[#allocation3 + $0x90] sm:$0xff] %vm727, %v4285
      %4318 = vst.msk [vmem:[#allocation3 + $0x98] sm:$0xff] %vm727, %v4286
      %4319 = vst.msk [vmem:[#allocation3 + $0xa0] sm:$0xff] %vm727, %v4287
      %4320 = vst.msk [vmem:[#allocation3 + $0xa8] sm:$0xff] %vm727, %v4288
      %4321 = vst.msk [vmem:[#allocation3 + $0xb0] sm:$0xff] %vm727, %v4289
      %4322 = vst.msk [vmem:[#allocation3 + $0xb8] sm:$0xff] %vm727, %v4290
      %4323 = vst.msk [vmem:[#allocation3 + $0xc0] sm:$0xff] %vm727, %v4291
      %4324 = vst.msk [vmem:[#allocation3 + $0xc8] sm:$0xff] %vm727, %v4292
      %4325 = vst.msk [vmem:[#allocation3 + $0xd0] sm:$0xff] %vm727, %v4293
      %4326 = vst.msk [vmem:[#allocation3 + $0xd8] sm:$0xff] %vm727, %v4294
      %4327 = vst.msk [vmem:[#allocation3 + $0xe0] sm:$0xff] %vm727, %v4295
      %4328 = vst.msk [vmem:[#allocation3 + $0xe8] sm:$0xff] %vm727, %v4296
      %4329 = vst.msk [vmem:[#allocation3 + $0xf0] sm:$0xff] %vm727, %v4297
      %4330 = vst.msk [vmem:[#allocation3 + $0xf8] sm:$0xff] %vm727, %v4298
      %v4331 = vld [vmem:[#allocation2 + $0x46] sm:$0xff]
      %v4332 = vld [vmem:[#allocation2 + $0x4e] sm:$0xff]
      %v4333 = vld [vmem:[#allocation2 + $0x56] sm:$0xff]
      %v4334 = vld [vmem:[#allocation2 + $0x5e] sm:$0xff]
      %v4335 = vld [vmem:[#allocation2 + $0x66] sm:$0xff]
      %v4336 = vld [vmem:[#allocation2 + $0x6e] sm:$0xff]
      %v4337 = vld [vmem:[#allocation2 + $0x76] sm:$0xff]
      %v4338 = vld [vmem:[#allocation2 + $0x7e] sm:$0xff]
      %v4339 = vld [vmem:[#allocation2 + $0x86] sm:$0xff]
      %v4340 = vld [vmem:[#allocation2 + $0x8e] sm:$0xff]
      %v4341 = vld [vmem:[#allocation2 + $0x96] sm:$0xff]
      %v4342 = vld [vmem:[#allocation2 + $0x9e] sm:$0xff]
      %v4343 = vld [vmem:[#allocation2 + $0xa6] sm:$0xff]
      %v4344 = vld [vmem:[#allocation2 + $0xae] sm:$0xff]
      %v4345 = vld [vmem:[#allocation2 + $0xb6] sm:$0xff]
      %v4346 = vld [vmem:[#allocation2 + $0xbe] sm:$0xff]
      %v4347 = vld [vmem:[#allocation2 + $0xc6] sm:$0xff]
      %v4348 = vld [vmem:[#allocation2 + $0xce] sm:$0xff]
      %v4349 = vld [vmem:[#allocation2 + $0xd6] sm:$0xff]
      %v4350 = vld [vmem:[#allocation2 + $0xde] sm:$0xff]
      %v4351 = vld [vmem:[#allocation2 + $0xe6] sm:$0xff]
      %v4352 = vld [vmem:[#allocation2 + $0xee] sm:$0xff]
      %v4353 = vld [vmem:[#allocation2 + $0xf6] sm:$0xff]
      %v4354 = vld [vmem:[#allocation2 + $0xfe] sm:$0xff]
      %v4355 = vld [vmem:[#allocation2 + $0x106] sm:$0xff]
      %v4356 = vld [vmem:[#allocation2 + $0x10e] sm:$0xff]
      %v4357 = vld [vmem:[#allocation2 + $0x116] sm:$0xff]
      %v4358 = vld [vmem:[#allocation2 + $0x11e] sm:$0xff]
      %v4359 = vld [vmem:[#allocation2 + $0x126] sm:$0xff]
      %v4360 = vld [vmem:[#allocation2 + $0x12e] sm:$0xff]
      %v4361 = vld [vmem:[#allocation2 + $0x136] sm:$0xff]
      %v4362 = vld [vmem:[#allocation2 + $0x13e] sm:$0xff]
      %v4363 = vpack.c.bf16 %v4332, %v4331
      %v4364 = vpack.c.bf16 %v4334, %v4333
      %v4365 = vpack.c.bf16 %v4336, %v4335
      %v4366 = vpack.c.bf16 %v4338, %v4337
      %v4367 = vpack.c.bf16 %v4340, %v4339
      %v4368 = vpack.c.bf16 %v4342, %v4341
      %v4369 = vpack.c.bf16 %v4344, %v4343
      %v4370 = vpack.c.bf16 %v4346, %v4345
      %v4371 = vpack.c.bf16 %v4348, %v4347
      %v4372 = vpack.c.bf16 %v4350, %v4349
      %v4373 = vpack.c.bf16 %v4352, %v4351
      %v4374 = vpack.c.bf16 %v4354, %v4353
      %v4375 = vpack.c.bf16 %v4356, %v4355
      %v4376 = vpack.c.bf16 %v4358, %v4357
      %v4377 = vpack.c.bf16 %v4360, %v4359
      %v4378 = vpack.c.bf16 %v4362, %v4361
      %s4379 = scalar_lea.vmem %s3, 24
      %v4380 = vld [vmem:[%s4379] sm:$0xf]
      %v4382 = vsel %vm727, %v4363, 0
      %v4385 = vsel %vm727, %v4364, 0
      %v4388 = vsel %vm727, %v4365, 0
      %v4391 = vsel %vm727, %v4366, 0
      %v4394 = vsel %vm727, %v4367, 0
      %v4397 = vsel %vm727, %v4368, 0
      %v4400 = vsel %vm727, %v4369, 0
      %v4403 = vsel %vm727, %v4370, 0
      %v4406 = vsel %vm727, %v4371, 0
      %v4409 = vsel %vm727, %v4372, 0
      %v4412 = vsel %vm727, %v4373, 0
      %v4415 = vsel %vm727, %v4374, 0
      %v4418 = vsel %vm727, %v4375, 0
      %v4421 = vsel %vm727, %v4376, 0
      %v4424 = vsel %vm727, %v4377, 0
      %v4427 = vsel %vm727, %v4378, 0
      %v4430 = vsel %vm931, %v4380, 0
      %4432 = vmatprep.subr.bf16.mxu0 0
      %4433 = vmatpush1.bf16.msra.mxu0 %v4430
      %4434 = vmatprep.subr.bf16.mxu0 0
      %4435 = vmatpush1.bf16.msra.mxu0 0
      %4436 = vmatprep.subr.bf16.mxu0 0
      %4437 = vmatpush1.bf16.msra.mxu0 0
      %4438 = vmatprep.subr.bf16.mxu0 0
      %4439 = vmatpush1.bf16.msra.mxu0 0
      %4440 = vmatprep.subr.bf16.mxu0 0
      %4441 = vmatpush1.bf16.msra.mxu0 0
      %4442 = vmatprep.subr.bf16.mxu0 0
      %4443 = vmatpush1.bf16.msra.mxu0 0
      %4444 = vmatprep.subr.bf16.mxu0 0
      %4445 = vmatpush1.bf16.msra.mxu0 0
      %4446 = vmatprep.subr.bf16.mxu0 0
      %4447 = vmatpush1.bf16.msra.mxu0 0
      %4448 = vmatprep.subr.bf16.mxu0 0
      %4449 = vmatpush1.bf16.msra.mxu0 0
      %4450 = vmatprep.subr.bf16.mxu0 0
      %4451 = vmatpush1.bf16.msra.mxu0 0
      %4452 = vmatprep.subr.bf16.mxu0 0
      %4453 = vmatpush1.bf16.msra.mxu0 0
      %4454 = vmatprep.subr.bf16.mxu0 0
      %4455 = vmatpush1.bf16.msra.mxu0 0
      %4456 = vmatprep.subr.bf16.mxu0 0
      %4457 = vmatpush1.bf16.msra.mxu0 0
      %4458 = vmatprep.subr.bf16.mxu0 0
      %4459 = vmatpush1.bf16.msra.mxu0 0
      %4460 = vmatprep.subr.bf16.mxu0 0
      %4461 = vmatpush1.bf16.msra.mxu0 0
      %4462 = vmatprep.subr.bf16.mxu0 0
      %4463 = vmatpush1.bf16.msra.mxu0 0
      %4464 = vmatprep.mubr.bf16.mxu0 0
      %4465 = vmatmul.mubr.bf16.gmra.mrb[0].mxu0 %v4382
      %v4466 = vpop.f32.mrb[0].mxu0
      %v4467 = vadd.f32 0.0, %v4466
      %v4468 = vpop.f32.mrb[0].mxu0
      %v4469 = vpop.f32.mrb[0].mxu0
      %v4470 = vadd.f32 0.0, %v4469
      %v4471 = vpop.f32.mrb[0].mxu0
      %4472 = vmatprep.mubr.bf16.mxu0 0
      %4473 = vmatmul.mubr.bf16.gmra.mrb[0].mxu0 %v4385
      %v4474 = vpop.f32.mrb[0].mxu0
      %v4475 = vadd.f32 0.0, %v4474
      %v4476 = vpop.f32.mrb[0].mxu0
      %v4477 = vpop.f32.mrb[0].mxu0
      %v4478 = vadd.f32 0.0, %v4477
      %v4479 = vpop.f32.mrb[0].mxu0
      %4480 = vmatprep.mubr.bf16.mxu0 0
      %4481 = vmatmul.mubr.bf16.gmra.mrb[0].mxu0 %v4388
      %v4482 = vpop.f32.mrb[0].mxu0
      %v4483 = vadd.f32 0.0, %v4482
      %v4484 = vpop.f32.mrb[0].mxu0
      %v4485 = vpop.f32.mrb[0].mxu0
      %v4486 = vadd.f32 0.0, %v4485
      %v4487 = vpop.f32.mrb[0].mxu0
      %4488 = vmatprep.mubr.bf16.mxu0 0
      %4489 = vmatmul.mubr.bf16.gmra.mrb[0].mxu0 %v4391
      %v4490 = vpop.f32.mrb[0].mxu0
      %v4491 = vadd.f32 0.0, %v4490
      %v4492 = vpop.f32.mrb[0].mxu0
      %v4493 = vpop.f32.mrb[0].mxu0
      %v4494 = vadd.f32 0.0, %v4493
      %v4495 = vpop.f32.mrb[0].mxu0
      %4496 = vmatprep.mubr.bf16.mxu0 0
      %4497 = vmatmul.mubr.bf16.gmra.mrb[0].mxu0 %v4394
      %v4498 = vpop.f32.mrb[0].mxu0
      %v4499 = vadd.f32 0.0, %v4498
      %v4500 = vpop.f32.mrb[0].mxu0
      %v4501 = vpop.f32.mrb[0].mxu0
      %v4502 = vadd.f32 0.0, %v4501
      %v4503 = vpop.f32.mrb[0].mxu0
      %4504 = vmatprep.mubr.bf16.mxu0 0
      %4505 = vmatmul.mubr.bf16.gmra.mrb[0].mxu0 %v4397
      %v4506 = vpop.f32.mrb[0].mxu0
      %v4507 = vadd.f32 0.0, %v4506
      %v4508 = vpop.f32.mrb[0].mxu0
      %v4509 = vpop.f32.mrb[0].mxu0
      %v4510 = vadd.f32 0.0, %v4509
      %v4511 = vpop.f32.mrb[0].mxu0
      %4512 = vmatprep.mubr.bf16.mxu0 0
      %4513 = vmatmul.mubr.bf16.gmra.mrb[0].mxu0 %v4400
      %v4514 = vpop.f32.mrb[0].mxu0
      %v4515 = vadd.f32 0.0, %v4514
      %v4516 = vpop.f32.mrb[0].mxu0
      %v4517 = vpop.f32.mrb[0].mxu0
      %v4518 = vadd.f32 0.0, %v4517
      %v4519 = vpop.f32.mrb[0].mxu0
      %4520 = vmatprep.mubr.bf16.mxu0 0
      %4521 = vmatmul.mubr.bf16.gmra.mrb[0].mxu0 %v4403
      %v4522 = vpop.f32.mrb[0].mxu0
      %v4523 = vadd.f32 0.0, %v4522
      %v4524 = vpop.f32.mrb[0].mxu0
      %v4525 = vpop.f32.mrb[0].mxu0
      %v4526 = vadd.f32 0.0, %v4525
      %v4527 = vpop.f32.mrb[0].mxu0
      %4528 = vmatprep.mubr.bf16.mxu0 0
      %4529 = vmatmul.mubr.bf16.gmra.mrb[0].mxu0 %v4406
      %v4530 = vpop.f32.mrb[0].mxu0
      %v4531 = vadd.f32 0.0, %v4530
      %v4532 = vpop.f32.mrb[0].mxu0
      %v4533 = vpop.f32.mrb[0].mxu0
      %v4534 = vadd.f32 0.0, %v4533
      %v4535 = vpop.f32.mrb[0].mxu0
      %4536 = vmatprep.mubr.bf16.mxu0 0
      %4537 = vmatmul.mubr.bf16.gmra.mrb[0].mxu0 %v4409
      %v4538 = vpop.f32.mrb[0].mxu0
      %v4539 = vadd.f32 0.0, %v4538
      %v4540 = vpop.f32.mrb[0].mxu0
      %v4541 = vpop.f32.mrb[0].mxu0
      %v4542 = vadd.f32 0.0, %v4541
      %v4543 = vpop.f32.mrb[0].mxu0
      %4544 = vmatprep.mubr.bf16.mxu0 0
      %4545 = vmatmul.mubr.bf16.gmra.mrb[0].mxu0 %v4412
      %v4546 = vpop.f32.mrb[0].mxu0
      %v4547 = vadd.f32 0.0, %v4546
      %v4548 = vpop.f32.mrb[0].mxu0
      %v4549 = vpop.f32.mrb[0].mxu0
      %v4550 = vadd.f32 0.0, %v4549
      %v4551 = vpop.f32.mrb[0].mxu0
      %4552 = vmatprep.mubr.bf16.mxu0 0
      %4553 = vmatmul.mubr.bf16.gmra.mrb[0].mxu0 %v4415
      %v4554 = vpop.f32.mrb[0].mxu0
      %v4555 = vadd.f32 0.0, %v4554
      %v4556 = vpop.f32.mrb[0].mxu0
      %v4557 = vpop.f32.mrb[0].mxu0
      %v4558 = vadd.f32 0.0, %v4557
      %v4559 = vpop.f32.mrb[0].mxu0
      %4560 = vmatprep.mubr.bf16.mxu0 0
      %4561 = vmatmul.mubr.bf16.gmra.mrb[0].mxu0 %v4418
      %v4562 = vpop.f32.mrb[0].mxu0
      %v4563 = vadd.f32 0.0, %v4562
      %v4564 = vpop.f32.mrb[0].mxu0
      %v4565 = vpop.f32.mrb[0].mxu0
      %v4566 = vadd.f32 0.0, %v4565
      %v4567 = vpop.f32.mrb[0].mxu0
      %4568 = vmatprep.mubr.bf16.mxu0 0
      %4569 = vmatmul.mubr.bf16.gmra.mrb[0].mxu0 %v4421
      %v4570 = vpop.f32.mrb[0].mxu0
      %v4571 = vadd.f32 0.0, %v4570
      %v4572 = vpop.f32.mrb[0].mxu0
      %v4573 = vpop.f32.mrb[0].mxu0
      %v4574 = vadd.f32 0.0, %v4573
      %v4575 = vpop.f32.mrb[0].mxu0
      %4576 = vmatprep.mubr.bf16.mxu0 0
      %4577 = vmatmul.mubr.bf16.gmra.mrb[0].mxu0 %v4424
      %v4578 = vpop.f32.mrb[0].mxu0
      %v4579 = vadd.f32 0.0, %v4578
      %v4580 = vpop.f32.mrb[0].mxu0
      %v4581 = vpop.f32.mrb[0].mxu0
      %v4582 = vadd.f32 0.0, %v4581
      %v4583 = vpop.f32.mrb[0].mxu0
      %4584 = vmatprep.mubr.bf16.mxu0 0
      %4585 = vmatmul.mubr.bf16.gmra.mrb[0].mxu0 %v4427
      %v4586 = vpop.f32.mrb[0].mxu0
      %v4587 = vadd.f32 0.0, %v4586
      %v4588 = vpop.f32.mrb[0].mxu0
      %v4589 = vpop.f32.mrb[0].mxu0
      %v4590 = vadd.f32 0.0, %v4589
      %v4591 = vpop.f32.mrb[0].mxu0
      %4592 = vdwg.mxu0
      %v4593 = vld [vmem:[#allocation3] sm:$0xff]
      %v4594 = vld [vmem:[#allocation3 + $0x8] sm:$0xff]
      %v4595 = vld [vmem:[#allocation3 + $0x10] sm:$0xff]
      %v4596 = vld [vmem:[#allocation3 + $0x18] sm:$0xff]
      %v4597 = vld [vmem:[#allocation3 + $0x20] sm:$0xff]
      %v4598 = vld [vmem:[#allocation3 + $0x28] sm:$0xff]
      %v4599 = vld [vmem:[#allocation3 + $0x30] sm:$0xff]
      %v4600 = vld [vmem:[#allocation3 + $0x38] sm:$0xff]
      %v4601 = vld [vmem:[#allocation3 + $0x40] sm:$0xff]
      %v4602 = vld [vmem:[#allocation3 + $0x48] sm:$0xff]
      %v4603 = vld [vmem:[#allocation3 + $0x50] sm:$0xff]
      %v4604 = vld [vmem:[#allocation3 + $0x58] sm:$0xff]
      %v4605 = vld [vmem:[#allocation3 + $0x60] sm:$0xff]
      %v4606 = vld [vmem:[#allocation3 + $0x68] sm:$0xff]
      %v4607 = vld [vmem:[#allocation3 + $0x70] sm:$0xff]
      %v4608 = vld [vmem:[#allocation3 + $0x78] sm:$0xff]
      %v4609 = vld [vmem:[#allocation3 + $0x80] sm:$0xff]
      %v4610 = vld [vmem:[#allocation3 + $0x88] sm:$0xff]
      %v4611 = vld [vmem:[#allocation3 + $0x90] sm:$0xff]
      %v4612 = vld [vmem:[#allocation3 + $0x98] sm:$0xff]
      %v4613 = vld [vmem:[#allocation3 + $0xa0] sm:$0xff]
      %v4614 = vld [vmem:[#allocation3 + $0xa8] sm:$0xff]
      %v4615 = vld [vmem:[#allocation3 + $0xb0] sm:$0xff]
      %v4616 = vld [vmem:[#allocation3 + $0xb8] sm:$0xff]
      %v4617 = vld [vmem:[#allocation3 + $0xc0] sm:$0xff]
      %v4618 = vld [vmem:[#allocation3 + $0xc8] sm:$0xff]
      %v4619 = vld [vmem:[#allocation3 + $0xd0] sm:$0xff]
      %v4620 = vld [vmem:[#allocation3 + $0xd8] sm:$0xff]
      %v4621 = vld [vmem:[#allocation3 + $0xe0] sm:$0xff]
      %v4622 = vld [vmem:[#allocation3 + $0xe8] sm:$0xff]
      %v4623 = vld [vmem:[#allocation3 + $0xf0] sm:$0xff]
      %v4624 = vld [vmem:[#allocation3 + $0xf8] sm:$0xff]
      %s4625 = scalar_lea.vmem %s1, 1536
      %v4626 = vld [vmem:[%s4625] sm:$0xff]
      %v4627 = vld [vmem:[%s4625 + $0x8] sm:$0xff]
      %v4628 = vld [vmem:[%s4625 + $0x10] sm:$0xff]
      %v4629 = vld [vmem:[%s4625 + $0x18] sm:$0xff]
      %v4630 = vld [vmem:[%s4625 + $0x20] sm:$0xff]
      %v4631 = vld [vmem:[%s4625 + $0x28] sm:$0xff]
      %v4632 = vld [vmem:[%s4625 + $0x30] sm:$0xff]
      %v4633 = vld [vmem:[%s4625 + $0x38] sm:$0xff]
      %v4634 = vld [vmem:[%s4625 + $0x40] sm:$0xff]
      %v4635 = vld [vmem:[%s4625 + $0x48] sm:$0xff]
      %v4636 = vld [vmem:[%s4625 + $0x50] sm:$0xff]
      %v4637 = vld [vmem:[%s4625 + $0x58] sm:$0xff]
      %v4638 = vld [vmem:[%s4625 + $0x60] sm:$0xff]
      %v4639 = vld [vmem:[%s4625 + $0x68] sm:$0xff]
      %v4640 = vld [vmem:[%s4625 + $0x70] sm:$0xff]
      %v4641 = vld [vmem:[%s4625 + $0x78] sm:$0xff]
      %v4642 = vld [vmem:[%s4625 + $0x80] sm:$0xff]
      %v4643 = vld [vmem:[%s4625 + $0x88] sm:$0xff]
      %v4644 = vld [vmem:[%s4625 + $0x90] sm:$0xff]
      %v4645 = vld [vmem:[%s4625 + $0x98] sm:$0xff]
      %v4646 = vld [vmem:[%s4625 + $0xa0] sm:$0xff]
      %v4647 = vld [vmem:[%s4625 + $0xa8] sm:$0xff]
      %v4648 = vld [vmem:[%s4625 + $0xb0] sm:$0xff]
      %v4649 = vld [vmem:[%s4625 + $0xb8] sm:$0xff]
      %v4650 = vld [vmem:[%s4625 + $0xc0] sm:$0xff]
      %v4651 = vld [vmem:[%s4625 + $0xc8] sm:$0xff]
      %v4652 = vld [vmem:[%s4625 + $0xd0] sm:$0xff]
      %v4653 = vld [vmem:[%s4625 + $0xd8] sm:$0xff]
      %v4654 = vld [vmem:[%s4625 + $0xe0] sm:$0xff]
      %v4655 = vld [vmem:[%s4625 + $0xe8] sm:$0xff]
      %v4656 = vld [vmem:[%s4625 + $0xf0] sm:$0xff]
      %v4657 = vld [vmem:[%s4625 + $0xf8] sm:$0xff]
      %4659 = vset.pattern.permute.xlu0 0
      %4660 = vperm.xlu0 %4659, %v4626
      %v4661 = vpop.permute.xlu0 %4660
      %4664 = vset.pattern.permute.xlu0 0
      %4665 = vperm.xlu0 %4664, %v4627
      %v4666 = vpop.permute.xlu0 %4665
      %4669 = vset.pattern.permute.xlu0 0
      %4670 = vperm.xlu0 %4669, %v4628
      %v4671 = vpop.permute.xlu0 %4670
      %4674 = vset.pattern.permute.xlu0 0
      %4675 = vperm.xlu0 %4674, %v4629
      %v4676 = vpop.permute.xlu0 %4675
      %4679 = vset.pattern.permute.xlu0 0
      %4680 = vperm.xlu0 %4679, %v4630
      %v4681 = vpop.permute.xlu0 %4680
      %4684 = vset.pattern.permute.xlu0 0
      %4685 = vperm.xlu0 %4684, %v4631
      %v4686 = vpop.permute.xlu0 %4685
      %4689 = vset.pattern.permute.xlu0 0
      %4690 = vperm.xlu0 %4689, %v4632
      %v4691 = vpop.permute.xlu0 %4690
      %4694 = vset.pattern.permute.xlu0 0
      %4695 = vperm.xlu0 %4694, %v4633
      %v4696 = vpop.permute.xlu0 %4695
      %4699 = vset.pattern.permute.xlu0 0
      %4700 = vperm.xlu0 %4699, %v4634
      %v4701 = vpop.permute.xlu0 %4700
      %4704 = vset.pattern.permute.xlu0 0
      %4705 = vperm.xlu0 %4704, %v4635
      %v4706 = vpop.permute.xlu0 %4705
      %4709 = vset.pattern.permute.xlu0 0
      %4710 = vperm.xlu0 %4709, %v4636
      %v4711 = vpop.permute.xlu0 %4710
      %4714 = vset.pattern.permute.xlu0 0
      %4715 = vperm.xlu0 %4714, %v4637
      %v4716 = vpop.permute.xlu0 %4715
      %4719 = vset.pattern.permute.xlu0 0
      %4720 = vperm.xlu0 %4719, %v4638
      %v4721 = vpop.permute.xlu0 %4720
      %4724 = vset.pattern.permute.xlu0 0
      %4725 = vperm.xlu0 %4724, %v4639
      %v4726 = vpop.permute.xlu0 %4725
      %4729 = vset.pattern.permute.xlu0 0
      %4730 = vperm.xlu0 %4729, %v4640
      %v4731 = vpop.permute.xlu0 %4730
      %4734 = vset.pattern.permute.xlu0 0
      %4735 = vperm.xlu0 %4734, %v4641
      %v4736 = vpop.permute.xlu0 %4735
      %4739 = vset.pattern.permute.xlu0 0
      %4740 = vperm.xlu0 %4739, %v4642
      %v4741 = vpop.permute.xlu0 %4740
      %4744 = vset.pattern.permute.xlu0 0
      %4745 = vperm.xlu0 %4744, %v4643
      %v4746 = vpop.permute.xlu0 %4745
      %4749 = vset.pattern.permute.xlu0 0
      %4750 = vperm.xlu0 %4749, %v4644
      %v4751 = vpop.permute.xlu0 %4750
      %4754 = vset.pattern.permute.xlu0 0
      %4755 = vperm.xlu0 %4754, %v4645
      %v4756 = vpop.permute.xlu0 %4755
      %4759 = vset.pattern.permute.xlu0 0
      %4760 = vperm.xlu0 %4759, %v4646
      %v4761 = vpop.permute.xlu0 %4760
      %4764 = vset.pattern.permute.xlu0 0
      %4765 = vperm.xlu0 %4764, %v4647
      %v4766 = vpop.permute.xlu0 %4765
      %4769 = vset.pattern.permute.xlu0 0
      %4770 = vperm.xlu0 %4769, %v4648
      %v4771 = vpop.permute.xlu0 %4770
      %4774 = vset.pattern.permute.xlu0 0
      %4775 = vperm.xlu0 %4774, %v4649
      %v4776 = vpop.permute.xlu0 %4775
      %4779 = vset.pattern.permute.xlu0 0
      %4780 = vperm.xlu0 %4779, %v4650
      %v4781 = vpop.permute.xlu0 %4780
      %4784 = vset.pattern.permute.xlu0 0
      %4785 = vperm.xlu0 %4784, %v4651
      %v4786 = vpop.permute.xlu0 %4785
      %4789 = vset.pattern.permute.xlu0 0
      %4790 = vperm.xlu0 %4789, %v4652
      %v4791 = vpop.permute.xlu0 %4790
      %4794 = vset.pattern.permute.xlu0 0
      %4795 = vperm.xlu0 %4794, %v4653
      %v4796 = vpop.permute.xlu0 %4795
      %4799 = vset.pattern.permute.xlu0 0
      %4800 = vperm.xlu0 %4799, %v4654
      %v4801 = vpop.permute.xlu0 %4800
      %4804 = vset.pattern.permute.xlu0 0
      %4805 = vperm.xlu0 %4804, %v4655
      %v4806 = vpop.permute.xlu0 %4805
      %4809 = vset.pattern.permute.xlu0 0
      %4810 = vperm.xlu0 %4809, %v4656
      %v4811 = vpop.permute.xlu0 %4810
      %4814 = vset.pattern.permute.xlu0 0
      %4815 = vperm.xlu0 %4814, %v4657
      %v4816 = vpop.permute.xlu0 %4815
      %v4818 = vmul.f32 %v4467, %v4661
      %v4819 = vmul.f32 %v4470, %v4666
      %v4820 = vmul.f32 %v4475, %v4671
      %v4821 = vmul.f32 %v4478, %v4676
      %v4822 = vmul.f32 %v4483, %v4681
      %v4823 = vmul.f32 %v4486, %v4686
      %v4824 = vmul.f32 %v4491, %v4691
      %v4825 = vmul.f32 %v4494, %v4696
      %v4826 = vmul.f32 %v4499, %v4701
      %v4827 = vmul.f32 %v4502, %v4706
      %v4828 = vmul.f32 %v4507, %v4711
      %v4829 = vmul.f32 %v4510, %v4716
      %v4830 = vmul.f32 %v4515, %v4721
      %v4831 = vmul.f32 %v4518, %v4726
      %v4832 = vmul.f32 %v4523, %v4731
      %v4833 = vmul.f32 %v4526, %v4736
      %v4834 = vmul.f32 %v4531, %v4741
      %v4835 = vmul.f32 %v4534, %v4746
      %v4836 = vmul.f32 %v4539, %v4751
      %v4837 = vmul.f32 %v4542, %v4756
      %v4838 = vmul.f32 %v4547, %v4761
      %v4839 = vmul.f32 %v4550, %v4766
      %v4840 = vmul.f32 %v4555, %v4771
      %v4841 = vmul.f32 %v4558, %v4776
      %v4842 = vmul.f32 %v4563, %v4781
      %v4843 = vmul.f32 %v4566, %v4786
      %v4844 = vmul.f32 %v4571, %v4791
      %v4845 = vmul.f32 %v4574, %v4796
      %v4846 = vmul.f32 %v4579, %v4801
      %v4847 = vmul.f32 %v4582, %v4806
      %v4848 = vmul.f32 %v4587, %v4811
      %v4849 = vmul.f32 %v4590, %v4816
      %v4850 = vadd.f32 %v4593, %v4818
      %v4851 = vadd.f32 %v4594, %v4819
      %v4852 = vadd.f32 %v4595, %v4820
      %v4853 = vadd.f32 %v4596, %v4821
      %v4854 = vadd.f32 %v4597, %v4822
      %v4855 = vadd.f32 %v4598, %v4823
      %v4856 = vadd.f32 %v4599, %v4824
      %v4857 = vadd.f32 %v4600, %v4825
      %v4858 = vadd.f32 %v4601, %v4826
      %v4859 = vadd.f32 %v4602, %v4827
      %v4860 = vadd.f32 %v4603, %v4828
      %v4861 = vadd.f32 %v4604, %v4829
      %v4862 = vadd.f32 %v4605, %v4830
      %v4863 = vadd.f32 %v4606, %v4831
      %v4864 = vadd.f32 %v4607, %v4832
      %v4865 = vadd.f32 %v4608, %v4833
      %v4866 = vadd.f32 %v4609, %v4834
      %v4867 = vadd.f32 %v4610, %v4835
      %v4868 = vadd.f32 %v4611, %v4836
      %v4869 = vadd.f32 %v4612, %v4837
      %v4870 = vadd.f32 %v4613, %v4838
      %v4871 = vadd.f32 %v4614, %v4839
      %v4872 = vadd.f32 %v4615, %v4840
      %v4873 = vadd.f32 %v4616, %v4841
      %v4874 = vadd.f32 %v4617, %v4842
      %v4875 = vadd.f32 %v4618, %v4843
      %v4876 = vadd.f32 %v4619, %v4844
      %v4877 = vadd.f32 %v4620, %v4845
      %v4878 = vadd.f32 %v4621, %v4846
      %v4879 = vadd.f32 %v4622, %v4847
      %v4880 = vadd.f32 %v4623, %v4848
      %v4881 = vadd.f32 %v4624, %v4849
      %4882 = vst.msk [vmem:[#allocation3] sm:$0xff] %vm727, %v4850
      %4883 = vst.msk [vmem:[#allocation3 + $0x8] sm:$0xff] %vm727, %v4851
      %4884 = vst.msk [vmem:[#allocation3 + $0x10] sm:$0xff] %vm727, %v4852
      %4885 = vst.msk [vmem:[#allocation3 + $0x18] sm:$0xff] %vm727, %v4853
      %4886 = vst.msk [vmem:[#allocation3 + $0x20] sm:$0xff] %vm727, %v4854
      %4887 = vst.msk [vmem:[#allocation3 + $0x28] sm:$0xff] %vm727, %v4855
      %4888 = vst.msk [vmem:[#allocation3 + $0x30] sm:$0xff] %vm727, %v4856
      %4889 = vst.msk [vmem:[#allocation3 + $0x38] sm:$0xff] %vm727, %v4857
      %4890 = vst.msk [vmem:[#allocation3 + $0x40] sm:$0xff] %vm727, %v4858
      %4891 = vst.msk [vmem:[#allocation3 + $0x48] sm:$0xff] %vm727, %v4859
      %4892 = vst.msk [vmem:[#allocation3 + $0x50] sm:$0xff] %vm727, %v4860
      %4893 = vst.msk [vmem:[#allocation3 + $0x58] sm:$0xff] %vm727, %v4861
      %4894 = vst.msk [vmem:[#allocation3 + $0x60] sm:$0xff] %vm727, %v4862
      %4895 = vst.msk [vmem:[#allocation3 + $0x68] sm:$0xff] %vm727, %v4863
      %4896 = vst.msk [vmem:[#allocation3 + $0x70] sm:$0xff] %vm727, %v4864
      %4897 = vst.msk [vmem:[#allocation3 + $0x78] sm:$0xff] %vm727, %v4865
      %4898 = vst.msk [vmem:[#allocation3 + $0x80] sm:$0xff] %vm727, %v4866
      %4899 = vst.msk [vmem:[#allocation3 + $0x88] sm:$0xff] %vm727, %v4867
      %4900 = vst.msk [vmem:[#allocation3 + $0x90] sm:$0xff] %vm727, %v4868
      %4901 = vst.msk [vmem:[#allocation3 + $0x98] sm:$0xff] %vm727, %v4869
      %4902 = vst.msk [vmem:[#allocation3 + $0xa0] sm:$0xff] %vm727, %v4870
      %4903 = vst.msk [vmem:[#allocation3 + $0xa8] sm:$0xff] %vm727, %v4871
      %4904 = vst.msk [vmem:[#allocation3 + $0xb0] sm:$0xff] %vm727, %v4872
      %4905 = vst.msk [vmem:[#allocation3 + $0xb8] sm:$0xff] %vm727, %v4873
      %4906 = vst.msk [vmem:[#allocation3 + $0xc0] sm:$0xff] %vm727, %v4874
      %4907 = vst.msk [vmem:[#allocation3 + $0xc8] sm:$0xff] %vm727, %v4875
      %4908 = vst.msk [vmem:[#allocation3 + $0xd0] sm:$0xff] %vm727, %v4876
      %4909 = vst.msk [vmem:[#allocation3 + $0xd8] sm:$0xff] %vm727, %v4877
      %4910 = vst.msk [vmem:[#allocation3 + $0xe0] sm:$0xff] %vm727, %v4878
      %4911 = vst.msk [vmem:[#allocation3 + $0xe8] sm:$0xff] %vm727, %v4879
      %4912 = vst.msk [vmem:[#allocation3 + $0xf0] sm:$0xff] %vm727, %v4880
      %4913 = vst.msk [vmem:[#allocation3 + $0xf8] sm:$0xff] %vm727, %v4881
      %v4914 = vld [vmem:[#allocation2 + $0x48] sm:$0xff]
      %v4915 = vld [vmem:[#allocation2 + $0x50] sm:$0xff]
      %v4916 = vld [vmem:[#allocation2 + $0x58] sm:$0xff]
      %v4917 = vld [vmem:[#allocation2 + $0x60] sm:$0xff]
      %v4918 = vld [vmem:[#allocation2 + $0x68] sm:$0xff]
      %v4919 = vld [vmem:[#allocation2 + $0x70] sm:$0xff]
      %v4920 = vld [vmem:[#allocation2 + $0x78] sm:$0xff]
      %v4921 = vld [vmem:[#allocation2 + $0x80] sm:$0xff]
      %v4922 = vld [vmem:[#allocation2 + $0x88] sm:$0xff]
      %v4923 = vld [vmem:[#allocation2 + $0x90] sm:$0xff]
      %v4924 = vld [vmem:[#allocation2 + $0x98] sm:$0xff]
      %v4925 = vld [vmem:[#allocation2 + $0xa0] sm:$0xff]
      %v4926 = vld [vmem:[#allocation2 + $0xa8] sm:$0xff]
      %v4927 = vld [vmem:[#allocation2 + $0xb0] sm:$0xff]
      %v4928 = vld [vmem:[#allocation2 + $0xb8] sm:$0xff]
      %v4929 = vld [vmem:[#allocation2 + $0xc0] sm:$0xff]
      %v4930 = vld [vmem:[#allocation2 + $0xc8] sm:$0xff]
      %v4931 = vld [vmem:[#allocation2 + $0xd0] sm:$0xff]
      %v4932 = vld [vmem:[#allocation2 + $0xd8] sm:$0xff]
      %v4933 = vld [vmem:[#allocation2 + $0xe0] sm:$0xff]
      %v4934 = vld [vmem:[#allocation2 + $0xe8] sm:$0xff]
      %v4935 = vld [vmem:[#allocation2 + $0xf0] sm:$0xff]
      %v4936 = vld [vmem:[#allocation2 + $0xf8] sm:$0xff]
      %v4937 = vld [vmem:[#allocation2 + $0x100] sm:$0xff]
      %v4938 = vld [vmem:[#allocation2 + $0x108] sm:$0xff]
      %v4939 = vld [vmem:[#allocation2 + $0x110] sm:$0xff]
      %v4940 = vld [vmem:[#allocation2 + $0x118] sm:$0xff]
      %v4941 = vld [vmem:[#allocation2 + $0x120] sm:$0xff]
      %v4942 = vld [vmem:[#allocation2 + $0x128] sm:$0xff]
      %v4943 = vld [vmem:[#allocation2 + $0x130] sm:$0xff]
      %v4944 = vld [vmem:[#allocation2 + $0x138] sm:$0xff]
      %v4945 = vld [vmem:[#allocation2 + $0x140] sm:$0xff]
      %v4946 = vpack.c.bf16 %v4915, %v4914
      %v4947 = vpack.c.bf16 %v4917, %v4916
      %v4948 = vpack.c.bf16 %v4919, %v4918
      %v4949 = vpack.c.bf16 %v4921, %v4920
      %v4950 = vpack.c.bf16 %v4923, %v4922
      %v4951 = vpack.c.bf16 %v4925, %v4924
      %v4952 = vpack.c.bf16 %v4927, %v4926
      %v4953 = vpack.c.bf16 %v4929, %v4928
      %v4954 = vpack.c.bf16 %v4931, %v4930
      %v4955 = vpack.c.bf16 %v4933, %v4932
      %v4956 = vpack.c.bf16 %v4935, %v4934
      %v4957 = vpack.c.bf16 %v4937, %v4936
      %v4958 = vpack.c.bf16 %v4939, %v4938
      %v4959 = vpack.c.bf16 %v4941, %v4940
      %v4960 = vpack.c.bf16 %v4943, %v4942
      %v4961 = vpack.c.bf16 %v4945, %v4944
      %s4962 = scalar_lea.vmem %s3, 28
      %v4963 = vld [vmem:[%s4962] sm:$0xf]
      %v4965 = vsel %vm727, %v4946, 0
      %v4968 = vsel %vm727, %v4947, 0
      %v4971 = vsel %vm727, %v4948, 0
      %v4974 = vsel %vm727, %v4949, 0
      %v4977 = vsel %vm727, %v4950, 0
      %v4980 = vsel %vm727, %v4951, 0
      %v4983 = vsel %vm727, %v4952, 0
      %v4986 = vsel %vm727, %v4953, 0
      %v4989 = vsel %vm727, %v4954, 0
      %v4992 = vsel %vm727, %v4955, 0
      %v4995 = vsel %vm727, %v4956, 0
      %v4998 = vsel %vm727, %v4957, 0
      %v5001 = vsel %vm727, %v4958, 0
      %v5004 = vsel %vm727, %v4959, 0
      %v5007 = vsel %vm727, %v4960, 0
      %v5010 = vsel %vm727, %v4961, 0
      %v5013 = vsel %vm931, %v4963, 0
      %5015 = vmatprep.subr.bf16.mxu0 0
      %5016 = vmatpush1.bf16.msra.mxu0 %v5013
      %5017 = vmatprep.subr.bf16.mxu0 0
      %5018 = vmatpush1.bf16.msra.mxu0 0
      %5019 = vmatprep.subr.bf16.mxu0 0
      %5020 = vmatpush1.bf16.msra.mxu0 0
      %5021 = vmatprep.subr.bf16.mxu0 0
      %5022 = vmatpush1.bf16.msra.mxu0 0
      %5023 = vmatprep.subr.bf16.mxu0 0
      %5024 = vmatpush1.bf16.msra.mxu0 0
      %5025 = vmatprep.subr.bf16.mxu0 0
      %5026 = vmatpush1.bf16.msra.mxu0 0
      %5027 = vmatprep.subr.bf16.mxu0 0
      %5028 = vmatpush1.bf16.msra.mxu0 0
      %5029 = vmatprep.subr.bf16.mxu0 0
      %5030 = vmatpush1.bf16.msra.mxu0 0
      %5031 = vmatprep.subr.bf16.mxu0 0
      %5032 = vmatpush1.bf16.msra.mxu0 0
      %5033 = vmatprep.subr.bf16.mxu0 0
      %5034 = vmatpush1.bf16.msra.mxu0 0
      %5035 = vmatprep.subr.bf16.mxu0 0
      %5036 = vmatpush1.bf16.msra.mxu0 0
      %5037 = vmatprep.subr.bf16.mxu0 0
      %5038 = vmatpush1.bf16.msra.mxu0 0
      %5039 = vmatprep.subr.bf16.mxu0 0
      %5040 = vmatpush1.bf16.msra.mxu0 0
      %5041 = vmatprep.subr.bf16.mxu0 0
      %5042 = vmatpush1.bf16.msra.mxu0 0
      %5043 = vmatprep.subr.bf16.mxu0 0
      %5044 = vmatpush1.bf16.msra.mxu0 0
      %5045 = vmatprep.subr.bf16.mxu0 0
      %5046 = vmatpush1.bf16.msra.mxu0 0
      %5047 = vmatprep.mubr.bf16.mxu0 0
      %5048 = vmatmul.mubr.bf16.gmra.mrb[0].mxu0 %v4965
      %v5049 = vpop.f32.mrb[0].mxu0
      %v5050 = vadd.f32 0.0, %v5049
      %v5051 = vpop.f32.mrb[0].mxu0
      %v5052 = vpop.f32.mrb[0].mxu0
      %v5053 = vadd.f32 0.0, %v5052
      %v5054 = vpop.f32.mrb[0].mxu0
      %5055 = vmatprep.mubr.bf16.mxu0 0
      %5056 = vmatmul.mubr.bf16.gmra.mrb[0].mxu0 %v4968
      %v5057 = vpop.f32.mrb[0].mxu0
      %v5058 = vadd.f32 0.0, %v5057
      %v5059 = vpop.f32.mrb[0].mxu0
      %v5060 = vpop.f32.mrb[0].mxu0
      %v5061 = vadd.f32 0.0, %v5060
      %v5062 = vpop.f32.mrb[0].mxu0
      %5063 = vmatprep.mubr.bf16.mxu0 0
      %5064 = vmatmul.mubr.bf16.gmra.mrb[0].mxu0 %v4971
      %v5065 = vpop.f32.mrb[0].mxu0
      %v5066 = vadd.f32 0.0, %v5065
      %v5067 = vpop.f32.mrb[0].mxu0
      %v5068 = vpop.f32.mrb[0].mxu0
      %v5069 = vadd.f32 0.0, %v5068
      %v5070 = vpop.f32.mrb[0].mxu0
      %5071 = vmatprep.mubr.bf16.mxu0 0
      %5072 = vmatmul.mubr.bf16.gmra.mrb[0].mxu0 %v4974
      %v5073 = vpop.f32.mrb[0].mxu0
      %v5074 = vadd.f32 0.0, %v5073
      %v5075 = vpop.f32.mrb[0].mxu0
      %v5076 = vpop.f32.mrb[0].mxu0
      %v5077 = vadd.f32 0.0, %v5076
      %v5078 = vpop.f32.mrb[0].mxu0
      %5079 = vmatprep.mubr.bf16.mxu0 0
      %5080 = vmatmul.mubr.bf16.gmra.mrb[0].mxu0 %v4977
      %v5081 = vpop.f32.mrb[0].mxu0
      %v5082 = vadd.f32 0.0, %v5081
      %v5083 = vpop.f32.mrb[0].mxu0
      %v5084 = vpop.f32.mrb[0].mxu0
      %v5085 = vadd.f32 0.0, %v5084
      %v5086 = vpop.f32.mrb[0].mxu0
      %5087 = vmatprep.mubr.bf16.mxu0 0
      %5088 = vmatmul.mubr.bf16.gmra.mrb[0].mxu0 %v4980
      %v5089 = vpop.f32.mrb[0].mxu0
      %v5090 = vadd.f32 0.0, %v5089
      %v5091 = vpop.f32.mrb[0].mxu0
      %v5092 = vpop.f32.mrb[0].mxu0
      %v5093 = vadd.f32 0.0, %v5092
      %v5094 = vpop.f32.mrb[0].mxu0
      %5095 = vmatprep.mubr.bf16.mxu0 0
      %5096 = vmatmul.mubr.bf16.gmra.mrb[0].mxu0 %v4983
      %v5097 = vpop.f32.mrb[0].mxu0
      %v5098 = vadd.f32 0.0, %v5097
      %v5099 = vpop.f32.mrb[0].mxu0
      %v5100 = vpop.f32.mrb[0].mxu0
      %v5101 = vadd.f32 0.0, %v5100
      %v5102 = vpop.f32.mrb[0].mxu0
      %5103 = vmatprep.mubr.bf16.mxu0 0
      %5104 = vmatmul.mubr.bf16.gmra.mrb[0].mxu0 %v4986
      %v5105 = vpop.f32.mrb[0].mxu0
      %v5106 = vadd.f32 0.0, %v5105
      %v5107 = vpop.f32.mrb[0].mxu0
      %v5108 = vpop.f32.mrb[0].mxu0
      %v5109 = vadd.f32 0.0, %v5108
      %v5110 = vpop.f32.mrb[0].mxu0
      %5111 = vmatprep.mubr.bf16.mxu0 0
      %5112 = vmatmul.mubr.bf16.gmra.mrb[0].mxu0 %v4989
      %v5113 = vpop.f32.mrb[0].mxu0
      %v5114 = vadd.f32 0.0, %v5113
      %v5115 = vpop.f32.mrb[0].mxu0
      %v5116 = vpop.f32.mrb[0].mxu0
      %v5117 = vadd.f32 0.0, %v5116
      %v5118 = vpop.f32.mrb[0].mxu0
      %5119 = vmatprep.mubr.bf16.mxu0 0
      %5120 = vmatmul.mubr.bf16.gmra.mrb[0].mxu0 %v4992
      %v5121 = vpop.f32.mrb[0].mxu0
      %v5122 = vadd.f32 0.0, %v5121
      %v5123 = vpop.f32.mrb[0].mxu0
      %v5124 = vpop.f32.mrb[0].mxu0
      %v5125 = vadd.f32 0.0, %v5124
      %v5126 = vpop.f32.mrb[0].mxu0
      %5127 = vmatprep.mubr.bf16.mxu0 0
      %5128 = vmatmul.mubr.bf16.gmra.mrb[0].mxu0 %v4995
      %v5129 = vpop.f32.mrb[0].mxu0
      %v5130 = vadd.f32 0.0, %v5129
      %v5131 = vpop.f32.mrb[0].mxu0
      %v5132 = vpop.f32.mrb[0].mxu0
      %v5133 = vadd.f32 0.0, %v5132
      %v5134 = vpop.f32.mrb[0].mxu0
      %5135 = vmatprep.mubr.bf16.mxu0 0
      %5136 = vmatmul.mubr.bf16.gmra.mrb[0].mxu0 %v4998
      %v5137 = vpop.f32.mrb[0].mxu0
      %v5138 = vadd.f32 0.0, %v5137
      %v5139 = vpop.f32.mrb[0].mxu0
      %v5140 = vpop.f32.mrb[0].mxu0
      %v5141 = vadd.f32 0.0, %v5140
      %v5142 = vpop.f32.mrb[0].mxu0
      %5143 = vmatprep.mubr.bf16.mxu0 0
      %5144 = vmatmul.mubr.bf16.gmra.mrb[0].mxu0 %v5001
      %v5145 = vpop.f32.mrb[0].mxu0
      %v5146 = vadd.f32 0.0, %v5145
      %v5147 = vpop.f32.mrb[0].mxu0
      %v5148 = vpop.f32.mrb[0].mxu0
      %v5149 = vadd.f32 0.0, %v5148
      %v5150 = vpop.f32.mrb[0].mxu0
      %5151 = vmatprep.mubr.bf16.mxu0 0
      %5152 = vmatmul.mubr.bf16.gmra.mrb[0].mxu0 %v5004
      %v5153 = vpop.f32.mrb[0].mxu0
      %v5154 = vadd.f32 0.0, %v5153
      %v5155 = vpop.f32.mrb[0].mxu0
      %v5156 = vpop.f32.mrb[0].mxu0
      %v5157 = vadd.f32 0.0, %v5156
      %v5158 = vpop.f32.mrb[0].mxu0
      %5159 = vmatprep.mubr.bf16.mxu0 0
      %5160 = vmatmul.mubr.bf16.gmra.mrb[0].mxu0 %v5007
      %v5161 = vpop.f32.mrb[0].mxu0
      %v5162 = vadd.f32 0.0, %v5161
      %v5163 = vpop.f32.mrb[0].mxu0
      %v5164 = vpop.f32.mrb[0].mxu0
      %v5165 = vadd.f32 0.0, %v5164
      %v5166 = vpop.f32.mrb[0].mxu0
      %5167 = vmatprep.mubr.bf16.mxu0 0
      %5168 = vmatmul.mubr.bf16.gmra.mrb[0].mxu0 %v5010
      %v5169 = vpop.f32.mrb[0].mxu0
      %v5170 = vadd.f32 0.0, %v5169
      %v5171 = vpop.f32.mrb[0].mxu0
      %v5172 = vpop.f32.mrb[0].mxu0
      %v5173 = vadd.f32 0.0, %v5172
      %v5174 = vpop.f32.mrb[0].mxu0
      %5175 = vdwg.mxu0
      %v5176 = vld [vmem:[#allocation3] sm:$0xff]
      %v5177 = vld [vmem:[#allocation3 + $0x8] sm:$0xff]
      %v5178 = vld [vmem:[#allocation3 + $0x10] sm:$0xff]
      %v5179 = vld [vmem:[#allocation3 + $0x18] sm:$0xff]
      %v5180 = vld [vmem:[#allocation3 + $0x20] sm:$0xff]
      %v5181 = vld [vmem:[#allocation3 + $0x28] sm:$0xff]
      %v5182 = vld [vmem:[#allocation3 + $0x30] sm:$0xff]
      %v5183 = vld [vmem:[#allocation3 + $0x38] sm:$0xff]
      %v5184 = vld [vmem:[#allocation3 + $0x40] sm:$0xff]
      %v5185 = vld [vmem:[#allocation3 + $0x48] sm:$0xff]
      %v5186 = vld [vmem:[#allocation3 + $0x50] sm:$0xff]
      %v5187 = vld [vmem:[#allocation3 + $0x58] sm:$0xff]
      %v5188 = vld [vmem:[#allocation3 + $0x60] sm:$0xff]
      %v5189 = vld [vmem:[#allocation3 + $0x68] sm:$0xff]
      %v5190 = vld [vmem:[#allocation3 + $0x70] sm:$0xff]
      %v5191 = vld [vmem:[#allocation3 + $0x78] sm:$0xff]
      %v5192 = vld [vmem:[#allocation3 + $0x80] sm:$0xff]
      %v5193 = vld [vmem:[#allocation3 + $0x88] sm:$0xff]
      %v5194 = vld [vmem:[#allocation3 + $0x90] sm:$0xff]
      %v5195 = vld [vmem:[#allocation3 + $0x98] sm:$0xff]
      %v5196 = vld [vmem:[#allocation3 + $0xa0] sm:$0xff]
      %v5197 = vld [vmem:[#allocation3 + $0xa8] sm:$0xff]
      %v5198 = vld [vmem:[#allocation3 + $0xb0] sm:$0xff]
      %v5199 = vld [vmem:[#allocation3 + $0xb8] sm:$0xff]
      %v5200 = vld [vmem:[#allocation3 + $0xc0] sm:$0xff]
      %v5201 = vld [vmem:[#allocation3 + $0xc8] sm:$0xff]
      %v5202 = vld [vmem:[#allocation3 + $0xd0] sm:$0xff]
      %v5203 = vld [vmem:[#allocation3 + $0xd8] sm:$0xff]
      %v5204 = vld [vmem:[#allocation3 + $0xe0] sm:$0xff]
      %v5205 = vld [vmem:[#allocation3 + $0xe8] sm:$0xff]
      %v5206 = vld [vmem:[#allocation3 + $0xf0] sm:$0xff]
      %v5207 = vld [vmem:[#allocation3 + $0xf8] sm:$0xff]
      %s5208 = scalar_lea.vmem %s1, 1792
      %v5209 = vld [vmem:[%s5208] sm:$0xff]
      %v5210 = vld [vmem:[%s5208 + $0x8] sm:$0xff]
      %v5211 = vld [vmem:[%s5208 + $0x10] sm:$0xff]
      %v5212 = vld [vmem:[%s5208 + $0x18] sm:$0xff]
      %v5213 = vld [vmem:[%s5208 + $0x20] sm:$0xff]
      %v5214 = vld [vmem:[%s5208 + $0x28] sm:$0xff]
      %v5215 = vld [vmem:[%s5208 + $0x30] sm:$0xff]
      %v5216 = vld [vmem:[%s5208 + $0x38] sm:$0xff]
      %v5217 = vld [vmem:[%s5208 + $0x40] sm:$0xff]
      %v5218 = vld [vmem:[%s5208 + $0x48] sm:$0xff]
      %v5219 = vld [vmem:[%s5208 + $0x50] sm:$0xff]
      %v5220 = vld [vmem:[%s5208 + $0x58] sm:$0xff]
      %v5221 = vld [vmem:[%s5208 + $0x60] sm:$0xff]
      %v5222 = vld [vmem:[%s5208 + $0x68] sm:$0xff]
      %v5223 = vld [vmem:[%s5208 + $0x70] sm:$0xff]
      %v5224 = vld [vmem:[%s5208 + $0x78] sm:$0xff]
      %v5225 = vld [vmem:[%s5208 + $0x80] sm:$0xff]
      %v5226 = vld [vmem:[%s5208 + $0x88] sm:$0xff]
      %v5227 = vld [vmem:[%s5208 + $0x90] sm:$0xff]
      %v5228 = vld [vmem:[%s5208 + $0x98] sm:$0xff]
      %v5229 = vld [vmem:[%s5208 + $0xa0] sm:$0xff]
      %v5230 = vld [vmem:[%s5208 + $0xa8] sm:$0xff]
      %v5231 = vld [vmem:[%s5208 + $0xb0] sm:$0xff]
      %v5232 = vld [vmem:[%s5208 + $0xb8] sm:$0xff]
      %v5233 = vld [vmem:[%s5208 + $0xc0] sm:$0xff]
      %v5234 = vld [vmem:[%s5208 + $0xc8] sm:$0xff]
      %v5235 = vld [vmem:[%s5208 + $0xd0] sm:$0xff]
      %v5236 = vld [vmem:[%s5208 + $0xd8] sm:$0xff]
      %v5237 = vld [vmem:[%s5208 + $0xe0] sm:$0xff]
      %v5238 = vld [vmem:[%s5208 + $0xe8] sm:$0xff]
      %v5239 = vld [vmem:[%s5208 + $0xf0] sm:$0xff]
      %v5240 = vld [vmem:[%s5208 + $0xf8] sm:$0xff]
      %5242 = vset.pattern.permute.xlu0 0
      %5243 = vperm.xlu0 %5242, %v5209
      %v5244 = vpop.permute.xlu0 %5243
      %5247 = vset.pattern.permute.xlu0 0
      %5248 = vperm.xlu0 %5247, %v5210
      %v5249 = vpop.permute.xlu0 %5248
      %5252 = vset.pattern.permute.xlu0 0
      %5253 = vperm.xlu0 %5252, %v5211
      %v5254 = vpop.permute.xlu0 %5253
      %5257 = vset.pattern.permute.xlu0 0
      %5258 = vperm.xlu0 %5257, %v5212
      %v5259 = vpop.permute.xlu0 %5258
      %5262 = vset.pattern.permute.xlu0 0
      %5263 = vperm.xlu0 %5262, %v5213
      %v5264 = vpop.permute.xlu0 %5263
      %5267 = vset.pattern.permute.xlu0 0
      %5268 = vperm.xlu0 %5267, %v5214
      %v5269 = vpop.permute.xlu0 %5268
      %5272 = vset.pattern.permute.xlu0 0
      %5273 = vperm.xlu0 %5272, %v5215
      %v5274 = vpop.permute.xlu0 %5273
      %5277 = vset.pattern.permute.xlu0 0
      %5278 = vperm.xlu0 %5277, %v5216
      %v5279 = vpop.permute.xlu0 %5278
      %5282 = vset.pattern.permute.xlu0 0
      %5283 = vperm.xlu0 %5282, %v5217
      %v5284 = vpop.permute.xlu0 %5283
      %5287 = vset.pattern.permute.xlu0 0
      %5288 = vperm.xlu0 %5287, %v5218
      %v5289 = vpop.permute.xlu0 %5288
      %5292 = vset.pattern.permute.xlu0 0
      %5293 = vperm.xlu0 %5292, %v5219
      %v5294 = vpop.permute.xlu0 %5293
      %5297 = vset.pattern.permute.xlu0 0
      %5298 = vperm.xlu0 %5297, %v5220
      %v5299 = vpop.permute.xlu0 %5298
      %5302 = vset.pattern.permute.xlu0 0
      %5303 = vperm.xlu0 %5302, %v5221
      %v5304 = vpop.permute.xlu0 %5303
      %5307 = vset.pattern.permute.xlu0 0
      %5308 = vperm.xlu0 %5307, %v5222
      %v5309 = vpop.permute.xlu0 %5308
      %5312 = vset.pattern.permute.xlu0 0
      %5313 = vperm.xlu0 %5312, %v5223
      %v5314 = vpop.permute.xlu0 %5313
      %5317 = vset.pattern.permute.xlu0 0
      %5318 = vperm.xlu0 %5317, %v5224
      %v5319 = vpop.permute.xlu0 %5318
      %5322 = vset.pattern.permute.xlu0 0
      %5323 = vperm.xlu0 %5322, %v5225
      %v5324 = vpop.permute.xlu0 %5323
      %5327 = vset.pattern.permute.xlu0 0
      %5328 = vperm.xlu0 %5327, %v5226
      %v5329 = vpop.permute.xlu0 %5328
      %5332 = vset.pattern.permute.xlu0 0
      %5333 = vperm.xlu0 %5332, %v5227
      %v5334 = vpop.permute.xlu0 %5333
      %5337 = vset.pattern.permute.xlu0 0
      %5338 = vperm.xlu0 %5337, %v5228
      %v5339 = vpop.permute.xlu0 %5338
      %5342 = vset.pattern.permute.xlu0 0
      %5343 = vperm.xlu0 %5342, %v5229
      %v5344 = vpop.permute.xlu0 %5343
      %5347 = vset.pattern.permute.xlu0 0
      %5348 = vperm.xlu0 %5347, %v5230
      %v5349 = vpop.permute.xlu0 %5348
      %5352 = vset.pattern.permute.xlu0 0
      %5353 = vperm.xlu0 %5352, %v5231
      %v5354 = vpop.permute.xlu0 %5353
      %5357 = vset.pattern.permute.xlu0 0
      %5358 = vperm.xlu0 %5357, %v5232
      %v5359 = vpop.permute.xlu0 %5358
      %5362 = vset.pattern.permute.xlu0 0
      %5363 = vperm.xlu0 %5362, %v5233
      %v5364 = vpop.permute.xlu0 %5363
      %5367 = vset.pattern.permute.xlu0 0
      %5368 = vperm.xlu0 %5367, %v5234
      %v5369 = vpop.permute.xlu0 %5368
      %5372 = vset.pattern.permute.xlu0 0
      %5373 = vperm.xlu0 %5372, %v5235
      %v5374 = vpop.permute.xlu0 %5373
      %5377 = vset.pattern.permute.xlu0 0
      %5378 = vperm.xlu0 %5377, %v5236
      %v5379 = vpop.permute.xlu0 %5378
      %5382 = vset.pattern.permute.xlu0 0
      %5383 = vperm.xlu0 %5382, %v5237
      %v5384 = vpop.permute.xlu0 %5383
      %5387 = vset.pattern.permute.xlu0 0
      %5388 = vperm.xlu0 %5387, %v5238
      %v5389 = vpop.permute.xlu0 %5388
      %5392 = vset.pattern.permute.xlu0 0
      %5393 = vperm.xlu0 %5392, %v5239
      %v5394 = vpop.permute.xlu0 %5393
      %5397 = vset.pattern.permute.xlu0 0
      %5398 = vperm.xlu0 %5397, %v5240
      %v5399 = vpop.permute.xlu0 %5398
      %v5401 = vmul.f32 %v5050, %v5244
      %v5402 = vmul.f32 %v5053, %v5249
      %v5403 = vmul.f32 %v5058, %v5254
      %v5404 = vmul.f32 %v5061, %v5259
      %v5405 = vmul.f32 %v5066, %v5264
      %v5406 = vmul.f32 %v5069, %v5269
      %v5407 = vmul.f32 %v5074, %v5274
      %v5408 = vmul.f32 %v5077, %v5279
      %v5409 = vmul.f32 %v5082, %v5284
      %v5410 = vmul.f32 %v5085, %v5289
      %v5411 = vmul.f32 %v5090, %v5294
      %v5412 = vmul.f32 %v5093, %v5299
      %v5413 = vmul.f32 %v5098, %v5304
      %v5414 = vmul.f32 %v5101, %v5309
      %v5415 = vmul.f32 %v5106, %v5314
      %v5416 = vmul.f32 %v5109, %v5319
      %v5417 = vmul.f32 %v5114, %v5324
      %v5418 = vmul.f32 %v5117, %v5329
      %v5419 = vmul.f32 %v5122, %v5334
      %v5420 = vmul.f32 %v5125, %v5339
      %v5421 = vmul.f32 %v5130, %v5344
      %v5422 = vmul.f32 %v5133, %v5349
      %v5423 = vmul.f32 %v5138, %v5354
      %v5424 = vmul.f32 %v5141, %v5359
      %v5425 = vmul.f32 %v5146, %v5364
      %v5426 = vmul.f32 %v5149, %v5369
      %v5427 = vmul.f32 %v5154, %v5374
      %v5428 = vmul.f32 %v5157, %v5379
      %v5429 = vmul.f32 %v5162, %v5384
      %v5430 = vmul.f32 %v5165, %v5389
      %v5431 = vmul.f32 %v5170, %v5394
      %v5432 = vmul.f32 %v5173, %v5399
      %v5433 = vadd.f32 %v5176, %v5401
      %v5434 = vadd.f32 %v5177, %v5402
      %v5435 = vadd.f32 %v5178, %v5403
      %v5436 = vadd.f32 %v5179, %v5404
      %v5437 = vadd.f32 %v5180, %v5405
      %v5438 = vadd.f32 %v5181, %v5406
      %v5439 = vadd.f32 %v5182, %v5407
      %v5440 = vadd.f32 %v5183, %v5408
      %v5441 = vadd.f32 %v5184, %v5409
      %v5442 = vadd.f32 %v5185, %v5410
      %v5443 = vadd.f32 %v5186, %v5411
      %v5444 = vadd.f32 %v5187, %v5412
      %v5445 = vadd.f32 %v5188, %v5413
      %v5446 = vadd.f32 %v5189, %v5414
      %v5447 = vadd.f32 %v5190, %v5415
      %v5448 = vadd.f32 %v5191, %v5416
      %v5449 = vadd.f32 %v5192, %v5417
      %v5450 = vadd.f32 %v5193, %v5418
      %v5451 = vadd.f32 %v5194, %v5419
      %v5452 = vadd.f32 %v5195, %v5420
      %v5453 = vadd.f32 %v5196, %v5421
      %v5454 = vadd.f32 %v5197, %v5422
      %v5455 = vadd.f32 %v5198, %v5423
      %v5456 = vadd.f32 %v5199, %v5424
      %v5457 = vadd.f32 %v5200, %v5425
      %v5458 = vadd.f32 %v5201, %v5426
      %v5459 = vadd.f32 %v5202, %v5427
      %v5460 = vadd.f32 %v5203, %v5428
      %v5461 = vadd.f32 %v5204, %v5429
      %v5462 = vadd.f32 %v5205, %v5430
      %v5463 = vadd.f32 %v5206, %v5431
      %v5464 = vadd.f32 %v5207, %v5432
      %5465 = vst.msk [vmem:[#allocation3] sm:$0xff] %vm727, %v5433
      %5466 = vst.msk [vmem:[#allocation3 + $0x8] sm:$0xff] %vm727, %v5434
      %5467 = vst.msk [vmem:[#allocation3 + $0x10] sm:$0xff] %vm727, %v5435
      %5468 = vst.msk [vmem:[#allocation3 + $0x18] sm:$0xff] %vm727, %v5436
      %5469 = vst.msk [vmem:[#allocation3 + $0x20] sm:$0xff] %vm727, %v5437
      %5470 = vst.msk [vmem:[#allocation3 + $0x28] sm:$0xff] %vm727, %v5438
      %5471 = vst.msk [vmem:[#allocation3 + $0x30] sm:$0xff] %vm727, %v5439
      %5472 = vst.msk [vmem:[#allocation3 + $0x38] sm:$0xff] %vm727, %v5440
      %5473 = vst.msk [vmem:[#allocation3 + $0x40] sm:$0xff] %vm727, %v5441
      %5474 = vst.msk [vmem:[#allocation3 + $0x48] sm:$0xff] %vm727, %v5442
      %5475 = vst.msk [vmem:[#allocation3 + $0x50] sm:$0xff] %vm727, %v5443
      %5476 = vst.msk [vmem:[#allocation3 + $0x58] sm:$0xff] %vm727, %v5444
      %5477 = vst.msk [vmem:[#allocation3 + $0x60] sm:$0xff] %vm727, %v5445
      %5478 = vst.msk [vmem:[#allocation3 + $0x68] sm:$0xff] %vm727, %v5446
      %5479 = vst.msk [vmem:[#allocation3 + $0x70] sm:$0xff] %vm727, %v5447
      %5480 = vst.msk [vmem:[#allocation3 + $0x78] sm:$0xff] %vm727, %v5448
      %5481 = vst.msk [vmem:[#allocation3 + $0x80] sm:$0xff] %vm727, %v5449
      %5482 = vst.msk [vmem:[#allocation3 + $0x88] sm:$0xff] %vm727, %v5450
      %5483 = vst.msk [vmem:[#allocation3 + $0x90] sm:$0xff] %vm727, %v5451
      %5484 = vst.msk [vmem:[#allocation3 + $0x98] sm:$0xff] %vm727, %v5452
      %5485 = vst.msk [vmem:[#allocation3 + $0xa0] sm:$0xff] %vm727, %v5453
      %5486 = vst.msk [vmem:[#allocation3 + $0xa8] sm:$0xff] %vm727, %v5454
      %5487 = vst.msk [vmem:[#allocation3 + $0xb0] sm:$0xff] %vm727, %v5455
      %5488 = vst.msk [vmem:[#allocation3 + $0xb8] sm:$0xff] %vm727, %v5456
      %5489 = vst.msk [vmem:[#allocation3 + $0xc0] sm:$0xff] %vm727, %v5457
      %5490 = vst.msk [vmem:[#allocation3 + $0xc8] sm:$0xff] %vm727, %v5458
      %5491 = vst.msk [vmem:[#allocation3 + $0xd0] sm:$0xff] %vm727, %v5459
      %5492 = vst.msk [vmem:[#allocation3 + $0xd8] sm:$0xff] %vm727, %v5460
      %5493 = vst.msk [vmem:[#allocation3 + $0xe0] sm:$0xff] %vm727, %v5461
      %5494 = vst.msk [vmem:[#allocation3 + $0xe8] sm:$0xff] %vm727, %v5462
      %5495 = vst.msk [vmem:[#allocation3 + $0xf0] sm:$0xff] %vm727, %v5463
      %5496 = vst.msk [vmem:[#allocation3 + $0xf8] sm:$0xff] %vm727, %v5464
      %v5497 = vld [vmem:[#allocation2 + $0x4a] sm:$0xff]
      %v5498 = vld [vmem:[#allocation2 + $0x52] sm:$0xff]
      %v5499 = vld [vmem:[#allocation2 + $0x5a] sm:$0xff]
      %v5500 = vld [vmem:[#allocation2 + $0x62] sm:$0xff]
      %v5501 = vld [vmem:[#allocation2 + $0x6a] sm:$0xff]
      %v5502 = vld [vmem:[#allocation2 + $0x72] sm:$0xff]
      %v5503 = vld [vmem:[#allocation2 + $0x7a] sm:$0xff]
      %v5504 = vld [vmem:[#allocation2 + $0x82] sm:$0xff]
      %v5505 = vld [vmem:[#allocation2 + $0x8a] sm:$0xff]
      %v5506 = vld [vmem:[#allocation2 + $0x92] sm:$0xff]
      %v5507 = vld [vmem:[#allocation2 + $0x9a] sm:$0xff]
      %v5508 = vld [vmem:[#allocation2 + $0xa2] sm:$0xff]
      %v5509 = vld [vmem:[#allocation2 + $0xaa] sm:$0xff]
      %v5510 = vld [vmem:[#allocation2 + $0xb2] sm:$0xff]
      %v5511 = vld [vmem:[#allocation2 + $0xba] sm:$0xff]
      %v5512 = vld [vmem:[#allocation2 + $0xc2] sm:$0xff]
      %v5513 = vld [vmem:[#allocation2 + $0xca] sm:$0xff]
      %v5514 = vld [vmem:[#allocation2 + $0xd2] sm:$0xff]
      %v5515 = vld [vmem:[#allocation2 + $0xda] sm:$0xff]
      %v5516 = vld [vmem:[#allocation2 + $0xe2] sm:$0xff]
      %v5517 = vld [vmem:[#allocation2 + $0xea] sm:$0xff]
      %v5518 = vld [vmem:[#allocation2 + $0xf2] sm:$0xff]
      %v5519 = vld [vmem:[#allocation2 + $0xfa] sm:$0xff]
      %v5520 = vld [vmem:[#allocation2 + $0x102] sm:$0xff]
      %v5521 = vld [vmem:[#allocation2 + $0x10a] sm:$0xff]
      %v5522 = vld [vmem:[#allocation2 + $0x112] sm:$0xff]
      %v5523 = vld [vmem:[#allocation2 + $0x11a] sm:$0xff]
      %v5524 = vld [vmem:[#allocation2 + $0x122] sm:$0xff]
      %v5525 = vld [vmem:[#allocation2 + $0x12a] sm:$0xff]
      %v5526 = vld [vmem:[#allocation2 + $0x132] sm:$0xff]
      %v5527 = vld [vmem:[#allocation2 + $0x13a] sm:$0xff]
      %v5528 = vld [vmem:[#allocation2 + $0x142] sm:$0xff]
      %v5529 = vpack.c.bf16 %v5498, %v5497
      %v5530 = vpack.c.bf16 %v5500, %v5499
      %v5531 = vpack.c.bf16 %v5502, %v5501
      %v5532 = vpack.c.bf16 %v5504, %v5503
      %v5533 = vpack.c.bf16 %v5506, %v5505
      %v5534 = vpack.c.bf16 %v5508, %v5507
      %v5535 = vpack.c.bf16 %v5510, %v5509
      %v5536 = vpack.c.bf16 %v5512, %v5511
      %v5537 = vpack.c.bf16 %v5514, %v5513
      %v5538 = vpack.c.bf16 %v5516, %v5515
      %v5539 = vpack.c.bf16 %v5518, %v5517
      %v5540 = vpack.c.bf16 %v5520, %v5519
      %v5541 = vpack.c.bf16 %v5522, %v5521
      %v5542 = vpack.c.bf16 %v5524, %v5523
      %v5543 = vpack.c.bf16 %v5526, %v5525
      %v5544 = vpack.c.bf16 %v5528, %v5527
      %s5545 = scalar_lea.vmem %s3, 32
      %v5546 = vld [vmem:[%s5545] sm:$0xf]
      %v5548 = vsel %vm727, %v5529, 0
      %v5551 = vsel %vm727, %v5530, 0
      %v5554 = vsel %vm727, %v5531, 0
      %v5557 = vsel %vm727, %v5532, 0
      %v5560 = vsel %vm727, %v5533, 0
      %v5563 = vsel %vm727, %v5534, 0
      %v5566 = vsel %vm727, %v5535, 0
      %v5569 = vsel %vm727, %v5536, 0
      %v5572 = vsel %vm727, %v5537, 0
      %v5575 = vsel %vm727, %v5538, 0
      %v5578 = vsel %vm727, %v5539, 0
      %v5581 = vsel %vm727, %v5540, 0
      %v5584 = vsel %vm727, %v5541, 0
      %v5587 = vsel %vm727, %v5542, 0
      %v5590 = vsel %vm727, %v5543, 0
      %v5593 = vsel %vm727, %v5544, 0
      %v5596 = vsel %vm931, %v5546, 0
      %5598 = vmatprep.subr.bf16.mxu0 0
      %5599 = vmatpush1.bf16.msra.mxu0 %v5596
      %5600 = vmatprep.subr.bf16.mxu0 0
      %5601 = vmatpush1.bf16.msra.mxu0 0
      %5602 = vmatprep.subr.bf16.mxu0 0
      %5603 = vmatpush1.bf16.msra.mxu0 0
      %5604 = vmatprep.subr.bf16.mxu0 0
      %5605 = vmatpush1.bf16.msra.mxu0 0
      %5606 = vmatprep.subr.bf16.mxu0 0
      %5607 = vmatpush1.bf16.msra.mxu0 0
      %5608 = vmatprep.subr.bf16.mxu0 0
      %5609 = vmatpush1.bf16.msra.mxu0 0
      %5610 = vmatprep.subr.bf16.mxu0 0
      %5611 = vmatpush1.bf16.msra.mxu0 0
      %5612 = vmatprep.subr.bf16.mxu0 0
      %5613 = vmatpush1.bf16.msra.mxu0 0
      %5614 = vmatprep.subr.bf16.mxu0 0
      %5615 = vmatpush1.bf16.msra.mxu0 0
      %5616 = vmatprep.subr.bf16.mxu0 0
      %5617 = vmatpush1.bf16.msra.mxu0 0
      %5618 = vmatprep.subr.bf16.mxu0 0
      %5619 = vmatpush1.bf16.msra.mxu0 0
      %5620 = vmatprep.subr.bf16.mxu0 0
      %5621 = vmatpush1.bf16.msra.mxu0 0
      %5622 = vmatprep.subr.bf16.mxu0 0
      %5623 = vmatpush1.bf16.msra.mxu0 0
      %5624 = vmatprep.subr.bf16.mxu0 0
      %5625 = vmatpush1.bf16.msra.mxu0 0
      %5626 = vmatprep.subr.bf16.mxu0 0
      %5627 = vmatpush1.bf16.msra.mxu0 0
      %5628 = vmatprep.subr.bf16.mxu0 0
      %5629 = vmatpush1.bf16.msra.mxu0 0
      %5630 = vmatprep.mubr.bf16.mxu0 0
      %5631 = vmatmul.mubr.bf16.gmra.mrb[0].mxu0 %v5548
      %v5632 = vpop.f32.mrb[0].mxu0
      %v5633 = vadd.f32 0.0, %v5632
      %v5634 = vpop.f32.mrb[0].mxu0
      %v5635 = vpop.f32.mrb[0].mxu0
      %v5636 = vadd.f32 0.0, %v5635
      %v5637 = vpop.f32.mrb[0].mxu0
      %5638 = vmatprep.mubr.bf16.mxu0 0
      %5639 = vmatmul.mubr.bf16.gmra.mrb[0].mxu0 %v5551
      %v5640 = vpop.f32.mrb[0].mxu0
      %v5641 = vadd.f32 0.0, %v5640
      %v5642 = vpop.f32.mrb[0].mxu0
      %v5643 = vpop.f32.mrb[0].mxu0
      %v5644 = vadd.f32 0.0, %v5643
      %v5645 = vpop.f32.mrb[0].mxu0
      %5646 = vmatprep.mubr.bf16.mxu0 0
      %5647 = vmatmul.mubr.bf16.gmra.mrb[0].mxu0 %v5554
      %v5648 = vpop.f32.mrb[0].mxu0
      %v5649 = vadd.f32 0.0, %v5648
      %v5650 = vpop.f32.mrb[0].mxu0
      %v5651 = vpop.f32.mrb[0].mxu0
      %v5652 = vadd.f32 0.0, %v5651
      %v5653 = vpop.f32.mrb[0].mxu0
      %5654 = vmatprep.mubr.bf16.mxu0 0
      %5655 = vmatmul.mubr.bf16.gmra.mrb[0].mxu0 %v5557
      %v5656 = vpop.f32.mrb[0].mxu0
      %v5657 = vadd.f32 0.0, %v5656
      %v5658 = vpop.f32.mrb[0].mxu0
      %v5659 = vpop.f32.mrb[0].mxu0
      %v5660 = vadd.f32 0.0, %v5659
      %v5661 = vpop.f32.mrb[0].mxu0
      %5662 = vmatprep.mubr.bf16.mxu0 0
      %5663 = vmatmul.mubr.bf16.gmra.mrb[0].mxu0 %v5560
      %v5664 = vpop.f32.mrb[0].mxu0
      %v5665 = vadd.f32 0.0, %v5664
      %v5666 = vpop.f32.mrb[0].mxu0
      %v5667 = vpop.f32.mrb[0].mxu0
      %v5668 = vadd.f32 0.0, %v5667
      %v5669 = vpop.f32.mrb[0].mxu0
      %5670 = vmatprep.mubr.bf16.mxu0 0
      %5671 = vmatmul.mubr.bf16.gmra.mrb[0].mxu0 %v5563
      %v5672 = vpop.f32.mrb[0].mxu0
      %v5673 = vadd.f32 0.0, %v5672
      %v5674 = vpop.f32.mrb[0].mxu0
      %v5675 = vpop.f32.mrb[0].mxu0
      %v5676 = vadd.f32 0.0, %v5675
      %v5677 = vpop.f32.mrb[0].mxu0
      %5678 = vmatprep.mubr.bf16.mxu0 0
      %5679 = vmatmul.mubr.bf16.gmra.mrb[0].mxu0 %v5566
      %v5680 = vpop.f32.mrb[0].mxu0
      %v5681 = vadd.f32 0.0, %v5680
      %v5682 = vpop.f32.mrb[0].mxu0
      %v5683 = vpop.f32.mrb[0].mxu0
      %v5684 = vadd.f32 0.0, %v5683
      %v5685 = vpop.f32.mrb[0].mxu0
      %5686 = vmatprep.mubr.bf16.mxu0 0
      %5687 = vmatmul.mubr.bf16.gmra.mrb[0].mxu0 %v5569
      %v5688 = vpop.f32.mrb[0].mxu0
      %v5689 = vadd.f32 0.0, %v5688
      %v5690 = vpop.f32.mrb[0].mxu0
      %v5691 = vpop.f32.mrb[0].mxu0
      %v5692 = vadd.f32 0.0, %v5691
      %v5693 = vpop.f32.mrb[0].mxu0
      %5694 = vmatprep.mubr.bf16.mxu0 0
      %5695 = vmatmul.mubr.bf16.gmra.mrb[0].mxu0 %v5572
      %v5696 = vpop.f32.mrb[0].mxu0
      %v5697 = vadd.f32 0.0, %v5696
      %v5698 = vpop.f32.mrb[0].mxu0
      %v5699 = vpop.f32.mrb[0].mxu0
      %v5700 = vadd.f32 0.0, %v5699
      %v5701 = vpop.f32.mrb[0].mxu0
      %5702 = vmatprep.mubr.bf16.mxu0 0
      %5703 = vmatmul.mubr.bf16.gmra.mrb[0].mxu0 %v5575
      %v5704 = vpop.f32.mrb[0].mxu0
      %v5705 = vadd.f32 0.0, %v5704
      %v5706 = vpop.f32.mrb[0].mxu0
      %v5707 = vpop.f32.mrb[0].mxu0
      %v5708 = vadd.f32 0.0, %v5707
      %v5709 = vpop.f32.mrb[0].mxu0
      %5710 = vmatprep.mubr.bf16.mxu0 0
      %5711 = vmatmul.mubr.bf16.gmra.mrb[0].mxu0 %v5578
      %v5712 = vpop.f32.mrb[0].mxu0
      %v5713 = vadd.f32 0.0, %v5712
      %v5714 = vpop.f32.mrb[0].mxu0
      %v5715 = vpop.f32.mrb[0].mxu0
      %v5716 = vadd.f32 0.0, %v5715
      %v5717 = vpop.f32.mrb[0].mxu0
      %5718 = vmatprep.mubr.bf16.mxu0 0
      %5719 = vmatmul.mubr.bf16.gmra.mrb[0].mxu0 %v5581
      %v5720 = vpop.f32.mrb[0].mxu0
      %v5721 = vadd.f32 0.0, %v5720
      %v5722 = vpop.f32.mrb[0].mxu0
      %v5723 = vpop.f32.mrb[0].mxu0
      %v5724 = vadd.f32 0.0, %v5723
      %v5725 = vpop.f32.mrb[0].mxu0
      %5726 = vmatprep.mubr.bf16.mxu0 0
      %5727 = vmatmul.mubr.bf16.gmra.mrb[0].mxu0 %v5584
      %v5728 = vpop.f32.mrb[0].mxu0
      %v5729 = vadd.f32 0.0, %v5728
      %v5730 = vpop.f32.mrb[0].mxu0
      %v5731 = vpop.f32.mrb[0].mxu0
      %v5732 = vadd.f32 0.0, %v5731
      %v5733 = vpop.f32.mrb[0].mxu0
      %5734 = vmatprep.mubr.bf16.mxu0 0
      %5735 = vmatmul.mubr.bf16.gmra.mrb[0].mxu0 %v5587
      %v5736 = vpop.f32.mrb[0].mxu0
      %v5737 = vadd.f32 0.0, %v5736
      %v5738 = vpop.f32.mrb[0].mxu0
      %v5739 = vpop.f32.mrb[0].mxu0
      %v5740 = vadd.f32 0.0, %v5739
      %v5741 = vpop.f32.mrb[0].mxu0
      %5742 = vmatprep.mubr.bf16.mxu0 0
      %5743 = vmatmul.mubr.bf16.gmra.mrb[0].mxu0 %v5590
      %v5744 = vpop.f32.mrb[0].mxu0
      %v5745 = vadd.f32 0.0, %v5744
      %v5746 = vpop.f32.mrb[0].mxu0
      %v5747 = vpop.f32.mrb[0].mxu0
      %v5748 = vadd.f32 0.0, %v5747
      %v5749 = vpop.f32.mrb[0].mxu0
      %5750 = vmatprep.mubr.bf16.mxu0 0
      %5751 = vmatmul.mubr.bf16.gmra.mrb[0].mxu0 %v5593
      %v5752 = vpop.f32.mrb[0].mxu0
      %v5753 = vadd.f32 0.0, %v5752
      %v5754 = vpop.f32.mrb[0].mxu0
      %v5755 = vpop.f32.mrb[0].mxu0
      %v5756 = vadd.f32 0.0, %v5755
      %v5757 = vpop.f32.mrb[0].mxu0
      %5758 = vdwg.mxu0
      %v5759 = vld [vmem:[#allocation3] sm:$0xff]
      %v5760 = vld [vmem:[#allocation3 + $0x8] sm:$0xff]
      %v5761 = vld [vmem:[#allocation3 + $0x10] sm:$0xff]
      %v5762 = vld [vmem:[#allocation3 + $0x18] sm:$0xff]
      %v5763 = vld [vmem:[#allocation3 + $0x20] sm:$0xff]
      %v5764 = vld [vmem:[#allocation3 + $0x28] sm:$0xff]
      %v5765 = vld [vmem:[#allocation3 + $0x30] sm:$0xff]
      %v5766 = vld [vmem:[#allocation3 + $0x38] sm:$0xff]
      %v5767 = vld [vmem:[#allocation3 + $0x40] sm:$0xff]
      %v5768 = vld [vmem:[#allocation3 + $0x48] sm:$0xff]
      %v5769 = vld [vmem:[#allocation3 + $0x50] sm:$0xff]
      %v5770 = vld [vmem:[#allocation3 + $0x58] sm:$0xff]
      %v5771 = vld [vmem:[#allocation3 + $0x60] sm:$0xff]
      %v5772 = vld [vmem:[#allocation3 + $0x68] sm:$0xff]
      %v5773 = vld [vmem:[#allocation3 + $0x70] sm:$0xff]
      %v5774 = vld [vmem:[#allocation3 + $0x78] sm:$0xff]
      %v5775 = vld [vmem:[#allocation3 + $0x80] sm:$0xff]
      %v5776 = vld [vmem:[#allocation3 + $0x88] sm:$0xff]
      %v5777 = vld [vmem:[#allocation3 + $0x90] sm:$0xff]
      %v5778 = vld [vmem:[#allocation3 + $0x98] sm:$0xff]
      %v5779 = vld [vmem:[#allocation3 + $0xa0] sm:$0xff]
      %v5780 = vld [vmem:[#allocation3 + $0xa8] sm:$0xff]
      %v5781 = vld [vmem:[#allocation3 + $0xb0] sm:$0xff]
      %v5782 = vld [vmem:[#allocation3 + $0xb8] sm:$0xff]
      %v5783 = vld [vmem:[#allocation3 + $0xc0] sm:$0xff]
      %v5784 = vld [vmem:[#allocation3 + $0xc8] sm:$0xff]
      %v5785 = vld [vmem:[#allocation3 + $0xd0] sm:$0xff]
      %v5786 = vld [vmem:[#allocation3 + $0xd8] sm:$0xff]
      %v5787 = vld [vmem:[#allocation3 + $0xe0] sm:$0xff]
      %v5788 = vld [vmem:[#allocation3 + $0xe8] sm:$0xff]
      %v5789 = vld [vmem:[#allocation3 + $0xf0] sm:$0xff]
      %v5790 = vld [vmem:[#allocation3 + $0xf8] sm:$0xff]
      %s5791 = scalar_lea.vmem %s1, 2048
      %v5792 = vld [vmem:[%s5791] sm:$0xff]
      %v5793 = vld [vmem:[%s5791 + $0x8] sm:$0xff]
      %v5794 = vld [vmem:[%s5791 + $0x10] sm:$0xff]
      %v5795 = vld [vmem:[%s5791 + $0x18] sm:$0xff]
      %v5796 = vld [vmem:[%s5791 + $0x20] sm:$0xff]
      %v5797 = vld [vmem:[%s5791 + $0x28] sm:$0xff]
      %v5798 = vld [vmem:[%s5791 + $0x30] sm:$0xff]
      %v5799 = vld [vmem:[%s5791 + $0x38] sm:$0xff]
      %v5800 = vld [vmem:[%s5791 + $0x40] sm:$0xff]
      %v5801 = vld [vmem:[%s5791 + $0x48] sm:$0xff]
      %v5802 = vld [vmem:[%s5791 + $0x50] sm:$0xff]
      %v5803 = vld [vmem:[%s5791 + $0x58] sm:$0xff]
      %v5804 = vld [vmem:[%s5791 + $0x60] sm:$0xff]
      %v5805 = vld [vmem:[%s5791 + $0x68] sm:$0xff]
      %v5806 = vld [vmem:[%s5791 + $0x70] sm:$0xff]
      %v5807 = vld [vmem:[%s5791 + $0x78] sm:$0xff]
      %v5808 = vld [vmem:[%s5791 + $0x80] sm:$0xff]
      %v5809 = vld [vmem:[%s5791 + $0x88] sm:$0xff]
      %v5810 = vld [vmem:[%s5791 + $0x90] sm:$0xff]
      %v5811 = vld [vmem:[%s5791 + $0x98] sm:$0xff]
      %v5812 = vld [vmem:[%s5791 + $0xa0] sm:$0xff]
      %v5813 = vld [vmem:[%s5791 + $0xa8] sm:$0xff]
      %v5814 = vld [vmem:[%s5791 + $0xb0] sm:$0xff]
      %v5815 = vld [vmem:[%s5791 + $0xb8] sm:$0xff]
      %v5816 = vld [vmem:[%s5791 + $0xc0] sm:$0xff]
      %v5817 = vld [vmem:[%s5791 + $0xc8] sm:$0xff]
      %v5818 = vld [vmem:[%s5791 + $0xd0] sm:$0xff]
      %v5819 = vld [vmem:[%s5791 + $0xd8] sm:$0xff]
      %v5820 = vld [vmem:[%s5791 + $0xe0] sm:$0xff]
      %v5821 = vld [vmem:[%s5791 + $0xe8] sm:$0xff]
      %v5822 = vld [vmem:[%s5791 + $0xf0] sm:$0xff]
      %v5823 = vld [vmem:[%s5791 + $0xf8] sm:$0xff]
      %5825 = vset.pattern.permute.xlu0 0
      %5826 = vperm.xlu0 %5825, %v5792
      %v5827 = vpop.permute.xlu0 %5826
      %5830 = vset.pattern.permute.xlu0 0
      %5831 = vperm.xlu0 %5830, %v5793
      %v5832 = vpop.permute.xlu0 %5831
      %5835 = vset.pattern.permute.xlu0 0
      %5836 = vperm.xlu0 %5835, %v5794
      %v5837 = vpop.permute.xlu0 %5836
      %5840 = vset.pattern.permute.xlu0 0
      %5841 = vperm.xlu0 %5840, %v5795
      %v5842 = vpop.permute.xlu0 %5841
      %5845 = vset.pattern.permute.xlu0 0
      %5846 = vperm.xlu0 %5845, %v5796
      %v5847 = vpop.permute.xlu0 %5846
      %5850 = vset.pattern.permute.xlu0 0
      %5851 = vperm.xlu0 %5850, %v5797
      %v5852 = vpop.permute.xlu0 %5851
      %5855 = vset.pattern.permute.xlu0 0
      %5856 = vperm.xlu0 %5855, %v5798
      %v5857 = vpop.permute.xlu0 %5856
      %5860 = vset.pattern.permute.xlu0 0
      %5861 = vperm.xlu0 %5860, %v5799
      %v5862 = vpop.permute.xlu0 %5861
      %5865 = vset.pattern.permute.xlu0 0
      %5866 = vperm.xlu0 %5865, %v5800
      %v5867 = vpop.permute.xlu0 %5866
      %5870 = vset.pattern.permute.xlu0 0
      %5871 = vperm.xlu0 %5870, %v5801
      %v5872 = vpop.permute.xlu0 %5871
      %5875 = vset.pattern.permute.xlu0 0
      %5876 = vperm.xlu0 %5875, %v5802
      %v5877 = vpop.permute.xlu0 %5876
      %5880 = vset.pattern.permute.xlu0 0
      %5881 = vperm.xlu0 %5880, %v5803
      %v5882 = vpop.permute.xlu0 %5881
      %5885 = vset.pattern.permute.xlu0 0
      %5886 = vperm.xlu0 %5885, %v5804
      %v5887 = vpop.permute.xlu0 %5886
      %5890 = vset.pattern.permute.xlu0 0
      %5891 = vperm.xlu0 %5890, %v5805
      %v5892 = vpop.permute.xlu0 %5891
      %5895 = vset.pattern.permute.xlu0 0
      %5896 = vperm.xlu0 %5895, %v5806
      %v5897 = vpop.permute.xlu0 %5896
      %5900 = vset.pattern.permute.xlu0 0
      %5901 = vperm.xlu0 %5900, %v5807
      %v5902 = vpop.permute.xlu0 %5901
      %5905 = vset.pattern.permute.xlu0 0
      %5906 = vperm.xlu0 %5905, %v5808
      %v5907 = vpop.permute.xlu0 %5906
      %5910 = vset.pattern.permute.xlu0 0
      %5911 = vperm.xlu0 %5910, %v5809
      %v5912 = vpop.permute.xlu0 %5911
      %5915 = vset.pattern.permute.xlu0 0
      %5916 = vperm.xlu0 %5915, %v5810
      %v5917 = vpop.permute.xlu0 %5916
      %5920 = vset.pattern.permute.xlu0 0
      %5921 = vperm.xlu0 %5920, %v5811
      %v5922 = vpop.permute.xlu0 %5921
      %5925 = vset.pattern.permute.xlu0 0
      %5926 = vperm.xlu0 %5925, %v5812
      %v5927 = vpop.permute.xlu0 %5926
      %5930 = vset.pattern.permute.xlu0 0
      %5931 = vperm.xlu0 %5930, %v5813
      %v5932 = vpop.permute.xlu0 %5931
      %5935 = vset.pattern.permute.xlu0 0
      %5936 = vperm.xlu0 %5935, %v5814
      %v5937 = vpop.permute.xlu0 %5936
      %5940 = vset.pattern.permute.xlu0 0
      %5941 = vperm.xlu0 %5940, %v5815
      %v5942 = vpop.permute.xlu0 %5941
      %5945 = vset.pattern.permute.xlu0 0
      %5946 = vperm.xlu0 %5945, %v5816
      %v5947 = vpop.permute.xlu0 %5946
      %5950 = vset.pattern.permute.xlu0 0
      %5951 = vperm.xlu0 %5950, %v5817
      %v5952 = vpop.permute.xlu0 %5951
      %5955 = vset.pattern.permute.xlu0 0
      %5956 = vperm.xlu0 %5955, %v5818
      %v5957 = vpop.permute.xlu0 %5956
      %5960 = vset.pattern.permute.xlu0 0
      %5961 = vperm.xlu0 %5960, %v5819
      %v5962 = vpop.permute.xlu0 %5961
      %5965 = vset.pattern.permute.xlu0 0
      %5966 = vperm.xlu0 %5965, %v5820
      %v5967 = vpop.permute.xlu0 %5966
      %5970 = vset.pattern.permute.xlu0 0
      %5971 = vperm.xlu0 %5970, %v5821
      %v5972 = vpop.permute.xlu0 %5971
      %5975 = vset.pattern.permute.xlu0 0
      %5976 = vperm.xlu0 %5975, %v5822
      %v5977 = vpop.permute.xlu0 %5976
      %5980 = vset.pattern.permute.xlu0 0
      %5981 = vperm.xlu0 %5980, %v5823
      %v5982 = vpop.permute.xlu0 %5981
      %v5984 = vmul.f32 %v5633, %v5827
      %v5985 = vmul.f32 %v5636, %v5832
      %v5986 = vmul.f32 %v5641, %v5837
      %v5987 = vmul.f32 %v5644, %v5842
      %v5988 = vmul.f32 %v5649, %v5847
      %v5989 = vmul.f32 %v5652, %v5852
      %v5990 = vmul.f32 %v5657, %v5857
      %v5991 = vmul.f32 %v5660, %v5862
      %v5992 = vmul.f32 %v5665, %v5867
      %v5993 = vmul.f32 %v5668, %v5872
      %v5994 = vmul.f32 %v5673, %v5877
      %v5995 = vmul.f32 %v5676, %v5882
      %v5996 = vmul.f32 %v5681, %v5887
      %v5997 = vmul.f32 %v5684, %v5892
      %v5998 = vmul.f32 %v5689, %v5897
      %v5999 = vmul.f32 %v5692, %v5902
      %v6000 = vmul.f32 %v5697, %v5907
      %v6001 = vmul.f32 %v5700, %v5912
      %v6002 = vmul.f32 %v5705, %v5917
      %v6003 = vmul.f32 %v5708, %v5922
      %v6004 = vmul.f32 %v5713, %v5927
      %v6005 = vmul.f32 %v5716, %v5932
      %v6006 = vmul.f32 %v5721, %v5937
      %v6007 = vmul.f32 %v5724, %v5942
      %v6008 = vmul.f32 %v5729, %v5947
      %v6009 = vmul.f32 %v5732, %v5952
      %v6010 = vmul.f32 %v5737, %v5957
      %v6011 = vmul.f32 %v5740, %v5962
      %v6012 = vmul.f32 %v5745, %v5967
      %v6013 = vmul.f32 %v5748, %v5972
      %v6014 = vmul.f32 %v5753, %v5977
      %v6015 = vmul.f32 %v5756, %v5982
      %v6016 = vadd.f32 %v5759, %v5984
      %v6017 = vadd.f32 %v5760, %v5985
      %v6018 = vadd.f32 %v5761, %v5986
      %v6019 = vadd.f32 %v5762, %v5987
      %v6020 = vadd.f32 %v5763, %v5988
      %v6021 = vadd.f32 %v5764, %v5989
      %v6022 = vadd.f32 %v5765, %v5990
      %v6023 = vadd.f32 %v5766, %v5991
      %v6024 = vadd.f32 %v5767, %v5992
      %v6025 = vadd.f32 %v5768, %v5993
      %v6026 = vadd.f32 %v5769, %v5994
      %v6027 = vadd.f32 %v5770, %v5995
      %v6028 = vadd.f32 %v5771, %v5996
      %v6029 = vadd.f32 %v5772, %v5997
      %v6030 = vadd.f32 %v5773, %v5998
      %v6031 = vadd.f32 %v5774, %v5999
      %v6032 = vadd.f32 %v5775, %v6000
      %v6033 = vadd.f32 %v5776, %v6001
      %v6034 = vadd.f32 %v5777, %v6002
      %v6035 = vadd.f32 %v5778, %v6003
      %v6036 = vadd.f32 %v5779, %v6004
      %v6037 = vadd.f32 %v5780, %v6005
      %v6038 = vadd.f32 %v5781, %v6006
      %v6039 = vadd.f32 %v5782, %v6007
      %v6040 = vadd.f32 %v5783, %v6008
      %v6041 = vadd.f32 %v5784, %v6009
      %v6042 = vadd.f32 %v5785, %v6010
      %v6043 = vadd.f32 %v5786, %v6011
      %v6044 = vadd.f32 %v5787, %v6012
      %v6045 = vadd.f32 %v5788, %v6013
      %v6046 = vadd.f32 %v5789, %v6014
      %v6047 = vadd.f32 %v5790, %v6015
      %6048 = vst.msk [vmem:[#allocation3] sm:$0xff] %vm727, %v6016
      %6049 = vst.msk [vmem:[#allocation3 + $0x8] sm:$0xff] %vm727, %v6017
      %6050 = vst.msk [vmem:[#allocation3 + $0x10] sm:$0xff] %vm727, %v6018
      %6051 = vst.msk [vmem:[#allocation3 + $0x18] sm:$0xff] %vm727, %v6019
      %6052 = vst.msk [vmem:[#allocation3 + $0x20] sm:$0xff] %vm727, %v6020
      %6053 = vst.msk [vmem:[#allocation3 + $0x28] sm:$0xff] %vm727, %v6021
      %6054 = vst.msk [vmem:[#allocation3 + $0x30] sm:$0xff] %vm727, %v6022
      %6055 = vst.msk [vmem:[#allocation3 + $0x38] sm:$0xff] %vm727, %v6023
      %6056 = vst.msk [vmem:[#allocation3 + $0x40] sm:$0xff] %vm727, %v6024
      %6057 = vst.msk [vmem:[#allocation3 + $0x48] sm:$0xff] %vm727, %v6025
      %6058 = vst.msk [vmem:[#allocation3 + $0x50] sm:$0xff] %vm727, %v6026
      %6059 = vst.msk [vmem:[#allocation3 + $0x58] sm:$0xff] %vm727, %v6027
      %6060 = vst.msk [vmem:[#allocation3 + $0x60] sm:$0xff] %vm727, %v6028
      %6061 = vst.msk [vmem:[#allocation3 + $0x68] sm:$0xff] %vm727, %v6029
      %6062 = vst.msk [vmem:[#allocation3 + $0x70] sm:$0xff] %vm727, %v6030
      %6063 = vst.msk [vmem:[#allocation3 + $0x78] sm:$0xff] %vm727, %v6031
      %6064 = vst.msk [vmem:[#allocation3 + $0x80] sm:$0xff] %vm727, %v6032
      %6065 = vst.msk [vmem:[#allocation3 + $0x88] sm:$0xff] %vm727, %v6033
      %6066 = vst.msk [vmem:[#allocation3 + $0x90] sm:$0xff] %vm727, %v6034
      %6067 = vst.msk [vmem:[#allocation3 + $0x98] sm:$0xff] %vm727, %v6035
      %6068 = vst.msk [vmem:[#allocation3 + $0xa0] sm:$0xff] %vm727, %v6036
      %6069 = vst.msk [vmem:[#allocation3 + $0xa8] sm:$0xff] %vm727, %v6037
      %6070 = vst.msk [vmem:[#allocation3 + $0xb0] sm:$0xff] %vm727, %v6038
      %6071 = vst.msk [vmem:[#allocation3 + $0xb8] sm:$0xff] %vm727, %v6039
      %6072 = vst.msk [vmem:[#allocation3 + $0xc0] sm:$0xff] %vm727, %v6040
      %6073 = vst.msk [vmem:[#allocation3 + $0xc8] sm:$0xff] %vm727, %v6041
      %6074 = vst.msk [vmem:[#allocation3 + $0xd0] sm:$0xff] %vm727, %v6042
      %6075 = vst.msk [vmem:[#allocation3 + $0xd8] sm:$0xff] %vm727, %v6043
      %6076 = vst.msk [vmem:[#allocation3 + $0xe0] sm:$0xff] %vm727, %v6044
      %6077 = vst.msk [vmem:[#allocation3 + $0xe8] sm:$0xff] %vm727, %v6045
      %6078 = vst.msk [vmem:[#allocation3 + $0xf0] sm:$0xff] %vm727, %v6046
      %6079 = vst.msk [vmem:[#allocation3 + $0xf8] sm:$0xff] %vm727, %v6047
      %v6080 = vld [vmem:[#allocation3] sm:$0xff]
      %v6081 = vld [vmem:[#allocation3 + $0x8] sm:$0xff]
      %v6082 = vld [vmem:[#allocation3 + $0x10] sm:$0xff]
      %v6083 = vld [vmem:[#allocation3 + $0x18] sm:$0xff]
      %v6084 = vld [vmem:[#allocation3 + $0x20] sm:$0xff]
      %v6085 = vld [vmem:[#allocation3 + $0x28] sm:$0xff]
      %v6086 = vld [vmem:[#allocation3 + $0x30] sm:$0xff]
      %v6087 = vld [vmem:[#allocation3 + $0x38] sm:$0xff]
      %v6088 = vld [vmem:[#allocation3 + $0x40] sm:$0xff]
      %v6089 = vld [vmem:[#allocation3 + $0x48] sm:$0xff]
      %v6090 = vld [vmem:[#allocation3 + $0x50] sm:$0xff]
      %v6091 = vld [vmem:[#allocation3 + $0x58] sm:$0xff]
      %v6092 = vld [vmem:[#allocation3 + $0x60] sm:$0xff]
      %v6093 = vld [vmem:[#allocation3 + $0x68] sm:$0xff]
      %v6094 = vld [vmem:[#allocation3 + $0x70] sm:$0xff]
      %v6095 = vld [vmem:[#allocation3 + $0x78] sm:$0xff]
      %v6096 = vld [vmem:[#allocation3 + $0x80] sm:$0xff]
      %v6097 = vld [vmem:[#allocation3 + $0x88] sm:$0xff]
      %v6098 = vld [vmem:[#allocation3 + $0x90] sm:$0xff]
      %v6099 = vld [vmem:[#allocation3 + $0x98] sm:$0xff]
      %v6100 = vld [vmem:[#allocation3 + $0xa0] sm:$0xff]
      %v6101 = vld [vmem:[#allocation3 + $0xa8] sm:$0xff]
      %v6102 = vld [vmem:[#allocation3 + $0xb0] sm:$0xff]
      %v6103 = vld [vmem:[#allocation3 + $0xb8] sm:$0xff]
      %v6104 = vld [vmem:[#allocation3 + $0xc0] sm:$0xff]
      %v6105 = vld [vmem:[#allocation3 + $0xc8] sm:$0xff]
      %v6106 = vld [vmem:[#allocation3 + $0xd0] sm:$0xff]
      %v6107 = vld [vmem:[#allocation3 + $0xd8] sm:$0xff]
      %v6108 = vld [vmem:[#allocation3 + $0xe0] sm:$0xff]
      %v6109 = vld [vmem:[#allocation3 + $0xe8] sm:$0xff]
      %v6110 = vld [vmem:[#allocation3 + $0xf0] sm:$0xff]
      %v6111 = vld [vmem:[#allocation3 + $0xf8] sm:$0xff]
      %v6112 = vld [vmem:[%s7] sm:$0x1]
      %v6114 = vlaneseq
      %v6115 = vshrl.u32 %v6114, 7
      %v6116 = vsub.s32 0, %v6115
      %v6117 = vrot.slane %v6112, %v6116
      %v6119 = vadd.f32 %v6080, %v6117
      %v6120 = vadd.f32 %v6081, %v6117
      %v6121 = vadd.f32 %v6082, %v6117
      %v6122 = vadd.f32 %v6083, %v6117
      %v6123 = vadd.f32 %v6084, %v6117
      %v6124 = vadd.f32 %v6085, %v6117
      %v6125 = vadd.f32 %v6086, %v6117
      %v6126 = vadd.f32 %v6087, %v6117
      %v6127 = vadd.f32 %v6088, %v6117
      %v6128 = vadd.f32 %v6089, %v6117
      %v6129 = vadd.f32 %v6090, %v6117
      %v6130 = vadd.f32 %v6091, %v6117
      %v6131 = vadd.f32 %v6092, %v6117
      %v6132 = vadd.f32 %v6093, %v6117
      %v6133 = vadd.f32 %v6094, %v6117
      %v6134 = vadd.f32 %v6095, %v6117
      %v6135 = vadd.f32 %v6096, %v6117
      %v6136 = vadd.f32 %v6097, %v6117
      %v6137 = vadd.f32 %v6098, %v6117
      %v6138 = vadd.f32 %v6099, %v6117
      %v6139 = vadd.f32 %v6100, %v6117
      %v6140 = vadd.f32 %v6101, %v6117
      %v6141 = vadd.f32 %v6102, %v6117
      %v6142 = vadd.f32 %v6103, %v6117
      %v6143 = vadd.f32 %v6104, %v6117
      %v6144 = vadd.f32 %v6105, %v6117
      %v6145 = vadd.f32 %v6106, %v6117
      %v6146 = vadd.f32 %v6107, %v6117
      %v6147 = vadd.f32 %v6108, %v6117
      %v6148 = vadd.f32 %v6109, %v6117
      %v6149 = vadd.f32 %v6110, %v6117
      %v6150 = vadd.f32 %v6111, %v6117
      %v6151 = vmax.f32 %v6119, 0.0
      %v6152 = vmax.f32 %v6120, 0.0
      %v6153 = vmax.f32 %v6121, 0.0
      %v6154 = vmax.f32 %v6122, 0.0
      %v6155 = vmax.f32 %v6123, 0.0
      %v6156 = vmax.f32 %v6124, 0.0
      %v6157 = vmax.f32 %v6125, 0.0
      %v6158 = vmax.f32 %v6126, 0.0
      %v6159 = vmax.f32 %v6127, 0.0
      %v6160 = vmax.f32 %v6128, 0.0
      %v6161 = vmax.f32 %v6129, 0.0
      %v6162 = vmax.f32 %v6130, 0.0
      %v6163 = vmax.f32 %v6131, 0.0
      %v6164 = vmax.f32 %v6132, 0.0
      %v6165 = vmax.f32 %v6133, 0.0
      %v6166 = vmax.f32 %v6134, 0.0
      %v6167 = vmax.f32 %v6135, 0.0
      %v6168 = vmax.f32 %v6136, 0.0
      %v6169 = vmax.f32 %v6137, 0.0
      %v6170 = vmax.f32 %v6138, 0.0
      %v6171 = vmax.f32 %v6139, 0.0
      %v6172 = vmax.f32 %v6140, 0.0
      %v6173 = vmax.f32 %v6141, 0.0
      %v6174 = vmax.f32 %v6142, 0.0
      %v6175 = vmax.f32 %v6143, 0.0
      %v6176 = vmax.f32 %v6144, 0.0
      %v6177 = vmax.f32 %v6145, 0.0
      %v6178 = vmax.f32 %v6146, 0.0
      %v6179 = vmax.f32 %v6147, 0.0
      %v6180 = vmax.f32 %v6148, 0.0
      %v6181 = vmax.f32 %v6149, 0.0
      %v6182 = vmax.f32 %v6150, 0.0
      %v6183 = vpack.c.bf16 %v6152, %v6151
      %v6184 = vpack.c.bf16 %v6154, %v6153
      %v6185 = vpack.c.bf16 %v6156, %v6155
      %v6186 = vpack.c.bf16 %v6158, %v6157
      %v6187 = vpack.c.bf16 %v6160, %v6159
      %v6188 = vpack.c.bf16 %v6162, %v6161
      %v6189 = vpack.c.bf16 %v6164, %v6163
      %v6190 = vpack.c.bf16 %v6166, %v6165
      %v6191 = vpack.c.bf16 %v6168, %v6167
      %v6192 = vpack.c.bf16 %v6170, %v6169
      %v6193 = vpack.c.bf16 %v6172, %v6171
      %v6194 = vpack.c.bf16 %v6174, %v6173
      %v6195 = vpack.c.bf16 %v6176, %v6175
      %v6196 = vpack.c.bf16 %v6178, %v6177
      %v6197 = vpack.c.bf16 %v6180, %v6179
      %v6198 = vpack.c.bf16 %v6182, %v6181
      %v6199 = vld [vmem:[%s4] sm:$0xf]
      %v6200 = vld [vmem:[%s8] sm:$0x1]
      %v6202 = vlaneseq
      %v6203 = vshrl.u32 %v6202, 7
      %v6204 = vsub.s32 0, %v6203
      %v6205 = vrot.slane %v6200, %v6204
      %v6208 = vsel %vm727, %v6183, 0
      %v6211 = vsel %vm727, %v6184, 0
      %v6214 = vsel %vm727, %v6185, 0
      %v6217 = vsel %vm727, %v6186, 0
      %v6220 = vsel %vm727, %v6187, 0
      %v6223 = vsel %vm727, %v6188, 0
      %v6226 = vsel %vm727, %v6189, 0
      %v6229 = vsel %vm727, %v6190, 0
      %v6232 = vsel %vm727, %v6191, 0
      %v6235 = vsel %vm727, %v6192, 0
      %v6238 = vsel %vm727, %v6193, 0
      %v6241 = vsel %vm727, %v6194, 0
      %v6244 = vsel %vm727, %v6195, 0
      %v6247 = vsel %vm727, %v6196, 0
      %v6250 = vsel %vm727, %v6197, 0
      %v6253 = vsel %vm727, %v6198, 0
      %v6256 = vsel %vm931, %v6199, 0
      %6258 = vmatprep.subr.bf16.mxu0 0
      %6259 = vmatpush1.bf16.msra.mxu0 %v6256
      %6260 = vmatprep.subr.bf16.mxu0 0
      %6261 = vmatpush1.bf16.msra.mxu0 0
      %6262 = vmatprep.subr.bf16.mxu0 0
      %6263 = vmatpush1.bf16.msra.mxu0 0
      %6264 = vmatprep.subr.bf16.mxu0 0
      %6265 = vmatpush1.bf16.msra.mxu0 0
      %6266 = vmatprep.subr.bf16.mxu0 0
      %6267 = vmatpush1.bf16.msra.mxu0 0
      %6268 = vmatprep.subr.bf16.mxu0 0
      %6269 = vmatpush1.bf16.msra.mxu0 0
      %6270 = vmatprep.subr.bf16.mxu0 0
      %6271 = vmatpush1.bf16.msra.mxu0 0
      %6272 = vmatprep.subr.bf16.mxu0 0
      %6273 = vmatpush1.bf16.msra.mxu0 0
      %6274 = vmatprep.subr.bf16.mxu0 0
      %6275 = vmatpush1.bf16.msra.mxu0 0
      %6276 = vmatprep.subr.bf16.mxu0 0
      %6277 = vmatpush1.bf16.msra.mxu0 0
      %6278 = vmatprep.subr.bf16.mxu0 0
      %6279 = vmatpush1.bf16.msra.mxu0 0
      %6280 = vmatprep.subr.bf16.mxu0 0
      %6281 = vmatpush1.bf16.msra.mxu0 0
      %6282 = vmatprep.subr.bf16.mxu0 0
      %6283 = vmatpush1.bf16.msra.mxu0 0
      %6284 = vmatprep.subr.bf16.mxu0 0
      %6285 = vmatpush1.bf16.msra.mxu0 0
      %6286 = vmatprep.subr.bf16.mxu0 0
      %6287 = vmatpush1.bf16.msra.mxu0 0
      %6288 = vmatprep.subr.bf16.mxu0 0
      %6289 = vmatpush1.bf16.msra.mxu0 0
      %6290 = vmatprep.mubr.bf16.mxu0 0
      %6291 = vmatmul.mubr.bf16.gmra.mrb[0].mxu0 %v6208
      %v6292 = vpop.f32.mrb[0].mxu0
      %v6293 = vadd.f32 %v6205, %v6292
      %v6294 = vpop.f32.mrb[0].mxu0
      %v6295 = vpop.f32.mrb[0].mxu0
      %v6296 = vadd.f32 %v6205, %v6295
      %v6297 = vpop.f32.mrb[0].mxu0
      %6298 = vmatprep.mubr.bf16.mxu0 0
      %6299 = vmatmul.mubr.bf16.gmra.mrb[0].mxu0 %v6211
      %v6300 = vpop.f32.mrb[0].mxu0
      %v6301 = vadd.f32 %v6205, %v6300
      %v6302 = vpop.f32.mrb[0].mxu0
      %v6303 = vpop.f32.mrb[0].mxu0
      %v6304 = vadd.f32 %v6205, %v6303
      %v6305 = vpop.f32.mrb[0].mxu0
      %6306 = vmatprep.mubr.bf16.mxu0 0
      %6307 = vmatmul.mubr.bf16.gmra.mrb[0].mxu0 %v6214
      %v6308 = vpop.f32.mrb[0].mxu0
      %v6309 = vadd.f32 %v6205, %v6308
      %v6310 = vpop.f32.mrb[0].mxu0
      %v6311 = vpop.f32.mrb[0].mxu0
      %v6312 = vadd.f32 %v6205, %v6311
      %v6313 = vpop.f32.mrb[0].mxu0
      %6314 = vmatprep.mubr.bf16.mxu0 0
      %6315 = vmatmul.mubr.bf16.gmra.mrb[0].mxu0 %v6217
      %v6316 = vpop.f32.mrb[0].mxu0
      %v6317 = vadd.f32 %v6205, %v6316
      %v6318 = vpop.f32.mrb[0].mxu0
      %v6319 = vpop.f32.mrb[0].mxu0
      %v6320 = vadd.f32 %v6205, %v6319
      %v6321 = vpop.f32.mrb[0].mxu0
      %6322 = vmatprep.mubr.bf16.mxu0 0
      %6323 = vmatmul.mubr.bf16.gmra.mrb[0].mxu0 %v6220
      %v6324 = vpop.f32.mrb[0].mxu0
      %v6325 = vadd.f32 %v6205, %v6324
      %v6326 = vpop.f32.mrb[0].mxu0
      %v6327 = vpop.f32.mrb[0].mxu0
      %v6328 = vadd.f32 %v6205, %v6327
      %v6329 = vpop.f32.mrb[0].mxu0
      %6330 = vmatprep.mubr.bf16.mxu0 0
      %6331 = vmatmul.mubr.bf16.gmra.mrb[0].mxu0 %v6223
      %v6332 = vpop.f32.mrb[0].mxu0
      %v6333 = vadd.f32 %v6205, %v6332
      %v6334 = vpop.f32.mrb[0].mxu0
      %v6335 = vpop.f32.mrb[0].mxu0
      %v6336 = vadd.f32 %v6205, %v6335
      %v6337 = vpop.f32.mrb[0].mxu0
      %6338 = vmatprep.mubr.bf16.mxu0 0
      %6339 = vmatmul.mubr.bf16.gmra.mrb[0].mxu0 %v6226
      %v6340 = vpop.f32.mrb[0].mxu0
      %v6341 = vadd.f32 %v6205, %v6340
      %v6342 = vpop.f32.mrb[0].mxu0
      %v6343 = vpop.f32.mrb[0].mxu0
      %v6344 = vadd.f32 %v6205, %v6343
      %v6345 = vpop.f32.mrb[0].mxu0
      %6346 = vmatprep.mubr.bf16.mxu0 0
      %6347 = vmatmul.mubr.bf16.gmra.mrb[0].mxu0 %v6229
      %v6348 = vpop.f32.mrb[0].mxu0
      %v6349 = vadd.f32 %v6205, %v6348
      %v6350 = vpop.f32.mrb[0].mxu0
      %v6351 = vpop.f32.mrb[0].mxu0
      %v6352 = vadd.f32 %v6205, %v6351
      %v6353 = vpop.f32.mrb[0].mxu0
      %6354 = vmatprep.mubr.bf16.mxu0 0
      %6355 = vmatmul.mubr.bf16.gmra.mrb[0].mxu0 %v6232
      %v6356 = vpop.f32.mrb[0].mxu0
      %v6357 = vadd.f32 %v6205, %v6356
      %v6358 = vpop.f32.mrb[0].mxu0
      %v6359 = vpop.f32.mrb[0].mxu0
      %v6360 = vadd.f32 %v6205, %v6359
      %v6361 = vpop.f32.mrb[0].mxu0
      %6362 = vmatprep.mubr.bf16.mxu0 0
      %6363 = vmatmul.mubr.bf16.gmra.mrb[0].mxu0 %v6235
      %v6364 = vpop.f32.mrb[0].mxu0
      %v6365 = vadd.f32 %v6205, %v6364
      %v6366 = vpop.f32.mrb[0].mxu0
      %v6367 = vpop.f32.mrb[0].mxu0
      %v6368 = vadd.f32 %v6205, %v6367
      %v6369 = vpop.f32.mrb[0].mxu0
      %6370 = vmatprep.mubr.bf16.mxu0 0
      %6371 = vmatmul.mubr.bf16.gmra.mrb[0].mxu0 %v6238
      %v6372 = vpop.f32.mrb[0].mxu0
      %v6373 = vadd.f32 %v6205, %v6372
      %v6374 = vpop.f32.mrb[0].mxu0
      %v6375 = vpop.f32.mrb[0].mxu0
      %v6376 = vadd.f32 %v6205, %v6375
      %v6377 = vpop.f32.mrb[0].mxu0
      %6378 = vmatprep.mubr.bf16.mxu0 0
      %6379 = vmatmul.mubr.bf16.gmra.mrb[0].mxu0 %v6241
      %v6380 = vpop.f32.mrb[0].mxu0
      %v6381 = vadd.f32 %v6205, %v6380
      %v6382 = vpop.f32.mrb[0].mxu0
      %v6383 = vpop.f32.mrb[0].mxu0
      %v6384 = vadd.f32 %v6205, %v6383
      %v6385 = vpop.f32.mrb[0].mxu0
      %6386 = vmatprep.mubr.bf16.mxu0 0
      %6387 = vmatmul.mubr.bf16.gmra.mrb[0].mxu0 %v6244
      %v6388 = vpop.f32.mrb[0].mxu0
      %v6389 = vadd.f32 %v6205, %v6388
      %v6390 = vpop.f32.mrb[0].mxu0
      %v6391 = vpop.f32.mrb[0].mxu0
      %v6392 = vadd.f32 %v6205, %v6391
      %v6393 = vpop.f32.mrb[0].mxu0
      %6394 = vmatprep.mubr.bf16.mxu0 0
      %6395 = vmatmul.mubr.bf16.gmra.mrb[0].mxu0 %v6247
      %v6396 = vpop.f32.mrb[0].mxu0
      %v6397 = vadd.f32 %v6205, %v6396
      %v6398 = vpop.f32.mrb[0].mxu0
      %v6399 = vpop.f32.mrb[0].mxu0
      %v6400 = vadd.f32 %v6205, %v6399
      %v6401 = vpop.f32.mrb[0].mxu0
      %6402 = vmatprep.mubr.bf16.mxu0 0
      %6403 = vmatmul.mubr.bf16.gmra.mrb[0].mxu0 %v6250
      %v6404 = vpop.f32.mrb[0].mxu0
      %v6405 = vadd.f32 %v6205, %v6404
      %v6406 = vpop.f32.mrb[0].mxu0
      %v6407 = vpop.f32.mrb[0].mxu0
      %v6408 = vadd.f32 %v6205, %v6407
      %v6409 = vpop.f32.mrb[0].mxu0
      %6410 = vmatprep.mubr.bf16.mxu0 0
      %6411 = vmatmul.mubr.bf16.gmra.mrb[0].mxu0 %v6253
      %v6412 = vpop.f32.mrb[0].mxu0
      %v6413 = vadd.f32 %v6205, %v6412
      %v6414 = vpop.f32.mrb[0].mxu0
      %v6415 = vpop.f32.mrb[0].mxu0
      %v6416 = vadd.f32 %v6205, %v6415
      %v6417 = vpop.f32.mrb[0].mxu0
      %6418 = vdwg.mxu0
      %v6419 = vld [vmem:[%s5] sm:$0x3]
      %v6420 = vld [vmem:[%s9] sm:$0x1]
      %v6422 = vlaneseq
      %v6423 = vshrl.u32 %v6422, 7
      %v6424 = vsub.s32 0, %v6423
      %v6425 = vrot.slane %v6420, %v6424
      %v6428 = vsel %vm530, %v6419, 0
      %6430 = vmatprep.subr.bf16.mxu0 0
      %6431 = vmatpush1.bf16.msra.mxu0 %v6428
      %6432 = vmatprep.subr.bf16.mxu0 0
      %6433 = vmatpush1.bf16.msra.mxu0 0
      %6434 = vmatprep.subr.bf16.mxu0 0
      %6435 = vmatpush1.bf16.msra.mxu0 0
      %6436 = vmatprep.subr.bf16.mxu0 0
      %6437 = vmatpush1.bf16.msra.mxu0 0
      %6438 = vmatprep.subr.bf16.mxu0 0
      %6439 = vmatpush1.bf16.msra.mxu0 0
      %6440 = vmatprep.subr.bf16.mxu0 0
      %6441 = vmatpush1.bf16.msra.mxu0 0
      %6442 = vmatprep.subr.bf16.mxu0 0
      %6443 = vmatpush1.bf16.msra.mxu0 0
      %6444 = vmatprep.subr.bf16.mxu0 0
      %6445 = vmatpush1.bf16.msra.mxu0 0
      %6446 = vmatprep.subr.bf16.mxu0 0
      %6447 = vmatpush1.bf16.msra.mxu0 0
      %6448 = vmatprep.subr.bf16.mxu0 0
      %6449 = vmatpush1.bf16.msra.mxu0 0
      %6450 = vmatprep.subr.bf16.mxu0 0
      %6451 = vmatpush1.bf16.msra.mxu0 0
      %6452 = vmatprep.subr.bf16.mxu0 0
      %6453 = vmatpush1.bf16.msra.mxu0 0
      %6454 = vmatprep.subr.bf16.mxu0 0
      %6455 = vmatpush1.bf16.msra.mxu0 0
      %6456 = vmatprep.subr.bf16.mxu0 0
      %6457 = vmatpush1.bf16.msra.mxu0 0
      %6458 = vmatprep.subr.bf16.mxu0 0
      %6459 = vmatpush1.bf16.msra.mxu0 0
      %6460 = vmatprep.subr.bf16.mxu0 0
      %6461 = vmatpush1.bf16.msra.mxu0 0
      %6462 = vmatprep.mubr.bf16.mxu0 0
      %6463 = vmatmul.mubr.bf16.gmra.mrb[0].mxu0 %v483
      %v6464 = vpop.f32.mrb[0].mxu0
      %v6465 = vadd.f32 %v6425, %v6464
      %v6466 = vpop.f32.mrb[0].mxu0
      %v6467 = vpop.f32.mrb[0].mxu0
      %v6468 = vadd.f32 %v6425, %v6467
      %v6469 = vpop.f32.mrb[0].mxu0
      %6470 = vmatprep.mubr.bf16.mxu0 0
      %6471 = vmatmul.mubr.bf16.gmra.mrb[0].mxu0 %v486
      %v6472 = vpop.f32.mrb[0].mxu0
      %v6473 = vadd.f32 %v6425, %v6472
      %v6474 = vpop.f32.mrb[0].mxu0
      %v6475 = vpop.f32.mrb[0].mxu0
      %v6476 = vadd.f32 %v6425, %v6475
      %v6477 = vpop.f32.mrb[0].mxu0
      %6478 = vmatprep.mubr.bf16.mxu0 0
      %6479 = vmatmul.mubr.bf16.gmra.mrb[0].mxu0 %v489
      %v6480 = vpop.f32.mrb[0].mxu0
      %v6481 = vadd.f32 %v6425, %v6480
      %v6482 = vpop.f32.mrb[0].mxu0
      %v6483 = vpop.f32.mrb[0].mxu0
      %v6484 = vadd.f32 %v6425, %v6483
      %v6485 = vpop.f32.mrb[0].mxu0
      %6486 = vmatprep.mubr.bf16.mxu0 0
      %6487 = vmatmul.mubr.bf16.gmra.mrb[0].mxu0 %v492
      %v6488 = vpop.f32.mrb[0].mxu0
      %v6489 = vadd.f32 %v6425, %v6488
      %v6490 = vpop.f32.mrb[0].mxu0
      %v6491 = vpop.f32.mrb[0].mxu0
      %v6492 = vadd.f32 %v6425, %v6491
      %v6493 = vpop.f32.mrb[0].mxu0
      %6494 = vmatprep.mubr.bf16.mxu0 0
      %6495 = vmatmul.mubr.bf16.gmra.mrb[0].mxu0 %v495
      %v6496 = vpop.f32.mrb[0].mxu0
      %v6497 = vadd.f32 %v6425, %v6496
      %v6498 = vpop.f32.mrb[0].mxu0
      %v6499 = vpop.f32.mrb[0].mxu0
      %v6500 = vadd.f32 %v6425, %v6499
      %v6501 = vpop.f32.mrb[0].mxu0
      %6502 = vmatprep.mubr.bf16.mxu0 0
      %6503 = vmatmul.mubr.bf16.gmra.mrb[0].mxu0 %v498
      %v6504 = vpop.f32.mrb[0].mxu0
      %v6505 = vadd.f32 %v6425, %v6504
      %v6506 = vpop.f32.mrb[0].mxu0
      %v6507 = vpop.f32.mrb[0].mxu0
      %v6508 = vadd.f32 %v6425, %v6507
      %v6509 = vpop.f32.mrb[0].mxu0
      %6510 = vmatprep.mubr.bf16.mxu0 0
      %6511 = vmatmul.mubr.bf16.gmra.mrb[0].mxu0 %v501
      %v6512 = vpop.f32.mrb[0].mxu0
      %v6513 = vadd.f32 %v6425, %v6512
      %v6514 = vpop.f32.mrb[0].mxu0
      %v6515 = vpop.f32.mrb[0].mxu0
      %v6516 = vadd.f32 %v6425, %v6515
      %v6517 = vpop.f32.mrb[0].mxu0
      %6518 = vmatprep.mubr.bf16.mxu0 0
      %6519 = vmatmul.mubr.bf16.gmra.mrb[0].mxu0 %v504
      %v6520 = vpop.f32.mrb[0].mxu0
      %v6521 = vadd.f32 %v6425, %v6520
      %v6522 = vpop.f32.mrb[0].mxu0
      %v6523 = vpop.f32.mrb[0].mxu0
      %v6524 = vadd.f32 %v6425, %v6523
      %v6525 = vpop.f32.mrb[0].mxu0
      %6526 = vmatprep.mubr.bf16.mxu0 0
      %6527 = vmatmul.mubr.bf16.gmra.mrb[0].mxu0 %v507
      %v6528 = vpop.f32.mrb[0].mxu0
      %v6529 = vadd.f32 %v6425, %v6528
      %v6530 = vpop.f32.mrb[0].mxu0
      %v6531 = vpop.f32.mrb[0].mxu0
      %v6532 = vadd.f32 %v6425, %v6531
      %v6533 = vpop.f32.mrb[0].mxu0
      %6534 = vmatprep.mubr.bf16.mxu0 0
      %6535 = vmatmul.mubr.bf16.gmra.mrb[0].mxu0 %v510
      %v6536 = vpop.f32.mrb[0].mxu0
      %v6537 = vadd.f32 %v6425, %v6536
      %v6538 = vpop.f32.mrb[0].mxu0
      %v6539 = vpop.f32.mrb[0].mxu0
      %v6540 = vadd.f32 %v6425, %v6539
      %v6541 = vpop.f32.mrb[0].mxu0
      %6542 = vmatprep.mubr.bf16.mxu0 0
      %6543 = vmatmul.mubr.bf16.gmra.mrb[0].mxu0 %v513
      %v6544 = vpop.f32.mrb[0].mxu0
      %v6545 = vadd.f32 %v6425, %v6544
      %v6546 = vpop.f32.mrb[0].mxu0
      %v6547 = vpop.f32.mrb[0].mxu0
      %v6548 = vadd.f32 %v6425, %v6547
      %v6549 = vpop.f32.mrb[0].mxu0
      %6550 = vmatprep.mubr.bf16.mxu0 0
      %6551 = vmatmul.mubr.bf16.gmra.mrb[0].mxu0 %v516
      %v6552 = vpop.f32.mrb[0].mxu0
      %v6553 = vadd.f32 %v6425, %v6552
      %v6554 = vpop.f32.mrb[0].mxu0
      %v6555 = vpop.f32.mrb[0].mxu0
      %v6556 = vadd.f32 %v6425, %v6555
      %v6557 = vpop.f32.mrb[0].mxu0
      %6558 = vmatprep.mubr.bf16.mxu0 0
      %6559 = vmatmul.mubr.bf16.gmra.mrb[0].mxu0 %v519
      %v6560 = vpop.f32.mrb[0].mxu0
      %v6561 = vadd.f32 %v6425, %v6560
      %v6562 = vpop.f32.mrb[0].mxu0
      %v6563 = vpop.f32.mrb[0].mxu0
      %v6564 = vadd.f32 %v6425, %v6563
      %v6565 = vpop.f32.mrb[0].mxu0
      %6566 = vmatprep.mubr.bf16.mxu0 0
      %6567 = vmatmul.mubr.bf16.gmra.mrb[0].mxu0 %v522
      %v6568 = vpop.f32.mrb[0].mxu0
      %v6569 = vadd.f32 %v6425, %v6568
      %v6570 = vpop.f32.mrb[0].mxu0
      %v6571 = vpop.f32.mrb[0].mxu0
      %v6572 = vadd.f32 %v6425, %v6571
      %v6573 = vpop.f32.mrb[0].mxu0
      %6574 = vmatprep.mubr.bf16.mxu0 0
      %6575 = vmatmul.mubr.bf16.gmra.mrb[0].mxu0 %v525
      %v6576 = vpop.f32.mrb[0].mxu0
      %v6577 = vadd.f32 %v6425, %v6576
      %v6578 = vpop.f32.mrb[0].mxu0
      %v6579 = vpop.f32.mrb[0].mxu0
      %v6580 = vadd.f32 %v6425, %v6579
      %v6581 = vpop.f32.mrb[0].mxu0
      %6582 = vmatprep.mubr.bf16.mxu0 0
      %6583 = vmatmul.mubr.bf16.gmra.mrb[0].mxu0 %v528
      %v6584 = vpop.f32.mrb[0].mxu0
      %v6585 = vadd.f32 %v6425, %v6584
      %v6586 = vpop.f32.mrb[0].mxu0
      %v6587 = vpop.f32.mrb[0].mxu0
      %v6588 = vadd.f32 %v6425, %v6587
      %v6589 = vpop.f32.mrb[0].mxu0
      %6590 = vdwg.mxu0
      %v6591 = vadd.f32 %v6293, %v6465
      %v6592 = vadd.f32 %v6296, %v6468
      %v6593 = vadd.f32 %v6301, %v6473
      %v6594 = vadd.f32 %v6304, %v6476
      %v6595 = vadd.f32 %v6309, %v6481
      %v6596 = vadd.f32 %v6312, %v6484
      %v6597 = vadd.f32 %v6317, %v6489
      %v6598 = vadd.f32 %v6320, %v6492
      %v6599 = vadd.f32 %v6325, %v6497
      %v6600 = vadd.f32 %v6328, %v6500
      %v6601 = vadd.f32 %v6333, %v6505
      %v6602 = vadd.f32 %v6336, %v6508
      %v6603 = vadd.f32 %v6341, %v6513
      %v6604 = vadd.f32 %v6344, %v6516
      %v6605 = vadd.f32 %v6349, %v6521
      %v6606 = vadd.f32 %v6352, %v6524
      %v6607 = vadd.f32 %v6357, %v6529
      %v6608 = vadd.f32 %v6360, %v6532
      %v6609 = vadd.f32 %v6365, %v6537
      %v6610 = vadd.f32 %v6368, %v6540
      %v6611 = vadd.f32 %v6373, %v6545
      %v6612 = vadd.f32 %v6376, %v6548
      %v6613 = vadd.f32 %v6381, %v6553
      %v6614 = vadd.f32 %v6384, %v6556
      %v6615 = vadd.f32 %v6389, %v6561
      %v6616 = vadd.f32 %v6392, %v6564
      %v6617 = vadd.f32 %v6397, %v6569
      %v6618 = vadd.f32 %v6400, %v6572
      %v6619 = vadd.f32 %v6405, %v6577
      %v6620 = vadd.f32 %v6408, %v6580
      %v6621 = vadd.f32 %v6413, %v6585
      %v6622 = vadd.f32 %v6416, %v6588
      %v6623 = vmax.f32 %v6591, 0.0
      %v6624 = vmax.f32 %v6592, 0.0
      %v6625 = vmax.f32 %v6593, 0.0
      %v6626 = vmax.f32 %v6594, 0.0
      %v6627 = vmax.f32 %v6595, 0.0
      %v6628 = vmax.f32 %v6596, 0.0
      %v6629 = vmax.f32 %v6597, 0.0
      %v6630 = vmax.f32 %v6598, 0.0
      %v6631 = vmax.f32 %v6599, 0.0
      %v6632 = vmax.f32 %v6600, 0.0
      %v6633 = vmax.f32 %v6601, 0.0
      %v6634 = vmax.f32 %v6602, 0.0
      %v6635 = vmax.f32 %v6603, 0.0
      %v6636 = vmax.f32 %v6604, 0.0
      %v6637 = vmax.f32 %v6605, 0.0
      %v6638 = vmax.f32 %v6606, 0.0
      %v6639 = vmax.f32 %v6607, 0.0
      %v6640 = vmax.f32 %v6608, 0.0
      %v6641 = vmax.f32 %v6609, 0.0
      %v6642 = vmax.f32 %v6610, 0.0
      %v6643 = vmax.f32 %v6611, 0.0
      %v6644 = vmax.f32 %v6612, 0.0
      %v6645 = vmax.f32 %v6613, 0.0
      %v6646 = vmax.f32 %v6614, 0.0
      %v6647 = vmax.f32 %v6615, 0.0
      %v6648 = vmax.f32 %v6616, 0.0
      %v6649 = vmax.f32 %v6617, 0.0
      %v6650 = vmax.f32 %v6618, 0.0
      %v6651 = vmax.f32 %v6619, 0.0
      %v6652 = vmax.f32 %v6620, 0.0
      %v6653 = vmax.f32 %v6621, 0.0
      %v6654 = vmax.f32 %v6622, 0.0
      %6655 = vst.msk [vmem:[%s359] sm:$0xff] %vm727, %v6623
      %6656 = vst.msk [vmem:[%s359 + $0x8] sm:$0xff] %vm727, %v6624
      %6657 = vst.msk [vmem:[%s359 + $0x10] sm:$0xff] %vm727, %v6625
      %6658 = vst.msk [vmem:[%s359 + $0x18] sm:$0xff] %vm727, %v6626
      %6659 = vst.msk [vmem:[%s359 + $0x20] sm:$0xff] %vm727, %v6627
      %6660 = vst.msk [vmem:[%s359 + $0x28] sm:$0xff] %vm727, %v6628
      %6661 = vst.msk [vmem:[%s359 + $0x30] sm:$0xff] %vm727, %v6629
      %6662 = vst.msk [vmem:[%s359 + $0x38] sm:$0xff] %vm727, %v6630
      %6663 = vst.msk [vmem:[%s359 + $0x40] sm:$0xff] %vm727, %v6631
      %6664 = vst.msk [vmem:[%s359 + $0x48] sm:$0xff] %vm727, %v6632
      %6665 = vst.msk [vmem:[%s359 + $0x50] sm:$0xff] %vm727, %v6633
      %6666 = vst.msk [vmem:[%s359 + $0x58] sm:$0xff] %vm727, %v6634
      %6667 = vst.msk [vmem:[%s359 + $0x60] sm:$0xff] %vm727, %v6635
      %6668 = vst.msk [vmem:[%s359 + $0x68] sm:$0xff] %vm727, %v6636
      %6669 = vst.msk [vmem:[%s359 + $0x70] sm:$0xff] %vm727, %v6637
      %6670 = vst.msk [vmem:[%s359 + $0x78] sm:$0xff] %vm727, %v6638
      %6671 = vst.msk [vmem:[%s359 + $0x80] sm:$0xff] %vm727, %v6639
      %6672 = vst.msk [vmem:[%s359 + $0x88] sm:$0xff] %vm727, %v6640
      %6673 = vst.msk [vmem:[%s359 + $0x90] sm:$0xff] %vm727, %v6641
      %6674 = vst.msk [vmem:[%s359 + $0x98] sm:$0xff] %vm727, %v6642
      %6675 = vst.msk [vmem:[%s359 + $0xa0] sm:$0xff] %vm727, %v6643
      %6676 = vst.msk [vmem:[%s359 + $0xa8] sm:$0xff] %vm727, %v6644
      %6677 = vst.msk [vmem:[%s359 + $0xb0] sm:$0xff] %vm727, %v6645
      %6678 = vst.msk [vmem:[%s359 + $0xb8] sm:$0xff] %vm727, %v6646
      %6679 = vst.msk [vmem:[%s359 + $0xc0] sm:$0xff] %vm727, %v6647
      %6680 = vst.msk [vmem:[%s359 + $0xc8] sm:$0xff] %vm727, %v6648
      %6681 = vst.msk [vmem:[%s359 + $0xd0] sm:$0xff] %vm727, %v6649
      %6682 = vst.msk [vmem:[%s359 + $0xd8] sm:$0xff] %vm727, %v6650
      %6683 = vst.msk [vmem:[%s359 + $0xe0] sm:$0xff] %vm727, %v6651
      %6684 = vst.msk [vmem:[%s359 + $0xe8] sm:$0xff] %vm727, %v6652
      %6685 = vst.msk [vmem:[%s359 + $0xf0] sm:$0xff] %vm727, %v6653
      %6686 = vst.msk [vmem:[%s359 + $0xf8] sm:$0xff] %vm727, %v6654
      %p6687 = scmp.lt.s32.totalorder %s21, 1
      %s6688 = scalar_select %p6687, %s21, 1
      %s6689 = smul.addr %s6688, 32
      %s6690 = smul.addr %s6689, 8
      %s6691 = scalar_lea.vmem %s10, %s6690
      // Predicated region
      $region61: #{tpu_custom_call.1} parent=59 // pred_check
        %p6692 = pneg %p254
      $region62: #{tpu_custom_call.1} parent=59 // pred_check_branch
        %6694 = sbr.rel (%p6692) target = $region64
      $region63: #{tpu_custom_call.1} parent=59 // pred_region
        _
      $region64: #{tpu_custom_call.1} parent=59 // pred_fallthru
        _
    $region60: #{tpu_custom_call.1} parent=5 // pred_fallthru
      _
    %p6695 = scmp.le.s32.totalorder 2, %s16
    // Predicated region
    $region65: #{tpu_custom_call.1} parent=5 // pred_check
      %p6696 = pneg %p6695
    $region66: #{tpu_custom_call.1} parent=5 // pred_check_branch
      %6698 = sbr.rel (%p6696) target = $region68
    $region67: #{tpu_custom_call.1} parent=5 // pred_region
      %s6699 = ssub.s32 %s16, 2
      // Predicated region
      $region69: #{tpu_custom_call.1} parent=67 // pred_check
        %p6700 = pneg %p260
      $region70: #{tpu_custom_call.1} parent=67 // pred_check_branch
        %6702 = sbr.rel (%p6700) target = $region72
      $region71: #{tpu_custom_call.1} parent=67 // pred_region
        %p6703 = scmp.lt.s32.totalorder %s22, 1
        %s6704 = scalar_select %p6703, %s22, 1
        %s6705 = smul.addr %s6704, 32
        %s6706 = smul.addr %s6705, 8
        %s6707 = scalar_lea.vmem %s10, %s6706
      $region72: #{tpu_custom_call.1} parent=67 // pred_fallthru
        _
    $region68: #{tpu_custom_call.1} parent=5 // pred_fallthru
      _
  $region6: #{tpu_custom_call.1} parent=0 // loop_footer
    %s20 = sadd.s32 1, %s16
  $region7: #{tpu_custom_call.1} parent=0 // loop_footer_branch
    %15 = sbr.rel target = $region3
  $region8: #{tpu_custom_call.1} parent=0 // loop_exit
    _

</llo_original>
